<compile_context>
chip_gen: v7x
topology: tpu7x:2x2x1
jax: 0.10.0
libtpu: 0.0.40
codegen_flags: <defaults>
</compile_context>

<pallas_src>
import functools
import math

import jax
import jax.numpy as jnp
from jax.experimental import pallas as pl
from jax.experimental.pallas import tpu as pltpu


def _round_up(x, m):
    return (x + m - 1) // m * m


def _cdiv(a, b):
    return (a + b - 1) // b


# ----------------------------------------------------------------------------
# Pallas kernel 1: fused conv (tap-decomposed matmuls) + bias + optional SiLU
# ----------------------------------------------------------------------------
def _conv_tap_kernel(x_ref, w_ref, b_ref, o_ref, *, taps, mp, act):
    """One batch element per grid step.

    x_ref : (1, n_phase, PH*PW, Cin)  f32  flattened stride-phase planes
    w_ref : (n_taps, Cin, Coutp)      bf16 per-tap weight matrices
    b_ref : (1, Coutp)                f32
    o_ref : (1, mp, Coutp)            f32  (mp = Ho * PW rows; PW-wide rows,
                                            garbage right-edge columns are
                                            sliced off in the wrapper)
    """
    acc = None
    for t, (ph, d) in enumerate(taps):
        a = x_ref[0, ph, d:d + mp, :].astype(jnp.bfloat16)   # contiguous slab
        part = jnp.dot(a, w_ref[t], preferred_element_type=jnp.float32)
        acc = part if acc is None else acc + part
    acc = acc + b_ref[...]
    if act:  # SiLU = x * sigmoid(x); keep f32 on the VPU, reciprocal on EUP
        acc = acc * pl.reciprocal(1.0 + jnp.exp(-acc), approx=True)
    o_ref[0] = acc.astype(o_ref.dtype)


def _make_taps(k, s, pw):
    # tap (ky, kx) -> (phase index, flattened element offset inside the phase)
    return tuple(((ky % s) * s + (kx % s), (ky // s) * pw + (kx // s))
                 for ky in range(k) for kx in range(k))


def conv2d_block(x_nhwc, w_taps, bias_row, *, k, s, act):
    """act(conv2d(x, w) + b) with 'same' padding, stride s, NHWC layout.

    w_taps : (k*k, Cin_stored, Coutp) bf16, bias_row : (1, Coutp) f32.
    Returns (N, Ho, Wo, Coutp) f32 (channels zero-padded up to Coutp).
    """
    N, H, W, C = x_nhwc.shape
    n_taps, cin_s, coutp = w_taps.shape
    assert cin_s == C and n_taps == k * k
    p = k // 2
    Ho = (H + 2 * p - k) // s + 1
    Wo = (W + 2 * p - k) // s + 1
    q = (k - 1) // s                 # max per-axis tap offset inside a phase
    PW = Wo + q                      # phase width kept per output row
    PH = Ho + q + (1 if q > 0 else 0)  # +1 zero row so tap slabs stay in-bounds

    xp = jnp.pad(x_nhwc, ((0, 0), (p, p), (p, p), (0, 0)))
    phases = []
    for pr in range(s):
        for pc in range(s):
            ph = xp[:, pr::s, pc::s, :][:, :PH, :PW, :]
            ph = jnp.pad(ph, ((0, 0), (0, PH - ph.shape[1]),
                              (0, PW - ph.shape[2]), (0, 0)))
            phases.append(ph.reshape(N, PH * PW, C))
    phx = jnp.stack(phases, axis=1)          # (N, s*s, PH*PW, C)  ~1x traffic

    n_ph = s * s
    taps = _make_taps(k, s, PW)
    mp = Ho * PW

    out = pl.pallas_call(
        functools.partial(_conv_tap_kernel, taps=taps, mp=mp, act=act),
        out_shape=jax.ShapeDtypeStruct((N, mp, coutp), jnp.float32),
        grid_spec=pltpu.PrefetchScalarGridSpec(
            num_scalar_prefetch=0,
            grid=(N,),
            in_specs=[
                pl.BlockSpec((1, n_ph, PH * PW, C), lambda n: (n, 0, 0, 0)),
                pl.BlockSpec((n_taps, cin_s, coutp), lambda n: (0, 0, 0)),
                pl.BlockSpec((1, coutp), lambda n: (0, 0)),
            ],
            out_specs=pl.BlockSpec((1, mp, coutp), lambda n: (n, 0, 0)),
        ),
        compiler_params=pltpu.CompilerParams(dimension_semantics=("parallel",)),
    )(phx, w_taps, bias_row)

    # drop the (PW - Wo) garbage right-edge columns of each output row
    return out.reshape(N, Ho, PW, coutp)[:, :, :Wo, :]


# ----------------------------------------------------------------------------
# Pallas kernel 2: BCE-with-logits partial sums (objectness loss hot path)
# ----------------------------------------------------------------------------
def _bce_partial_kernel(x_ref, z_ref, o_ref):
    x = x_ref[...]
    z = z_ref[...]
    bce = jnp.logaddexp(0.0, x) - x * z          # softplus(x) - x*z, f32
    # elementwise (VPU) fold of sublane groups -> one (8,128) partial per block;
    # the cross-lane reduce is deferred to plain JAX outside the kernel.
    o_ref[...] = bce.reshape(-1, 8, 128).sum(axis=0)


def bce_with_logits_mean(logits, targets):
    x = logits.reshape(-1).astype(jnp.float32)
    z = targets.reshape(-1).astype(jnp.float32)
    n = x.shape[0]
    rows = _cdiv(n, 128)
    tile_rows = min(512, _round_up(rows, 8))
    R = _round_up(rows, tile_rows)
    G = R // tile_rows
    npad = R * 128
    # padded logits = -100 (softplus ~ 4e-44), padded targets = 0 -> ~exact sum
    xp = jnp.pad(x, (0, npad - n), constant_values=-100.0).reshape(R, 128)
    zp = jnp.pad(z, (0, npad - n)).reshape(R, 128)

    parts = pl.pallas_call(
        _bce_partial_kernel,
        out_shape=jax.ShapeDtypeStruct((G * 8, 128), jnp.float32),
        grid_spec=pltpu.PrefetchScalarGridSpec(
            num_scalar_prefetch=0,
            grid=(G,),
            in_specs=[
                pl.BlockSpec((tile_rows, 128), lambda i: (i, 0)),
                pl.BlockSpec((tile_rows, 128), lambda i: (i, 0)),
            ],
            out_specs=pl.BlockSpec((8, 128), lambda i: (i, 0)),
        ),
        compiler_params=pltpu.CompilerParams(dimension_semantics=("parallel",)),
    )(xp, zp)
    return jnp.sum(parts) / n


# ----------------------------------------------------------------------------
# Tiny YOLOv5-style backbone + detect heads + simplified YoloLoss
# ----------------------------------------------------------------------------
NUM_CLASSES = 8
NA = 3  # anchors per level
ANCHORS = [
    jnp.array([[10, 13], [16, 30], [33, 23]], jnp.float32) / 8.0,        # P3
    jnp.array([[30, 61], [62, 45], [59, 119]], jnp.float32) / 16.0,      # P4
    jnp.array([[116, 90], [156, 198], [373, 326]], jnp.float32) / 32.0,  # P5
]
OBJ_BALANCE = [4.0, 1.0, 0.4]

# (name, Cin, Cout, k, stride)
BACKBONE_CFG = [
    ("stem", 3, 16, 3, 2),
    ("c1", 16, 32, 3, 2),
    ("c2", 32, 32, 3, 1),
    ("c3", 32, 64, 3, 2),    # -> P3 (stride 8)
    ("c4", 64, 64, 3, 1),
    ("c5", 64, 128, 3, 2),   # -> P4 (stride 16)
    ("c6", 128, 128, 3, 1),
    ("c7", 128, 256, 3, 2),  # -> P5 (stride 32)
]
P3_IDX, P4_IDX, P5_IDX = 3, 5, 7
HEAD_CIN = [64, 128, 256]


def init_params(key):
    params = {}
    for (name, cin, cout, k, s) in BACKBONE_CFG:
        key, kw = jax.random.split(key)
        std = 1.0 / math.sqrt(cin * k * k)
        params[name + "_w"] = jax.random.normal(kw, (cout, cin, k, k), jnp.float32) * std
        params[name + "_b"] = jnp.zeros((cout,), jnp.float32)
    no = NA * (5 + NUM_CLASSES)
    for l, cin in enumerate(HEAD_CIN):
        key, kw = jax.random.split(key)
        std = 1.0 / math.sqrt(cin)
        params[f"head{l}_w"] = jax.random.normal(kw, (no, cin, 1, 1), jnp.float32) * std
        params[f"head{l}_b"] = jnp.zeros((no,), jnp.float32)
    return params


def _prep_weight(w_oihw, cin_store, coutp):
    cout, cin, kh, kw = w_oihw.shape
    w = jnp.transpose(w_oihw, (2, 3, 1, 0)).reshape(kh * kw, cin, cout)
    w = jnp.pad(w, ((0, 0), (0, cin_store - cin), (0, coutp - cout)))
    return w.astype(jnp.bfloat16)   # bf16 MXU operands


def _prep_bias(b, coutp):
    return jnp.pad(b, (0, coutp - b.shape[0])).astype(jnp.float32).reshape(1, coutp)


def backbone_forward(params, imgs_nchw):
    x = jnp.transpose(imgs_nchw, (0, 2, 3, 1)).astype(jnp.float32)  # NCHW -> NHWC
    feats = []
    for (name, cin, cout, k, s) in BACKBONE_CFG:
        coutp = _round_up(cout, 128)
        w = _prep_weight(params[name + "_w"], x.shape[-1], coutp)
        b = _prep_bias(params[name + "_b"], coutp)
        x = conv2d_block(x, w, b, k=k, s=s, act=True)
        feats.append(x)

    outs = []
    no = 5 + NUM_CLASSES
    n_out = NA * no
    for l, fidx in enumerate([P3_IDX, P4_IDX, P5_IDX]):
        f = feats[fidx]
        coutp = _round_up(n_out, 128)
        w = _prep_weight(params[f"head{l}_w"], f.shape[-1], coutp)
        b = _prep_bias(params[f"head{l}_b"], coutp)
        y = conv2d_block(f, w, b, k=1, s=1, act=False)[..., :n_out]
        N, ny, nx, _ = y.shape
        # [N, ny, nx, na*no] -> [N, na, ny, nx, no]  (YOLOv5 Detect layout)
        y = y.reshape(N, ny, nx, NA, no).transpose(0, 3, 1, 2, 4)
        outs.append(y)
    return outs


def _iou_cxcywh(xy1, wh1, xy2, wh2, eps=1e-7):
    b1x1 = xy1[..., 0] - wh1[..., 0] / 2
    b1x2 = xy1[..., 0] + wh1[..., 0] / 2
    b1y1 = xy1[..., 1] - wh1[..., 1] / 2
    b1y2 = xy1[..., 1] + wh1[..., 1] / 2
    b2x1 = xy2[..., 0] - wh2[..., 0] / 2
    b2x2 = xy2[..., 0] + wh2[..., 0] / 2
    b2y1 = xy2[..., 1] - wh2[..., 1] / 2
    b2y2 = xy2[..., 1] + wh2[..., 1] / 2
    iw = jnp.clip(jnp.minimum(b1x2, b2x2) - jnp.maximum(b1x1, b2x1), 0)
    ih = jnp.clip(jnp.minimum(b1y2, b2y2) - jnp.maximum(b1y1, b2y1), 0)
    inter = iw * ih
    union = wh1[..., 0] * wh1[..., 1] + wh2[..., 0] * wh2[..., 1] - inter + eps
    return inter / union


def _level_loss(p, targets, anchors):
    # p: [B, na, ny, nx, 5+nc];  targets: [nt, 6] = (img, cls, x, y, w, h) norm.
    B, na, ny, nx, no = p.shape
    nc = no - 5
    valid = (targets[:, 1] >= 0).astype(jnp.float32)
    b = jnp.clip(targets[:, 0].astype(jnp.int32), 0, B - 1)
    cls = jnp.clip(targets[:, 1].astype(jnp.int32), 0, nc - 1)
    gx, gy = targets[:, 2] * nx, targets[:, 3] * ny
    gw, gh = targets[:, 4] * nx, targets[:, 5] * ny
    gi = jnp.clip(jnp.floor(gx), 0, nx - 1).astype(jnp.int32)
    gj = jnp.clip(jnp.floor(gy), 0, ny - 1).astype(jnp.int32)

    # TODO(synk): YOLOv5 build_targets anchor-ratio filtering + neighbor-cell
    # assignment is not reproduced; all anchors of the owning cell are positive.
    a_idx = jnp.arange(na)[None, :]
    ps = p[b[:, None], a_idx, gj[:, None], gi[:, None]]  # [nt, na, no]

    pxy = jax.nn.sigmoid(ps[..., :2]) * 2.0 - 0.5
    pwh = (jax.nn.sigmoid(ps[..., 2:4]) * 2.0) ** 2 * anchors[None, :, :]
    txy = jnp.stack([gx - gi, gy - gj], -1)[:, None, :]
    twh = jnp.stack([gw, gh], -1)[:, None, :]
    iou = _iou_cxcywh(pxy, pwh, txy, twh)  # [nt, na]

    w = valid[:, None]
    n_pos = jnp.maximum(jnp.sum(w) * na, 1.0)
    lbox = jnp.sum((1.0 - iou) * w) / n_pos

    tcls = jax.nn.one_hot(cls, nc)
    cls_logits = ps[..., 5:]
    cls_bce = jnp.logaddexp(0.0, cls_logits) - cls_logits * tcls[:, None, :]
    lcls = jnp.sum(cls_bce * w[..., None]) / (n_pos * nc)

    tobj = jnp.zeros((B, na, ny, nx), jnp.float32)
    iou_pos = jnp.clip(jax.lax.stop_gradient(iou), 0.0, 1.0) * w
    tobj = tobj.at[b[:, None], a_idx, gj[:, None], gi[:, None]].max(iou_pos)
    lobj = bce_with_logits_mean(p[..., 4], tobj)  # Pallas reduction kernel
    return lbox, lobj, lcls


def yolo_loss(outputs, targets):
    lbox = jnp.float32(0.0)
    lobj = jnp.float32(0.0)
    lcls = jnp.float32(0.0)
    for l, p in enumerate(outputs):
        b_l, o_l, c_l = _level_loss(p, targets, ANCHORS[l])
        lbox = lbox + b_l
        lobj = lobj + o_l * OBJ_BALANCE[l]
        lcls = lcls + c_l
    bs = outputs[0].shape[0]
    lbox = lbox * 0.05
    lobj = lobj * 1.0
    lcls = lcls * 0.5
    total = (lbox + lobj + lcls) * bs
    return total, (lbox, lobj, lcls)


def yolo_backbone_forward(params, batch):
    """Mirrors YoloBackbone.forward: returns {'T','IOU','OBJ','CLS'} loss dict."""
    outputs = backbone_forward(params, batch["imgs"])
    loss, (liou, lobj, lcls) = yolo_loss(outputs, batch["yolo_targets"])
    return {"T": loss, "IOU": liou, "OBJ": lobj, "CLS": lcls}


# TODO(synk): pretrained-weight download/load, nn.DataParallel wrapping and the
# detect() path (non_max_suppression) have no clean Pallas equivalent here.

if __name__ == "__main__":
    key = jax.random.PRNGKey(0)
    key, k_img = jax.random.split(key)
    params = init_params(key)

    imgs = jax.random.normal(k_img, (2, 3, 64, 64), jnp.float32)  # NCHW like PyTorch
    # YOLO targets: (image_idx, class, cx, cy, w, h) normalized to [0,1]
    yolo_targets = jnp.array(
        [
            [0, 1, 0.50, 0.50, 0.30, 0.40],
            [0, 3, 0.25, 0.75, 0.10, 0.15],
            [1, 0, 0.60, 0.30, 0.50, 0.30],
            [1, 5, 0.80, 0.80, 0.20, 0.20],
        ],
        jnp.float32,
    )
    batch = {"imgs": imgs, "yolo_targets": yolo_targets}

    out = yolo_backbone_forward(params, batch)
    out = jax.tree_util.tree_map(jax.block_until_ready, out)
    for v in out.values():
        assert jnp.isfinite(v).all()
    print("KERNEL_OK")
</pallas_src>

<mosaic_0001>
module attributes {stable_mosaic.version = 11 : i64} {
  func.func @_conv_tap_kernel(%arg0: i32, %arg1: memref<1x4x1122x3xf32, #tpu.memory_space<vmem>>, %arg2: memref<9x3x128xbf16, #tpu.memory_space<vmem>>, %arg3: memref<1x128xf32, #tpu.memory_space<vmem>>, %arg4: memref<1x1056x128xf32, #tpu.memory_space<vmem>>) attributes {dimension_semantics = [#tpu.dimension_semantics<parallel>], iteration_bounds = array<i64: 2>, scalar_prefetch = 0 : i64, scratch_operands = 0 : i64, tpu.core_type = #tpu.core_type<tc>, window_params = [{transform_indices = @transform_0, window_bounds = array<i64: 1, 4, 1122, 3>}, {pipeline_mode = #tpu.pipeline_mode<synchronous>, transform_indices = @transform_1, window_bounds = array<i64: 9, 3, 128>}, {pipeline_mode = #tpu.pipeline_mode<synchronous>, transform_indices = @transform_2, window_bounds = array<i64: 1, 128>}, {transform_indices = @transform_3, window_bounds = array<i64: 1, 1056, 128>}]} {
    %c0 = arith.constant 0 : index
    %c0_0 = arith.constant 0 : index
    %c0_1 = arith.constant 0 : index
    %c0_2 = arith.constant 0 : index
    %0 = vector.load %arg1[%c0, %c0_0, %c0_1, %c0_2] : memref<1x4x1122x3xf32, #tpu.memory_space<vmem>>, vector<1x1x1056x3xf32>
    %1 = vector.shape_cast %0 : vector<1x1x1056x3xf32> to vector<1056x3xf32>
    %2 = arith.truncf %1 : vector<1056x3xf32> to vector<1056x3xbf16>
    %c0_3 = arith.constant 0 : index
    %c0_4 = arith.constant 0 : index
    %c0_5 = arith.constant 0 : index
    %3 = vector.load %arg2[%c0_3, %c0_4, %c0_5] : memref<9x3x128xbf16, #tpu.memory_space<vmem>>, vector<1x3x128xbf16>
    %4 = vector.shape_cast %3 : vector<1x3x128xbf16> to vector<3x128xbf16>
    %cst = arith.constant dense<0.000000e+00> : vector<1056x128xf32>
    %5 = tpu.matmul %2, %4, %cst {dimension_numbers = #tpu.dot_dimension_numbers<[1], [0], [0], [1], [0, 0, 1, 1], [], []>} : vector<1056x3xbf16>, vector<3x128xbf16>, vector<1056x128xf32> -> vector<1056x128xf32>
    %c0_6 = arith.constant 0 : index
    %c1 = arith.constant 1 : index
    %c0_7 = arith.constant 0 : index
    %c0_8 = arith.constant 0 : index
    %6 = vector.load %arg1[%c0_6, %c1, %c0_7, %c0_8] : memref<1x4x1122x3xf32, #tpu.memory_space<vmem>>, vector<1x1x1056x3xf32>
    %7 = vector.shape_cast %6 : vector<1x1x1056x3xf32> to vector<1056x3xf32>
    %8 = arith.truncf %7 : vector<1056x3xf32> to vector<1056x3xbf16>
    %c1_9 = arith.constant 1 : index
    %c0_10 = arith.constant 0 : index
    %c0_11 = arith.constant 0 : index
    %9 = vector.load %arg2[%c1_9, %c0_10, %c0_11] : memref<9x3x128xbf16, #tpu.memory_space<vmem>>, vector<1x3x128xbf16>
    %10 = vector.shape_cast %9 : vector<1x3x128xbf16> to vector<3x128xbf16>
    %cst_12 = arith.constant dense<0.000000e+00> : vector<1056x128xf32>
    %11 = tpu.matmul %8, %10, %cst_12 {dimension_numbers = #tpu.dot_dimension_numbers<[1], [0], [0], [1], [0, 0, 1, 1], [], []>} : vector<1056x3xbf16>, vector<3x128xbf16>, vector<1056x128xf32> -> vector<1056x128xf32>
    %12 = arith.addf %5, %11 : vector<1056x128xf32>
    %c0_13 = arith.constant 0 : index
    %c0_14 = arith.constant 0 : index
    %c1_15 = arith.constant 1 : index
    %c0_16 = arith.constant 0 : index
    %13 = vector.load %arg1[%c0_13, %c0_14, %c1_15, %c0_16] : memref<1x4x1122x3xf32, #tpu.memory_space<vmem>>, vector<1x1x1056x3xf32>
    %14 = vector.shape_cast %13 : vector<1x1x1056x3xf32> to vector<1056x3xf32>
    %15 = arith.truncf %14 : vector<1056x3xf32> to vector<1056x3xbf16>
    %c2 = arith.constant 2 : index
    %c0_17 = arith.constant 0 : index
    %c0_18 = arith.constant 0 : index
    %16 = vector.load %arg2[%c2, %c0_17, %c0_18] : memref<9x3x128xbf16, #tpu.memory_space<vmem>>, vector<1x3x128xbf16>
    %17 = vector.shape_cast %16 : vector<1x3x128xbf16> to vector<3x128xbf16>
    %cst_19 = arith.constant dense<0.000000e+00> : vector<1056x128xf32>
    %18 = tpu.matmul %15, %17, %cst_19 {dimension_numbers = #tpu.dot_dimension_numbers<[1], [0], [0], [1], [0, 0, 1, 1], [], []>} : vector<1056x3xbf16>, vector<3x128xbf16>, vector<1056x128xf32> -> vector<1056x128xf32>
    %19 = arith.addf %12, %18 : vector<1056x128xf32>
    %c0_20 = arith.constant 0 : index
    %c2_21 = arith.constant 2 : index
    %c0_22 = arith.constant 0 : index
    %c0_23 = arith.constant 0 : index
    %20 = vector.load %arg1[%c0_20, %c2_21, %c0_22, %c0_23] : memref<1x4x1122x3xf32, #tpu.memory_space<vmem>>, vector<1x1x1056x3xf32>
    %21 = vector.shape_cast %20 : vector<1x1x1056x3xf32> to vector<1056x3xf32>
    %22 = arith.truncf %21 : vector<1056x3xf32> to vector<1056x3xbf16>
    %c3 = arith.constant 3 : index
    %c0_24 = arith.constant 0 : index
    %c0_25 = arith.constant 0 : index
    %23 = vector.load %arg2[%c3, %c0_24, %c0_25] : memref<9x3x128xbf16, #tpu.memory_space<vmem>>, vector<1x3x128xbf16>
    %24 = vector.shape_cast %23 : vector<1x3x128xbf16> to vector<3x128xbf16>
    %cst_26 = arith.constant dense<0.000000e+00> : vector<1056x128xf32>
    %25 = tpu.matmul %22, %24, %cst_26 {dimension_numbers = #tpu.dot_dimension_numbers<[1], [0], [0], [1], [0, 0, 1, 1], [], []>} : vector<1056x3xbf16>, vector<3x128xbf16>, vector<1056x128xf32> -> vector<1056x128xf32>
    %26 = arith.addf %19, %25 : vector<1056x128xf32>
    %c0_27 = arith.constant 0 : index
    %c3_28 = arith.constant 3 : index
    %c0_29 = arith.constant 0 : index
    %c0_30 = arith.constant 0 : index
    %27 = vector.load %arg1[%c0_27, %c3_28, %c0_29, %c0_30] : memref<1x4x1122x3xf32, #tpu.memory_space<vmem>>, vector<1x1x1056x3xf32>
    %28 = vector.shape_cast %27 : vector<1x1x1056x3xf32> to vector<1056x3xf32>
    %29 = arith.truncf %28 : vector<1056x3xf32> to vector<1056x3xbf16>
    %c4 = arith.constant 4 : index
    %c0_31 = arith.constant 0 : index
    %c0_32 = arith.constant 0 : index
    %30 = vector.load %arg2[%c4, %c0_31, %c0_32] : memref<9x3x128xbf16, #tpu.memory_space<vmem>>, vector<1x3x128xbf16>
    %31 = vector.shape_cast %30 : vector<1x3x128xbf16> to vector<3x128xbf16>
    %cst_33 = arith.constant dense<0.000000e+00> : vector<1056x128xf32>
    %32 = tpu.matmul %29, %31, %cst_33 {dimension_numbers = #tpu.dot_dimension_numbers<[1], [0], [0], [1], [0, 0, 1, 1], [], []>} : vector<1056x3xbf16>, vector<3x128xbf16>, vector<1056x128xf32> -> vector<1056x128xf32>
    %33 = arith.addf %26, %32 : vector<1056x128xf32>
    %c0_34 = arith.constant 0 : index
    %c2_35 = arith.constant 2 : index
    %c1_36 = arith.constant 1 : index
    %c0_37 = arith.constant 0 : index
    %34 = vector.load %arg1[%c0_34, %c2_35, %c1_36, %c0_37] : memref<1x4x1122x3xf32, #tpu.memory_space<vmem>>, vector<1x1x1056x3xf32>
    %35 = vector.shape_cast %34 : vector<1x1x1056x3xf32> to vector<1056x3xf32>
    %36 = arith.truncf %35 : vector<1056x3xf32> to vector<1056x3xbf16>
    %c5 = arith.constant 5 : index
    %c0_38 = arith.constant 0 : index
    %c0_39 = arith.constant 0 : index
    %37 = vector.load %arg2[%c5, %c0_38, %c0_39] : memref<9x3x128xbf16, #tpu.memory_space<vmem>>, vector<1x3x128xbf16>
    %38 = vector.shape_cast %37 : vector<1x3x128xbf16> to vector<3x128xbf16>
    %cst_40 = arith.constant dense<0.000000e+00> : vector<1056x128xf32>
    %39 = tpu.matmul %36, %38, %cst_40 {dimension_numbers = #tpu.dot_dimension_numbers<[1], [0], [0], [1], [0, 0, 1, 1], [], []>} : vector<1056x3xbf16>, vector<3x128xbf16>, vector<1056x128xf32> -> vector<1056x128xf32>
    %40 = arith.addf %33, %39 : vector<1056x128xf32>
    %c0_41 = arith.constant 0 : index
    %c0_42 = arith.constant 0 : index
    %c33 = arith.constant 33 : index
    %c0_43 = arith.constant 0 : index
    %41 = vector.load %arg1[%c0_41, %c0_42, %c33, %c0_43] : memref<1x4x1122x3xf32, #tpu.memory_space<vmem>>, vector<1x1x1056x3xf32>
    %42 = vector.shape_cast %41 : vector<1x1x1056x3xf32> to vector<1056x3xf32>
    %43 = arith.truncf %42 : vector<1056x3xf32> to vector<1056x3xbf16>
    %c6 = arith.constant 6 : index
    %c0_44 = arith.constant 0 : index
    %c0_45 = arith.constant 0 : index
    %44 = vector.load %arg2[%c6, %c0_44, %c0_45] : memref<9x3x128xbf16, #tpu.memory_space<vmem>>, vector<1x3x128xbf16>
    %45 = vector.shape_cast %44 : vector<1x3x128xbf16> to vector<3x128xbf16>
    %cst_46 = arith.constant dense<0.000000e+00> : vector<1056x128xf32>
    %46 = tpu.matmul %43, %45, %cst_46 {dimension_numbers = #tpu.dot_dimension_numbers<[1], [0], [0], [1], [0, 0, 1, 1], [], []>} : vector<1056x3xbf16>, vector<3x128xbf16>, vector<1056x128xf32> -> vector<1056x128xf32>
    %47 = arith.addf %40, %46 : vector<1056x128xf32>
    %c0_47 = arith.constant 0 : index
    %c1_48 = arith.constant 1 : index
    %c33_49 = arith.constant 33 : index
    %c0_50 = arith.constant 0 : index
    %48 = vector.load %arg1[%c0_47, %c1_48, %c33_49, %c0_50] : memref<1x4x1122x3xf32, #tpu.memory_space<vmem>>, vector<1x1x1056x3xf32>
    %49 = vector.shape_cast %48 : vector<1x1x1056x3xf32> to vector<1056x3xf32>
    %50 = arith.truncf %49 : vector<1056x3xf32> to vector<1056x3xbf16>
    %c7 = arith.constant 7 : index
    %c0_51 = arith.constant 0 : index
    %c0_52 = arith.constant 0 : index
    %51 = vector.load %arg2[%c7, %c0_51, %c0_52] : memref<9x3x128xbf16, #tpu.memory_space<vmem>>, vector<1x3x128xbf16>
    %52 = vector.shape_cast %51 : vector<1x3x128xbf16> to vector<3x128xbf16>
    %cst_53 = arith.constant dense<0.000000e+00> : vector<1056x128xf32>
    %53 = tpu.matmul %50, %52, %cst_53 {dimension_numbers = #tpu.dot_dimension_numbers<[1], [0], [0], [1], [0, 0, 1, 1], [], []>} : vector<1056x3xbf16>, vector<3x128xbf16>, vector<1056x128xf32> -> vector<1056x128xf32>
    %54 = arith.addf %47, %53 : vector<1056x128xf32>
    %c0_54 = arith.constant 0 : index
    %c0_55 = arith.constant 0 : index
    %c34 = arith.constant 34 : index
    %c0_56 = arith.constant 0 : index
    %55 = vector.load %arg1[%c0_54, %c0_55, %c34, %c0_56] : memref<1x4x1122x3xf32, #tpu.memory_space<vmem>>, vector<1x1x1056x3xf32>
    %56 = vector.shape_cast %55 : vector<1x1x1056x3xf32> to vector<1056x3xf32>
    %57 = arith.truncf %56 : vector<1056x3xf32> to vector<1056x3xbf16>
    %c8 = arith.constant 8 : index
    %c0_57 = arith.constant 0 : index
    %c0_58 = arith.constant 0 : index
    %58 = vector.load %arg2[%c8, %c0_57, %c0_58] : memref<9x3x128xbf16, #tpu.memory_space<vmem>>, vector<1x3x128xbf16>
    %59 = vector.shape_cast %58 : vector<1x3x128xbf16> to vector<3x128xbf16>
    %cst_59 = arith.constant dense<0.000000e+00> : vector<1056x128xf32>
    %60 = tpu.matmul %57, %59, %cst_59 {dimension_numbers = #tpu.dot_dimension_numbers<[1], [0], [0], [1], [0, 0, 1, 1], [], []>} : vector<1056x3xbf16>, vector<3x128xbf16>, vector<1056x128xf32> -> vector<1056x128xf32>
    %61 = arith.addf %54, %60 : vector<1056x128xf32>
    %c0_60 = arith.constant 0 : index
    %c0_61 = arith.constant 0 : index
    %62 = vector.load %arg3[%c0_60, %c0_61] : memref<1x128xf32, #tpu.memory_space<vmem>>, vector<1x128xf32>
    %63 = vector.broadcast %62 : vector<1x128xf32> to vector<1056x128xf32>
    %64 = arith.addf %61, %63 : vector<1056x128xf32>
    %cst_62 = arith.constant 0.000000e+00 : f32
    %65 = vector.broadcast %cst_62 : f32 to vector<1056x128xf32>
    %66 = arith.subf %65, %64 : vector<1056x128xf32>
    %67 = math.exp %66 : vector<1056x128xf32>
    %cst_63 = arith.constant 1.000000e+00 : f32
    %68 = vector.broadcast %cst_63 : f32 to vector<1056x128xf32>
    %69 = arith.addf %68, %67 : vector<1056x128xf32>
    %70 = tpu.reciprocal %69 {approx = true} : vector<1056x128xf32> -> vector<1056x128xf32>
    %71 = arith.mulf %64, %70 : vector<1056x128xf32>
    %c0_64 = arith.constant 0 : index
    %c0_65 = arith.constant 0 : index
    %c0_66 = arith.constant 0 : index
    %72 = vector.load %arg4[%c0_64, %c0_65, %c0_66] : memref<1x1056x128xf32, #tpu.memory_space<vmem>>, vector<1x1056x128xf32>
    %73 = vector.shape_cast %72 : vector<1x1056x128xf32> to vector<1056x128xf32>
    %74 = vector.shape_cast %71 : vector<1056x128xf32> to vector<1x1056x128xf32>
    tpu.vector_store %arg4[%c0_64, %c0_65, %c0_66], %74 {strides = array<i32>} : memref<1x1056x128xf32, #tpu.memory_space<vmem>>, vector<1x1056x128xf32>,
    return
  }
  func.func @transform_0(%arg0: i32) -> (i32, i32, i32, i32) {
    %c0_i32 = arith.constant 0 : i32
    %c0_i32_0 = arith.constant 0 : i32
    %c0_i32_1 = arith.constant 0 : i32
    %c0_i32_2 = arith.constant 0 : i32
    return %arg0, %c0_i32, %c0_i32_0, %c0_i32_1 : i32, i32, i32, i32
  }
  func.func @transform_1(%arg0: i32) -> (i32, i32, i32) {
    %c0_i32 = arith.constant 0 : i32
    %c0_i32_0 = arith.constant 0 : i32
    %c0_i32_1 = arith.constant 0 : i32
    %c0_i32_2 = arith.constant 0 : i32
    return %c0_i32, %c0_i32_0, %c0_i32_1 : i32, i32, i32
  }
  func.func @transform_2(%arg0: i32) -> (i32, i32) {
    %c0_i32 = arith.constant 0 : i32
    %c0_i32_0 = arith.constant 0 : i32
    %c0_i32_1 = arith.constant 0 : i32
    return %c0_i32, %c0_i32_0 : i32, i32
  }
  func.func @transform_3(%arg0: i32) -> (i32, i32, i32) {
    %c0_i32 = arith.constant 0 : i32
    %c0_i32_0 = arith.constant 0 : i32
    %c0_i32_1 = arith.constant 0 : i32
    return %arg0, %c0_i32, %c0_i32_0 : i32, i32, i32
  }
}

</mosaic_0001>

<llo_original>
// kernel: tpu_custom_call.1
$region0: #{tpu_custom_call.1}
  #allocation0 [shape = 'u32[]', space=smem, size = 0x4, offset = 0x4, fixed_abs, tag = 'smem constant byte address 0x4 - core index']
  #allocation1 [shape = 'u32[144,128]{1,0:T(1,128)}', space=vmem, size = 0x12000, scoped, tag = 'internal scratch']
  %s0 = inlined_call_operand.vmem [shape: f32[2,4,1122,3], index: 0, kind: input, shape index: {}]
  %s1 = inlined_call_operand.vmem [shape: bf16[9,3,128], index: 1, kind: input, shape index: {}]
  %s2 = inlined_call_operand.vmem [shape: f32[1,128], index: 2, kind: input, shape index: {}]
  %s3 = inlined_call_operand.hbm [shape: f32[2,1056,128], index: 3, kind: output, shape index: {}]
  %s4 = sld [smem:[#allocation0]]
  $region45: #{tpu_custom_call.1} parent=0
    _
  %s6 = ssub.s32 1, %s4
  %s7 = scalar_select 0, %s6, %s4
  $region1: #{tpu_custom_call.1} parent=0
    #allocation2 [shape = 'u8[1081344]{0}', space=vmem, size = 0x108000, scoped, tag = 'output window, operand 0']
    #allocation3 [shape = 's32[2]{0}', space=sflag, size = 0x8, scoped, tag = 'scoped memory for tpu_custom_call.1']
    %8 = vsyncpa [#allocation3], 0
    %s9 = scalar_lea.sflag [#allocation3], 1
    %10 = vsyncpa %s9, 0
    loop: start=0, step=1, limit=4
    $region2: #{tpu_custom_call.1} parent=1 // loop_pre_header
      _
    $region3: #{tpu_custom_call.1} parent=1 // loop_header
      %s12 = sphi 0, %s16
      %p13 = scmp.ge.s32.totalorder %s12, 4
      %s22 = sphi 0, %s24
      %s25 = sphi 0, %s22
      %s26 = sphi 0, %s25
      %s42 = sphi 0, %s26
      %s46 = sphi 0, %s46
      %s48 = sphi 0, %s46
      %s49 = sphi 0, %s48
      %s63 = sphi 0, %s49
      %s67 = sphi 0, %s67
      %s69 = sphi 0, %s67
      %s70 = sphi 0, %s69
      %s84 = sphi 0, %s70
      %s90 = sphi 0, %s92
      %s93 = sphi 0, %s90
      %s94 = sphi 0, %s93
      %s110 = sphi 0, %s94
    $region4: #{tpu_custom_call.1} parent=1 // loop_header_branch
      %15 = sbr.rel (%p13) target = $region8
    $region5: #{tpu_custom_call.1} parent=1 // loop_body
      %s17 = ssub.s32 %s12, 1
      %s18 = ssub.s32 %s12, 2
      %s19 = sadd.s32 %s12, 1
      %s20 = ssub.s32 %s12, %s19
      %p21 = scmp.eq.s32.totalorder %s20, 0
      %s23 = sadd.s32 %s22, 1
      %s24 = scalar_select %p21, %s22, %s23
      %p27 = pneg %p21
      %p28 = scmp.eq.s32.totalorder %s12, 1
      %p29 = por %p27, %p28
      %p30 = scmp.ne.s32.totalorder %s22, %s25
      %p31 = scmp.eq.s32.totalorder %s12, 0
      %p32 = por %p30, %p31
      %p33 = scmp.ne.s32.totalorder %s22, %s25
      %p34 = scmp.eq.s32.totalorder %s17, 1
      %p35 = por %p33, %p34
      %p36 = scmp.ne.s32.totalorder %s25, %s26
      %p37 = scmp.eq.s32.totalorder %s17, 0
      %p38 = por %p36, %p37
      %p39 = scmp.ne.s32.totalorder %s25, %s26
      %p40 = scmp.eq.s32.totalorder %s18, 1
      %p41 = por %p39, %p40
      %p43 = scmp.ne.s32.totalorder %s26, %s42
      %p44 = scmp.eq.s32.totalorder %s18, 0
      %p45 = por %p43, %p44
      %s47 = sadd.s32 %s46, 1
      %p50 = scmp.eq.s32.totalorder %s12, 1
      %p51 = scmp.ne.s32.totalorder %s46, %s48
      %p52 = scmp.eq.s32.totalorder %s12, 0
      %p53 = por %p51, %p52
      %p54 = scmp.ne.s32.totalorder %s46, %s48
      %p55 = scmp.eq.s32.totalorder %s17, 1
      %p56 = por %p54, %p55
      %p57 = scmp.ne.s32.totalorder %s48, %s49
      %p58 = scmp.eq.s32.totalorder %s17, 0
      %p59 = por %p57, %p58
      %p60 = scmp.ne.s32.totalorder %s48, %s49
      %p61 = scmp.eq.s32.totalorder %s18, 1
      %p62 = por %p60, %p61
      %p64 = scmp.ne.s32.totalorder %s49, %s63
      %p65 = scmp.eq.s32.totalorder %s18, 0
      %p66 = por %p64, %p65
      %s68 = sadd.s32 %s67, 1
      %p71 = scmp.eq.s32.totalorder %s12, 1
      %p72 = scmp.ne.s32.totalorder %s67, %s69
      %p73 = scmp.eq.s32.totalorder %s12, 0
      %p74 = por %p72, %p73
      %p75 = scmp.ne.s32.totalorder %s67, %s69
      %p76 = scmp.eq.s32.totalorder %s17, 1
      %p77 = por %p75, %p76
      %p78 = scmp.ne.s32.totalorder %s69, %s70
      %p79 = scmp.eq.s32.totalorder %s17, 0
      %p80 = por %p78, %p79
      %p81 = scmp.ne.s32.totalorder %s69, %s70
      %p82 = scmp.eq.s32.totalorder %s18, 1
      %p83 = por %p81, %p82
      %p85 = scmp.ne.s32.totalorder %s70, %s84
      %p86 = scmp.eq.s32.totalorder %s18, 0
      %p87 = por %p85, %p86
      %s88 = ssub.s32 %s12, %s19
      %p89 = scmp.eq.s32.totalorder %s88, 0
      %s91 = sadd.s32 %s90, 1
      %s92 = scalar_select %p89, %s90, %s91
      %p95 = pneg %p89
      %p96 = scmp.eq.s32.totalorder %s12, 1
      %p97 = por %p95, %p96
      %p98 = scmp.ne.s32.totalorder %s90, %s93
      %p99 = scmp.eq.s32.totalorder %s12, 0
      %p100 = por %p98, %p99
      %p101 = scmp.ne.s32.totalorder %s90, %s93
      %p102 = scmp.eq.s32.totalorder %s17, 1
      %p103 = por %p101, %p102
      %p104 = scmp.ne.s32.totalorder %s93, %s94
      %p105 = scmp.eq.s32.totalorder %s17, 0
      %p106 = por %p104, %p105
      %p107 = scmp.ne.s32.totalorder %s93, %s94
      %p108 = scmp.eq.s32.totalorder %s18, 1
      %p109 = por %p107, %p108
      %p111 = scmp.ne.s32.totalorder %s94, %s110
      %p112 = scmp.eq.s32.totalorder %s18, 0
      %p113 = por %p111, %p112
      %p114 = scmp.le.s32.totalorder 1, %s12
      %p115 = scmp.lt.s32.totalorder %s12, 3
      %p116 = pnand %p114, %p115
      %p117 = pneg %p116
      // Predicated region
      $region9: #{tpu_custom_call.1} parent=5 // pred_check
        _
      $region10: #{tpu_custom_call.1} parent=5 // pred_check_branch
        %119 = sbr.rel (%p116) target = $region12
      $region11: #{tpu_custom_call.1} parent=5 // pred_region
        %s120 = ssub.s32 %s12, 1
        // Predicated region
        $region13: #{tpu_custom_call.1} parent=11 // pred_check
          %p121 = pneg %p59
        $region14: #{tpu_custom_call.1} parent=11 // pred_check_branch
          %123 = sbr.rel (%p121) target = $region16
        $region15: #{tpu_custom_call.1} parent=11 // pred_region
          _
        $region16: #{tpu_custom_call.1} parent=11 // pred_fallthru
          _
        // Predicated region
        $region17: #{tpu_custom_call.1} parent=11 // pred_check
          %p124 = pneg %p80
        $region18: #{tpu_custom_call.1} parent=11 // pred_check_branch
          %126 = sbr.rel (%p124) target = $region20
        $region19: #{tpu_custom_call.1} parent=11 // pred_region
          _
        $region20: #{tpu_custom_call.1} parent=11 // pred_fallthru
          _
      $region12: #{tpu_custom_call.1} parent=5 // pred_fallthru
        _
      %p127 = scmp.lt.s32.totalorder %s12, 2
      // Predicated region
      $region21: #{tpu_custom_call.1} parent=5 // pred_check
        %p128 = pneg %p127
      $region22: #{tpu_custom_call.1} parent=5 // pred_check_branch
        %130 = sbr.rel (%p128) target = $region24
      $region23: #{tpu_custom_call.1} parent=5 // pred_region
        // Predicated region
        $region25: #{tpu_custom_call.1} parent=23 // pred_check
          %p131 = pneg %p32
        $region26: #{tpu_custom_call.1} parent=23 // pred_check_branch
          %133 = sbr.rel (%p131) target = $region28
        $region27: #{tpu_custom_call.1} parent=23 // pred_region
          %p134 = scmp.lt.s32.totalorder %s12, 1
          %s135 = scalar_select %p134, %s12, 1
          %s136 = smul.addr %s135, 564
          %s137 = smul.addr %s136, 8
          %s138 = scalar_lea.vmem %s0, %s137
        $region28: #{tpu_custom_call.1} parent=23 // pred_fallthru
          _
      $region24: #{tpu_custom_call.1} parent=5 // pred_fallthru
        _
      %p139 = scmp.le.s32.totalorder 1, %s12
      %p140 = scmp.lt.s32.totalorder %s12, 3
      %p141 = pnand %p139, %p140
      %p142 = pneg %p141
      // Predicated region
      $region29: #{tpu_custom_call.1} parent=5 // pred_check
        _
      $region30: #{tpu_custom_call.1} parent=5 // pred_check_branch
        %144 = sbr.rel (%p141) target = $region32
      $region31: #{tpu_custom_call.1} parent=5 // pred_region
        %s145 = ssub.s32 %s12, 1
        %p146 = scmp.lt.s32.totalorder %s17, 1
        %s147 = scalar_select %p146, %s17, 1
        %s148 = smul.addr %s147, 564
        %s149 = smul.addr %s148, 8
        %s150 = scalar_lea.vmem %s0, %s149
        %p151 = pneg %p38
        %p152 = pneg %p35
        %p153 = pneg %p59
        %p154 = pneg %p56
        %p155 = pneg %p80
        %p156 = pneg %p77
        %p157 = pneg %p106
        %p158 = pneg %p103
        %s159 = sand.u32 %s93, 1
        %s160 = scalar_lea.sflag [#allocation3], %s159
        %s161 = sand.u32 %s93, 1
        %s162 = smul.addr %s161, 1056
        %s163 = scalar_lea.vmem [#allocation2], %s162
        %p164 = scmp.lt.s32.totalorder %s17, 1
        %s165 = scalar_select %p164, %s17, 1
        %s166 = smul.addr %s165, 564
        %s167 = smul.addr %s166, 8
        %s168 = scalar_lea.vmem %s0, %s167
        %v170 = vld [vmem:[%s168] sm:$0xff]
        %v171 = vld [vmem:[%s168 + $0x8] sm:$0xff]
        %v172 = vld [vmem:[%s168 + $0x10] sm:$0xff]
        %v173 = vld [vmem:[%s168 + $0x18] sm:$0xff]
        %v174 = vld [vmem:[%s168 + $0x20] sm:$0xff]
        %v175 = vld [vmem:[%s168 + $0x28] sm:$0xff]
        %v176 = vld [vmem:[%s168 + $0x30] sm:$0xff]
        %v177 = vld [vmem:[%s168 + $0x38] sm:$0xff]
        %v178 = vld [vmem:[%s168 + $0x40] sm:$0xff]
        %v179 = vld [vmem:[%s168 + $0x48] sm:$0xff]
        %v180 = vld [vmem:[%s168 + $0x50] sm:$0xff]
        %v181 = vld [vmem:[%s168 + $0x58] sm:$0xff]
        %v182 = vld [vmem:[%s168 + $0x60] sm:$0xff]
        %v183 = vld [vmem:[%s168 + $0x68] sm:$0xff]
        %v184 = vld [vmem:[%s168 + $0x70] sm:$0xff]
        %v185 = vld [vmem:[%s168 + $0x78] sm:$0xff]
        %v186 = vld [vmem:[%s168 + $0x80] sm:$0xff]
        %v187 = vld [vmem:[%s168 + $0x88] sm:$0xff]
        %v188 = vld [vmem:[%s168 + $0x90] sm:$0xff]
        %v189 = vld [vmem:[%s168 + $0x98] sm:$0xff]
        %v190 = vld [vmem:[%s168 + $0xa0] sm:$0xff]
        %v191 = vld [vmem:[%s168 + $0xa8] sm:$0xff]
        %v192 = vld [vmem:[%s168 + $0xb0] sm:$0xff]
        %v193 = vld [vmem:[%s168 + $0xb8] sm:$0xff]
        %v194 = vld [vmem:[%s168 + $0xc0] sm:$0xff]
        %v195 = vld [vmem:[%s168 + $0xc8] sm:$0xff]
        %v196 = vld [vmem:[%s168 + $0xd0] sm:$0xff]
        %v197 = vld [vmem:[%s168 + $0xd8] sm:$0xff]
        %v198 = vld [vmem:[%s168 + $0xe0] sm:$0xff]
        %v199 = vld [vmem:[%s168 + $0xe8] sm:$0xff]
        %v200 = vld [vmem:[%s168 + $0xf0] sm:$0xff]
        %v201 = vld [vmem:[%s168 + $0xf8] sm:$0xff]
        %v202 = vld [vmem:[%s168 + $0x100] sm:$0xff]
        %v203 = vld [vmem:[%s168 + $0x108] sm:$0xff]
        %v204 = vld [vmem:[%s168 + $0x110] sm:$0xff]
        %v205 = vld [vmem:[%s168 + $0x118] sm:$0xff]
        %v206 = vld [vmem:[%s168 + $0x120] sm:$0xff]
        %v207 = vld [vmem:[%s168 + $0x128] sm:$0xff]
        %v208 = vld [vmem:[%s168 + $0x130] sm:$0xff]
        %v209 = vld [vmem:[%s168 + $0x138] sm:$0xff]
        %v210 = vld [vmem:[%s168 + $0x140] sm:$0xff]
        %v211 = vld [vmem:[%s168 + $0x148] sm:$0xff]
        %v212 = vld [vmem:[%s168 + $0x150] sm:$0xff]
        %v213 = vld [vmem:[%s168 + $0x158] sm:$0xff]
        %v214 = vld [vmem:[%s168 + $0x160] sm:$0xff]
        %v215 = vld [vmem:[%s168 + $0x168] sm:$0xff]
        %v216 = vld [vmem:[%s168 + $0x170] sm:$0xff]
        %v217 = vld [vmem:[%s168 + $0x178] sm:$0xff]
        %v218 = vld [vmem:[%s168 + $0x180] sm:$0xff]
        %v219 = vld [vmem:[%s168 + $0x188] sm:$0xff]
        %v220 = vld [vmem:[%s168 + $0x190] sm:$0xff]
        %v221 = vld [vmem:[%s168 + $0x198] sm:$0xff]
        %v222 = vld [vmem:[%s168 + $0x1a0] sm:$0xff]
        %v223 = vld [vmem:[%s168 + $0x1a8] sm:$0xff]
        %v224 = vld [vmem:[%s168 + $0x1b0] sm:$0xff]
        %v225 = vld [vmem:[%s168 + $0x1b8] sm:$0xff]
        %v226 = vld [vmem:[%s168 + $0x1c0] sm:$0xff]
        %v227 = vld [vmem:[%s168 + $0x1c8] sm:$0xff]
        %v228 = vld [vmem:[%s168 + $0x1d0] sm:$0xff]
        %v229 = vld [vmem:[%s168 + $0x1d8] sm:$0xff]
        %v230 = vld [vmem:[%s168 + $0x1e0] sm:$0xff]
        %v231 = vld [vmem:[%s168 + $0x1e8] sm:$0xff]
        %v232 = vld [vmem:[%s168 + $0x1f0] sm:$0xff]
        %v233 = vld [vmem:[%s168 + $0x1f8] sm:$0xff]
        %v234 = vld [vmem:[%s168 + $0x200] sm:$0xff]
        %v235 = vld [vmem:[%s168 + $0x208] sm:$0xff]
        %v236 = vld [vmem:[%s168 + $0x210] sm:$0xff]
        %v237 = vld [vmem:[%s168 + $0x218] sm:$0xff]
        %v238 = vld [vmem:[%s168 + $0x220] sm:$0xff]
        %v239 = vld [vmem:[%s168 + $0x228] sm:$0xff]
        %v240 = vld [vmem:[%s168 + $0x230] sm:$0xff]
        %v241 = vld [vmem:[%s168 + $0x238] sm:$0xff]
        %v242 = vld [vmem:[%s168 + $0x240] sm:$0xff]
        %v243 = vld [vmem:[%s168 + $0x248] sm:$0xff]
        %v244 = vld [vmem:[%s168 + $0x250] sm:$0xff]
        %v245 = vld [vmem:[%s168 + $0x258] sm:$0xff]
        %v246 = vld [vmem:[%s168 + $0x260] sm:$0xff]
        %v247 = vld [vmem:[%s168 + $0x268] sm:$0xff]
        %v248 = vld [vmem:[%s168 + $0x270] sm:$0xff]
        %v249 = vld [vmem:[%s168 + $0x278] sm:$0xff]
        %v250 = vld [vmem:[%s168 + $0x280] sm:$0xff]
        %v251 = vld [vmem:[%s168 + $0x288] sm:$0xff]
        %v252 = vld [vmem:[%s168 + $0x290] sm:$0xff]
        %v253 = vld [vmem:[%s168 + $0x298] sm:$0xff]
        %v254 = vld [vmem:[%s168 + $0x2a0] sm:$0xff]
        %v255 = vld [vmem:[%s168 + $0x2a8] sm:$0xff]
        %v256 = vld [vmem:[%s168 + $0x2b0] sm:$0xff]
        %v257 = vld [vmem:[%s168 + $0x2b8] sm:$0xff]
        %v258 = vld [vmem:[%s168 + $0x2c0] sm:$0xff]
        %v259 = vld [vmem:[%s168 + $0x2c8] sm:$0xff]
        %v260 = vld [vmem:[%s168 + $0x2d0] sm:$0xff]
        %v261 = vld [vmem:[%s168 + $0x2d8] sm:$0xff]
        %v262 = vld [vmem:[%s168 + $0x2e0] sm:$0xff]
        %v263 = vld [vmem:[%s168 + $0x2e8] sm:$0xff]
        %v264 = vld [vmem:[%s168 + $0x2f0] sm:$0xff]
        %v265 = vld [vmem:[%s168 + $0x2f8] sm:$0xff]
        %v266 = vld [vmem:[%s168 + $0x300] sm:$0xff]
        %v267 = vld [vmem:[%s168 + $0x308] sm:$0xff]
        %v268 = vld [vmem:[%s168 + $0x310] sm:$0xff]
        %v269 = vld [vmem:[%s168 + $0x318] sm:$0xff]
        %v270 = vld [vmem:[%s168 + $0x320] sm:$0xff]
        %v271 = vld [vmem:[%s168 + $0x328] sm:$0xff]
        %v272 = vld [vmem:[%s168 + $0x330] sm:$0xff]
        %v273 = vld [vmem:[%s168 + $0x338] sm:$0xff]
        %v274 = vld [vmem:[%s168 + $0x340] sm:$0xff]
        %v275 = vld [vmem:[%s168 + $0x348] sm:$0xff]
        %v276 = vld [vmem:[%s168 + $0x350] sm:$0xff]
        %v277 = vld [vmem:[%s168 + $0x358] sm:$0xff]
        %v278 = vld [vmem:[%s168 + $0x360] sm:$0xff]
        %v279 = vld [vmem:[%s168 + $0x368] sm:$0xff]
        %v280 = vld [vmem:[%s168 + $0x370] sm:$0xff]
        %v281 = vld [vmem:[%s168 + $0x378] sm:$0xff]
        %v282 = vld [vmem:[%s168 + $0x380] sm:$0xff]
        %v283 = vld [vmem:[%s168 + $0x388] sm:$0xff]
        %v284 = vld [vmem:[%s168 + $0x390] sm:$0xff]
        %v285 = vld [vmem:[%s168 + $0x398] sm:$0xff]
        %v286 = vld [vmem:[%s168 + $0x3a0] sm:$0xff]
        %v287 = vld [vmem:[%s168 + $0x3a8] sm:$0xff]
        %v288 = vld [vmem:[%s168 + $0x3b0] sm:$0xff]
        %v289 = vld [vmem:[%s168 + $0x3b8] sm:$0xff]
        %v290 = vld [vmem:[%s168 + $0x3c0] sm:$0xff]
        %v291 = vld [vmem:[%s168 + $0x3c8] sm:$0xff]
        %v292 = vld [vmem:[%s168 + $0x3d0] sm:$0xff]
        %v293 = vld [vmem:[%s168 + $0x3d8] sm:$0xff]
        %v294 = vld [vmem:[%s168 + $0x3e0] sm:$0xff]
        %v295 = vld [vmem:[%s168 + $0x3e8] sm:$0xff]
        %v296 = vld [vmem:[%s168 + $0x3f0] sm:$0xff]
        %v297 = vld [vmem:[%s168 + $0x3f8] sm:$0xff]
        %v298 = vld [vmem:[%s168 + $0x400] sm:$0xff]
        %v299 = vld [vmem:[%s168 + $0x408] sm:$0xff]
        %v300 = vld [vmem:[%s168 + $0x410] sm:$0xff]
        %v301 = vld [vmem:[%s168 + $0x418] sm:$0xff]
        %v302 = vpack.c.bf16 %v171, %v170
        %v303 = vpack.c.bf16 %v173, %v172
        %v304 = vpack.c.bf16 %v175, %v174
        %v305 = vpack.c.bf16 %v177, %v176
        %v306 = vpack.c.bf16 %v179, %v178
        %v307 = vpack.c.bf16 %v181, %v180
        %v308 = vpack.c.bf16 %v183, %v182
        %v309 = vpack.c.bf16 %v185, %v184
        %v310 = vpack.c.bf16 %v187, %v186
        %v311 = vpack.c.bf16 %v189, %v188
        %v312 = vpack.c.bf16 %v191, %v190
        %v313 = vpack.c.bf16 %v193, %v192
        %v314 = vpack.c.bf16 %v195, %v194
        %v315 = vpack.c.bf16 %v197, %v196
        %v316 = vpack.c.bf16 %v199, %v198
        %v317 = vpack.c.bf16 %v201, %v200
        %v318 = vpack.c.bf16 %v203, %v202
        %v319 = vpack.c.bf16 %v205, %v204
        %v320 = vpack.c.bf16 %v207, %v206
        %v321 = vpack.c.bf16 %v209, %v208
        %v322 = vpack.c.bf16 %v211, %v210
        %v323 = vpack.c.bf16 %v213, %v212
        %v324 = vpack.c.bf16 %v215, %v214
        %v325 = vpack.c.bf16 %v217, %v216
        %v326 = vpack.c.bf16 %v219, %v218
        %v327 = vpack.c.bf16 %v221, %v220
        %v328 = vpack.c.bf16 %v223, %v222
        %v329 = vpack.c.bf16 %v225, %v224
        %v330 = vpack.c.bf16 %v227, %v226
        %v331 = vpack.c.bf16 %v229, %v228
        %v332 = vpack.c.bf16 %v231, %v230
        %v333 = vpack.c.bf16 %v233, %v232
        %v334 = vpack.c.bf16 %v235, %v234
        %v335 = vpack.c.bf16 %v237, %v236
        %v336 = vpack.c.bf16 %v239, %v238
        %v337 = vpack.c.bf16 %v241, %v240
        %v338 = vpack.c.bf16 %v243, %v242
        %v339 = vpack.c.bf16 %v245, %v244
        %v340 = vpack.c.bf16 %v247, %v246
        %v341 = vpack.c.bf16 %v249, %v248
        %v342 = vpack.c.bf16 %v251, %v250
        %v343 = vpack.c.bf16 %v253, %v252
        %v344 = vpack.c.bf16 %v255, %v254
        %v345 = vpack.c.bf16 %v257, %v256
        %v346 = vpack.c.bf16 %v259, %v258
        %v347 = vpack.c.bf16 %v261, %v260
        %v348 = vpack.c.bf16 %v263, %v262
        %v349 = vpack.c.bf16 %v265, %v264
        %v350 = vpack.c.bf16 %v267, %v266
        %v351 = vpack.c.bf16 %v269, %v268
        %v352 = vpack.c.bf16 %v271, %v270
        %v353 = vpack.c.bf16 %v273, %v272
        %v354 = vpack.c.bf16 %v275, %v274
        %v355 = vpack.c.bf16 %v277, %v276
        %v356 = vpack.c.bf16 %v279, %v278
        %v357 = vpack.c.bf16 %v281, %v280
        %v358 = vpack.c.bf16 %v283, %v282
        %v359 = vpack.c.bf16 %v285, %v284
        %v360 = vpack.c.bf16 %v287, %v286
        %v361 = vpack.c.bf16 %v289, %v288
        %v362 = vpack.c.bf16 %v291, %v290
        %v363 = vpack.c.bf16 %v293, %v292
        %v364 = vpack.c.bf16 %v295, %v294
        %v365 = vpack.c.bf16 %v297, %v296
        %v366 = vpack.c.bf16 %v299, %v298
        %v367 = vpack.c.bf16 %v301, %v300
        %v368 = vld [vmem:[%s1] sm:$0x3]
        %s369 = scalar_lea.vmem %s168, 1128
        %v370 = vld [vmem:[%s369] sm:$0xff]
        %v371 = vld [vmem:[%s369 + $0x8] sm:$0xff]
        %v372 = vld [vmem:[%s369 + $0x10] sm:$0xff]
        %v373 = vld [vmem:[%s369 + $0x18] sm:$0xff]
        %v374 = vld [vmem:[%s369 + $0x20] sm:$0xff]
        %v375 = vld [vmem:[%s369 + $0x28] sm:$0xff]
        %v376 = vld [vmem:[%s369 + $0x30] sm:$0xff]
        %v377 = vld [vmem:[%s369 + $0x38] sm:$0xff]
        %v378 = vld [vmem:[%s369 + $0x40] sm:$0xff]
        %v379 = vld [vmem:[%s369 + $0x48] sm:$0xff]
        %v380 = vld [vmem:[%s369 + $0x50] sm:$0xff]
        %v381 = vld [vmem:[%s369 + $0x58] sm:$0xff]
        %v382 = vld [vmem:[%s369 + $0x60] sm:$0xff]
        %v383 = vld [vmem:[%s369 + $0x68] sm:$0xff]
        %v384 = vld [vmem:[%s369 + $0x70] sm:$0xff]
        %v385 = vld [vmem:[%s369 + $0x78] sm:$0xff]
        %v386 = vld [vmem:[%s369 + $0x80] sm:$0xff]
        %v387 = vld [vmem:[%s369 + $0x88] sm:$0xff]
        %v388 = vld [vmem:[%s369 + $0x90] sm:$0xff]
        %v389 = vld [vmem:[%s369 + $0x98] sm:$0xff]
        %v390 = vld [vmem:[%s369 + $0xa0] sm:$0xff]
        %v391 = vld [vmem:[%s369 + $0xa8] sm:$0xff]
        %v392 = vld [vmem:[%s369 + $0xb0] sm:$0xff]
        %v393 = vld [vmem:[%s369 + $0xb8] sm:$0xff]
        %v394 = vld [vmem:[%s369 + $0xc0] sm:$0xff]
        %v395 = vld [vmem:[%s369 + $0xc8] sm:$0xff]
        %v396 = vld [vmem:[%s369 + $0xd0] sm:$0xff]
        %v397 = vld [vmem:[%s369 + $0xd8] sm:$0xff]
        %v398 = vld [vmem:[%s369 + $0xe0] sm:$0xff]
        %v399 = vld [vmem:[%s369 + $0xe8] sm:$0xff]
        %v400 = vld [vmem:[%s369 + $0xf0] sm:$0xff]
        %v401 = vld [vmem:[%s369 + $0xf8] sm:$0xff]
        %v402 = vld [vmem:[%s369 + $0x100] sm:$0xff]
        %v403 = vld [vmem:[%s369 + $0x108] sm:$0xff]
        %v404 = vld [vmem:[%s369 + $0x110] sm:$0xff]
        %v405 = vld [vmem:[%s369 + $0x118] sm:$0xff]
        %v406 = vld [vmem:[%s369 + $0x120] sm:$0xff]
        %v407 = vld [vmem:[%s369 + $0x128] sm:$0xff]
        %v408 = vld [vmem:[%s369 + $0x130] sm:$0xff]
        %v409 = vld [vmem:[%s369 + $0x138] sm:$0xff]
        %v410 = vld [vmem:[%s369 + $0x140] sm:$0xff]
        %v411 = vld [vmem:[%s369 + $0x148] sm:$0xff]
        %v412 = vld [vmem:[%s369 + $0x150] sm:$0xff]
        %v413 = vld [vmem:[%s369 + $0x158] sm:$0xff]
        %v414 = vld [vmem:[%s369 + $0x160] sm:$0xff]
        %v415 = vld [vmem:[%s369 + $0x168] sm:$0xff]
        %v416 = vld [vmem:[%s369 + $0x170] sm:$0xff]
        %v417 = vld [vmem:[%s369 + $0x178] sm:$0xff]
        %v418 = vld [vmem:[%s369 + $0x180] sm:$0xff]
        %v419 = vld [vmem:[%s369 + $0x188] sm:$0xff]
        %v420 = vld [vmem:[%s369 + $0x190] sm:$0xff]
        %v421 = vld [vmem:[%s369 + $0x198] sm:$0xff]
        %v422 = vld [vmem:[%s369 + $0x1a0] sm:$0xff]
        %v423 = vld [vmem:[%s369 + $0x1a8] sm:$0xff]
        %v424 = vld [vmem:[%s369 + $0x1b0] sm:$0xff]
        %v425 = vld [vmem:[%s369 + $0x1b8] sm:$0xff]
        %v426 = vld [vmem:[%s369 + $0x1c0] sm:$0xff]
        %v427 = vld [vmem:[%s369 + $0x1c8] sm:$0xff]
        %v428 = vld [vmem:[%s369 + $0x1d0] sm:$0xff]
        %v429 = vld [vmem:[%s369 + $0x1d8] sm:$0xff]
        %v430 = vld [vmem:[%s369 + $0x1e0] sm:$0xff]
        %v431 = vld [vmem:[%s369 + $0x1e8] sm:$0xff]
        %v432 = vld [vmem:[%s369 + $0x1f0] sm:$0xff]
        %v433 = vld [vmem:[%s369 + $0x1f8] sm:$0xff]
        %v434 = vld [vmem:[%s369 + $0x200] sm:$0xff]
        %v435 = vld [vmem:[%s369 + $0x208] sm:$0xff]
        %v436 = vld [vmem:[%s369 + $0x210] sm:$0xff]
        %v437 = vld [vmem:[%s369 + $0x218] sm:$0xff]
        %v438 = vld [vmem:[%s369 + $0x220] sm:$0xff]
        %v439 = vld [vmem:[%s369 + $0x228] sm:$0xff]
        %v440 = vld [vmem:[%s369 + $0x230] sm:$0xff]
        %v441 = vld [vmem:[%s369 + $0x238] sm:$0xff]
        %v442 = vld [vmem:[%s369 + $0x240] sm:$0xff]
        %v443 = vld [vmem:[%s369 + $0x248] sm:$0xff]
        %v444 = vld [vmem:[%s369 + $0x250] sm:$0xff]
        %v445 = vld [vmem:[%s369 + $0x258] sm:$0xff]
        %v446 = vld [vmem:[%s369 + $0x260] sm:$0xff]
        %v447 = vld [vmem:[%s369 + $0x268] sm:$0xff]
        %v448 = vld [vmem:[%s369 + $0x270] sm:$0xff]
        %v449 = vld [vmem:[%s369 + $0x278] sm:$0xff]
        %v450 = vld [vmem:[%s369 + $0x280] sm:$0xff]
        %v451 = vld [vmem:[%s369 + $0x288] sm:$0xff]
        %v452 = vld [vmem:[%s369 + $0x290] sm:$0xff]
        %v453 = vld [vmem:[%s369 + $0x298] sm:$0xff]
        %v454 = vld [vmem:[%s369 + $0x2a0] sm:$0xff]
        %v455 = vld [vmem:[%s369 + $0x2a8] sm:$0xff]
        %v456 = vld [vmem:[%s369 + $0x2b0] sm:$0xff]
        %v457 = vld [vmem:[%s369 + $0x2b8] sm:$0xff]
        %v458 = vld [vmem:[%s369 + $0x2c0] sm:$0xff]
        %v459 = vld [vmem:[%s369 + $0x2c8] sm:$0xff]
        %v460 = vld [vmem:[%s369 + $0x2d0] sm:$0xff]
        %v461 = vld [vmem:[%s369 + $0x2d8] sm:$0xff]
        %v462 = vld [vmem:[%s369 + $0x2e0] sm:$0xff]
        %v463 = vld [vmem:[%s369 + $0x2e8] sm:$0xff]
        %v464 = vld [vmem:[%s369 + $0x2f0] sm:$0xff]
        %v465 = vld [vmem:[%s369 + $0x2f8] sm:$0xff]
        %v466 = vld [vmem:[%s369 + $0x300] sm:$0xff]
        %v467 = vld [vmem:[%s369 + $0x308] sm:$0xff]
        %v468 = vld [vmem:[%s369 + $0x310] sm:$0xff]
        %v469 = vld [vmem:[%s369 + $0x318] sm:$0xff]
        %v470 = vld [vmem:[%s369 + $0x320] sm:$0xff]
        %v471 = vld [vmem:[%s369 + $0x328] sm:$0xff]
        %v472 = vld [vmem:[%s369 + $0x330] sm:$0xff]
        %v473 = vld [vmem:[%s369 + $0x338] sm:$0xff]
        %v474 = vld [vmem:[%s369 + $0x340] sm:$0xff]
        %v475 = vld [vmem:[%s369 + $0x348] sm:$0xff]
        %v476 = vld [vmem:[%s369 + $0x350] sm:$0xff]
        %v477 = vld [vmem:[%s369 + $0x358] sm:$0xff]
        %v478 = vld [vmem:[%s369 + $0x360] sm:$0xff]
        %v479 = vld [vmem:[%s369 + $0x368] sm:$0xff]
        %v480 = vld [vmem:[%s369 + $0x370] sm:$0xff]
        %v481 = vld [vmem:[%s369 + $0x378] sm:$0xff]
        %v482 = vld [vmem:[%s369 + $0x380] sm:$0xff]
        %v483 = vld [vmem:[%s369 + $0x388] sm:$0xff]
        %v484 = vld [vmem:[%s369 + $0x390] sm:$0xff]
        %v485 = vld [vmem:[%s369 + $0x398] sm:$0xff]
        %v486 = vld [vmem:[%s369 + $0x3a0] sm:$0xff]
        %v487 = vld [vmem:[%s369 + $0x3a8] sm:$0xff]
        %v488 = vld [vmem:[%s369 + $0x3b0] sm:$0xff]
        %v489 = vld [vmem:[%s369 + $0x3b8] sm:$0xff]
        %v490 = vld [vmem:[%s369 + $0x3c0] sm:$0xff]
        %v491 = vld [vmem:[%s369 + $0x3c8] sm:$0xff]
        %v492 = vld [vmem:[%s369 + $0x3d0] sm:$0xff]
        %v493 = vld [vmem:[%s369 + $0x3d8] sm:$0xff]
        %v494 = vld [vmem:[%s369 + $0x3e0] sm:$0xff]
        %v495 = vld [vmem:[%s369 + $0x3e8] sm:$0xff]
        %v496 = vld [vmem:[%s369 + $0x3f0] sm:$0xff]
        %v497 = vld [vmem:[%s369 + $0x3f8] sm:$0xff]
        %v498 = vld [vmem:[%s369 + $0x400] sm:$0xff]
        %v499 = vld [vmem:[%s369 + $0x408] sm:$0xff]
        %v500 = vld [vmem:[%s369 + $0x410] sm:$0xff]
        %v501 = vld [vmem:[%s369 + $0x418] sm:$0xff]
        %v502 = vpack.c.bf16 %v371, %v370
        %v503 = vpack.c.bf16 %v373, %v372
        %v504 = vpack.c.bf16 %v375, %v374
        %v505 = vpack.c.bf16 %v377, %v376
        %v506 = vpack.c.bf16 %v379, %v378
        %v507 = vpack.c.bf16 %v381, %v380
        %v508 = vpack.c.bf16 %v383, %v382
        %v509 = vpack.c.bf16 %v385, %v384
        %v510 = vpack.c.bf16 %v387, %v386
        %v511 = vpack.c.bf16 %v389, %v388
        %v512 = vpack.c.bf16 %v391, %v390
        %v513 = vpack.c.bf16 %v393, %v392
        %v514 = vpack.c.bf16 %v395, %v394
        %v515 = vpack.c.bf16 %v397, %v396
        %v516 = vpack.c.bf16 %v399, %v398
        %v517 = vpack.c.bf16 %v401, %v400
        %v518 = vpack.c.bf16 %v403, %v402
        %v519 = vpack.c.bf16 %v405, %v404
        %v520 = vpack.c.bf16 %v407, %v406
        %v521 = vpack.c.bf16 %v409, %v408
        %v522 = vpack.c.bf16 %v411, %v410
        %v523 = vpack.c.bf16 %v413, %v412
        %v524 = vpack.c.bf16 %v415, %v414
        %v525 = vpack.c.bf16 %v417, %v416
        %v526 = vpack.c.bf16 %v419, %v418
        %v527 = vpack.c.bf16 %v421, %v420
        %v528 = vpack.c.bf16 %v423, %v422
        %v529 = vpack.c.bf16 %v425, %v424
        %v530 = vpack.c.bf16 %v427, %v426
        %v531 = vpack.c.bf16 %v429, %v428
        %v532 = vpack.c.bf16 %v431, %v430
        %v533 = vpack.c.bf16 %v433, %v432
        %v534 = vpack.c.bf16 %v435, %v434
        %v535 = vpack.c.bf16 %v437, %v436
        %v536 = vpack.c.bf16 %v439, %v438
        %v537 = vpack.c.bf16 %v441, %v440
        %v538 = vpack.c.bf16 %v443, %v442
        %v539 = vpack.c.bf16 %v445, %v444
        %v540 = vpack.c.bf16 %v447, %v446
        %v541 = vpack.c.bf16 %v449, %v448
        %v542 = vpack.c.bf16 %v451, %v450
        %v543 = vpack.c.bf16 %v453, %v452
        %v544 = vpack.c.bf16 %v455, %v454
        %v545 = vpack.c.bf16 %v457, %v456
        %v546 = vpack.c.bf16 %v459, %v458
        %v547 = vpack.c.bf16 %v461, %v460
        %v548 = vpack.c.bf16 %v463, %v462
        %v549 = vpack.c.bf16 %v465, %v464
        %v550 = vpack.c.bf16 %v467, %v466
        %v551 = vpack.c.bf16 %v469, %v468
        %v552 = vpack.c.bf16 %v471, %v470
        %v553 = vpack.c.bf16 %v473, %v472
        %v554 = vpack.c.bf16 %v475, %v474
        %v555 = vpack.c.bf16 %v477, %v476
        %v556 = vpack.c.bf16 %v479, %v478
        %v557 = vpack.c.bf16 %v481, %v480
        %v558 = vpack.c.bf16 %v483, %v482
        %v559 = vpack.c.bf16 %v485, %v484
        %v560 = vpack.c.bf16 %v487, %v486
        %v561 = vpack.c.bf16 %v489, %v488
        %v562 = vpack.c.bf16 %v491, %v490
        %v563 = vpack.c.bf16 %v493, %v492
        %v564 = vpack.c.bf16 %v495, %v494
        %v565 = vpack.c.bf16 %v497, %v496
        %v566 = vpack.c.bf16 %v499, %v498
        %v567 = vpack.c.bf16 %v501, %v500
        %s568 = scalar_lea.vmem %s1, 2
        %v569 = vld [vmem:[%s568] sm:$0x3]
        %vm570 = vcmask 23552
        %v572 = vsel %vm570, %v502, 0
        %v575 = vsel %vm570, %v503, 0
        %v578 = vsel %vm570, %v504, 0
        %v581 = vsel %vm570, %v505, 0
        %v584 = vsel %vm570, %v506, 0
        %v587 = vsel %vm570, %v507, 0
        %v590 = vsel %vm570, %v508, 0
        %v593 = vsel %vm570, %v509, 0
        %v596 = vsel %vm570, %v510, 0
        %v599 = vsel %vm570, %v511, 0
        %v602 = vsel %vm570, %v512, 0
        %v605 = vsel %vm570, %v513, 0
        %v608 = vsel %vm570, %v514, 0
        %v611 = vsel %vm570, %v515, 0
        %v614 = vsel %vm570, %v516, 0
        %v617 = vsel %vm570, %v517, 0
        %v620 = vsel %vm570, %v518, 0
        %v623 = vsel %vm570, %v519, 0
        %v626 = vsel %vm570, %v520, 0
        %v629 = vsel %vm570, %v521, 0
        %v632 = vsel %vm570, %v522, 0
        %v635 = vsel %vm570, %v523, 0
        %v638 = vsel %vm570, %v524, 0
        %v641 = vsel %vm570, %v525, 0
        %v644 = vsel %vm570, %v526, 0
        %v647 = vsel %vm570, %v527, 0
        %v650 = vsel %vm570, %v528, 0
        %v653 = vsel %vm570, %v529, 0
        %v656 = vsel %vm570, %v530, 0
        %v659 = vsel %vm570, %v531, 0
        %v662 = vsel %vm570, %v532, 0
        %v665 = vsel %vm570, %v533, 0
        %v668 = vsel %vm570, %v534, 0
        %v671 = vsel %vm570, %v535, 0
        %v674 = vsel %vm570, %v536, 0
        %v677 = vsel %vm570, %v537, 0
        %v680 = vsel %vm570, %v538, 0
        %v683 = vsel %vm570, %v539, 0
        %v686 = vsel %vm570, %v540, 0
        %v689 = vsel %vm570, %v541, 0
        %v692 = vsel %vm570, %v542, 0
        %v695 = vsel %vm570, %v543, 0
        %v698 = vsel %vm570, %v544, 0
        %v701 = vsel %vm570, %v545, 0
        %v704 = vsel %vm570, %v546, 0
        %v707 = vsel %vm570, %v547, 0
        %v710 = vsel %vm570, %v548, 0
        %v713 = vsel %vm570, %v549, 0
        %v716 = vsel %vm570, %v550, 0
        %v719 = vsel %vm570, %v551, 0
        %v722 = vsel %vm570, %v552, 0
        %v725 = vsel %vm570, %v553, 0
        %v728 = vsel %vm570, %v554, 0
        %v731 = vsel %vm570, %v555, 0
        %v734 = vsel %vm570, %v556, 0
        %v737 = vsel %vm570, %v557, 0
        %v740 = vsel %vm570, %v558, 0
        %v743 = vsel %vm570, %v559, 0
        %v746 = vsel %vm570, %v560, 0
        %v749 = vsel %vm570, %v561, 0
        %v752 = vsel %vm570, %v562, 0
        %v755 = vsel %vm570, %v563, 0
        %v758 = vsel %vm570, %v564, 0
        %v761 = vsel %vm570, %v565, 0
        %v764 = vsel %vm570, %v566, 0
        %v767 = vsel %vm570, %v567, 0
        %vm769 = vcmask 1040384
        %vm770 = vcmask 1041408
        %v771 = vsel %vm769, 4294967295, 65535
        %v772 = vsel %vm770, %v771, 0
        %v774 = vand.u32 %v569, %v772
        %776 = vmatprep.subr.bf16.mxu0 0
        %777 = vmatpush1.bf16.msra.mxu0 %v774
        %778 = vmatprep.subr.bf16.mxu0 0
        %779 = vmatpush1.bf16.msra.mxu0 0
        %780 = vmatprep.subr.bf16.mxu0 0
        %781 = vmatpush1.bf16.msra.mxu0 0
        %782 = vmatprep.subr.bf16.mxu0 0
        %783 = vmatpush1.bf16.msra.mxu0 0
        %784 = vmatprep.subr.bf16.mxu0 0
        %785 = vmatpush1.bf16.msra.mxu0 0
        %786 = vmatprep.subr.bf16.mxu0 0
        %787 = vmatpush1.bf16.msra.mxu0 0
        %788 = vmatprep.subr.bf16.mxu0 0
        %789 = vmatpush1.bf16.msra.mxu0 0
        %790 = vmatprep.subr.bf16.mxu0 0
        %791 = vmatpush1.bf16.msra.mxu0 0
        %792 = vmatprep.subr.bf16.mxu0 0
        %793 = vmatpush1.bf16.msra.mxu0 0
        %794 = vmatprep.subr.bf16.mxu0 0
        %795 = vmatpush1.bf16.msra.mxu0 0
        %796 = vmatprep.subr.bf16.mxu0 0
        %797 = vmatpush1.bf16.msra.mxu0 0
        %798 = vmatprep.subr.bf16.mxu0 0
        %799 = vmatpush1.bf16.msra.mxu0 0
        %800 = vmatprep.subr.bf16.mxu0 0
        %801 = vmatpush1.bf16.msra.mxu0 0
        %802 = vmatprep.subr.bf16.mxu0 0
        %803 = vmatpush1.bf16.msra.mxu0 0
        %804 = vmatprep.subr.bf16.mxu0 0
        %805 = vmatpush1.bf16.msra.mxu0 0
        %806 = vmatprep.subr.bf16.mxu0 0
        %807 = vmatpush1.bf16.msra.mxu0 0
        %808 = vmatprep.mubr.bf16.mxu0 0
        %809 = vmatmul.mubr.bf16.gmra.mrb[0].mxu0 %v572
        %v810 = vpop.f32.mrb[0].mxu0
        %v811 = vadd.f32 0.0, %v810
        %v812 = vpop.f32.mrb[0].mxu0
        %v813 = vpop.f32.mrb[0].mxu0
        %v814 = vadd.f32 0.0, %v813
        %v815 = vpop.f32.mrb[0].mxu0
        %816 = vmatprep.mubr.bf16.mxu0 0
        %817 = vmatmul.mubr.bf16.gmra.mrb[0].mxu0 %v575
        %v818 = vpop.f32.mrb[0].mxu0
        %v819 = vadd.f32 0.0, %v818
        %v820 = vpop.f32.mrb[0].mxu0
        %v821 = vpop.f32.mrb[0].mxu0
        %v822 = vadd.f32 0.0, %v821
        %v823 = vpop.f32.mrb[0].mxu0
        %824 = vmatprep.mubr.bf16.mxu0 0
        %825 = vmatmul.mubr.bf16.gmra.mrb[0].mxu0 %v578
        %v826 = vpop.f32.mrb[0].mxu0
        %v827 = vadd.f32 0.0, %v826
        %v828 = vpop.f32.mrb[0].mxu0
        %v829 = vpop.f32.mrb[0].mxu0
        %v830 = vadd.f32 0.0, %v829
        %v831 = vpop.f32.mrb[0].mxu0
        %832 = vmatprep.mubr.bf16.mxu0 0
        %833 = vmatmul.mubr.bf16.gmra.mrb[0].mxu0 %v581
        %v834 = vpop.f32.mrb[0].mxu0
        %v835 = vadd.f32 0.0, %v834
        %v836 = vpop.f32.mrb[0].mxu0
        %v837 = vpop.f32.mrb[0].mxu0
        %v838 = vadd.f32 0.0, %v837
        %v839 = vpop.f32.mrb[0].mxu0
        %840 = vmatprep.mubr.bf16.mxu0 0
        %841 = vmatmul.mubr.bf16.gmra.mrb[0].mxu0 %v584
        %v842 = vpop.f32.mrb[0].mxu0
        %v843 = vadd.f32 0.0, %v842
        %v844 = vpop.f32.mrb[0].mxu0
        %v845 = vpop.f32.mrb[0].mxu0
        %v846 = vadd.f32 0.0, %v845
        %v847 = vpop.f32.mrb[0].mxu0
        %848 = vmatprep.mubr.bf16.mxu0 0
        %849 = vmatmul.mubr.bf16.gmra.mrb[0].mxu0 %v587
        %v850 = vpop.f32.mrb[0].mxu0
        %v851 = vadd.f32 0.0, %v850
        %v852 = vpop.f32.mrb[0].mxu0
        %v853 = vpop.f32.mrb[0].mxu0
        %v854 = vadd.f32 0.0, %v853
        %v855 = vpop.f32.mrb[0].mxu0
        %856 = vmatprep.mubr.bf16.mxu0 0
        %857 = vmatmul.mubr.bf16.gmra.mrb[0].mxu0 %v590
        %v858 = vpop.f32.mrb[0].mxu0
        %v859 = vadd.f32 0.0, %v858
        %v860 = vpop.f32.mrb[0].mxu0
        %v861 = vpop.f32.mrb[0].mxu0
        %v862 = vadd.f32 0.0, %v861
        %v863 = vpop.f32.mrb[0].mxu0
        %864 = vmatprep.mubr.bf16.mxu0 0
        %865 = vmatmul.mubr.bf16.gmra.mrb[0].mxu0 %v593
        %v866 = vpop.f32.mrb[0].mxu0
        %v867 = vadd.f32 0.0, %v866
        %v868 = vpop.f32.mrb[0].mxu0
        %v869 = vpop.f32.mrb[0].mxu0
        %v870 = vadd.f32 0.0, %v869
        %v871 = vpop.f32.mrb[0].mxu0
        %872 = vmatprep.mubr.bf16.mxu0 0
        %873 = vmatmul.mubr.bf16.gmra.mrb[0].mxu0 %v596
        %v874 = vpop.f32.mrb[0].mxu0
        %v875 = vadd.f32 0.0, %v874
        %v876 = vpop.f32.mrb[0].mxu0
        %v877 = vpop.f32.mrb[0].mxu0
        %v878 = vadd.f32 0.0, %v877
        %v879 = vpop.f32.mrb[0].mxu0
        %880 = vmatprep.mubr.bf16.mxu0 0
        %881 = vmatmul.mubr.bf16.gmra.mrb[0].mxu0 %v599
        %v882 = vpop.f32.mrb[0].mxu0
        %v883 = vadd.f32 0.0, %v882
        %v884 = vpop.f32.mrb[0].mxu0
        %v885 = vpop.f32.mrb[0].mxu0
        %v886 = vadd.f32 0.0, %v885
        %v887 = vpop.f32.mrb[0].mxu0
        %888 = vmatprep.mubr.bf16.mxu0 0
        %889 = vmatmul.mubr.bf16.gmra.mrb[0].mxu0 %v602
        %v890 = vpop.f32.mrb[0].mxu0
        %v891 = vadd.f32 0.0, %v890
        %v892 = vpop.f32.mrb[0].mxu0
        %v893 = vpop.f32.mrb[0].mxu0
        %v894 = vadd.f32 0.0, %v893
        %v895 = vpop.f32.mrb[0].mxu0
        %896 = vmatprep.mubr.bf16.mxu0 0
        %897 = vmatmul.mubr.bf16.gmra.mrb[0].mxu0 %v605
        %v898 = vpop.f32.mrb[0].mxu0
        %v899 = vadd.f32 0.0, %v898
        %v900 = vpop.f32.mrb[0].mxu0
        %v901 = vpop.f32.mrb[0].mxu0
        %v902 = vadd.f32 0.0, %v901
        %v903 = vpop.f32.mrb[0].mxu0
        %904 = vmatprep.mubr.bf16.mxu0 0
        %905 = vmatmul.mubr.bf16.gmra.mrb[0].mxu0 %v608
        %v906 = vpop.f32.mrb[0].mxu0
        %v907 = vadd.f32 0.0, %v906
        %v908 = vpop.f32.mrb[0].mxu0
        %v909 = vpop.f32.mrb[0].mxu0
        %v910 = vadd.f32 0.0, %v909
        %v911 = vpop.f32.mrb[0].mxu0
        %912 = vmatprep.mubr.bf16.mxu0 0
        %913 = vmatmul.mubr.bf16.gmra.mrb[0].mxu0 %v611
        %v914 = vpop.f32.mrb[0].mxu0
        %v915 = vadd.f32 0.0, %v914
        %v916 = vpop.f32.mrb[0].mxu0
        %v917 = vpop.f32.mrb[0].mxu0
        %v918 = vadd.f32 0.0, %v917
        %v919 = vpop.f32.mrb[0].mxu0
        %920 = vmatprep.mubr.bf16.mxu0 0
        %921 = vmatmul.mubr.bf16.gmra.mrb[0].mxu0 %v614
        %v922 = vpop.f32.mrb[0].mxu0
        %v923 = vadd.f32 0.0, %v922
        %v924 = vpop.f32.mrb[0].mxu0
        %v925 = vpop.f32.mrb[0].mxu0
        %v926 = vadd.f32 0.0, %v925
        %v927 = vpop.f32.mrb[0].mxu0
        %928 = vmatprep.mubr.bf16.mxu0 0
        %929 = vmatmul.mubr.bf16.gmra.mrb[0].mxu0 %v617
        %v930 = vpop.f32.mrb[0].mxu0
        %v931 = vadd.f32 0.0, %v930
        %v932 = vpop.f32.mrb[0].mxu0
        %v933 = vpop.f32.mrb[0].mxu0
        %v934 = vadd.f32 0.0, %v933
        %v935 = vpop.f32.mrb[0].mxu0
        %936 = vmatprep.mubr.bf16.mxu0 0
        %937 = vmatmul.mubr.bf16.gmra.mrb[0].mxu0 %v620
        %v938 = vpop.f32.mrb[0].mxu0
        %v939 = vadd.f32 0.0, %v938
        %v940 = vpop.f32.mrb[0].mxu0
        %v941 = vpop.f32.mrb[0].mxu0
        %v942 = vadd.f32 0.0, %v941
        %v943 = vpop.f32.mrb[0].mxu0
        %944 = vmatprep.mubr.bf16.mxu0 0
        %945 = vmatmul.mubr.bf16.gmra.mrb[0].mxu0 %v623
        %v946 = vpop.f32.mrb[0].mxu0
        %v947 = vadd.f32 0.0, %v946
        %v948 = vpop.f32.mrb[0].mxu0
        %v949 = vpop.f32.mrb[0].mxu0
        %v950 = vadd.f32 0.0, %v949
        %v951 = vpop.f32.mrb[0].mxu0
        %952 = vmatprep.mubr.bf16.mxu0 0
        %953 = vmatmul.mubr.bf16.gmra.mrb[0].mxu0 %v626
        %v954 = vpop.f32.mrb[0].mxu0
        %v955 = vadd.f32 0.0, %v954
        %v956 = vpop.f32.mrb[0].mxu0
        %v957 = vpop.f32.mrb[0].mxu0
        %v958 = vadd.f32 0.0, %v957
        %v959 = vpop.f32.mrb[0].mxu0
        %960 = vmatprep.mubr.bf16.mxu0 0
        %961 = vmatmul.mubr.bf16.gmra.mrb[0].mxu0 %v629
        %v962 = vpop.f32.mrb[0].mxu0
        %v963 = vadd.f32 0.0, %v962
        %v964 = vpop.f32.mrb[0].mxu0
        %v965 = vpop.f32.mrb[0].mxu0
        %v966 = vadd.f32 0.0, %v965
        %v967 = vpop.f32.mrb[0].mxu0
        %968 = vmatprep.mubr.bf16.mxu0 0
        %969 = vmatmul.mubr.bf16.gmra.mrb[0].mxu0 %v632
        %v970 = vpop.f32.mrb[0].mxu0
        %v971 = vadd.f32 0.0, %v970
        %v972 = vpop.f32.mrb[0].mxu0
        %v973 = vpop.f32.mrb[0].mxu0
        %v974 = vadd.f32 0.0, %v973
        %v975 = vpop.f32.mrb[0].mxu0
        %976 = vmatprep.mubr.bf16.mxu0 0
        %977 = vmatmul.mubr.bf16.gmra.mrb[0].mxu0 %v635
        %v978 = vpop.f32.mrb[0].mxu0
        %v979 = vadd.f32 0.0, %v978
        %v980 = vpop.f32.mrb[0].mxu0
        %v981 = vpop.f32.mrb[0].mxu0
        %v982 = vadd.f32 0.0, %v981
        %v983 = vpop.f32.mrb[0].mxu0
        %984 = vmatprep.mubr.bf16.mxu0 0
        %985 = vmatmul.mubr.bf16.gmra.mrb[0].mxu0 %v638
        %v986 = vpop.f32.mrb[0].mxu0
        %v987 = vadd.f32 0.0, %v986
        %v988 = vpop.f32.mrb[0].mxu0
        %v989 = vpop.f32.mrb[0].mxu0
        %v990 = vadd.f32 0.0, %v989
        %v991 = vpop.f32.mrb[0].mxu0
        %992 = vmatprep.mubr.bf16.mxu0 0
        %993 = vmatmul.mubr.bf16.gmra.mrb[0].mxu0 %v641
        %v994 = vpop.f32.mrb[0].mxu0
        %v995 = vadd.f32 0.0, %v994
        %v996 = vpop.f32.mrb[0].mxu0
        %v997 = vpop.f32.mrb[0].mxu0
        %v998 = vadd.f32 0.0, %v997
        %v999 = vpop.f32.mrb[0].mxu0
        %1000 = vmatprep.mubr.bf16.mxu0 0
        %1001 = vmatmul.mubr.bf16.gmra.mrb[0].mxu0 %v644
        %v1002 = vpop.f32.mrb[0].mxu0
        %v1003 = vadd.f32 0.0, %v1002
        %v1004 = vpop.f32.mrb[0].mxu0
        %v1005 = vpop.f32.mrb[0].mxu0
        %v1006 = vadd.f32 0.0, %v1005
        %v1007 = vpop.f32.mrb[0].mxu0
        %1008 = vmatprep.mubr.bf16.mxu0 0
        %1009 = vmatmul.mubr.bf16.gmra.mrb[0].mxu0 %v647
        %v1010 = vpop.f32.mrb[0].mxu0
        %v1011 = vadd.f32 0.0, %v1010
        %v1012 = vpop.f32.mrb[0].mxu0
        %v1013 = vpop.f32.mrb[0].mxu0
        %v1014 = vadd.f32 0.0, %v1013
        %v1015 = vpop.f32.mrb[0].mxu0
        %1016 = vmatprep.mubr.bf16.mxu0 0
        %1017 = vmatmul.mubr.bf16.gmra.mrb[0].mxu0 %v650
        %v1018 = vpop.f32.mrb[0].mxu0
        %v1019 = vadd.f32 0.0, %v1018
        %v1020 = vpop.f32.mrb[0].mxu0
        %v1021 = vpop.f32.mrb[0].mxu0
        %v1022 = vadd.f32 0.0, %v1021
        %v1023 = vpop.f32.mrb[0].mxu0
        %1024 = vmatprep.mubr.bf16.mxu0 0
        %1025 = vmatmul.mubr.bf16.gmra.mrb[0].mxu0 %v653
        %v1026 = vpop.f32.mrb[0].mxu0
        %v1027 = vadd.f32 0.0, %v1026
        %v1028 = vpop.f32.mrb[0].mxu0
        %v1029 = vpop.f32.mrb[0].mxu0
        %v1030 = vadd.f32 0.0, %v1029
        %v1031 = vpop.f32.mrb[0].mxu0
        %1032 = vmatprep.mubr.bf16.mxu0 0
        %1033 = vmatmul.mubr.bf16.gmra.mrb[0].mxu0 %v656
        %v1034 = vpop.f32.mrb[0].mxu0
        %v1035 = vadd.f32 0.0, %v1034
        %v1036 = vpop.f32.mrb[0].mxu0
        %v1037 = vpop.f32.mrb[0].mxu0
        %v1038 = vadd.f32 0.0, %v1037
        %v1039 = vpop.f32.mrb[0].mxu0
        %1040 = vmatprep.mubr.bf16.mxu0 0
        %1041 = vmatmul.mubr.bf16.gmra.mrb[0].mxu0 %v659
        %v1042 = vpop.f32.mrb[0].mxu0
        %v1043 = vadd.f32 0.0, %v1042
        %v1044 = vpop.f32.mrb[0].mxu0
        %v1045 = vpop.f32.mrb[0].mxu0
        %v1046 = vadd.f32 0.0, %v1045
        %v1047 = vpop.f32.mrb[0].mxu0
        %1048 = vmatprep.mubr.bf16.mxu0 0
        %1049 = vmatmul.mubr.bf16.gmra.mrb[0].mxu0 %v662
        %v1050 = vpop.f32.mrb[0].mxu0
        %v1051 = vadd.f32 0.0, %v1050
        %v1052 = vpop.f32.mrb[0].mxu0
        %v1053 = vpop.f32.mrb[0].mxu0
        %v1054 = vadd.f32 0.0, %v1053
        %v1055 = vpop.f32.mrb[0].mxu0
        %1056 = vmatprep.mubr.bf16.mxu0 0
        %1057 = vmatmul.mubr.bf16.gmra.mrb[0].mxu0 %v665
        %v1058 = vpop.f32.mrb[0].mxu0
        %v1059 = vadd.f32 0.0, %v1058
        %v1060 = vpop.f32.mrb[0].mxu0
        %v1061 = vpop.f32.mrb[0].mxu0
        %v1062 = vadd.f32 0.0, %v1061
        %v1063 = vpop.f32.mrb[0].mxu0
        %1064 = vmatprep.mubr.bf16.mxu0 0
        %1065 = vmatmul.mubr.bf16.gmra.mrb[0].mxu0 %v668
        %v1066 = vpop.f32.mrb[0].mxu0
        %v1067 = vadd.f32 0.0, %v1066
        %v1068 = vpop.f32.mrb[0].mxu0
        %v1069 = vpop.f32.mrb[0].mxu0
        %v1070 = vadd.f32 0.0, %v1069
        %v1071 = vpop.f32.mrb[0].mxu0
        %1072 = vmatprep.mubr.bf16.mxu0 0
        %1073 = vmatmul.mubr.bf16.gmra.mrb[0].mxu0 %v671
        %v1074 = vpop.f32.mrb[0].mxu0
        %v1075 = vadd.f32 0.0, %v1074
        %v1076 = vpop.f32.mrb[0].mxu0
        %v1077 = vpop.f32.mrb[0].mxu0
        %v1078 = vadd.f32 0.0, %v1077
        %v1079 = vpop.f32.mrb[0].mxu0
        %1080 = vmatprep.mubr.bf16.mxu0 0
        %1081 = vmatmul.mubr.bf16.gmra.mrb[0].mxu0 %v674
        %v1082 = vpop.f32.mrb[0].mxu0
        %v1083 = vadd.f32 0.0, %v1082
        %v1084 = vpop.f32.mrb[0].mxu0
        %v1085 = vpop.f32.mrb[0].mxu0
        %v1086 = vadd.f32 0.0, %v1085
        %v1087 = vpop.f32.mrb[0].mxu0
        %1088 = vmatprep.mubr.bf16.mxu0 0
        %1089 = vmatmul.mubr.bf16.gmra.mrb[0].mxu0 %v677
        %v1090 = vpop.f32.mrb[0].mxu0
        %v1091 = vadd.f32 0.0, %v1090
        %v1092 = vpop.f32.mrb[0].mxu0
        %v1093 = vpop.f32.mrb[0].mxu0
        %v1094 = vadd.f32 0.0, %v1093
        %v1095 = vpop.f32.mrb[0].mxu0
        %1096 = vmatprep.mubr.bf16.mxu0 0
        %1097 = vmatmul.mubr.bf16.gmra.mrb[0].mxu0 %v680
        %v1098 = vpop.f32.mrb[0].mxu0
        %v1099 = vadd.f32 0.0, %v1098
        %v1100 = vpop.f32.mrb[0].mxu0
        %v1101 = vpop.f32.mrb[0].mxu0
        %v1102 = vadd.f32 0.0, %v1101
        %v1103 = vpop.f32.mrb[0].mxu0
        %1104 = vmatprep.mubr.bf16.mxu0 0
        %1105 = vmatmul.mubr.bf16.gmra.mrb[0].mxu0 %v683
        %v1106 = vpop.f32.mrb[0].mxu0
        %v1107 = vadd.f32 0.0, %v1106
        %v1108 = vpop.f32.mrb[0].mxu0
        %v1109 = vpop.f32.mrb[0].mxu0
        %v1110 = vadd.f32 0.0, %v1109
        %v1111 = vpop.f32.mrb[0].mxu0
        %1112 = vmatprep.mubr.bf16.mxu0 0
        %1113 = vmatmul.mubr.bf16.gmra.mrb[0].mxu0 %v686
        %v1114 = vpop.f32.mrb[0].mxu0
        %v1115 = vadd.f32 0.0, %v1114
        %v1116 = vpop.f32.mrb[0].mxu0
        %v1117 = vpop.f32.mrb[0].mxu0
        %v1118 = vadd.f32 0.0, %v1117
        %v1119 = vpop.f32.mrb[0].mxu0
        %1120 = vmatprep.mubr.bf16.mxu0 0
        %1121 = vmatmul.mubr.bf16.gmra.mrb[0].mxu0 %v689
        %v1122 = vpop.f32.mrb[0].mxu0
        %v1123 = vadd.f32 0.0, %v1122
        %v1124 = vpop.f32.mrb[0].mxu0
        %v1125 = vpop.f32.mrb[0].mxu0
        %v1126 = vadd.f32 0.0, %v1125
        %v1127 = vpop.f32.mrb[0].mxu0
        %1128 = vmatprep.mubr.bf16.mxu0 0
        %1129 = vmatmul.mubr.bf16.gmra.mrb[0].mxu0 %v692
        %v1130 = vpop.f32.mrb[0].mxu0
        %v1131 = vadd.f32 0.0, %v1130
        %v1132 = vpop.f32.mrb[0].mxu0
        %v1133 = vpop.f32.mrb[0].mxu0
        %v1134 = vadd.f32 0.0, %v1133
        %v1135 = vpop.f32.mrb[0].mxu0
        %1136 = vmatprep.mubr.bf16.mxu0 0
        %1137 = vmatmul.mubr.bf16.gmra.mrb[0].mxu0 %v695
        %v1138 = vpop.f32.mrb[0].mxu0
        %v1139 = vadd.f32 0.0, %v1138
        %v1140 = vpop.f32.mrb[0].mxu0
        %v1141 = vpop.f32.mrb[0].mxu0
        %v1142 = vadd.f32 0.0, %v1141
        %v1143 = vpop.f32.mrb[0].mxu0
        %1144 = vmatprep.mubr.bf16.mxu0 0
        %1145 = vmatmul.mubr.bf16.gmra.mrb[0].mxu0 %v698
        %v1146 = vpop.f32.mrb[0].mxu0
        %v1147 = vadd.f32 0.0, %v1146
        %v1148 = vpop.f32.mrb[0].mxu0
        %v1149 = vpop.f32.mrb[0].mxu0
        %v1150 = vadd.f32 0.0, %v1149
        %v1151 = vpop.f32.mrb[0].mxu0
        %1152 = vmatprep.mubr.bf16.mxu0 0
        %1153 = vmatmul.mubr.bf16.gmra.mrb[0].mxu0 %v701
        %v1154 = vpop.f32.mrb[0].mxu0
        %v1155 = vadd.f32 0.0, %v1154
        %v1156 = vpop.f32.mrb[0].mxu0
        %v1157 = vpop.f32.mrb[0].mxu0
        %v1158 = vadd.f32 0.0, %v1157
        %v1159 = vpop.f32.mrb[0].mxu0
        %1160 = vmatprep.mubr.bf16.mxu0 0
        %1161 = vmatmul.mubr.bf16.gmra.mrb[0].mxu0 %v704
        %v1162 = vpop.f32.mrb[0].mxu0
        %v1163 = vadd.f32 0.0, %v1162
        %v1164 = vpop.f32.mrb[0].mxu0
        %v1165 = vpop.f32.mrb[0].mxu0
        %v1166 = vadd.f32 0.0, %v1165
        %v1167 = vpop.f32.mrb[0].mxu0
        %1168 = vmatprep.mubr.bf16.mxu0 0
        %1169 = vmatmul.mubr.bf16.gmra.mrb[0].mxu0 %v707
        %v1170 = vpop.f32.mrb[0].mxu0
        %v1171 = vadd.f32 0.0, %v1170
        %v1172 = vpop.f32.mrb[0].mxu0
        %v1173 = vpop.f32.mrb[0].mxu0
        %v1174 = vadd.f32 0.0, %v1173
        %v1175 = vpop.f32.mrb[0].mxu0
        %1176 = vmatprep.mubr.bf16.mxu0 0
        %1177 = vmatmul.mubr.bf16.gmra.mrb[0].mxu0 %v710
        %v1178 = vpop.f32.mrb[0].mxu0
        %v1179 = vadd.f32 0.0, %v1178
        %v1180 = vpop.f32.mrb[0].mxu0
        %v1181 = vpop.f32.mrb[0].mxu0
        %v1182 = vadd.f32 0.0, %v1181
        %v1183 = vpop.f32.mrb[0].mxu0
        %1184 = vmatprep.mubr.bf16.mxu0 0
        %1185 = vmatmul.mubr.bf16.gmra.mrb[0].mxu0 %v713
        %v1186 = vpop.f32.mrb[0].mxu0
        %v1187 = vadd.f32 0.0, %v1186
        %v1188 = vpop.f32.mrb[0].mxu0
        %v1189 = vpop.f32.mrb[0].mxu0
        %v1190 = vadd.f32 0.0, %v1189
        %v1191 = vpop.f32.mrb[0].mxu0
        %1192 = vmatprep.mubr.bf16.mxu0 0
        %1193 = vmatmul.mubr.bf16.gmra.mrb[0].mxu0 %v716
        %v1194 = vpop.f32.mrb[0].mxu0
        %v1195 = vadd.f32 0.0, %v1194
        %v1196 = vpop.f32.mrb[0].mxu0
        %v1197 = vpop.f32.mrb[0].mxu0
        %v1198 = vadd.f32 0.0, %v1197
        %v1199 = vpop.f32.mrb[0].mxu0
        %1200 = vmatprep.mubr.bf16.mxu0 0
        %1201 = vmatmul.mubr.bf16.gmra.mrb[0].mxu0 %v719
        %v1202 = vpop.f32.mrb[0].mxu0
        %v1203 = vadd.f32 0.0, %v1202
        %v1204 = vpop.f32.mrb[0].mxu0
        %v1205 = vpop.f32.mrb[0].mxu0
        %v1206 = vadd.f32 0.0, %v1205
        %v1207 = vpop.f32.mrb[0].mxu0
        %1208 = vmatprep.mubr.bf16.mxu0 0
        %1209 = vmatmul.mubr.bf16.gmra.mrb[0].mxu0 %v722
        %v1210 = vpop.f32.mrb[0].mxu0
        %v1211 = vadd.f32 0.0, %v1210
        %v1212 = vpop.f32.mrb[0].mxu0
        %v1213 = vpop.f32.mrb[0].mxu0
        %v1214 = vadd.f32 0.0, %v1213
        %v1215 = vpop.f32.mrb[0].mxu0
        %1216 = vmatprep.mubr.bf16.mxu0 0
        %1217 = vmatmul.mubr.bf16.gmra.mrb[0].mxu0 %v725
        %v1218 = vpop.f32.mrb[0].mxu0
        %v1219 = vadd.f32 0.0, %v1218
        %v1220 = vpop.f32.mrb[0].mxu0
        %v1221 = vpop.f32.mrb[0].mxu0
        %v1222 = vadd.f32 0.0, %v1221
        %v1223 = vpop.f32.mrb[0].mxu0
        %1224 = vmatprep.mubr.bf16.mxu0 0
        %1225 = vmatmul.mubr.bf16.gmra.mrb[0].mxu0 %v728
        %v1226 = vpop.f32.mrb[0].mxu0
        %v1227 = vadd.f32 0.0, %v1226
        %v1228 = vpop.f32.mrb[0].mxu0
        %v1229 = vpop.f32.mrb[0].mxu0
        %v1230 = vadd.f32 0.0, %v1229
        %v1231 = vpop.f32.mrb[0].mxu0
        %1232 = vmatprep.mubr.bf16.mxu0 0
        %1233 = vmatmul.mubr.bf16.gmra.mrb[0].mxu0 %v731
        %v1234 = vpop.f32.mrb[0].mxu0
        %v1235 = vadd.f32 0.0, %v1234
        %v1236 = vpop.f32.mrb[0].mxu0
        %v1237 = vpop.f32.mrb[0].mxu0
        %v1238 = vadd.f32 0.0, %v1237
        %v1239 = vpop.f32.mrb[0].mxu0
        %1240 = vmatprep.mubr.bf16.mxu0 0
        %1241 = vmatmul.mubr.bf16.gmra.mrb[0].mxu0 %v734
        %v1242 = vpop.f32.mrb[0].mxu0
        %v1243 = vadd.f32 0.0, %v1242
        %v1244 = vpop.f32.mrb[0].mxu0
        %v1245 = vpop.f32.mrb[0].mxu0
        %v1246 = vadd.f32 0.0, %v1245
        %v1247 = vpop.f32.mrb[0].mxu0
        %1248 = vmatprep.mubr.bf16.mxu0 0
        %1249 = vmatmul.mubr.bf16.gmra.mrb[0].mxu0 %v737
        %v1250 = vpop.f32.mrb[0].mxu0
        %v1251 = vadd.f32 0.0, %v1250
        %v1252 = vpop.f32.mrb[0].mxu0
        %v1253 = vpop.f32.mrb[0].mxu0
        %v1254 = vadd.f32 0.0, %v1253
        %v1255 = vpop.f32.mrb[0].mxu0
        %1256 = vmatprep.mubr.bf16.mxu0 0
        %1257 = vmatmul.mubr.bf16.gmra.mrb[0].mxu0 %v740
        %v1258 = vpop.f32.mrb[0].mxu0
        %v1259 = vadd.f32 0.0, %v1258
        %v1260 = vpop.f32.mrb[0].mxu0
        %v1261 = vpop.f32.mrb[0].mxu0
        %v1262 = vadd.f32 0.0, %v1261
        %v1263 = vpop.f32.mrb[0].mxu0
        %1264 = vmatprep.mubr.bf16.mxu0 0
        %1265 = vmatmul.mubr.bf16.gmra.mrb[0].mxu0 %v743
        %v1266 = vpop.f32.mrb[0].mxu0
        %v1267 = vadd.f32 0.0, %v1266
        %v1268 = vpop.f32.mrb[0].mxu0
        %v1269 = vpop.f32.mrb[0].mxu0
        %v1270 = vadd.f32 0.0, %v1269
        %v1271 = vpop.f32.mrb[0].mxu0
        %1272 = vmatprep.mubr.bf16.mxu0 0
        %1273 = vmatmul.mubr.bf16.gmra.mrb[0].mxu0 %v746
        %v1274 = vpop.f32.mrb[0].mxu0
        %v1275 = vadd.f32 0.0, %v1274
        %v1276 = vpop.f32.mrb[0].mxu0
        %v1277 = vpop.f32.mrb[0].mxu0
        %v1278 = vadd.f32 0.0, %v1277
        %v1279 = vpop.f32.mrb[0].mxu0
        %1280 = vmatprep.mubr.bf16.mxu0 0
        %1281 = vmatmul.mubr.bf16.gmra.mrb[0].mxu0 %v749
        %v1282 = vpop.f32.mrb[0].mxu0
        %v1283 = vadd.f32 0.0, %v1282
        %v1284 = vpop.f32.mrb[0].mxu0
        %v1285 = vpop.f32.mrb[0].mxu0
        %v1286 = vadd.f32 0.0, %v1285
        %v1287 = vpop.f32.mrb[0].mxu0
        %1288 = vmatprep.mubr.bf16.mxu0 0
        %1289 = vmatmul.mubr.bf16.gmra.mrb[0].mxu0 %v752
        %v1290 = vpop.f32.mrb[0].mxu0
        %v1291 = vadd.f32 0.0, %v1290
        %v1292 = vpop.f32.mrb[0].mxu0
        %v1293 = vpop.f32.mrb[0].mxu0
        %v1294 = vadd.f32 0.0, %v1293
        %v1295 = vpop.f32.mrb[0].mxu0
        %1296 = vmatprep.mubr.bf16.mxu0 0
        %1297 = vmatmul.mubr.bf16.gmra.mrb[0].mxu0 %v755
        %v1298 = vpop.f32.mrb[0].mxu0
        %v1299 = vadd.f32 0.0, %v1298
        %v1300 = vpop.f32.mrb[0].mxu0
        %v1301 = vpop.f32.mrb[0].mxu0
        %v1302 = vadd.f32 0.0, %v1301
        %v1303 = vpop.f32.mrb[0].mxu0
        %1304 = vmatprep.mubr.bf16.mxu0 0
        %1305 = vmatmul.mubr.bf16.gmra.mrb[0].mxu0 %v758
        %v1306 = vpop.f32.mrb[0].mxu0
        %v1307 = vadd.f32 0.0, %v1306
        %v1308 = vpop.f32.mrb[0].mxu0
        %v1309 = vpop.f32.mrb[0].mxu0
        %v1310 = vadd.f32 0.0, %v1309
        %v1311 = vpop.f32.mrb[0].mxu0
        %1312 = vmatprep.mubr.bf16.mxu0 0
        %1313 = vmatmul.mubr.bf16.gmra.mrb[0].mxu0 %v761
        %v1314 = vpop.f32.mrb[0].mxu0
        %v1315 = vadd.f32 0.0, %v1314
        %v1316 = vpop.f32.mrb[0].mxu0
        %v1317 = vpop.f32.mrb[0].mxu0
        %v1318 = vadd.f32 0.0, %v1317
        %v1319 = vpop.f32.mrb[0].mxu0
        %1320 = vmatprep.mubr.bf16.mxu0 0
        %1321 = vmatmul.mubr.bf16.gmra.mrb[0].mxu0 %v764
        %v1322 = vpop.f32.mrb[0].mxu0
        %v1323 = vadd.f32 0.0, %v1322
        %v1324 = vpop.f32.mrb[0].mxu0
        %v1325 = vpop.f32.mrb[0].mxu0
        %v1326 = vadd.f32 0.0, %v1325
        %v1327 = vpop.f32.mrb[0].mxu0
        %1328 = vmatprep.mubr.bf16.mxu0 0
        %1329 = vmatmul.mubr.bf16.gmra.mrb[0].mxu0 %v767
        %v1330 = vpop.f32.mrb[0].mxu0
        %v1331 = vadd.f32 0.0, %v1330
        %v1332 = vpop.f32.mrb[0].mxu0
        %v1333 = vpop.f32.mrb[0].mxu0
        %v1334 = vadd.f32 0.0, %v1333
        %v1335 = vpop.f32.mrb[0].mxu0
        %1336 = vdwg.mxu0
        %v1338 = vsel %vm570, %v302, 0
        %v1341 = vsel %vm570, %v303, 0
        %v1344 = vsel %vm570, %v304, 0
        %v1347 = vsel %vm570, %v305, 0
        %v1350 = vsel %vm570, %v306, 0
        %v1353 = vsel %vm570, %v307, 0
        %v1356 = vsel %vm570, %v308, 0
        %v1359 = vsel %vm570, %v309, 0
        %v1362 = vsel %vm570, %v310, 0
        %v1365 = vsel %vm570, %v311, 0
        %v1368 = vsel %vm570, %v312, 0
        %v1371 = vsel %vm570, %v313, 0
        %v1374 = vsel %vm570, %v314, 0
        %v1377 = vsel %vm570, %v315, 0
        %v1380 = vsel %vm570, %v316, 0
        %v1383 = vsel %vm570, %v317, 0
        %v1386 = vsel %vm570, %v318, 0
        %v1389 = vsel %vm570, %v319, 0
        %v1392 = vsel %vm570, %v320, 0
        %v1395 = vsel %vm570, %v321, 0
        %v1398 = vsel %vm570, %v322, 0
        %v1401 = vsel %vm570, %v323, 0
        %v1404 = vsel %vm570, %v324, 0
        %v1407 = vsel %vm570, %v325, 0
        %v1410 = vsel %vm570, %v326, 0
        %v1413 = vsel %vm570, %v327, 0
        %v1416 = vsel %vm570, %v328, 0
        %v1419 = vsel %vm570, %v329, 0
        %v1422 = vsel %vm570, %v330, 0
        %v1425 = vsel %vm570, %v331, 0
        %v1428 = vsel %vm570, %v332, 0
        %v1431 = vsel %vm570, %v333, 0
        %v1434 = vsel %vm570, %v334, 0
        %v1437 = vsel %vm570, %v335, 0
        %v1440 = vsel %vm570, %v336, 0
        %v1443 = vsel %vm570, %v337, 0
        %v1446 = vsel %vm570, %v338, 0
        %v1449 = vsel %vm570, %v339, 0
        %v1452 = vsel %vm570, %v340, 0
        %v1455 = vsel %vm570, %v341, 0
        %v1458 = vsel %vm570, %v342, 0
        %v1461 = vsel %vm570, %v343, 0
        %v1464 = vsel %vm570, %v344, 0
        %v1467 = vsel %vm570, %v345, 0
        %v1470 = vsel %vm570, %v346, 0
        %v1473 = vsel %vm570, %v347, 0
        %v1476 = vsel %vm570, %v348, 0
        %v1479 = vsel %vm570, %v349, 0
        %v1482 = vsel %vm570, %v350, 0
        %v1485 = vsel %vm570, %v351, 0
        %v1488 = vsel %vm570, %v352, 0
        %v1491 = vsel %vm570, %v353, 0
        %v1494 = vsel %vm570, %v354, 0
        %v1497 = vsel %vm570, %v355, 0
        %v1500 = vsel %vm570, %v356, 0
        %v1503 = vsel %vm570, %v357, 0
        %v1506 = vsel %vm570, %v358, 0
        %v1509 = vsel %vm570, %v359, 0
        %v1512 = vsel %vm570, %v360, 0
        %v1515 = vsel %vm570, %v361, 0
        %v1518 = vsel %vm570, %v362, 0
        %v1521 = vsel %vm570, %v363, 0
        %v1524 = vsel %vm570, %v364, 0
        %v1527 = vsel %vm570, %v365, 0
        %v1530 = vsel %vm570, %v366, 0
        %v1533 = vsel %vm570, %v367, 0
        %v1536 = vand.u32 %v368, %v772
        %1538 = vmatprep.subr.bf16.mxu0 0
        %1539 = vmatpush1.bf16.msra.mxu0 %v1536
        %1540 = vmatprep.subr.bf16.mxu0 0
        %1541 = vmatpush1.bf16.msra.mxu0 0
        %1542 = vmatprep.subr.bf16.mxu0 0
        %1543 = vmatpush1.bf16.msra.mxu0 0
        %1544 = vmatprep.subr.bf16.mxu0 0
        %1545 = vmatpush1.bf16.msra.mxu0 0
        %1546 = vmatprep.subr.bf16.mxu0 0
        %1547 = vmatpush1.bf16.msra.mxu0 0
        %1548 = vmatprep.subr.bf16.mxu0 0
        %1549 = vmatpush1.bf16.msra.mxu0 0
        %1550 = vmatprep.subr.bf16.mxu0 0
        %1551 = vmatpush1.bf16.msra.mxu0 0
        %1552 = vmatprep.subr.bf16.mxu0 0
        %1553 = vmatpush1.bf16.msra.mxu0 0
        %1554 = vmatprep.subr.bf16.mxu0 0
        %1555 = vmatpush1.bf16.msra.mxu0 0
        %1556 = vmatprep.subr.bf16.mxu0 0
        %1557 = vmatpush1.bf16.msra.mxu0 0
        %1558 = vmatprep.subr.bf16.mxu0 0
        %1559 = vmatpush1.bf16.msra.mxu0 0
        %1560 = vmatprep.subr.bf16.mxu0 0
        %1561 = vmatpush1.bf16.msra.mxu0 0
        %1562 = vmatprep.subr.bf16.mxu0 0
        %1563 = vmatpush1.bf16.msra.mxu0 0
        %1564 = vmatprep.subr.bf16.mxu0 0
        %1565 = vmatpush1.bf16.msra.mxu0 0
        %1566 = vmatprep.subr.bf16.mxu0 0
        %1567 = vmatpush1.bf16.msra.mxu0 0
        %1568 = vmatprep.subr.bf16.mxu0 0
        %1569 = vmatpush1.bf16.msra.mxu0 0
        %1570 = vmatprep.mubr.bf16.mxu0 0
        %1571 = vmatmul.mubr.bf16.gmra.mrb[0].mxu0 %v1338
        %v1572 = vpop.f32.mrb[0].mxu0
        %v1573 = vadd.f32 %v811, %v1572
        %v1574 = vpop.f32.mrb[0].mxu0
        %v1575 = vpop.f32.mrb[0].mxu0
        %v1576 = vadd.f32 %v814, %v1575
        %v1577 = vpop.f32.mrb[0].mxu0
        %1578 = vmatprep.mubr.bf16.mxu0 0
        %1579 = vmatmul.mubr.bf16.gmra.mrb[0].mxu0 %v1341
        %v1580 = vpop.f32.mrb[0].mxu0
        %v1581 = vadd.f32 %v819, %v1580
        %v1582 = vpop.f32.mrb[0].mxu0
        %v1583 = vpop.f32.mrb[0].mxu0
        %v1584 = vadd.f32 %v822, %v1583
        %v1585 = vpop.f32.mrb[0].mxu0
        %1586 = vmatprep.mubr.bf16.mxu0 0
        %1587 = vmatmul.mubr.bf16.gmra.mrb[0].mxu0 %v1344
        %v1588 = vpop.f32.mrb[0].mxu0
        %v1589 = vadd.f32 %v827, %v1588
        %v1590 = vpop.f32.mrb[0].mxu0
        %v1591 = vpop.f32.mrb[0].mxu0
        %v1592 = vadd.f32 %v830, %v1591
        %v1593 = vpop.f32.mrb[0].mxu0
        %1594 = vmatprep.mubr.bf16.mxu0 0
        %1595 = vmatmul.mubr.bf16.gmra.mrb[0].mxu0 %v1347
        %v1596 = vpop.f32.mrb[0].mxu0
        %v1597 = vadd.f32 %v835, %v1596
        %v1598 = vpop.f32.mrb[0].mxu0
        %v1599 = vpop.f32.mrb[0].mxu0
        %v1600 = vadd.f32 %v838, %v1599
        %v1601 = vpop.f32.mrb[0].mxu0
        %1602 = vmatprep.mubr.bf16.mxu0 0
        %1603 = vmatmul.mubr.bf16.gmra.mrb[0].mxu0 %v1350
        %v1604 = vpop.f32.mrb[0].mxu0
        %v1605 = vadd.f32 %v843, %v1604
        %v1606 = vpop.f32.mrb[0].mxu0
        %v1607 = vpop.f32.mrb[0].mxu0
        %v1608 = vadd.f32 %v846, %v1607
        %v1609 = vpop.f32.mrb[0].mxu0
        %1610 = vmatprep.mubr.bf16.mxu0 0
        %1611 = vmatmul.mubr.bf16.gmra.mrb[0].mxu0 %v1353
        %v1612 = vpop.f32.mrb[0].mxu0
        %v1613 = vadd.f32 %v851, %v1612
        %v1614 = vpop.f32.mrb[0].mxu0
        %v1615 = vpop.f32.mrb[0].mxu0
        %v1616 = vadd.f32 %v854, %v1615
        %v1617 = vpop.f32.mrb[0].mxu0
        %1618 = vmatprep.mubr.bf16.mxu0 0
        %1619 = vmatmul.mubr.bf16.gmra.mrb[0].mxu0 %v1356
        %v1620 = vpop.f32.mrb[0].mxu0
        %v1621 = vadd.f32 %v859, %v1620
        %v1622 = vpop.f32.mrb[0].mxu0
        %v1623 = vpop.f32.mrb[0].mxu0
        %v1624 = vadd.f32 %v862, %v1623
        %v1625 = vpop.f32.mrb[0].mxu0
        %1626 = vmatprep.mubr.bf16.mxu0 0
        %1627 = vmatmul.mubr.bf16.gmra.mrb[0].mxu0 %v1359
        %v1628 = vpop.f32.mrb[0].mxu0
        %v1629 = vadd.f32 %v867, %v1628
        %v1630 = vpop.f32.mrb[0].mxu0
        %v1631 = vpop.f32.mrb[0].mxu0
        %v1632 = vadd.f32 %v870, %v1631
        %v1633 = vpop.f32.mrb[0].mxu0
        %1634 = vmatprep.mubr.bf16.mxu0 0
        %1635 = vmatmul.mubr.bf16.gmra.mrb[0].mxu0 %v1362
        %v1636 = vpop.f32.mrb[0].mxu0
        %v1637 = vadd.f32 %v875, %v1636
        %v1638 = vpop.f32.mrb[0].mxu0
        %v1639 = vpop.f32.mrb[0].mxu0
        %v1640 = vadd.f32 %v878, %v1639
        %v1641 = vpop.f32.mrb[0].mxu0
        %1642 = vmatprep.mubr.bf16.mxu0 0
        %1643 = vmatmul.mubr.bf16.gmra.mrb[0].mxu0 %v1365
        %v1644 = vpop.f32.mrb[0].mxu0
        %v1645 = vadd.f32 %v883, %v1644
        %v1646 = vpop.f32.mrb[0].mxu0
        %v1647 = vpop.f32.mrb[0].mxu0
        %v1648 = vadd.f32 %v886, %v1647
        %v1649 = vpop.f32.mrb[0].mxu0
        %1650 = vmatprep.mubr.bf16.mxu0 0
        %1651 = vmatmul.mubr.bf16.gmra.mrb[0].mxu0 %v1368
        %v1652 = vpop.f32.mrb[0].mxu0
        %v1653 = vadd.f32 %v891, %v1652
        %v1654 = vpop.f32.mrb[0].mxu0
        %v1655 = vpop.f32.mrb[0].mxu0
        %v1656 = vadd.f32 %v894, %v1655
        %v1657 = vpop.f32.mrb[0].mxu0
        %1658 = vmatprep.mubr.bf16.mxu0 0
        %1659 = vmatmul.mubr.bf16.gmra.mrb[0].mxu0 %v1371
        %v1660 = vpop.f32.mrb[0].mxu0
        %v1661 = vadd.f32 %v899, %v1660
        %v1662 = vpop.f32.mrb[0].mxu0
        %v1663 = vpop.f32.mrb[0].mxu0
        %v1664 = vadd.f32 %v902, %v1663
        %v1665 = vpop.f32.mrb[0].mxu0
        %1666 = vmatprep.mubr.bf16.mxu0 0
        %1667 = vmatmul.mubr.bf16.gmra.mrb[0].mxu0 %v1374
        %v1668 = vpop.f32.mrb[0].mxu0
        %v1669 = vadd.f32 %v907, %v1668
        %v1670 = vpop.f32.mrb[0].mxu0
        %v1671 = vpop.f32.mrb[0].mxu0
        %v1672 = vadd.f32 %v910, %v1671
        %v1673 = vpop.f32.mrb[0].mxu0
        %1674 = vmatprep.mubr.bf16.mxu0 0
        %1675 = vmatmul.mubr.bf16.gmra.mrb[0].mxu0 %v1377
        %v1676 = vpop.f32.mrb[0].mxu0
        %v1677 = vadd.f32 %v915, %v1676
        %v1678 = vpop.f32.mrb[0].mxu0
        %v1679 = vpop.f32.mrb[0].mxu0
        %v1680 = vadd.f32 %v918, %v1679
        %v1681 = vpop.f32.mrb[0].mxu0
        %1682 = vmatprep.mubr.bf16.mxu0 0
        %1683 = vmatmul.mubr.bf16.gmra.mrb[0].mxu0 %v1380
        %v1684 = vpop.f32.mrb[0].mxu0
        %v1685 = vadd.f32 %v923, %v1684
        %v1686 = vpop.f32.mrb[0].mxu0
        %v1687 = vpop.f32.mrb[0].mxu0
        %v1688 = vadd.f32 %v926, %v1687
        %v1689 = vpop.f32.mrb[0].mxu0
        %1690 = vmatprep.mubr.bf16.mxu0 0
        %1691 = vmatmul.mubr.bf16.gmra.mrb[0].mxu0 %v1383
        %v1692 = vpop.f32.mrb[0].mxu0
        %v1693 = vadd.f32 %v931, %v1692
        %v1694 = vpop.f32.mrb[0].mxu0
        %v1695 = vpop.f32.mrb[0].mxu0
        %v1696 = vadd.f32 %v934, %v1695
        %v1697 = vpop.f32.mrb[0].mxu0
        %1698 = vmatprep.mubr.bf16.mxu0 0
        %1699 = vmatmul.mubr.bf16.gmra.mrb[0].mxu0 %v1386
        %v1700 = vpop.f32.mrb[0].mxu0
        %v1701 = vadd.f32 %v939, %v1700
        %v1702 = vpop.f32.mrb[0].mxu0
        %v1703 = vpop.f32.mrb[0].mxu0
        %v1704 = vadd.f32 %v942, %v1703
        %v1705 = vpop.f32.mrb[0].mxu0
        %1706 = vmatprep.mubr.bf16.mxu0 0
        %1707 = vmatmul.mubr.bf16.gmra.mrb[0].mxu0 %v1389
        %v1708 = vpop.f32.mrb[0].mxu0
        %v1709 = vadd.f32 %v947, %v1708
        %v1710 = vpop.f32.mrb[0].mxu0
        %v1711 = vpop.f32.mrb[0].mxu0
        %v1712 = vadd.f32 %v950, %v1711
        %v1713 = vpop.f32.mrb[0].mxu0
        %1714 = vmatprep.mubr.bf16.mxu0 0
        %1715 = vmatmul.mubr.bf16.gmra.mrb[0].mxu0 %v1392
        %v1716 = vpop.f32.mrb[0].mxu0
        %v1717 = vadd.f32 %v955, %v1716
        %v1718 = vpop.f32.mrb[0].mxu0
        %v1719 = vpop.f32.mrb[0].mxu0
        %v1720 = vadd.f32 %v958, %v1719
        %v1721 = vpop.f32.mrb[0].mxu0
        %1722 = vmatprep.mubr.bf16.mxu0 0
        %1723 = vmatmul.mubr.bf16.gmra.mrb[0].mxu0 %v1395
        %v1724 = vpop.f32.mrb[0].mxu0
        %v1725 = vadd.f32 %v963, %v1724
        %v1726 = vpop.f32.mrb[0].mxu0
        %v1727 = vpop.f32.mrb[0].mxu0
        %v1728 = vadd.f32 %v966, %v1727
        %v1729 = vpop.f32.mrb[0].mxu0
        %1730 = vmatprep.mubr.bf16.mxu0 0
        %1731 = vmatmul.mubr.bf16.gmra.mrb[0].mxu0 %v1398
        %v1732 = vpop.f32.mrb[0].mxu0
        %v1733 = vadd.f32 %v971, %v1732
        %v1734 = vpop.f32.mrb[0].mxu0
        %v1735 = vpop.f32.mrb[0].mxu0
        %v1736 = vadd.f32 %v974, %v1735
        %v1737 = vpop.f32.mrb[0].mxu0
        %1738 = vmatprep.mubr.bf16.mxu0 0
        %1739 = vmatmul.mubr.bf16.gmra.mrb[0].mxu0 %v1401
        %v1740 = vpop.f32.mrb[0].mxu0
        %v1741 = vadd.f32 %v979, %v1740
        %v1742 = vpop.f32.mrb[0].mxu0
        %v1743 = vpop.f32.mrb[0].mxu0
        %v1744 = vadd.f32 %v982, %v1743
        %v1745 = vpop.f32.mrb[0].mxu0
        %1746 = vmatprep.mubr.bf16.mxu0 0
        %1747 = vmatmul.mubr.bf16.gmra.mrb[0].mxu0 %v1404
        %v1748 = vpop.f32.mrb[0].mxu0
        %v1749 = vadd.f32 %v987, %v1748
        %v1750 = vpop.f32.mrb[0].mxu0
        %v1751 = vpop.f32.mrb[0].mxu0
        %v1752 = vadd.f32 %v990, %v1751
        %v1753 = vpop.f32.mrb[0].mxu0
        %1754 = vmatprep.mubr.bf16.mxu0 0
        %1755 = vmatmul.mubr.bf16.gmra.mrb[0].mxu0 %v1407
        %v1756 = vpop.f32.mrb[0].mxu0
        %v1757 = vadd.f32 %v995, %v1756
        %v1758 = vpop.f32.mrb[0].mxu0
        %v1759 = vpop.f32.mrb[0].mxu0
        %v1760 = vadd.f32 %v998, %v1759
        %v1761 = vpop.f32.mrb[0].mxu0
        %1762 = vmatprep.mubr.bf16.mxu0 0
        %1763 = vmatmul.mubr.bf16.gmra.mrb[0].mxu0 %v1410
        %v1764 = vpop.f32.mrb[0].mxu0
        %v1765 = vadd.f32 %v1003, %v1764
        %v1766 = vpop.f32.mrb[0].mxu0
        %v1767 = vpop.f32.mrb[0].mxu0
        %v1768 = vadd.f32 %v1006, %v1767
        %v1769 = vpop.f32.mrb[0].mxu0
        %1770 = vmatprep.mubr.bf16.mxu0 0
        %1771 = vmatmul.mubr.bf16.gmra.mrb[0].mxu0 %v1413
        %v1772 = vpop.f32.mrb[0].mxu0
        %v1773 = vadd.f32 %v1011, %v1772
        %v1774 = vpop.f32.mrb[0].mxu0
        %v1775 = vpop.f32.mrb[0].mxu0
        %v1776 = vadd.f32 %v1014, %v1775
        %v1777 = vpop.f32.mrb[0].mxu0
        %1778 = vmatprep.mubr.bf16.mxu0 0
        %1779 = vmatmul.mubr.bf16.gmra.mrb[0].mxu0 %v1416
        %v1780 = vpop.f32.mrb[0].mxu0
        %v1781 = vadd.f32 %v1019, %v1780
        %v1782 = vpop.f32.mrb[0].mxu0
        %v1783 = vpop.f32.mrb[0].mxu0
        %v1784 = vadd.f32 %v1022, %v1783
        %v1785 = vpop.f32.mrb[0].mxu0
        %1786 = vmatprep.mubr.bf16.mxu0 0
        %1787 = vmatmul.mubr.bf16.gmra.mrb[0].mxu0 %v1419
        %v1788 = vpop.f32.mrb[0].mxu0
        %v1789 = vadd.f32 %v1027, %v1788
        %v1790 = vpop.f32.mrb[0].mxu0
        %v1791 = vpop.f32.mrb[0].mxu0
        %v1792 = vadd.f32 %v1030, %v1791
        %v1793 = vpop.f32.mrb[0].mxu0
        %1794 = vmatprep.mubr.bf16.mxu0 0
        %1795 = vmatmul.mubr.bf16.gmra.mrb[0].mxu0 %v1422
        %v1796 = vpop.f32.mrb[0].mxu0
        %v1797 = vadd.f32 %v1035, %v1796
        %v1798 = vpop.f32.mrb[0].mxu0
        %v1799 = vpop.f32.mrb[0].mxu0
        %v1800 = vadd.f32 %v1038, %v1799
        %v1801 = vpop.f32.mrb[0].mxu0
        %1802 = vmatprep.mubr.bf16.mxu0 0
        %1803 = vmatmul.mubr.bf16.gmra.mrb[0].mxu0 %v1425
        %v1804 = vpop.f32.mrb[0].mxu0
        %v1805 = vadd.f32 %v1043, %v1804
        %v1806 = vpop.f32.mrb[0].mxu0
        %v1807 = vpop.f32.mrb[0].mxu0
        %v1808 = vadd.f32 %v1046, %v1807
        %v1809 = vpop.f32.mrb[0].mxu0
        %1810 = vmatprep.mubr.bf16.mxu0 0
        %1811 = vmatmul.mubr.bf16.gmra.mrb[0].mxu0 %v1428
        %v1812 = vpop.f32.mrb[0].mxu0
        %v1813 = vadd.f32 %v1051, %v1812
        %v1814 = vpop.f32.mrb[0].mxu0
        %v1815 = vpop.f32.mrb[0].mxu0
        %v1816 = vadd.f32 %v1054, %v1815
        %v1817 = vpop.f32.mrb[0].mxu0
        %1818 = vmatprep.mubr.bf16.mxu0 0
        %1819 = vmatmul.mubr.bf16.gmra.mrb[0].mxu0 %v1431
        %v1820 = vpop.f32.mrb[0].mxu0
        %v1821 = vadd.f32 %v1059, %v1820
        %v1822 = vpop.f32.mrb[0].mxu0
        %v1823 = vpop.f32.mrb[0].mxu0
        %v1824 = vadd.f32 %v1062, %v1823
        %v1825 = vpop.f32.mrb[0].mxu0
        %1826 = vmatprep.mubr.bf16.mxu0 0
        %1827 = vmatmul.mubr.bf16.gmra.mrb[0].mxu0 %v1434
        %v1828 = vpop.f32.mrb[0].mxu0
        %v1829 = vadd.f32 %v1067, %v1828
        %v1830 = vpop.f32.mrb[0].mxu0
        %v1831 = vpop.f32.mrb[0].mxu0
        %v1832 = vadd.f32 %v1070, %v1831
        %v1833 = vpop.f32.mrb[0].mxu0
        %1834 = vmatprep.mubr.bf16.mxu0 0
        %1835 = vmatmul.mubr.bf16.gmra.mrb[0].mxu0 %v1437
        %v1836 = vpop.f32.mrb[0].mxu0
        %v1837 = vadd.f32 %v1075, %v1836
        %v1838 = vpop.f32.mrb[0].mxu0
        %v1839 = vpop.f32.mrb[0].mxu0
        %v1840 = vadd.f32 %v1078, %v1839
        %v1841 = vpop.f32.mrb[0].mxu0
        %1842 = vmatprep.mubr.bf16.mxu0 0
        %1843 = vmatmul.mubr.bf16.gmra.mrb[0].mxu0 %v1440
        %v1844 = vpop.f32.mrb[0].mxu0
        %v1845 = vadd.f32 %v1083, %v1844
        %v1846 = vpop.f32.mrb[0].mxu0
        %v1847 = vpop.f32.mrb[0].mxu0
        %v1848 = vadd.f32 %v1086, %v1847
        %v1849 = vpop.f32.mrb[0].mxu0
        %1850 = vmatprep.mubr.bf16.mxu0 0
        %1851 = vmatmul.mubr.bf16.gmra.mrb[0].mxu0 %v1443
        %v1852 = vpop.f32.mrb[0].mxu0
        %v1853 = vadd.f32 %v1091, %v1852
        %v1854 = vpop.f32.mrb[0].mxu0
        %v1855 = vpop.f32.mrb[0].mxu0
        %v1856 = vadd.f32 %v1094, %v1855
        %v1857 = vpop.f32.mrb[0].mxu0
        %1858 = vmatprep.mubr.bf16.mxu0 0
        %1859 = vmatmul.mubr.bf16.gmra.mrb[0].mxu0 %v1446
        %v1860 = vpop.f32.mrb[0].mxu0
        %v1861 = vadd.f32 %v1099, %v1860
        %v1862 = vpop.f32.mrb[0].mxu0
        %v1863 = vpop.f32.mrb[0].mxu0
        %v1864 = vadd.f32 %v1102, %v1863
        %v1865 = vpop.f32.mrb[0].mxu0
        %1866 = vmatprep.mubr.bf16.mxu0 0
        %1867 = vmatmul.mubr.bf16.gmra.mrb[0].mxu0 %v1449
        %v1868 = vpop.f32.mrb[0].mxu0
        %v1869 = vadd.f32 %v1107, %v1868
        %v1870 = vpop.f32.mrb[0].mxu0
        %v1871 = vpop.f32.mrb[0].mxu0
        %v1872 = vadd.f32 %v1110, %v1871
        %v1873 = vpop.f32.mrb[0].mxu0
        %1874 = vmatprep.mubr.bf16.mxu0 0
        %1875 = vmatmul.mubr.bf16.gmra.mrb[0].mxu0 %v1452
        %v1876 = vpop.f32.mrb[0].mxu0
        %v1877 = vadd.f32 %v1115, %v1876
        %v1878 = vpop.f32.mrb[0].mxu0
        %v1879 = vpop.f32.mrb[0].mxu0
        %v1880 = vadd.f32 %v1118, %v1879
        %v1881 = vpop.f32.mrb[0].mxu0
        %1882 = vmatprep.mubr.bf16.mxu0 0
        %1883 = vmatmul.mubr.bf16.gmra.mrb[0].mxu0 %v1455
        %v1884 = vpop.f32.mrb[0].mxu0
        %v1885 = vadd.f32 %v1123, %v1884
        %v1886 = vpop.f32.mrb[0].mxu0
        %v1887 = vpop.f32.mrb[0].mxu0
        %v1888 = vadd.f32 %v1126, %v1887
        %v1889 = vpop.f32.mrb[0].mxu0
        %1890 = vmatprep.mubr.bf16.mxu0 0
        %1891 = vmatmul.mubr.bf16.gmra.mrb[0].mxu0 %v1458
        %v1892 = vpop.f32.mrb[0].mxu0
        %v1893 = vadd.f32 %v1131, %v1892
        %v1894 = vpop.f32.mrb[0].mxu0
        %v1895 = vpop.f32.mrb[0].mxu0
        %v1896 = vadd.f32 %v1134, %v1895
        %v1897 = vpop.f32.mrb[0].mxu0
        %1898 = vmatprep.mubr.bf16.mxu0 0
        %1899 = vmatmul.mubr.bf16.gmra.mrb[0].mxu0 %v1461
        %v1900 = vpop.f32.mrb[0].mxu0
        %v1901 = vadd.f32 %v1139, %v1900
        %v1902 = vpop.f32.mrb[0].mxu0
        %v1903 = vpop.f32.mrb[0].mxu0
        %v1904 = vadd.f32 %v1142, %v1903
        %v1905 = vpop.f32.mrb[0].mxu0
        %1906 = vmatprep.mubr.bf16.mxu0 0
        %1907 = vmatmul.mubr.bf16.gmra.mrb[0].mxu0 %v1464
        %v1908 = vpop.f32.mrb[0].mxu0
        %v1909 = vadd.f32 %v1147, %v1908
        %v1910 = vpop.f32.mrb[0].mxu0
        %v1911 = vpop.f32.mrb[0].mxu0
        %v1912 = vadd.f32 %v1150, %v1911
        %v1913 = vpop.f32.mrb[0].mxu0
        %1914 = vmatprep.mubr.bf16.mxu0 0
        %1915 = vmatmul.mubr.bf16.gmra.mrb[0].mxu0 %v1467
        %v1916 = vpop.f32.mrb[0].mxu0
        %v1917 = vadd.f32 %v1155, %v1916
        %v1918 = vpop.f32.mrb[0].mxu0
        %v1919 = vpop.f32.mrb[0].mxu0
        %v1920 = vadd.f32 %v1158, %v1919
        %v1921 = vpop.f32.mrb[0].mxu0
        %1922 = vmatprep.mubr.bf16.mxu0 0
        %1923 = vmatmul.mubr.bf16.gmra.mrb[0].mxu0 %v1470
        %v1924 = vpop.f32.mrb[0].mxu0
        %v1925 = vadd.f32 %v1163, %v1924
        %v1926 = vpop.f32.mrb[0].mxu0
        %v1927 = vpop.f32.mrb[0].mxu0
        %v1928 = vadd.f32 %v1166, %v1927
        %v1929 = vpop.f32.mrb[0].mxu0
        %1930 = vmatprep.mubr.bf16.mxu0 0
        %1931 = vmatmul.mubr.bf16.gmra.mrb[0].mxu0 %v1473
        %v1932 = vpop.f32.mrb[0].mxu0
        %v1933 = vadd.f32 %v1171, %v1932
        %v1934 = vpop.f32.mrb[0].mxu0
        %v1935 = vpop.f32.mrb[0].mxu0
        %v1936 = vadd.f32 %v1174, %v1935
        %v1937 = vpop.f32.mrb[0].mxu0
        %1938 = vmatprep.mubr.bf16.mxu0 0
        %1939 = vmatmul.mubr.bf16.gmra.mrb[0].mxu0 %v1476
        %v1940 = vpop.f32.mrb[0].mxu0
        %v1941 = vadd.f32 %v1179, %v1940
        %v1942 = vpop.f32.mrb[0].mxu0
        %v1943 = vpop.f32.mrb[0].mxu0
        %v1944 = vadd.f32 %v1182, %v1943
        %v1945 = vpop.f32.mrb[0].mxu0
        %1946 = vmatprep.mubr.bf16.mxu0 0
        %1947 = vmatmul.mubr.bf16.gmra.mrb[0].mxu0 %v1479
        %v1948 = vpop.f32.mrb[0].mxu0
        %v1949 = vadd.f32 %v1187, %v1948
        %v1950 = vpop.f32.mrb[0].mxu0
        %v1951 = vpop.f32.mrb[0].mxu0
        %v1952 = vadd.f32 %v1190, %v1951
        %v1953 = vpop.f32.mrb[0].mxu0
        %1954 = vmatprep.mubr.bf16.mxu0 0
        %1955 = vmatmul.mubr.bf16.gmra.mrb[0].mxu0 %v1482
        %v1956 = vpop.f32.mrb[0].mxu0
        %v1957 = vadd.f32 %v1195, %v1956
        %v1958 = vpop.f32.mrb[0].mxu0
        %v1959 = vpop.f32.mrb[0].mxu0
        %v1960 = vadd.f32 %v1198, %v1959
        %v1961 = vpop.f32.mrb[0].mxu0
        %1962 = vmatprep.mubr.bf16.mxu0 0
        %1963 = vmatmul.mubr.bf16.gmra.mrb[0].mxu0 %v1485
        %v1964 = vpop.f32.mrb[0].mxu0
        %v1965 = vadd.f32 %v1203, %v1964
        %v1966 = vpop.f32.mrb[0].mxu0
        %v1967 = vpop.f32.mrb[0].mxu0
        %v1968 = vadd.f32 %v1206, %v1967
        %v1969 = vpop.f32.mrb[0].mxu0
        %1970 = vmatprep.mubr.bf16.mxu0 0
        %1971 = vmatmul.mubr.bf16.gmra.mrb[0].mxu0 %v1488
        %v1972 = vpop.f32.mrb[0].mxu0
        %v1973 = vadd.f32 %v1211, %v1972
        %v1974 = vpop.f32.mrb[0].mxu0
        %v1975 = vpop.f32.mrb[0].mxu0
        %v1976 = vadd.f32 %v1214, %v1975
        %v1977 = vpop.f32.mrb[0].mxu0
        %1978 = vmatprep.mubr.bf16.mxu0 0
        %1979 = vmatmul.mubr.bf16.gmra.mrb[0].mxu0 %v1491
        %v1980 = vpop.f32.mrb[0].mxu0
        %v1981 = vadd.f32 %v1219, %v1980
        %v1982 = vpop.f32.mrb[0].mxu0
        %v1983 = vpop.f32.mrb[0].mxu0
        %v1984 = vadd.f32 %v1222, %v1983
        %v1985 = vpop.f32.mrb[0].mxu0
        %1986 = vmatprep.mubr.bf16.mxu0 0
        %1987 = vmatmul.mubr.bf16.gmra.mrb[0].mxu0 %v1494
        %v1988 = vpop.f32.mrb[0].mxu0
        %v1989 = vadd.f32 %v1227, %v1988
        %v1990 = vpop.f32.mrb[0].mxu0
        %v1991 = vpop.f32.mrb[0].mxu0
        %v1992 = vadd.f32 %v1230, %v1991
        %v1993 = vpop.f32.mrb[0].mxu0
        %1994 = vmatprep.mubr.bf16.mxu0 0
        %1995 = vmatmul.mubr.bf16.gmra.mrb[0].mxu0 %v1497
        %v1996 = vpop.f32.mrb[0].mxu0
        %v1997 = vadd.f32 %v1235, %v1996
        %v1998 = vpop.f32.mrb[0].mxu0
        %v1999 = vpop.f32.mrb[0].mxu0
        %v2000 = vadd.f32 %v1238, %v1999
        %v2001 = vpop.f32.mrb[0].mxu0
        %2002 = vmatprep.mubr.bf16.mxu0 0
        %2003 = vmatmul.mubr.bf16.gmra.mrb[0].mxu0 %v1500
        %v2004 = vpop.f32.mrb[0].mxu0
        %v2005 = vadd.f32 %v1243, %v2004
        %v2006 = vpop.f32.mrb[0].mxu0
        %v2007 = vpop.f32.mrb[0].mxu0
        %v2008 = vadd.f32 %v1246, %v2007
        %v2009 = vpop.f32.mrb[0].mxu0
        %2010 = vmatprep.mubr.bf16.mxu0 0
        %2011 = vmatmul.mubr.bf16.gmra.mrb[0].mxu0 %v1503
        %v2012 = vpop.f32.mrb[0].mxu0
        %v2013 = vadd.f32 %v1251, %v2012
        %v2014 = vpop.f32.mrb[0].mxu0
        %v2015 = vpop.f32.mrb[0].mxu0
        %v2016 = vadd.f32 %v1254, %v2015
        %v2017 = vpop.f32.mrb[0].mxu0
        %2018 = vmatprep.mubr.bf16.mxu0 0
        %2019 = vmatmul.mubr.bf16.gmra.mrb[0].mxu0 %v1506
        %v2020 = vpop.f32.mrb[0].mxu0
        %v2021 = vadd.f32 %v1259, %v2020
        %v2022 = vpop.f32.mrb[0].mxu0
        %v2023 = vpop.f32.mrb[0].mxu0
        %v2024 = vadd.f32 %v1262, %v2023
        %v2025 = vpop.f32.mrb[0].mxu0
        %2026 = vmatprep.mubr.bf16.mxu0 0
        %2027 = vmatmul.mubr.bf16.gmra.mrb[0].mxu0 %v1509
        %v2028 = vpop.f32.mrb[0].mxu0
        %v2029 = vadd.f32 %v1267, %v2028
        %v2030 = vpop.f32.mrb[0].mxu0
        %v2031 = vpop.f32.mrb[0].mxu0
        %v2032 = vadd.f32 %v1270, %v2031
        %v2033 = vpop.f32.mrb[0].mxu0
        %2034 = vmatprep.mubr.bf16.mxu0 0
        %2035 = vmatmul.mubr.bf16.gmra.mrb[0].mxu0 %v1512
        %v2036 = vpop.f32.mrb[0].mxu0
        %v2037 = vadd.f32 %v1275, %v2036
        %v2038 = vpop.f32.mrb[0].mxu0
        %v2039 = vpop.f32.mrb[0].mxu0
        %v2040 = vadd.f32 %v1278, %v2039
        %v2041 = vpop.f32.mrb[0].mxu0
        %2042 = vmatprep.mubr.bf16.mxu0 0
        %2043 = vmatmul.mubr.bf16.gmra.mrb[0].mxu0 %v1515
        %v2044 = vpop.f32.mrb[0].mxu0
        %v2045 = vadd.f32 %v1283, %v2044
        %v2046 = vpop.f32.mrb[0].mxu0
        %v2047 = vpop.f32.mrb[0].mxu0
        %v2048 = vadd.f32 %v1286, %v2047
        %v2049 = vpop.f32.mrb[0].mxu0
        %2050 = vmatprep.mubr.bf16.mxu0 0
        %2051 = vmatmul.mubr.bf16.gmra.mrb[0].mxu0 %v1518
        %v2052 = vpop.f32.mrb[0].mxu0
        %v2053 = vadd.f32 %v1291, %v2052
        %v2054 = vpop.f32.mrb[0].mxu0
        %v2055 = vpop.f32.mrb[0].mxu0
        %v2056 = vadd.f32 %v1294, %v2055
        %v2057 = vpop.f32.mrb[0].mxu0
        %2058 = vmatprep.mubr.bf16.mxu0 0
        %2059 = vmatmul.mubr.bf16.gmra.mrb[0].mxu0 %v1521
        %v2060 = vpop.f32.mrb[0].mxu0
        %v2061 = vadd.f32 %v1299, %v2060
        %v2062 = vpop.f32.mrb[0].mxu0
        %v2063 = vpop.f32.mrb[0].mxu0
        %v2064 = vadd.f32 %v1302, %v2063
        %v2065 = vpop.f32.mrb[0].mxu0
        %2066 = vmatprep.mubr.bf16.mxu0 0
        %2067 = vmatmul.mubr.bf16.gmra.mrb[0].mxu0 %v1524
        %v2068 = vpop.f32.mrb[0].mxu0
        %v2069 = vadd.f32 %v1307, %v2068
        %v2070 = vpop.f32.mrb[0].mxu0
        %v2071 = vpop.f32.mrb[0].mxu0
        %v2072 = vadd.f32 %v1310, %v2071
        %v2073 = vpop.f32.mrb[0].mxu0
        %2074 = vmatprep.mubr.bf16.mxu0 0
        %2075 = vmatmul.mubr.bf16.gmra.mrb[0].mxu0 %v1527
        %v2076 = vpop.f32.mrb[0].mxu0
        %v2077 = vadd.f32 %v1315, %v2076
        %v2078 = vpop.f32.mrb[0].mxu0
        %v2079 = vpop.f32.mrb[0].mxu0
        %v2080 = vadd.f32 %v1318, %v2079
        %v2081 = vpop.f32.mrb[0].mxu0
        %2082 = vmatprep.mubr.bf16.mxu0 0
        %2083 = vmatmul.mubr.bf16.gmra.mrb[0].mxu0 %v1530
        %v2084 = vpop.f32.mrb[0].mxu0
        %v2085 = vadd.f32 %v1323, %v2084
        %v2086 = vpop.f32.mrb[0].mxu0
        %v2087 = vpop.f32.mrb[0].mxu0
        %v2088 = vadd.f32 %v1326, %v2087
        %v2089 = vpop.f32.mrb[0].mxu0
        %2090 = vmatprep.mubr.bf16.mxu0 0
        %2091 = vmatmul.mubr.bf16.gmra.mrb[0].mxu0 %v1533
        %v2092 = vpop.f32.mrb[0].mxu0
        %v2093 = vadd.f32 %v1331, %v2092
        %v2094 = vpop.f32.mrb[0].mxu0
        %v2095 = vpop.f32.mrb[0].mxu0
        %v2096 = vadd.f32 %v1334, %v2095
        %v2097 = vpop.f32.mrb[0].mxu0
        %2098 = vdwg.mxu0
        %v2099 = vld [vmem:[%s168 + $0x1] sm:$0xff]
        %v2100 = vld [vmem:[%s168 + $0x9] sm:$0xff]
        %v2101 = vld [vmem:[%s168 + $0x11] sm:$0xff]
        %v2102 = vld [vmem:[%s168 + $0x19] sm:$0xff]
        %v2103 = vld [vmem:[%s168 + $0x21] sm:$0xff]
        %v2104 = vld [vmem:[%s168 + $0x29] sm:$0xff]
        %v2105 = vld [vmem:[%s168 + $0x31] sm:$0xff]
        %v2106 = vld [vmem:[%s168 + $0x39] sm:$0xff]
        %v2107 = vld [vmem:[%s168 + $0x41] sm:$0xff]
        %v2108 = vld [vmem:[%s168 + $0x49] sm:$0xff]
        %v2109 = vld [vmem:[%s168 + $0x51] sm:$0xff]
        %v2110 = vld [vmem:[%s168 + $0x59] sm:$0xff]
        %v2111 = vld [vmem:[%s168 + $0x61] sm:$0xff]
        %v2112 = vld [vmem:[%s168 + $0x69] sm:$0xff]
        %v2113 = vld [vmem:[%s168 + $0x71] sm:$0xff]
        %v2114 = vld [vmem:[%s168 + $0x79] sm:$0xff]
        %v2115 = vld [vmem:[%s168 + $0x81] sm:$0xff]
        %v2116 = vld [vmem:[%s168 + $0x89] sm:$0xff]
        %v2117 = vld [vmem:[%s168 + $0x91] sm:$0xff]
        %v2118 = vld [vmem:[%s168 + $0x99] sm:$0xff]
        %v2119 = vld [vmem:[%s168 + $0xa1] sm:$0xff]
        %v2120 = vld [vmem:[%s168 + $0xa9] sm:$0xff]
        %v2121 = vld [vmem:[%s168 + $0xb1] sm:$0xff]
        %v2122 = vld [vmem:[%s168 + $0xb9] sm:$0xff]
        %v2123 = vld [vmem:[%s168 + $0xc1] sm:$0xff]
        %v2124 = vld [vmem:[%s168 + $0xc9] sm:$0xff]
        %v2125 = vld [vmem:[%s168 + $0xd1] sm:$0xff]
        %v2126 = vld [vmem:[%s168 + $0xd9] sm:$0xff]
        %v2127 = vld [vmem:[%s168 + $0xe1] sm:$0xff]
        %v2128 = vld [vmem:[%s168 + $0xe9] sm:$0xff]
        %v2129 = vld [vmem:[%s168 + $0xf1] sm:$0xff]
        %v2130 = vld [vmem:[%s168 + $0xf9] sm:$0xff]
        %v2131 = vld [vmem:[%s168 + $0x101] sm:$0xff]
        %v2132 = vld [vmem:[%s168 + $0x109] sm:$0xff]
        %v2133 = vld [vmem:[%s168 + $0x111] sm:$0xff]
        %v2134 = vld [vmem:[%s168 + $0x119] sm:$0xff]
        %v2135 = vld [vmem:[%s168 + $0x121] sm:$0xff]
        %v2136 = vld [vmem:[%s168 + $0x129] sm:$0xff]
        %v2137 = vld [vmem:[%s168 + $0x131] sm:$0xff]
        %v2138 = vld [vmem:[%s168 + $0x139] sm:$0xff]
        %v2139 = vld [vmem:[%s168 + $0x141] sm:$0xff]
        %v2140 = vld [vmem:[%s168 + $0x149] sm:$0xff]
        %v2141 = vld [vmem:[%s168 + $0x151] sm:$0xff]
        %v2142 = vld [vmem:[%s168 + $0x159] sm:$0xff]
        %v2143 = vld [vmem:[%s168 + $0x161] sm:$0xff]
        %v2144 = vld [vmem:[%s168 + $0x169] sm:$0xff]
        %v2145 = vld [vmem:[%s168 + $0x171] sm:$0xff]
        %v2146 = vld [vmem:[%s168 + $0x179] sm:$0xff]
        %v2147 = vld [vmem:[%s168 + $0x181] sm:$0xff]
        %v2148 = vld [vmem:[%s168 + $0x189] sm:$0xff]
        %v2149 = vld [vmem:[%s168 + $0x191] sm:$0xff]
        %v2150 = vld [vmem:[%s168 + $0x199] sm:$0xff]
        %v2151 = vld [vmem:[%s168 + $0x1a1] sm:$0xff]
        %v2152 = vld [vmem:[%s168 + $0x1a9] sm:$0xff]
        %v2153 = vld [vmem:[%s168 + $0x1b1] sm:$0xff]
        %v2154 = vld [vmem:[%s168 + $0x1b9] sm:$0xff]
        %v2155 = vld [vmem:[%s168 + $0x1c1] sm:$0xff]
        %v2156 = vld [vmem:[%s168 + $0x1c9] sm:$0xff]
        %v2157 = vld [vmem:[%s168 + $0x1d1] sm:$0xff]
        %v2158 = vld [vmem:[%s168 + $0x1d9] sm:$0xff]
        %v2159 = vld [vmem:[%s168 + $0x1e1] sm:$0xff]
        %v2160 = vld [vmem:[%s168 + $0x1e9] sm:$0xff]
        %v2161 = vld [vmem:[%s168 + $0x1f1] sm:$0xff]
        %v2162 = vld [vmem:[%s168 + $0x1f9] sm:$0xff]
        %v2163 = vld [vmem:[%s168 + $0x201] sm:$0xff]
        %v2164 = vld [vmem:[%s168 + $0x209] sm:$0xff]
        %v2165 = vld [vmem:[%s168 + $0x211] sm:$0xff]
        %v2166 = vld [vmem:[%s168 + $0x219] sm:$0xff]
        %v2167 = vld [vmem:[%s168 + $0x221] sm:$0xff]
        %v2168 = vld [vmem:[%s168 + $0x229] sm:$0xff]
        %v2169 = vld [vmem:[%s168 + $0x231] sm:$0xff]
        %v2170 = vld [vmem:[%s168 + $0x239] sm:$0xff]
        %v2171 = vld [vmem:[%s168 + $0x241] sm:$0xff]
        %v2172 = vld [vmem:[%s168 + $0x249] sm:$0xff]
        %v2173 = vld [vmem:[%s168 + $0x251] sm:$0xff]
        %v2174 = vld [vmem:[%s168 + $0x259] sm:$0xff]
        %v2175 = vld [vmem:[%s168 + $0x261] sm:$0xff]
        %v2176 = vld [vmem:[%s168 + $0x269] sm:$0xff]
        %v2177 = vld [vmem:[%s168 + $0x271] sm:$0xff]
        %v2178 = vld [vmem:[%s168 + $0x279] sm:$0xff]
        %v2179 = vld [vmem:[%s168 + $0x281] sm:$0xff]
        %v2180 = vld [vmem:[%s168 + $0x289] sm:$0xff]
        %v2181 = vld [vmem:[%s168 + $0x291] sm:$0xff]
        %v2182 = vld [vmem:[%s168 + $0x299] sm:$0xff]
        %v2183 = vld [vmem:[%s168 + $0x2a1] sm:$0xff]
        %v2184 = vld [vmem:[%s168 + $0x2a9] sm:$0xff]
        %v2185 = vld [vmem:[%s168 + $0x2b1] sm:$0xff]
        %v2186 = vld [vmem:[%s168 + $0x2b9] sm:$0xff]
        %v2187 = vld [vmem:[%s168 + $0x2c1] sm:$0xff]
        %v2188 = vld [vmem:[%s168 + $0x2c9] sm:$0xff]
        %v2189 = vld [vmem:[%s168 + $0x2d1] sm:$0xff]
        %v2190 = vld [vmem:[%s168 + $0x2d9] sm:$0xff]
        %v2191 = vld [vmem:[%s168 + $0x2e1] sm:$0xff]
        %v2192 = vld [vmem:[%s168 + $0x2e9] sm:$0xff]
        %v2193 = vld [vmem:[%s168 + $0x2f1] sm:$0xff]
        %v2194 = vld [vmem:[%s168 + $0x2f9] sm:$0xff]
        %v2195 = vld [vmem:[%s168 + $0x301] sm:$0xff]
        %v2196 = vld [vmem:[%s168 + $0x309] sm:$0xff]
        %v2197 = vld [vmem:[%s168 + $0x311] sm:$0xff]
        %v2198 = vld [vmem:[%s168 + $0x319] sm:$0xff]
        %v2199 = vld [vmem:[%s168 + $0x321] sm:$0xff]
        %v2200 = vld [vmem:[%s168 + $0x329] sm:$0xff]
        %v2201 = vld [vmem:[%s168 + $0x331] sm:$0xff]
        %v2202 = vld [vmem:[%s168 + $0x339] sm:$0xff]
        %v2203 = vld [vmem:[%s168 + $0x341] sm:$0xff]
        %v2204 = vld [vmem:[%s168 + $0x349] sm:$0xff]
        %v2205 = vld [vmem:[%s168 + $0x351] sm:$0xff]
        %v2206 = vld [vmem:[%s168 + $0x359] sm:$0xff]
        %v2207 = vld [vmem:[%s168 + $0x361] sm:$0xff]
        %v2208 = vld [vmem:[%s168 + $0x369] sm:$0xff]
        %v2209 = vld [vmem:[%s168 + $0x371] sm:$0xff]
        %v2210 = vld [vmem:[%s168 + $0x379] sm:$0xff]
        %v2211 = vld [vmem:[%s168 + $0x381] sm:$0xff]
        %v2212 = vld [vmem:[%s168 + $0x389] sm:$0xff]
        %v2213 = vld [vmem:[%s168 + $0x391] sm:$0xff]
        %v2214 = vld [vmem:[%s168 + $0x399] sm:$0xff]
        %v2215 = vld [vmem:[%s168 + $0x3a1] sm:$0xff]
        %v2216 = vld [vmem:[%s168 + $0x3a9] sm:$0xff]
        %v2217 = vld [vmem:[%s168 + $0x3b1] sm:$0xff]
        %v2218 = vld [vmem:[%s168 + $0x3b9] sm:$0xff]
        %v2219 = vld [vmem:[%s168 + $0x3c1] sm:$0xff]
        %v2220 = vld [vmem:[%s168 + $0x3c9] sm:$0xff]
        %v2221 = vld [vmem:[%s168 + $0x3d1] sm:$0xff]
        %v2222 = vld [vmem:[%s168 + $0x3d9] sm:$0xff]
        %v2223 = vld [vmem:[%s168 + $0x3e1] sm:$0xff]
        %v2224 = vld [vmem:[%s168 + $0x3e9] sm:$0xff]
        %v2225 = vld [vmem:[%s168 + $0x3f1] sm:$0xff]
        %v2226 = vld [vmem:[%s168 + $0x3f9] sm:$0xff]
        %v2227 = vld [vmem:[%s168 + $0x401] sm:$0xff]
        %v2228 = vld [vmem:[%s168 + $0x409] sm:$0xff]
        %v2229 = vld [vmem:[%s168 + $0x411] sm:$0xff]
        %v2230 = vld [vmem:[%s168 + $0x419] sm:$0xff]
        %v2231 = vpack.c.bf16 %v2100, %v2099
        %v2232 = vpack.c.bf16 %v2102, %v2101
        %v2233 = vpack.c.bf16 %v2104, %v2103
        %v2234 = vpack.c.bf16 %v2106, %v2105
        %v2235 = vpack.c.bf16 %v2108, %v2107
        %v2236 = vpack.c.bf16 %v2110, %v2109
        %v2237 = vpack.c.bf16 %v2112, %v2111
        %v2238 = vpack.c.bf16 %v2114, %v2113
        %v2239 = vpack.c.bf16 %v2116, %v2115
        %v2240 = vpack.c.bf16 %v2118, %v2117
        %v2241 = vpack.c.bf16 %v2120, %v2119
        %v2242 = vpack.c.bf16 %v2122, %v2121
        %v2243 = vpack.c.bf16 %v2124, %v2123
        %v2244 = vpack.c.bf16 %v2126, %v2125
        %v2245 = vpack.c.bf16 %v2128, %v2127
        %v2246 = vpack.c.bf16 %v2130, %v2129
        %v2247 = vpack.c.bf16 %v2132, %v2131
        %v2248 = vpack.c.bf16 %v2134, %v2133
        %v2249 = vpack.c.bf16 %v2136, %v2135
        %v2250 = vpack.c.bf16 %v2138, %v2137
        %v2251 = vpack.c.bf16 %v2140, %v2139
        %v2252 = vpack.c.bf16 %v2142, %v2141
        %v2253 = vpack.c.bf16 %v2144, %v2143
        %v2254 = vpack.c.bf16 %v2146, %v2145
        %v2255 = vpack.c.bf16 %v2148, %v2147
        %v2256 = vpack.c.bf16 %v2150, %v2149
        %v2257 = vpack.c.bf16 %v2152, %v2151
        %v2258 = vpack.c.bf16 %v2154, %v2153
        %v2259 = vpack.c.bf16 %v2156, %v2155
        %v2260 = vpack.c.bf16 %v2158, %v2157
        %v2261 = vpack.c.bf16 %v2160, %v2159
        %v2262 = vpack.c.bf16 %v2162, %v2161
        %v2263 = vpack.c.bf16 %v2164, %v2163
        %v2264 = vpack.c.bf16 %v2166, %v2165
        %v2265 = vpack.c.bf16 %v2168, %v2167
        %v2266 = vpack.c.bf16 %v2170, %v2169
        %v2267 = vpack.c.bf16 %v2172, %v2171
        %v2268 = vpack.c.bf16 %v2174, %v2173
        %v2269 = vpack.c.bf16 %v2176, %v2175
        %v2270 = vpack.c.bf16 %v2178, %v2177
        %v2271 = vpack.c.bf16 %v2180, %v2179
        %v2272 = vpack.c.bf16 %v2182, %v2181
        %v2273 = vpack.c.bf16 %v2184, %v2183
        %v2274 = vpack.c.bf16 %v2186, %v2185
        %v2275 = vpack.c.bf16 %v2188, %v2187
        %v2276 = vpack.c.bf16 %v2190, %v2189
        %v2277 = vpack.c.bf16 %v2192, %v2191
        %v2278 = vpack.c.bf16 %v2194, %v2193
        %v2279 = vpack.c.bf16 %v2196, %v2195
        %v2280 = vpack.c.bf16 %v2198, %v2197
        %v2281 = vpack.c.bf16 %v2200, %v2199
        %v2282 = vpack.c.bf16 %v2202, %v2201
        %v2283 = vpack.c.bf16 %v2204, %v2203
        %v2284 = vpack.c.bf16 %v2206, %v2205
        %v2285 = vpack.c.bf16 %v2208, %v2207
        %v2286 = vpack.c.bf16 %v2210, %v2209
        %v2287 = vpack.c.bf16 %v2212, %v2211
        %v2288 = vpack.c.bf16 %v2214, %v2213
        %v2289 = vpack.c.bf16 %v2216, %v2215
        %v2290 = vpack.c.bf16 %v2218, %v2217
        %v2291 = vpack.c.bf16 %v2220, %v2219
        %v2292 = vpack.c.bf16 %v2222, %v2221
        %v2293 = vpack.c.bf16 %v2224, %v2223
        %v2294 = vpack.c.bf16 %v2226, %v2225
        %v2295 = vpack.c.bf16 %v2228, %v2227
        %v2296 = vpack.c.bf16 %v2230, %v2229
        %s2297 = scalar_lea.vmem %s1, 4
        %v2298 = vld [vmem:[%s2297] sm:$0x3]
        %v2300 = vsel %vm570, %v2231, 0
        %v2303 = vsel %vm570, %v2232, 0
        %v2306 = vsel %vm570, %v2233, 0
        %v2309 = vsel %vm570, %v2234, 0
        %v2312 = vsel %vm570, %v2235, 0
        %v2315 = vsel %vm570, %v2236, 0
        %v2318 = vsel %vm570, %v2237, 0
        %v2321 = vsel %vm570, %v2238, 0
        %v2324 = vsel %vm570, %v2239, 0
        %v2327 = vsel %vm570, %v2240, 0
        %v2330 = vsel %vm570, %v2241, 0
        %v2333 = vsel %vm570, %v2242, 0
        %v2336 = vsel %vm570, %v2243, 0
        %v2339 = vsel %vm570, %v2244, 0
        %v2342 = vsel %vm570, %v2245, 0
        %v2345 = vsel %vm570, %v2246, 0
        %v2348 = vsel %vm570, %v2247, 0
        %v2351 = vsel %vm570, %v2248, 0
        %v2354 = vsel %vm570, %v2249, 0
        %v2357 = vsel %vm570, %v2250, 0
        %v2360 = vsel %vm570, %v2251, 0
        %v2363 = vsel %vm570, %v2252, 0
        %v2366 = vsel %vm570, %v2253, 0
        %v2369 = vsel %vm570, %v2254, 0
        %v2372 = vsel %vm570, %v2255, 0
        %v2375 = vsel %vm570, %v2256, 0
        %v2378 = vsel %vm570, %v2257, 0
        %v2381 = vsel %vm570, %v2258, 0
        %v2384 = vsel %vm570, %v2259, 0
        %v2387 = vsel %vm570, %v2260, 0
        %v2390 = vsel %vm570, %v2261, 0
        %v2393 = vsel %vm570, %v2262, 0
        %v2396 = vsel %vm570, %v2263, 0
        %v2399 = vsel %vm570, %v2264, 0
        %v2402 = vsel %vm570, %v2265, 0
        %v2405 = vsel %vm570, %v2266, 0
        %v2408 = vsel %vm570, %v2267, 0
        %v2411 = vsel %vm570, %v2268, 0
        %v2414 = vsel %vm570, %v2269, 0
        %v2417 = vsel %vm570, %v2270, 0
        %v2420 = vsel %vm570, %v2271, 0
        %v2423 = vsel %vm570, %v2272, 0
        %v2426 = vsel %vm570, %v2273, 0
        %v2429 = vsel %vm570, %v2274, 0
        %v2432 = vsel %vm570, %v2275, 0
        %v2435 = vsel %vm570, %v2276, 0
        %v2438 = vsel %vm570, %v2277, 0
        %v2441 = vsel %vm570, %v2278, 0
        %v2444 = vsel %vm570, %v2279, 0
        %v2447 = vsel %vm570, %v2280, 0
        %v2450 = vsel %vm570, %v2281, 0
        %v2453 = vsel %vm570, %v2282, 0
        %v2456 = vsel %vm570, %v2283, 0
        %v2459 = vsel %vm570, %v2284, 0
        %v2462 = vsel %vm570, %v2285, 0
        %v2465 = vsel %vm570, %v2286, 0
        %v2468 = vsel %vm570, %v2287, 0
        %v2471 = vsel %vm570, %v2288, 0
        %v2474 = vsel %vm570, %v2289, 0
        %v2477 = vsel %vm570, %v2290, 0
        %v2480 = vsel %vm570, %v2291, 0
        %v2483 = vsel %vm570, %v2292, 0
        %v2486 = vsel %vm570, %v2293, 0
        %v2489 = vsel %vm570, %v2294, 0
        %v2492 = vsel %vm570, %v2295, 0
        %v2495 = vsel %vm570, %v2296, 0
        %v2498 = vand.u32 %v2298, %v772
        %2500 = vmatprep.subr.bf16.mxu0 0
        %2501 = vmatpush1.bf16.msra.mxu0 %v2498
        %2502 = vmatprep.subr.bf16.mxu0 0
        %2503 = vmatpush1.bf16.msra.mxu0 0
        %2504 = vmatprep.subr.bf16.mxu0 0
        %2505 = vmatpush1.bf16.msra.mxu0 0
        %2506 = vmatprep.subr.bf16.mxu0 0
        %2507 = vmatpush1.bf16.msra.mxu0 0
        %2508 = vmatprep.subr.bf16.mxu0 0
        %2509 = vmatpush1.bf16.msra.mxu0 0
        %2510 = vmatprep.subr.bf16.mxu0 0
        %2511 = vmatpush1.bf16.msra.mxu0 0
        %2512 = vmatprep.subr.bf16.mxu0 0
        %2513 = vmatpush1.bf16.msra.mxu0 0
        %2514 = vmatprep.subr.bf16.mxu0 0
        %2515 = vmatpush1.bf16.msra.mxu0 0
        %2516 = vmatprep.subr.bf16.mxu0 0
        %2517 = vmatpush1.bf16.msra.mxu0 0
        %2518 = vmatprep.subr.bf16.mxu0 0
        %2519 = vmatpush1.bf16.msra.mxu0 0
        %2520 = vmatprep.subr.bf16.mxu0 0
        %2521 = vmatpush1.bf16.msra.mxu0 0
        %2522 = vmatprep.subr.bf16.mxu0 0
        %2523 = vmatpush1.bf16.msra.mxu0 0
        %2524 = vmatprep.subr.bf16.mxu0 0
        %2525 = vmatpush1.bf16.msra.mxu0 0
        %2526 = vmatprep.subr.bf16.mxu0 0
        %2527 = vmatpush1.bf16.msra.mxu0 0
        %2528 = vmatprep.subr.bf16.mxu0 0
        %2529 = vmatpush1.bf16.msra.mxu0 0
        %2530 = vmatprep.subr.bf16.mxu0 0
        %2531 = vmatpush1.bf16.msra.mxu0 0
        %2532 = vmatprep.mubr.bf16.mxu0 0
        %2533 = vmatmul.mubr.bf16.gmra.mrb[0].mxu0 %v2300
        %v2534 = vpop.f32.mrb[0].mxu0
        %v2535 = vadd.f32 0.0, %v2534
        %v2536 = vpop.f32.mrb[0].mxu0
        %v2537 = vpop.f32.mrb[0].mxu0
        %v2538 = vadd.f32 0.0, %v2537
        %v2539 = vpop.f32.mrb[0].mxu0
        %2540 = vmatprep.mubr.bf16.mxu0 0
        %2541 = vmatmul.mubr.bf16.gmra.mrb[0].mxu0 %v2303
        %v2542 = vpop.f32.mrb[0].mxu0
        %v2543 = vadd.f32 0.0, %v2542
        %v2544 = vpop.f32.mrb[0].mxu0
        %v2545 = vpop.f32.mrb[0].mxu0
        %v2546 = vadd.f32 0.0, %v2545
        %v2547 = vpop.f32.mrb[0].mxu0
        %2548 = vmatprep.mubr.bf16.mxu0 0
        %2549 = vmatmul.mubr.bf16.gmra.mrb[0].mxu0 %v2306
        %v2550 = vpop.f32.mrb[0].mxu0
        %v2551 = vadd.f32 0.0, %v2550
        %v2552 = vpop.f32.mrb[0].mxu0
        %v2553 = vpop.f32.mrb[0].mxu0
        %v2554 = vadd.f32 0.0, %v2553
        %v2555 = vpop.f32.mrb[0].mxu0
        %2556 = vmatprep.mubr.bf16.mxu0 0
        %2557 = vmatmul.mubr.bf16.gmra.mrb[0].mxu0 %v2309
        %v2558 = vpop.f32.mrb[0].mxu0
        %v2559 = vadd.f32 0.0, %v2558
        %v2560 = vpop.f32.mrb[0].mxu0
        %v2561 = vpop.f32.mrb[0].mxu0
        %v2562 = vadd.f32 0.0, %v2561
        %v2563 = vpop.f32.mrb[0].mxu0
        %2564 = vmatprep.mubr.bf16.mxu0 0
        %2565 = vmatmul.mubr.bf16.gmra.mrb[0].mxu0 %v2312
        %v2566 = vpop.f32.mrb[0].mxu0
        %v2567 = vadd.f32 0.0, %v2566
        %v2568 = vpop.f32.mrb[0].mxu0
        %v2569 = vpop.f32.mrb[0].mxu0
        %v2570 = vadd.f32 0.0, %v2569
        %v2571 = vpop.f32.mrb[0].mxu0
        %2572 = vmatprep.mubr.bf16.mxu0 0
        %2573 = vmatmul.mubr.bf16.gmra.mrb[0].mxu0 %v2315
        %v2574 = vpop.f32.mrb[0].mxu0
        %v2575 = vadd.f32 0.0, %v2574
        %v2576 = vpop.f32.mrb[0].mxu0
        %v2577 = vpop.f32.mrb[0].mxu0
        %v2578 = vadd.f32 0.0, %v2577
        %v2579 = vpop.f32.mrb[0].mxu0
        %2580 = vmatprep.mubr.bf16.mxu0 0
        %2581 = vmatmul.mubr.bf16.gmra.mrb[0].mxu0 %v2318
        %v2582 = vpop.f32.mrb[0].mxu0
        %v2583 = vadd.f32 0.0, %v2582
        %v2584 = vpop.f32.mrb[0].mxu0
        %v2585 = vpop.f32.mrb[0].mxu0
        %v2586 = vadd.f32 0.0, %v2585
        %v2587 = vpop.f32.mrb[0].mxu0
        %2588 = vmatprep.mubr.bf16.mxu0 0
        %2589 = vmatmul.mubr.bf16.gmra.mrb[0].mxu0 %v2321
        %v2590 = vpop.f32.mrb[0].mxu0
        %v2591 = vadd.f32 0.0, %v2590
        %v2592 = vpop.f32.mrb[0].mxu0
        %v2593 = vpop.f32.mrb[0].mxu0
        %v2594 = vadd.f32 0.0, %v2593
        %v2595 = vpop.f32.mrb[0].mxu0
        %2596 = vmatprep.mubr.bf16.mxu0 0
        %2597 = vmatmul.mubr.bf16.gmra.mrb[0].mxu0 %v2324
        %v2598 = vpop.f32.mrb[0].mxu0
        %v2599 = vadd.f32 0.0, %v2598
        %v2600 = vpop.f32.mrb[0].mxu0
        %v2601 = vpop.f32.mrb[0].mxu0
        %v2602 = vadd.f32 0.0, %v2601
        %v2603 = vpop.f32.mrb[0].mxu0
        %2604 = vmatprep.mubr.bf16.mxu0 0
        %2605 = vmatmul.mubr.bf16.gmra.mrb[0].mxu0 %v2327
        %v2606 = vpop.f32.mrb[0].mxu0
        %v2607 = vadd.f32 0.0, %v2606
        %v2608 = vpop.f32.mrb[0].mxu0
        %v2609 = vpop.f32.mrb[0].mxu0
        %v2610 = vadd.f32 0.0, %v2609
        %v2611 = vpop.f32.mrb[0].mxu0
        %2612 = vmatprep.mubr.bf16.mxu0 0
        %2613 = vmatmul.mubr.bf16.gmra.mrb[0].mxu0 %v2330
        %v2614 = vpop.f32.mrb[0].mxu0
        %v2615 = vadd.f32 0.0, %v2614
        %v2616 = vpop.f32.mrb[0].mxu0
        %v2617 = vpop.f32.mrb[0].mxu0
        %v2618 = vadd.f32 0.0, %v2617
        %v2619 = vpop.f32.mrb[0].mxu0
        %2620 = vmatprep.mubr.bf16.mxu0 0
        %2621 = vmatmul.mubr.bf16.gmra.mrb[0].mxu0 %v2333
        %v2622 = vpop.f32.mrb[0].mxu0
        %v2623 = vadd.f32 0.0, %v2622
        %v2624 = vpop.f32.mrb[0].mxu0
        %v2625 = vpop.f32.mrb[0].mxu0
        %v2626 = vadd.f32 0.0, %v2625
        %v2627 = vpop.f32.mrb[0].mxu0
        %2628 = vmatprep.mubr.bf16.mxu0 0
        %2629 = vmatmul.mubr.bf16.gmra.mrb[0].mxu0 %v2336
        %v2630 = vpop.f32.mrb[0].mxu0
        %v2631 = vadd.f32 0.0, %v2630
        %v2632 = vpop.f32.mrb[0].mxu0
        %v2633 = vpop.f32.mrb[0].mxu0
        %v2634 = vadd.f32 0.0, %v2633
        %v2635 = vpop.f32.mrb[0].mxu0
        %2636 = vmatprep.mubr.bf16.mxu0 0
        %2637 = vmatmul.mubr.bf16.gmra.mrb[0].mxu0 %v2339
        %v2638 = vpop.f32.mrb[0].mxu0
        %v2639 = vadd.f32 0.0, %v2638
        %v2640 = vpop.f32.mrb[0].mxu0
        %v2641 = vpop.f32.mrb[0].mxu0
        %v2642 = vadd.f32 0.0, %v2641
        %v2643 = vpop.f32.mrb[0].mxu0
        %2644 = vmatprep.mubr.bf16.mxu0 0
        %2645 = vmatmul.mubr.bf16.gmra.mrb[0].mxu0 %v2342
        %v2646 = vpop.f32.mrb[0].mxu0
        %v2647 = vadd.f32 0.0, %v2646
        %v2648 = vpop.f32.mrb[0].mxu0
        %v2649 = vpop.f32.mrb[0].mxu0
        %v2650 = vadd.f32 0.0, %v2649
        %v2651 = vpop.f32.mrb[0].mxu0
        %2652 = vmatprep.mubr.bf16.mxu0 0
        %2653 = vmatmul.mubr.bf16.gmra.mrb[0].mxu0 %v2345
        %v2654 = vpop.f32.mrb[0].mxu0
        %v2655 = vadd.f32 0.0, %v2654
        %v2656 = vpop.f32.mrb[0].mxu0
        %v2657 = vpop.f32.mrb[0].mxu0
        %v2658 = vadd.f32 0.0, %v2657
        %v2659 = vpop.f32.mrb[0].mxu0
        %2660 = vmatprep.mubr.bf16.mxu0 0
        %2661 = vmatmul.mubr.bf16.gmra.mrb[0].mxu0 %v2348
        %v2662 = vpop.f32.mrb[0].mxu0
        %v2663 = vadd.f32 0.0, %v2662
        %v2664 = vpop.f32.mrb[0].mxu0
        %v2665 = vpop.f32.mrb[0].mxu0
        %v2666 = vadd.f32 0.0, %v2665
        %v2667 = vpop.f32.mrb[0].mxu0
        %2668 = vmatprep.mubr.bf16.mxu0 0
        %2669 = vmatmul.mubr.bf16.gmra.mrb[0].mxu0 %v2351
        %v2670 = vpop.f32.mrb[0].mxu0
        %v2671 = vadd.f32 0.0, %v2670
        %v2672 = vpop.f32.mrb[0].mxu0
        %v2673 = vpop.f32.mrb[0].mxu0
        %v2674 = vadd.f32 0.0, %v2673
        %v2675 = vpop.f32.mrb[0].mxu0
        %2676 = vmatprep.mubr.bf16.mxu0 0
        %2677 = vmatmul.mubr.bf16.gmra.mrb[0].mxu0 %v2354
        %v2678 = vpop.f32.mrb[0].mxu0
        %v2679 = vadd.f32 0.0, %v2678
        %v2680 = vpop.f32.mrb[0].mxu0
        %v2681 = vpop.f32.mrb[0].mxu0
        %v2682 = vadd.f32 0.0, %v2681
        %v2683 = vpop.f32.mrb[0].mxu0
        %2684 = vmatprep.mubr.bf16.mxu0 0
        %2685 = vmatmul.mubr.bf16.gmra.mrb[0].mxu0 %v2357
        %v2686 = vpop.f32.mrb[0].mxu0
        %v2687 = vadd.f32 0.0, %v2686
        %v2688 = vpop.f32.mrb[0].mxu0
        %v2689 = vpop.f32.mrb[0].mxu0
        %v2690 = vadd.f32 0.0, %v2689
        %v2691 = vpop.f32.mrb[0].mxu0
        %2692 = vmatprep.mubr.bf16.mxu0 0
        %2693 = vmatmul.mubr.bf16.gmra.mrb[0].mxu0 %v2360
        %v2694 = vpop.f32.mrb[0].mxu0
        %v2695 = vadd.f32 0.0, %v2694
        %v2696 = vpop.f32.mrb[0].mxu0
        %v2697 = vpop.f32.mrb[0].mxu0
        %v2698 = vadd.f32 0.0, %v2697
        %v2699 = vpop.f32.mrb[0].mxu0
        %2700 = vmatprep.mubr.bf16.mxu0 0
        %2701 = vmatmul.mubr.bf16.gmra.mrb[0].mxu0 %v2363
        %v2702 = vpop.f32.mrb[0].mxu0
        %v2703 = vadd.f32 0.0, %v2702
        %v2704 = vpop.f32.mrb[0].mxu0
        %v2705 = vpop.f32.mrb[0].mxu0
        %v2706 = vadd.f32 0.0, %v2705
        %v2707 = vpop.f32.mrb[0].mxu0
        %2708 = vmatprep.mubr.bf16.mxu0 0
        %2709 = vmatmul.mubr.bf16.gmra.mrb[0].mxu0 %v2366
        %v2710 = vpop.f32.mrb[0].mxu0
        %v2711 = vadd.f32 0.0, %v2710
        %v2712 = vpop.f32.mrb[0].mxu0
        %v2713 = vpop.f32.mrb[0].mxu0
        %v2714 = vadd.f32 0.0, %v2713
        %v2715 = vpop.f32.mrb[0].mxu0
        %2716 = vmatprep.mubr.bf16.mxu0 0
        %2717 = vmatmul.mubr.bf16.gmra.mrb[0].mxu0 %v2369
        %v2718 = vpop.f32.mrb[0].mxu0
        %v2719 = vadd.f32 0.0, %v2718
        %v2720 = vpop.f32.mrb[0].mxu0
        %v2721 = vpop.f32.mrb[0].mxu0
        %v2722 = vadd.f32 0.0, %v2721
        %v2723 = vpop.f32.mrb[0].mxu0
        %2724 = vmatprep.mubr.bf16.mxu0 0
        %2725 = vmatmul.mubr.bf16.gmra.mrb[0].mxu0 %v2372
        %v2726 = vpop.f32.mrb[0].mxu0
        %v2727 = vadd.f32 0.0, %v2726
        %v2728 = vpop.f32.mrb[0].mxu0
        %v2729 = vpop.f32.mrb[0].mxu0
        %v2730 = vadd.f32 0.0, %v2729
        %v2731 = vpop.f32.mrb[0].mxu0
        %2732 = vmatprep.mubr.bf16.mxu0 0
        %2733 = vmatmul.mubr.bf16.gmra.mrb[0].mxu0 %v2375
        %v2734 = vpop.f32.mrb[0].mxu0
        %v2735 = vadd.f32 0.0, %v2734
        %v2736 = vpop.f32.mrb[0].mxu0
        %v2737 = vpop.f32.mrb[0].mxu0
        %v2738 = vadd.f32 0.0, %v2737
        %v2739 = vpop.f32.mrb[0].mxu0
        %2740 = vmatprep.mubr.bf16.mxu0 0
        %2741 = vmatmul.mubr.bf16.gmra.mrb[0].mxu0 %v2378
        %v2742 = vpop.f32.mrb[0].mxu0
        %v2743 = vadd.f32 0.0, %v2742
        %v2744 = vpop.f32.mrb[0].mxu0
        %v2745 = vpop.f32.mrb[0].mxu0
        %v2746 = vadd.f32 0.0, %v2745
        %v2747 = vpop.f32.mrb[0].mxu0
        %2748 = vmatprep.mubr.bf16.mxu0 0
        %2749 = vmatmul.mubr.bf16.gmra.mrb[0].mxu0 %v2381
        %v2750 = vpop.f32.mrb[0].mxu0
        %v2751 = vadd.f32 0.0, %v2750
        %v2752 = vpop.f32.mrb[0].mxu0
        %v2753 = vpop.f32.mrb[0].mxu0
        %v2754 = vadd.f32 0.0, %v2753
        %v2755 = vpop.f32.mrb[0].mxu0
        %2756 = vmatprep.mubr.bf16.mxu0 0
        %2757 = vmatmul.mubr.bf16.gmra.mrb[0].mxu0 %v2384
        %v2758 = vpop.f32.mrb[0].mxu0
        %v2759 = vadd.f32 0.0, %v2758
        %v2760 = vpop.f32.mrb[0].mxu0
        %v2761 = vpop.f32.mrb[0].mxu0
        %v2762 = vadd.f32 0.0, %v2761
        %v2763 = vpop.f32.mrb[0].mxu0
        %2764 = vmatprep.mubr.bf16.mxu0 0
        %2765 = vmatmul.mubr.bf16.gmra.mrb[0].mxu0 %v2387
        %v2766 = vpop.f32.mrb[0].mxu0
        %v2767 = vadd.f32 0.0, %v2766
        %v2768 = vpop.f32.mrb[0].mxu0
        %v2769 = vpop.f32.mrb[0].mxu0
        %v2770 = vadd.f32 0.0, %v2769
        %v2771 = vpop.f32.mrb[0].mxu0
        %2772 = vmatprep.mubr.bf16.mxu0 0
        %2773 = vmatmul.mubr.bf16.gmra.mrb[0].mxu0 %v2390
        %v2774 = vpop.f32.mrb[0].mxu0
        %v2775 = vadd.f32 0.0, %v2774
        %v2776 = vpop.f32.mrb[0].mxu0
        %v2777 = vpop.f32.mrb[0].mxu0
        %v2778 = vadd.f32 0.0, %v2777
        %v2779 = vpop.f32.mrb[0].mxu0
        %2780 = vmatprep.mubr.bf16.mxu0 0
        %2781 = vmatmul.mubr.bf16.gmra.mrb[0].mxu0 %v2393
        %v2782 = vpop.f32.mrb[0].mxu0
        %v2783 = vadd.f32 0.0, %v2782
        %v2784 = vpop.f32.mrb[0].mxu0
        %v2785 = vpop.f32.mrb[0].mxu0
        %v2786 = vadd.f32 0.0, %v2785
        %v2787 = vpop.f32.mrb[0].mxu0
        %2788 = vmatprep.mubr.bf16.mxu0 0
        %2789 = vmatmul.mubr.bf16.gmra.mrb[0].mxu0 %v2396
        %v2790 = vpop.f32.mrb[0].mxu0
        %v2791 = vadd.f32 0.0, %v2790
        %v2792 = vpop.f32.mrb[0].mxu0
        %v2793 = vpop.f32.mrb[0].mxu0
        %v2794 = vadd.f32 0.0, %v2793
        %v2795 = vpop.f32.mrb[0].mxu0
        %2796 = vmatprep.mubr.bf16.mxu0 0
        %2797 = vmatmul.mubr.bf16.gmra.mrb[0].mxu0 %v2399
        %v2798 = vpop.f32.mrb[0].mxu0
        %v2799 = vadd.f32 0.0, %v2798
        %v2800 = vpop.f32.mrb[0].mxu0
        %v2801 = vpop.f32.mrb[0].mxu0
        %v2802 = vadd.f32 0.0, %v2801
        %v2803 = vpop.f32.mrb[0].mxu0
        %2804 = vmatprep.mubr.bf16.mxu0 0
        %2805 = vmatmul.mubr.bf16.gmra.mrb[0].mxu0 %v2402
        %v2806 = vpop.f32.mrb[0].mxu0
        %v2807 = vadd.f32 0.0, %v2806
        %v2808 = vpop.f32.mrb[0].mxu0
        %v2809 = vpop.f32.mrb[0].mxu0
        %v2810 = vadd.f32 0.0, %v2809
        %v2811 = vpop.f32.mrb[0].mxu0
        %2812 = vmatprep.mubr.bf16.mxu0 0
        %2813 = vmatmul.mubr.bf16.gmra.mrb[0].mxu0 %v2405
        %v2814 = vpop.f32.mrb[0].mxu0
        %v2815 = vadd.f32 0.0, %v2814
        %v2816 = vpop.f32.mrb[0].mxu0
        %v2817 = vpop.f32.mrb[0].mxu0
        %v2818 = vadd.f32 0.0, %v2817
        %v2819 = vpop.f32.mrb[0].mxu0
        %2820 = vmatprep.mubr.bf16.mxu0 0
        %2821 = vmatmul.mubr.bf16.gmra.mrb[0].mxu0 %v2408
        %v2822 = vpop.f32.mrb[0].mxu0
        %v2823 = vadd.f32 0.0, %v2822
        %v2824 = vpop.f32.mrb[0].mxu0
        %v2825 = vpop.f32.mrb[0].mxu0
        %v2826 = vadd.f32 0.0, %v2825
        %v2827 = vpop.f32.mrb[0].mxu0
        %2828 = vmatprep.mubr.bf16.mxu0 0
        %2829 = vmatmul.mubr.bf16.gmra.mrb[0].mxu0 %v2411
        %v2830 = vpop.f32.mrb[0].mxu0
        %v2831 = vadd.f32 0.0, %v2830
        %v2832 = vpop.f32.mrb[0].mxu0
        %v2833 = vpop.f32.mrb[0].mxu0
        %v2834 = vadd.f32 0.0, %v2833
        %v2835 = vpop.f32.mrb[0].mxu0
        %2836 = vmatprep.mubr.bf16.mxu0 0
        %2837 = vmatmul.mubr.bf16.gmra.mrb[0].mxu0 %v2414
        %v2838 = vpop.f32.mrb[0].mxu0
        %v2839 = vadd.f32 0.0, %v2838
        %v2840 = vpop.f32.mrb[0].mxu0
        %v2841 = vpop.f32.mrb[0].mxu0
        %v2842 = vadd.f32 0.0, %v2841
        %v2843 = vpop.f32.mrb[0].mxu0
        %2844 = vmatprep.mubr.bf16.mxu0 0
        %2845 = vmatmul.mubr.bf16.gmra.mrb[0].mxu0 %v2417
        %v2846 = vpop.f32.mrb[0].mxu0
        %v2847 = vadd.f32 0.0, %v2846
        %v2848 = vpop.f32.mrb[0].mxu0
        %v2849 = vpop.f32.mrb[0].mxu0
        %v2850 = vadd.f32 0.0, %v2849
        %v2851 = vpop.f32.mrb[0].mxu0
        %2852 = vmatprep.mubr.bf16.mxu0 0
        %2853 = vmatmul.mubr.bf16.gmra.mrb[0].mxu0 %v2420
        %v2854 = vpop.f32.mrb[0].mxu0
        %v2855 = vadd.f32 0.0, %v2854
        %v2856 = vpop.f32.mrb[0].mxu0
        %v2857 = vpop.f32.mrb[0].mxu0
        %v2858 = vadd.f32 0.0, %v2857
        %v2859 = vpop.f32.mrb[0].mxu0
        %2860 = vmatprep.mubr.bf16.mxu0 0
        %2861 = vmatmul.mubr.bf16.gmra.mrb[0].mxu0 %v2423
        %v2862 = vpop.f32.mrb[0].mxu0
        %v2863 = vadd.f32 0.0, %v2862
        %v2864 = vpop.f32.mrb[0].mxu0
        %v2865 = vpop.f32.mrb[0].mxu0
        %v2866 = vadd.f32 0.0, %v2865
        %v2867 = vpop.f32.mrb[0].mxu0
        %2868 = vmatprep.mubr.bf16.mxu0 0
        %2869 = vmatmul.mubr.bf16.gmra.mrb[0].mxu0 %v2426
        %v2870 = vpop.f32.mrb[0].mxu0
        %v2871 = vadd.f32 0.0, %v2870
        %v2872 = vpop.f32.mrb[0].mxu0
        %v2873 = vpop.f32.mrb[0].mxu0
        %v2874 = vadd.f32 0.0, %v2873
        %v2875 = vpop.f32.mrb[0].mxu0
        %2876 = vmatprep.mubr.bf16.mxu0 0
        %2877 = vmatmul.mubr.bf16.gmra.mrb[0].mxu0 %v2429
        %v2878 = vpop.f32.mrb[0].mxu0
        %v2879 = vadd.f32 0.0, %v2878
        %v2880 = vpop.f32.mrb[0].mxu0
        %v2881 = vpop.f32.mrb[0].mxu0
        %v2882 = vadd.f32 0.0, %v2881
        %v2883 = vpop.f32.mrb[0].mxu0
        %2884 = vmatprep.mubr.bf16.mxu0 0
        %2885 = vmatmul.mubr.bf16.gmra.mrb[0].mxu0 %v2432
        %v2886 = vpop.f32.mrb[0].mxu0
        %v2887 = vadd.f32 0.0, %v2886
        %v2888 = vpop.f32.mrb[0].mxu0
        %v2889 = vpop.f32.mrb[0].mxu0
        %v2890 = vadd.f32 0.0, %v2889
        %v2891 = vpop.f32.mrb[0].mxu0
        %2892 = vmatprep.mubr.bf16.mxu0 0
        %2893 = vmatmul.mubr.bf16.gmra.mrb[0].mxu0 %v2435
        %v2894 = vpop.f32.mrb[0].mxu0
        %v2895 = vadd.f32 0.0, %v2894
        %v2896 = vpop.f32.mrb[0].mxu0
        %v2897 = vpop.f32.mrb[0].mxu0
        %v2898 = vadd.f32 0.0, %v2897
        %v2899 = vpop.f32.mrb[0].mxu0
        %2900 = vmatprep.mubr.bf16.mxu0 0
        %2901 = vmatmul.mubr.bf16.gmra.mrb[0].mxu0 %v2438
        %v2902 = vpop.f32.mrb[0].mxu0
        %v2903 = vadd.f32 0.0, %v2902
        %v2904 = vpop.f32.mrb[0].mxu0
        %v2905 = vpop.f32.mrb[0].mxu0
        %v2906 = vadd.f32 0.0, %v2905
        %v2907 = vpop.f32.mrb[0].mxu0
        %2908 = vmatprep.mubr.bf16.mxu0 0
        %2909 = vmatmul.mubr.bf16.gmra.mrb[0].mxu0 %v2441
        %v2910 = vpop.f32.mrb[0].mxu0
        %v2911 = vadd.f32 0.0, %v2910
        %v2912 = vpop.f32.mrb[0].mxu0
        %v2913 = vpop.f32.mrb[0].mxu0
        %v2914 = vadd.f32 0.0, %v2913
        %v2915 = vpop.f32.mrb[0].mxu0
        %2916 = vmatprep.mubr.bf16.mxu0 0
        %2917 = vmatmul.mubr.bf16.gmra.mrb[0].mxu0 %v2444
        %v2918 = vpop.f32.mrb[0].mxu0
        %v2919 = vadd.f32 0.0, %v2918
        %v2920 = vpop.f32.mrb[0].mxu0
        %v2921 = vpop.f32.mrb[0].mxu0
        %v2922 = vadd.f32 0.0, %v2921
        %v2923 = vpop.f32.mrb[0].mxu0
        %2924 = vmatprep.mubr.bf16.mxu0 0
        %2925 = vmatmul.mubr.bf16.gmra.mrb[0].mxu0 %v2447
        %v2926 = vpop.f32.mrb[0].mxu0
        %v2927 = vadd.f32 0.0, %v2926
        %v2928 = vpop.f32.mrb[0].mxu0
        %v2929 = vpop.f32.mrb[0].mxu0
        %v2930 = vadd.f32 0.0, %v2929
        %v2931 = vpop.f32.mrb[0].mxu0
        %2932 = vmatprep.mubr.bf16.mxu0 0
        %2933 = vmatmul.mubr.bf16.gmra.mrb[0].mxu0 %v2450
        %v2934 = vpop.f32.mrb[0].mxu0
        %v2935 = vadd.f32 0.0, %v2934
        %v2936 = vpop.f32.mrb[0].mxu0
        %v2937 = vpop.f32.mrb[0].mxu0
        %v2938 = vadd.f32 0.0, %v2937
        %v2939 = vpop.f32.mrb[0].mxu0
        %2940 = vmatprep.mubr.bf16.mxu0 0
        %2941 = vmatmul.mubr.bf16.gmra.mrb[0].mxu0 %v2453
        %v2942 = vpop.f32.mrb[0].mxu0
        %v2943 = vadd.f32 0.0, %v2942
        %v2944 = vpop.f32.mrb[0].mxu0
        %v2945 = vpop.f32.mrb[0].mxu0
        %v2946 = vadd.f32 0.0, %v2945
        %v2947 = vpop.f32.mrb[0].mxu0
        %2948 = vmatprep.mubr.bf16.mxu0 0
        %2949 = vmatmul.mubr.bf16.gmra.mrb[0].mxu0 %v2456
        %v2950 = vpop.f32.mrb[0].mxu0
        %v2951 = vadd.f32 0.0, %v2950
        %v2952 = vpop.f32.mrb[0].mxu0
        %v2953 = vpop.f32.mrb[0].mxu0
        %v2954 = vadd.f32 0.0, %v2953
        %v2955 = vpop.f32.mrb[0].mxu0
        %2956 = vmatprep.mubr.bf16.mxu0 0
        %2957 = vmatmul.mubr.bf16.gmra.mrb[0].mxu0 %v2459
        %v2958 = vpop.f32.mrb[0].mxu0
        %v2959 = vadd.f32 0.0, %v2958
        %v2960 = vpop.f32.mrb[0].mxu0
        %v2961 = vpop.f32.mrb[0].mxu0
        %v2962 = vadd.f32 0.0, %v2961
        %v2963 = vpop.f32.mrb[0].mxu0
        %2964 = vmatprep.mubr.bf16.mxu0 0
        %2965 = vmatmul.mubr.bf16.gmra.mrb[0].mxu0 %v2462
        %v2966 = vpop.f32.mrb[0].mxu0
        %v2967 = vadd.f32 0.0, %v2966
        %v2968 = vpop.f32.mrb[0].mxu0
        %v2969 = vpop.f32.mrb[0].mxu0
        %v2970 = vadd.f32 0.0, %v2969
        %v2971 = vpop.f32.mrb[0].mxu0
        %2972 = vmatprep.mubr.bf16.mxu0 0
        %2973 = vmatmul.mubr.bf16.gmra.mrb[0].mxu0 %v2465
        %v2974 = vpop.f32.mrb[0].mxu0
        %v2975 = vadd.f32 0.0, %v2974
        %v2976 = vpop.f32.mrb[0].mxu0
        %v2977 = vpop.f32.mrb[0].mxu0
        %v2978 = vadd.f32 0.0, %v2977
        %v2979 = vpop.f32.mrb[0].mxu0
        %2980 = vmatprep.mubr.bf16.mxu0 0
        %2981 = vmatmul.mubr.bf16.gmra.mrb[0].mxu0 %v2468
        %v2982 = vpop.f32.mrb[0].mxu0
        %v2983 = vadd.f32 0.0, %v2982
        %v2984 = vpop.f32.mrb[0].mxu0
        %v2985 = vpop.f32.mrb[0].mxu0
        %v2986 = vadd.f32 0.0, %v2985
        %v2987 = vpop.f32.mrb[0].mxu0
        %2988 = vmatprep.mubr.bf16.mxu0 0
        %2989 = vmatmul.mubr.bf16.gmra.mrb[0].mxu0 %v2471
        %v2990 = vpop.f32.mrb[0].mxu0
        %v2991 = vadd.f32 0.0, %v2990
        %v2992 = vpop.f32.mrb[0].mxu0
        %v2993 = vpop.f32.mrb[0].mxu0
        %v2994 = vadd.f32 0.0, %v2993
        %v2995 = vpop.f32.mrb[0].mxu0
        %2996 = vmatprep.mubr.bf16.mxu0 0
        %2997 = vmatmul.mubr.bf16.gmra.mrb[0].mxu0 %v2474
        %v2998 = vpop.f32.mrb[0].mxu0
        %v2999 = vadd.f32 0.0, %v2998
        %v3000 = vpop.f32.mrb[0].mxu0
        %v3001 = vpop.f32.mrb[0].mxu0
        %v3002 = vadd.f32 0.0, %v3001
        %v3003 = vpop.f32.mrb[0].mxu0
        %3004 = vmatprep.mubr.bf16.mxu0 0
        %3005 = vmatmul.mubr.bf16.gmra.mrb[0].mxu0 %v2477
        %v3006 = vpop.f32.mrb[0].mxu0
        %v3007 = vadd.f32 0.0, %v3006
        %v3008 = vpop.f32.mrb[0].mxu0
        %v3009 = vpop.f32.mrb[0].mxu0
        %v3010 = vadd.f32 0.0, %v3009
        %v3011 = vpop.f32.mrb[0].mxu0
        %3012 = vmatprep.mubr.bf16.mxu0 0
        %3013 = vmatmul.mubr.bf16.gmra.mrb[0].mxu0 %v2480
        %v3014 = vpop.f32.mrb[0].mxu0
        %v3015 = vadd.f32 0.0, %v3014
        %v3016 = vpop.f32.mrb[0].mxu0
        %v3017 = vpop.f32.mrb[0].mxu0
        %v3018 = vadd.f32 0.0, %v3017
        %v3019 = vpop.f32.mrb[0].mxu0
        %3020 = vmatprep.mubr.bf16.mxu0 0
        %3021 = vmatmul.mubr.bf16.gmra.mrb[0].mxu0 %v2483
        %v3022 = vpop.f32.mrb[0].mxu0
        %v3023 = vadd.f32 0.0, %v3022
        %v3024 = vpop.f32.mrb[0].mxu0
        %v3025 = vpop.f32.mrb[0].mxu0
        %v3026 = vadd.f32 0.0, %v3025
        %v3027 = vpop.f32.mrb[0].mxu0
        %3028 = vmatprep.mubr.bf16.mxu0 0
        %3029 = vmatmul.mubr.bf16.gmra.mrb[0].mxu0 %v2486
        %v3030 = vpop.f32.mrb[0].mxu0
        %v3031 = vadd.f32 0.0, %v3030
        %v3032 = vpop.f32.mrb[0].mxu0
        %v3033 = vpop.f32.mrb[0].mxu0
        %v3034 = vadd.f32 0.0, %v3033
        %v3035 = vpop.f32.mrb[0].mxu0
        %3036 = vmatprep.mubr.bf16.mxu0 0
        %3037 = vmatmul.mubr.bf16.gmra.mrb[0].mxu0 %v2489
        %v3038 = vpop.f32.mrb[0].mxu0
        %v3039 = vadd.f32 0.0, %v3038
        %v3040 = vpop.f32.mrb[0].mxu0
        %v3041 = vpop.f32.mrb[0].mxu0
        %v3042 = vadd.f32 0.0, %v3041
        %v3043 = vpop.f32.mrb[0].mxu0
        %3044 = vmatprep.mubr.bf16.mxu0 0
        %3045 = vmatmul.mubr.bf16.gmra.mrb[0].mxu0 %v2492
        %v3046 = vpop.f32.mrb[0].mxu0
        %v3047 = vadd.f32 0.0, %v3046
        %v3048 = vpop.f32.mrb[0].mxu0
        %v3049 = vpop.f32.mrb[0].mxu0
        %v3050 = vadd.f32 0.0, %v3049
        %v3051 = vpop.f32.mrb[0].mxu0
        %3052 = vmatprep.mubr.bf16.mxu0 0
        %3053 = vmatmul.mubr.bf16.gmra.mrb[0].mxu0 %v2495
        %v3054 = vpop.f32.mrb[0].mxu0
        %v3055 = vadd.f32 0.0, %v3054
        %v3056 = vpop.f32.mrb[0].mxu0
        %v3057 = vpop.f32.mrb[0].mxu0
        %v3058 = vadd.f32 0.0, %v3057
        %v3059 = vpop.f32.mrb[0].mxu0
        %3060 = vdwg.mxu0
        %v3061 = vadd.f32 %v1573, %v2535
        %v3062 = vadd.f32 %v1576, %v2538
        %v3063 = vadd.f32 %v1581, %v2543
        %v3064 = vadd.f32 %v1584, %v2546
        %v3065 = vadd.f32 %v1589, %v2551
        %v3066 = vadd.f32 %v1592, %v2554
        %v3067 = vadd.f32 %v1597, %v2559
        %v3068 = vadd.f32 %v1600, %v2562
        %v3069 = vadd.f32 %v1605, %v2567
        %v3070 = vadd.f32 %v1608, %v2570
        %v3071 = vadd.f32 %v1613, %v2575
        %v3072 = vadd.f32 %v1616, %v2578
        %v3073 = vadd.f32 %v1621, %v2583
        %v3074 = vadd.f32 %v1624, %v2586
        %v3075 = vadd.f32 %v1629, %v2591
        %v3076 = vadd.f32 %v1632, %v2594
        %v3077 = vadd.f32 %v1637, %v2599
        %v3078 = vadd.f32 %v1640, %v2602
        %v3079 = vadd.f32 %v1645, %v2607
        %v3080 = vadd.f32 %v1648, %v2610
        %v3081 = vadd.f32 %v1653, %v2615
        %v3082 = vadd.f32 %v1656, %v2618
        %v3083 = vadd.f32 %v1661, %v2623
        %v3084 = vadd.f32 %v1664, %v2626
        %v3085 = vadd.f32 %v1669, %v2631
        %v3086 = vadd.f32 %v1672, %v2634
        %v3087 = vadd.f32 %v1677, %v2639
        %v3088 = vadd.f32 %v1680, %v2642
        %v3089 = vadd.f32 %v1685, %v2647
        %v3090 = vadd.f32 %v1688, %v2650
        %v3091 = vadd.f32 %v1693, %v2655
        %v3092 = vadd.f32 %v1696, %v2658
        %v3093 = vadd.f32 %v1701, %v2663
        %v3094 = vadd.f32 %v1704, %v2666
        %v3095 = vadd.f32 %v1709, %v2671
        %v3096 = vadd.f32 %v1712, %v2674
        %v3097 = vadd.f32 %v1717, %v2679
        %v3098 = vadd.f32 %v1720, %v2682
        %v3099 = vadd.f32 %v1725, %v2687
        %v3100 = vadd.f32 %v1728, %v2690
        %v3101 = vadd.f32 %v1733, %v2695
        %v3102 = vadd.f32 %v1736, %v2698
        %v3103 = vadd.f32 %v1741, %v2703
        %v3104 = vadd.f32 %v1744, %v2706
        %v3105 = vadd.f32 %v1749, %v2711
        %v3106 = vadd.f32 %v1752, %v2714
        %v3107 = vadd.f32 %v1757, %v2719
        %v3108 = vadd.f32 %v1760, %v2722
        %v3109 = vadd.f32 %v1765, %v2727
        %v3110 = vadd.f32 %v1768, %v2730
        %v3111 = vadd.f32 %v1773, %v2735
        %v3112 = vadd.f32 %v1776, %v2738
        %v3113 = vadd.f32 %v1781, %v2743
        %v3114 = vadd.f32 %v1784, %v2746
        %v3115 = vadd.f32 %v1789, %v2751
        %v3116 = vadd.f32 %v1792, %v2754
        %v3117 = vadd.f32 %v1797, %v2759
        %v3118 = vadd.f32 %v1800, %v2762
        %v3119 = vadd.f32 %v1805, %v2767
        %v3120 = vadd.f32 %v1808, %v2770
        %v3121 = vadd.f32 %v1813, %v2775
        %v3122 = vadd.f32 %v1816, %v2778
        %v3123 = vadd.f32 %v1821, %v2783
        %v3124 = vadd.f32 %v1824, %v2786
        %v3125 = vadd.f32 %v1829, %v2791
        %v3126 = vadd.f32 %v1832, %v2794
        %v3127 = vadd.f32 %v1837, %v2799
        %v3128 = vadd.f32 %v1840, %v2802
        %v3129 = vadd.f32 %v1845, %v2807
        %v3130 = vadd.f32 %v1848, %v2810
        %v3131 = vadd.f32 %v1853, %v2815
        %v3132 = vadd.f32 %v1856, %v2818
        %v3133 = vadd.f32 %v1861, %v2823
        %v3134 = vadd.f32 %v1864, %v2826
        %v3135 = vadd.f32 %v1869, %v2831
        %v3136 = vadd.f32 %v1872, %v2834
        %v3137 = vadd.f32 %v1877, %v2839
        %v3138 = vadd.f32 %v1880, %v2842
        %v3139 = vadd.f32 %v1885, %v2847
        %v3140 = vadd.f32 %v1888, %v2850
        %v3141 = vadd.f32 %v1893, %v2855
        %v3142 = vadd.f32 %v1896, %v2858
        %v3143 = vadd.f32 %v1901, %v2863
        %v3144 = vadd.f32 %v1904, %v2866
        %v3145 = vadd.f32 %v1909, %v2871
        %v3146 = vadd.f32 %v1912, %v2874
        %v3147 = vadd.f32 %v1917, %v2879
        %v3148 = vadd.f32 %v1920, %v2882
        %v3149 = vadd.f32 %v1925, %v2887
        %v3150 = vadd.f32 %v1928, %v2890
        %v3151 = vadd.f32 %v1933, %v2895
        %v3152 = vadd.f32 %v1936, %v2898
        %v3153 = vadd.f32 %v1941, %v2903
        %v3154 = vadd.f32 %v1944, %v2906
        %v3155 = vadd.f32 %v1949, %v2911
        %v3156 = vadd.f32 %v1952, %v2914
        %v3157 = vadd.f32 %v1957, %v2919
        %v3158 = vadd.f32 %v1960, %v2922
        %v3159 = vadd.f32 %v1965, %v2927
        %v3160 = vadd.f32 %v1968, %v2930
        %v3161 = vadd.f32 %v1973, %v2935
        %v3162 = vadd.f32 %v1976, %v2938
        %v3163 = vadd.f32 %v1981, %v2943
        %v3164 = vadd.f32 %v1984, %v2946
        %v3165 = vadd.f32 %v1989, %v2951
        %v3166 = vadd.f32 %v1992, %v2954
        %v3167 = vadd.f32 %v1997, %v2959
        %v3168 = vadd.f32 %v2000, %v2962
        %v3169 = vadd.f32 %v2005, %v2967
        %v3170 = vadd.f32 %v2008, %v2970
        %v3171 = vadd.f32 %v2013, %v2975
        %v3172 = vadd.f32 %v2016, %v2978
        %v3173 = vadd.f32 %v2021, %v2983
        %v3174 = vadd.f32 %v2024, %v2986
        %v3175 = vadd.f32 %v2029, %v2991
        %v3176 = vadd.f32 %v2032, %v2994
        %v3177 = vadd.f32 %v2037, %v2999
        %v3178 = vadd.f32 %v2040, %v3002
        %v3179 = vadd.f32 %v2045, %v3007
        %v3180 = vadd.f32 %v2048, %v3010
        %v3181 = vadd.f32 %v2053, %v3015
        %v3182 = vadd.f32 %v2056, %v3018
        %v3183 = vadd.f32 %v2061, %v3023
        %v3184 = vadd.f32 %v2064, %v3026
        %v3185 = vadd.f32 %v2069, %v3031
        %v3186 = vadd.f32 %v2072, %v3034
        %v3187 = vadd.f32 %v2077, %v3039
        %v3188 = vadd.f32 %v2080, %v3042
        %v3189 = vadd.f32 %v2085, %v3047
        %v3190 = vadd.f32 %v2088, %v3050
        %v3191 = vadd.f32 %v2093, %v3055
        %v3192 = vadd.f32 %v2096, %v3058
        %s3193 = scalar_lea.vmem %s168, 2256
        %v3194 = vld [vmem:[%s3193] sm:$0xff]
        %v3195 = vld [vmem:[%s3193 + $0x8] sm:$0xff]
        %v3196 = vld [vmem:[%s3193 + $0x10] sm:$0xff]
        %v3197 = vld [vmem:[%s3193 + $0x18] sm:$0xff]
        %v3198 = vld [vmem:[%s3193 + $0x20] sm:$0xff]
        %v3199 = vld [vmem:[%s3193 + $0x28] sm:$0xff]
        %v3200 = vld [vmem:[%s3193 + $0x30] sm:$0xff]
        %v3201 = vld [vmem:[%s3193 + $0x38] sm:$0xff]
        %v3202 = vld [vmem:[%s3193 + $0x40] sm:$0xff]
        %v3203 = vld [vmem:[%s3193 + $0x48] sm:$0xff]
        %v3204 = vld [vmem:[%s3193 + $0x50] sm:$0xff]
        %v3205 = vld [vmem:[%s3193 + $0x58] sm:$0xff]
        %v3206 = vld [vmem:[%s3193 + $0x60] sm:$0xff]
        %v3207 = vld [vmem:[%s3193 + $0x68] sm:$0xff]
        %v3208 = vld [vmem:[%s3193 + $0x70] sm:$0xff]
        %v3209 = vld [vmem:[%s3193 + $0x78] sm:$0xff]
        %v3210 = vld [vmem:[%s3193 + $0x80] sm:$0xff]
        %v3211 = vld [vmem:[%s3193 + $0x88] sm:$0xff]
        %v3212 = vld [vmem:[%s3193 + $0x90] sm:$0xff]
        %v3213 = vld [vmem:[%s3193 + $0x98] sm:$0xff]
        %v3214 = vld [vmem:[%s3193 + $0xa0] sm:$0xff]
        %v3215 = vld [vmem:[%s3193 + $0xa8] sm:$0xff]
        %v3216 = vld [vmem:[%s3193 + $0xb0] sm:$0xff]
        %v3217 = vld [vmem:[%s3193 + $0xb8] sm:$0xff]
        %v3218 = vld [vmem:[%s3193 + $0xc0] sm:$0xff]
        %v3219 = vld [vmem:[%s3193 + $0xc8] sm:$0xff]
        %v3220 = vld [vmem:[%s3193 + $0xd0] sm:$0xff]
        %v3221 = vld [vmem:[%s3193 + $0xd8] sm:$0xff]
        %v3222 = vld [vmem:[%s3193 + $0xe0] sm:$0xff]
        %v3223 = vld [vmem:[%s3193 + $0xe8] sm:$0xff]
        %v3224 = vld [vmem:[%s3193 + $0xf0] sm:$0xff]
        %v3225 = vld [vmem:[%s3193 + $0xf8] sm:$0xff]
        %v3226 = vld [vmem:[%s3193 + $0x100] sm:$0xff]
        %v3227 = vld [vmem:[%s3193 + $0x108] sm:$0xff]
        %v3228 = vld [vmem:[%s3193 + $0x110] sm:$0xff]
        %v3229 = vld [vmem:[%s3193 + $0x118] sm:$0xff]
        %v3230 = vld [vmem:[%s3193 + $0x120] sm:$0xff]
        %v3231 = vld [vmem:[%s3193 + $0x128] sm:$0xff]
        %v3232 = vld [vmem:[%s3193 + $0x130] sm:$0xff]
        %v3233 = vld [vmem:[%s3193 + $0x138] sm:$0xff]
        %v3234 = vld [vmem:[%s3193 + $0x140] sm:$0xff]
        %v3235 = vld [vmem:[%s3193 + $0x148] sm:$0xff]
        %v3236 = vld [vmem:[%s3193 + $0x150] sm:$0xff]
        %v3237 = vld [vmem:[%s3193 + $0x158] sm:$0xff]
        %v3238 = vld [vmem:[%s3193 + $0x160] sm:$0xff]
        %v3239 = vld [vmem:[%s3193 + $0x168] sm:$0xff]
        %v3240 = vld [vmem:[%s3193 + $0x170] sm:$0xff]
        %v3241 = vld [vmem:[%s3193 + $0x178] sm:$0xff]
        %v3242 = vld [vmem:[%s3193 + $0x180] sm:$0xff]
        %v3243 = vld [vmem:[%s3193 + $0x188] sm:$0xff]
        %v3244 = vld [vmem:[%s3193 + $0x190] sm:$0xff]
        %v3245 = vld [vmem:[%s3193 + $0x198] sm:$0xff]
        %v3246 = vld [vmem:[%s3193 + $0x1a0] sm:$0xff]
        %v3247 = vld [vmem:[%s3193 + $0x1a8] sm:$0xff]
        %v3248 = vld [vmem:[%s3193 + $0x1b0] sm:$0xff]
        %v3249 = vld [vmem:[%s3193 + $0x1b8] sm:$0xff]
        %v3250 = vld [vmem:[%s3193 + $0x1c0] sm:$0xff]
        %v3251 = vld [vmem:[%s3193 + $0x1c8] sm:$0xff]
        %v3252 = vld [vmem:[%s3193 + $0x1d0] sm:$0xff]
        %v3253 = vld [vmem:[%s3193 + $0x1d8] sm:$0xff]
        %v3254 = vld [vmem:[%s3193 + $0x1e0] sm:$0xff]
        %v3255 = vld [vmem:[%s3193 + $0x1e8] sm:$0xff]
        %v3256 = vld [vmem:[%s3193 + $0x1f0] sm:$0xff]
        %v3257 = vld [vmem:[%s3193 + $0x1f8] sm:$0xff]
        %v3258 = vld [vmem:[%s3193 + $0x200] sm:$0xff]
        %v3259 = vld [vmem:[%s3193 + $0x208] sm:$0xff]
        %v3260 = vld [vmem:[%s3193 + $0x210] sm:$0xff]
        %v3261 = vld [vmem:[%s3193 + $0x218] sm:$0xff]
        %v3262 = vld [vmem:[%s3193 + $0x220] sm:$0xff]
        %v3263 = vld [vmem:[%s3193 + $0x228] sm:$0xff]
        %v3264 = vld [vmem:[%s3193 + $0x230] sm:$0xff]
        %v3265 = vld [vmem:[%s3193 + $0x238] sm:$0xff]
        %v3266 = vld [vmem:[%s3193 + $0x240] sm:$0xff]
        %v3267 = vld [vmem:[%s3193 + $0x248] sm:$0xff]
        %v3268 = vld [vmem:[%s3193 + $0x250] sm:$0xff]
        %v3269 = vld [vmem:[%s3193 + $0x258] sm:$0xff]
        %v3270 = vld [vmem:[%s3193 + $0x260] sm:$0xff]
        %v3271 = vld [vmem:[%s3193 + $0x268] sm:$0xff]
        %v3272 = vld [vmem:[%s3193 + $0x270] sm:$0xff]
        %v3273 = vld [vmem:[%s3193 + $0x278] sm:$0xff]
        %v3274 = vld [vmem:[%s3193 + $0x280] sm:$0xff]
        %v3275 = vld [vmem:[%s3193 + $0x288] sm:$0xff]
        %v3276 = vld [vmem:[%s3193 + $0x290] sm:$0xff]
        %v3277 = vld [vmem:[%s3193 + $0x298] sm:$0xff]
        %v3278 = vld [vmem:[%s3193 + $0x2a0] sm:$0xff]
        %v3279 = vld [vmem:[%s3193 + $0x2a8] sm:$0xff]
        %v3280 = vld [vmem:[%s3193 + $0x2b0] sm:$0xff]
        %v3281 = vld [vmem:[%s3193 + $0x2b8] sm:$0xff]
        %v3282 = vld [vmem:[%s3193 + $0x2c0] sm:$0xff]
        %v3283 = vld [vmem:[%s3193 + $0x2c8] sm:$0xff]
        %v3284 = vld [vmem:[%s3193 + $0x2d0] sm:$0xff]
        %v3285 = vld [vmem:[%s3193 + $0x2d8] sm:$0xff]
        %v3286 = vld [vmem:[%s3193 + $0x2e0] sm:$0xff]
        %v3287 = vld [vmem:[%s3193 + $0x2e8] sm:$0xff]
        %v3288 = vld [vmem:[%s3193 + $0x2f0] sm:$0xff]
        %v3289 = vld [vmem:[%s3193 + $0x2f8] sm:$0xff]
        %v3290 = vld [vmem:[%s3193 + $0x300] sm:$0xff]
        %v3291 = vld [vmem:[%s3193 + $0x308] sm:$0xff]
        %v3292 = vld [vmem:[%s3193 + $0x310] sm:$0xff]
        %v3293 = vld [vmem:[%s3193 + $0x318] sm:$0xff]
        %v3294 = vld [vmem:[%s3193 + $0x320] sm:$0xff]
        %v3295 = vld [vmem:[%s3193 + $0x328] sm:$0xff]
        %v3296 = vld [vmem:[%s3193 + $0x330] sm:$0xff]
        %v3297 = vld [vmem:[%s3193 + $0x338] sm:$0xff]
        %v3298 = vld [vmem:[%s3193 + $0x340] sm:$0xff]
        %v3299 = vld [vmem:[%s3193 + $0x348] sm:$0xff]
        %v3300 = vld [vmem:[%s3193 + $0x350] sm:$0xff]
        %v3301 = vld [vmem:[%s3193 + $0x358] sm:$0xff]
        %v3302 = vld [vmem:[%s3193 + $0x360] sm:$0xff]
        %v3303 = vld [vmem:[%s3193 + $0x368] sm:$0xff]
        %v3304 = vld [vmem:[%s3193 + $0x370] sm:$0xff]
        %v3305 = vld [vmem:[%s3193 + $0x378] sm:$0xff]
        %v3306 = vld [vmem:[%s3193 + $0x380] sm:$0xff]
        %v3307 = vld [vmem:[%s3193 + $0x388] sm:$0xff]
        %v3308 = vld [vmem:[%s3193 + $0x390] sm:$0xff]
        %v3309 = vld [vmem:[%s3193 + $0x398] sm:$0xff]
        %v3310 = vld [vmem:[%s3193 + $0x3a0] sm:$0xff]
        %v3311 = vld [vmem:[%s3193 + $0x3a8] sm:$0xff]
        %v3312 = vld [vmem:[%s3193 + $0x3b0] sm:$0xff]
        %v3313 = vld [vmem:[%s3193 + $0x3b8] sm:$0xff]
        %v3314 = vld [vmem:[%s3193 + $0x3c0] sm:$0xff]
        %v3315 = vld [vmem:[%s3193 + $0x3c8] sm:$0xff]
        %v3316 = vld [vmem:[%s3193 + $0x3d0] sm:$0xff]
        %v3317 = vld [vmem:[%s3193 + $0x3d8] sm:$0xff]
        %v3318 = vld [vmem:[%s3193 + $0x3e0] sm:$0xff]
        %v3319 = vld [vmem:[%s3193 + $0x3e8] sm:$0xff]
        %v3320 = vld [vmem:[%s3193 + $0x3f0] sm:$0xff]
        %v3321 = vld [vmem:[%s3193 + $0x3f8] sm:$0xff]
        %v3322 = vld [vmem:[%s3193 + $0x400] sm:$0xff]
        %v3323 = vld [vmem:[%s3193 + $0x408] sm:$0xff]
        %v3324 = vld [vmem:[%s3193 + $0x410] sm:$0xff]
        %v3325 = vld [vmem:[%s3193 + $0x418] sm:$0xff]
        %v3326 = vpack.c.bf16 %v3195, %v3194
        %v3327 = vpack.c.bf16 %v3197, %v3196
        %v3328 = vpack.c.bf16 %v3199, %v3198
        %v3329 = vpack.c.bf16 %v3201, %v3200
        %v3330 = vpack.c.bf16 %v3203, %v3202
        %v3331 = vpack.c.bf16 %v3205, %v3204
        %v3332 = vpack.c.bf16 %v3207, %v3206
        %v3333 = vpack.c.bf16 %v3209, %v3208
        %v3334 = vpack.c.bf16 %v3211, %v3210
        %v3335 = vpack.c.bf16 %v3213, %v3212
        %v3336 = vpack.c.bf16 %v3215, %v3214
        %v3337 = vpack.c.bf16 %v3217, %v3216
        %v3338 = vpack.c.bf16 %v3219, %v3218
        %v3339 = vpack.c.bf16 %v3221, %v3220
        %v3340 = vpack.c.bf16 %v3223, %v3222
        %v3341 = vpack.c.bf16 %v3225, %v3224
        %v3342 = vpack.c.bf16 %v3227, %v3226
        %v3343 = vpack.c.bf16 %v3229, %v3228
        %v3344 = vpack.c.bf16 %v3231, %v3230
        %v3345 = vpack.c.bf16 %v3233, %v3232
        %v3346 = vpack.c.bf16 %v3235, %v3234
        %v3347 = vpack.c.bf16 %v3237, %v3236
        %v3348 = vpack.c.bf16 %v3239, %v3238
        %v3349 = vpack.c.bf16 %v3241, %v3240
        %v3350 = vpack.c.bf16 %v3243, %v3242
        %v3351 = vpack.c.bf16 %v3245, %v3244
        %v3352 = vpack.c.bf16 %v3247, %v3246
        %v3353 = vpack.c.bf16 %v3249, %v3248
        %v3354 = vpack.c.bf16 %v3251, %v3250
        %v3355 = vpack.c.bf16 %v3253, %v3252
        %v3356 = vpack.c.bf16 %v3255, %v3254
        %v3357 = vpack.c.bf16 %v3257, %v3256
        %v3358 = vpack.c.bf16 %v3259, %v3258
        %v3359 = vpack.c.bf16 %v3261, %v3260
        %v3360 = vpack.c.bf16 %v3263, %v3262
        %v3361 = vpack.c.bf16 %v3265, %v3264
        %v3362 = vpack.c.bf16 %v3267, %v3266
        %v3363 = vpack.c.bf16 %v3269, %v3268
        %v3364 = vpack.c.bf16 %v3271, %v3270
        %v3365 = vpack.c.bf16 %v3273, %v3272
        %v3366 = vpack.c.bf16 %v3275, %v3274
        %v3367 = vpack.c.bf16 %v3277, %v3276
        %v3368 = vpack.c.bf16 %v3279, %v3278
        %v3369 = vpack.c.bf16 %v3281, %v3280
        %v3370 = vpack.c.bf16 %v3283, %v3282
        %v3371 = vpack.c.bf16 %v3285, %v3284
        %v3372 = vpack.c.bf16 %v3287, %v3286
        %v3373 = vpack.c.bf16 %v3289, %v3288
        %v3374 = vpack.c.bf16 %v3291, %v3290
        %v3375 = vpack.c.bf16 %v3293, %v3292
        %v3376 = vpack.c.bf16 %v3295, %v3294
        %v3377 = vpack.c.bf16 %v3297, %v3296
        %v3378 = vpack.c.bf16 %v3299, %v3298
        %v3379 = vpack.c.bf16 %v3301, %v3300
        %v3380 = vpack.c.bf16 %v3303, %v3302
        %v3381 = vpack.c.bf16 %v3305, %v3304
        %v3382 = vpack.c.bf16 %v3307, %v3306
        %v3383 = vpack.c.bf16 %v3309, %v3308
        %v3384 = vpack.c.bf16 %v3311, %v3310
        %v3385 = vpack.c.bf16 %v3313, %v3312
        %v3386 = vpack.c.bf16 %v3315, %v3314
        %v3387 = vpack.c.bf16 %v3317, %v3316
        %v3388 = vpack.c.bf16 %v3319, %v3318
        %v3389 = vpack.c.bf16 %v3321, %v3320
        %v3390 = vpack.c.bf16 %v3323, %v3322
        %v3391 = vpack.c.bf16 %v3325, %v3324
        %s3392 = scalar_lea.vmem %s1, 6
        %v3393 = vld [vmem:[%s3392] sm:$0x3]
        %v3395 = vsel %vm570, %v3326, 0
        %v3398 = vsel %vm570, %v3327, 0
        %v3401 = vsel %vm570, %v3328, 0
        %v3404 = vsel %vm570, %v3329, 0
        %v3407 = vsel %vm570, %v3330, 0
        %v3410 = vsel %vm570, %v3331, 0
        %v3413 = vsel %vm570, %v3332, 0
        %v3416 = vsel %vm570, %v3333, 0
        %v3419 = vsel %vm570, %v3334, 0
        %v3422 = vsel %vm570, %v3335, 0
        %v3425 = vsel %vm570, %v3336, 0
        %v3428 = vsel %vm570, %v3337, 0
        %v3431 = vsel %vm570, %v3338, 0
        %v3434 = vsel %vm570, %v3339, 0
        %v3437 = vsel %vm570, %v3340, 0
        %v3440 = vsel %vm570, %v3341, 0
        %v3443 = vsel %vm570, %v3342, 0
        %v3446 = vsel %vm570, %v3343, 0
        %v3449 = vsel %vm570, %v3344, 0
        %v3452 = vsel %vm570, %v3345, 0
        %v3455 = vsel %vm570, %v3346, 0
        %v3458 = vsel %vm570, %v3347, 0
        %v3461 = vsel %vm570, %v3348, 0
        %v3464 = vsel %vm570, %v3349, 0
        %v3467 = vsel %vm570, %v3350, 0
        %v3470 = vsel %vm570, %v3351, 0
        %v3473 = vsel %vm570, %v3352, 0
        %v3476 = vsel %vm570, %v3353, 0
        %v3479 = vsel %vm570, %v3354, 0
        %v3482 = vsel %vm570, %v3355, 0
        %v3485 = vsel %vm570, %v3356, 0
        %v3488 = vsel %vm570, %v3357, 0
        %v3491 = vsel %vm570, %v3358, 0
        %v3494 = vsel %vm570, %v3359, 0
        %v3497 = vsel %vm570, %v3360, 0
        %v3500 = vsel %vm570, %v3361, 0
        %v3503 = vsel %vm570, %v3362, 0
        %v3506 = vsel %vm570, %v3363, 0
        %v3509 = vsel %vm570, %v3364, 0
        %v3512 = vsel %vm570, %v3365, 0
        %v3515 = vsel %vm570, %v3366, 0
        %v3518 = vsel %vm570, %v3367, 0
        %v3521 = vsel %vm570, %v3368, 0
        %v3524 = vsel %vm570, %v3369, 0
        %v3527 = vsel %vm570, %v3370, 0
        %v3530 = vsel %vm570, %v3371, 0
        %v3533 = vsel %vm570, %v3372, 0
        %v3536 = vsel %vm570, %v3373, 0
        %v3539 = vsel %vm570, %v3374, 0
        %v3542 = vsel %vm570, %v3375, 0
        %v3545 = vsel %vm570, %v3376, 0
        %v3548 = vsel %vm570, %v3377, 0
        %v3551 = vsel %vm570, %v3378, 0
        %v3554 = vsel %vm570, %v3379, 0
        %v3557 = vsel %vm570, %v3380, 0
        %v3560 = vsel %vm570, %v3381, 0
        %v3563 = vsel %vm570, %v3382, 0
        %v3566 = vsel %vm570, %v3383, 0
        %v3569 = vsel %vm570, %v3384, 0
        %v3572 = vsel %vm570, %v3385, 0
        %v3575 = vsel %vm570, %v3386, 0
        %v3578 = vsel %vm570, %v3387, 0
        %v3581 = vsel %vm570, %v3388, 0
        %v3584 = vsel %vm570, %v3389, 0
        %v3587 = vsel %vm570, %v3390, 0
        %v3590 = vsel %vm570, %v3391, 0
        %v3593 = vand.u32 %v3393, %v772
        %3595 = vmatprep.subr.bf16.mxu0 0
        %3596 = vmatpush1.bf16.msra.mxu0 %v3593
        %3597 = vmatprep.subr.bf16.mxu0 0
        %3598 = vmatpush1.bf16.msra.mxu0 0
        %3599 = vmatprep.subr.bf16.mxu0 0
        %3600 = vmatpush1.bf16.msra.mxu0 0
        %3601 = vmatprep.subr.bf16.mxu0 0
        %3602 = vmatpush1.bf16.msra.mxu0 0
        %3603 = vmatprep.subr.bf16.mxu0 0
        %3604 = vmatpush1.bf16.msra.mxu0 0
        %3605 = vmatprep.subr.bf16.mxu0 0
        %3606 = vmatpush1.bf16.msra.mxu0 0
        %3607 = vmatprep.subr.bf16.mxu0 0
        %3608 = vmatpush1.bf16.msra.mxu0 0
        %3609 = vmatprep.subr.bf16.mxu0 0
        %3610 = vmatpush1.bf16.msra.mxu0 0
        %3611 = vmatprep.subr.bf16.mxu0 0
        %3612 = vmatpush1.bf16.msra.mxu0 0
        %3613 = vmatprep.subr.bf16.mxu0 0
        %3614 = vmatpush1.bf16.msra.mxu0 0
        %3615 = vmatprep.subr.bf16.mxu0 0
        %3616 = vmatpush1.bf16.msra.mxu0 0
        %3617 = vmatprep.subr.bf16.mxu0 0
        %3618 = vmatpush1.bf16.msra.mxu0 0
        %3619 = vmatprep.subr.bf16.mxu0 0
        %3620 = vmatpush1.bf16.msra.mxu0 0
        %3621 = vmatprep.subr.bf16.mxu0 0
        %3622 = vmatpush1.bf16.msra.mxu0 0
        %3623 = vmatprep.subr.bf16.mxu0 0
        %3624 = vmatpush1.bf16.msra.mxu0 0
        %3625 = vmatprep.subr.bf16.mxu0 0
        %3626 = vmatpush1.bf16.msra.mxu0 0
        %3627 = vmatprep.mubr.bf16.mxu0 0
        %3628 = vmatmul.mubr.bf16.gmra.mrb[0].mxu0 %v3395
        %v3629 = vpop.f32.mrb[0].mxu0
        %v3630 = vadd.f32 0.0, %v3629
        %v3631 = vpop.f32.mrb[0].mxu0
        %v3632 = vpop.f32.mrb[0].mxu0
        %v3633 = vadd.f32 0.0, %v3632
        %v3634 = vpop.f32.mrb[0].mxu0
        %3635 = vmatprep.mubr.bf16.mxu0 0
        %3636 = vmatmul.mubr.bf16.gmra.mrb[0].mxu0 %v3398
        %v3637 = vpop.f32.mrb[0].mxu0
        %v3638 = vadd.f32 0.0, %v3637
        %v3639 = vpop.f32.mrb[0].mxu0
        %v3640 = vpop.f32.mrb[0].mxu0
        %v3641 = vadd.f32 0.0, %v3640
        %v3642 = vpop.f32.mrb[0].mxu0
        %3643 = vmatprep.mubr.bf16.mxu0 0
        %3644 = vmatmul.mubr.bf16.gmra.mrb[0].mxu0 %v3401
        %v3645 = vpop.f32.mrb[0].mxu0
        %v3646 = vadd.f32 0.0, %v3645
        %v3647 = vpop.f32.mrb[0].mxu0
        %v3648 = vpop.f32.mrb[0].mxu0
        %v3649 = vadd.f32 0.0, %v3648
        %v3650 = vpop.f32.mrb[0].mxu0
        %3651 = vmatprep.mubr.bf16.mxu0 0
        %3652 = vmatmul.mubr.bf16.gmra.mrb[0].mxu0 %v3404
        %v3653 = vpop.f32.mrb[0].mxu0
        %v3654 = vadd.f32 0.0, %v3653
        %v3655 = vpop.f32.mrb[0].mxu0
        %v3656 = vpop.f32.mrb[0].mxu0
        %v3657 = vadd.f32 0.0, %v3656
        %v3658 = vpop.f32.mrb[0].mxu0
        %3659 = vmatprep.mubr.bf16.mxu0 0
        %3660 = vmatmul.mubr.bf16.gmra.mrb[0].mxu0 %v3407
        %v3661 = vpop.f32.mrb[0].mxu0
        %v3662 = vadd.f32 0.0, %v3661
        %v3663 = vpop.f32.mrb[0].mxu0
        %v3664 = vpop.f32.mrb[0].mxu0
        %v3665 = vadd.f32 0.0, %v3664
        %v3666 = vpop.f32.mrb[0].mxu0
        %3667 = vmatprep.mubr.bf16.mxu0 0
        %3668 = vmatmul.mubr.bf16.gmra.mrb[0].mxu0 %v3410
        %v3669 = vpop.f32.mrb[0].mxu0
        %v3670 = vadd.f32 0.0, %v3669
        %v3671 = vpop.f32.mrb[0].mxu0
        %v3672 = vpop.f32.mrb[0].mxu0
        %v3673 = vadd.f32 0.0, %v3672
        %v3674 = vpop.f32.mrb[0].mxu0
        %3675 = vmatprep.mubr.bf16.mxu0 0
        %3676 = vmatmul.mubr.bf16.gmra.mrb[0].mxu0 %v3413
        %v3677 = vpop.f32.mrb[0].mxu0
        %v3678 = vadd.f32 0.0, %v3677
        %v3679 = vpop.f32.mrb[0].mxu0
        %v3680 = vpop.f32.mrb[0].mxu0
        %v3681 = vadd.f32 0.0, %v3680
        %v3682 = vpop.f32.mrb[0].mxu0
        %3683 = vmatprep.mubr.bf16.mxu0 0
        %3684 = vmatmul.mubr.bf16.gmra.mrb[0].mxu0 %v3416
        %v3685 = vpop.f32.mrb[0].mxu0
        %v3686 = vadd.f32 0.0, %v3685
        %v3687 = vpop.f32.mrb[0].mxu0
        %v3688 = vpop.f32.mrb[0].mxu0
        %v3689 = vadd.f32 0.0, %v3688
        %v3690 = vpop.f32.mrb[0].mxu0
        %3691 = vmatprep.mubr.bf16.mxu0 0
        %3692 = vmatmul.mubr.bf16.gmra.mrb[0].mxu0 %v3419
        %v3693 = vpop.f32.mrb[0].mxu0
        %v3694 = vadd.f32 0.0, %v3693
        %v3695 = vpop.f32.mrb[0].mxu0
        %v3696 = vpop.f32.mrb[0].mxu0
        %v3697 = vadd.f32 0.0, %v3696
        %v3698 = vpop.f32.mrb[0].mxu0
        %3699 = vmatprep.mubr.bf16.mxu0 0
        %3700 = vmatmul.mubr.bf16.gmra.mrb[0].mxu0 %v3422
        %v3701 = vpop.f32.mrb[0].mxu0
        %v3702 = vadd.f32 0.0, %v3701
        %v3703 = vpop.f32.mrb[0].mxu0
        %v3704 = vpop.f32.mrb[0].mxu0
        %v3705 = vadd.f32 0.0, %v3704
        %v3706 = vpop.f32.mrb[0].mxu0
        %3707 = vmatprep.mubr.bf16.mxu0 0
        %3708 = vmatmul.mubr.bf16.gmra.mrb[0].mxu0 %v3425
        %v3709 = vpop.f32.mrb[0].mxu0
        %v3710 = vadd.f32 0.0, %v3709
        %v3711 = vpop.f32.mrb[0].mxu0
        %v3712 = vpop.f32.mrb[0].mxu0
        %v3713 = vadd.f32 0.0, %v3712
        %v3714 = vpop.f32.mrb[0].mxu0
        %3715 = vmatprep.mubr.bf16.mxu0 0
        %3716 = vmatmul.mubr.bf16.gmra.mrb[0].mxu0 %v3428
        %v3717 = vpop.f32.mrb[0].mxu0
        %v3718 = vadd.f32 0.0, %v3717
        %v3719 = vpop.f32.mrb[0].mxu0
        %v3720 = vpop.f32.mrb[0].mxu0
        %v3721 = vadd.f32 0.0, %v3720
        %v3722 = vpop.f32.mrb[0].mxu0
        %3723 = vmatprep.mubr.bf16.mxu0 0
        %3724 = vmatmul.mubr.bf16.gmra.mrb[0].mxu0 %v3431
        %v3725 = vpop.f32.mrb[0].mxu0
        %v3726 = vadd.f32 0.0, %v3725
        %v3727 = vpop.f32.mrb[0].mxu0
        %v3728 = vpop.f32.mrb[0].mxu0
        %v3729 = vadd.f32 0.0, %v3728
        %v3730 = vpop.f32.mrb[0].mxu0
        %3731 = vmatprep.mubr.bf16.mxu0 0
        %3732 = vmatmul.mubr.bf16.gmra.mrb[0].mxu0 %v3434
        %v3733 = vpop.f32.mrb[0].mxu0
        %v3734 = vadd.f32 0.0, %v3733
        %v3735 = vpop.f32.mrb[0].mxu0
        %v3736 = vpop.f32.mrb[0].mxu0
        %v3737 = vadd.f32 0.0, %v3736
        %v3738 = vpop.f32.mrb[0].mxu0
        %3739 = vmatprep.mubr.bf16.mxu0 0
        %3740 = vmatmul.mubr.bf16.gmra.mrb[0].mxu0 %v3437
        %v3741 = vpop.f32.mrb[0].mxu0
        %v3742 = vadd.f32 0.0, %v3741
        %v3743 = vpop.f32.mrb[0].mxu0
        %v3744 = vpop.f32.mrb[0].mxu0
        %v3745 = vadd.f32 0.0, %v3744
        %v3746 = vpop.f32.mrb[0].mxu0
        %3747 = vmatprep.mubr.bf16.mxu0 0
        %3748 = vmatmul.mubr.bf16.gmra.mrb[0].mxu0 %v3440
        %v3749 = vpop.f32.mrb[0].mxu0
        %v3750 = vadd.f32 0.0, %v3749
        %v3751 = vpop.f32.mrb[0].mxu0
        %v3752 = vpop.f32.mrb[0].mxu0
        %v3753 = vadd.f32 0.0, %v3752
        %v3754 = vpop.f32.mrb[0].mxu0
        %3755 = vmatprep.mubr.bf16.mxu0 0
        %3756 = vmatmul.mubr.bf16.gmra.mrb[0].mxu0 %v3443
        %v3757 = vpop.f32.mrb[0].mxu0
        %v3758 = vadd.f32 0.0, %v3757
        %v3759 = vpop.f32.mrb[0].mxu0
        %v3760 = vpop.f32.mrb[0].mxu0
        %v3761 = vadd.f32 0.0, %v3760
        %v3762 = vpop.f32.mrb[0].mxu0
        %3763 = vmatprep.mubr.bf16.mxu0 0
        %3764 = vmatmul.mubr.bf16.gmra.mrb[0].mxu0 %v3446
        %v3765 = vpop.f32.mrb[0].mxu0
        %v3766 = vadd.f32 0.0, %v3765
        %v3767 = vpop.f32.mrb[0].mxu0
        %v3768 = vpop.f32.mrb[0].mxu0
        %v3769 = vadd.f32 0.0, %v3768
        %v3770 = vpop.f32.mrb[0].mxu0
        %3771 = vmatprep.mubr.bf16.mxu0 0
        %3772 = vmatmul.mubr.bf16.gmra.mrb[0].mxu0 %v3449
        %v3773 = vpop.f32.mrb[0].mxu0
        %v3774 = vadd.f32 0.0, %v3773
        %v3775 = vpop.f32.mrb[0].mxu0
        %v3776 = vpop.f32.mrb[0].mxu0
        %v3777 = vadd.f32 0.0, %v3776
        %v3778 = vpop.f32.mrb[0].mxu0
        %3779 = vmatprep.mubr.bf16.mxu0 0
        %3780 = vmatmul.mubr.bf16.gmra.mrb[0].mxu0 %v3452
        %v3781 = vpop.f32.mrb[0].mxu0
        %v3782 = vadd.f32 0.0, %v3781
        %v3783 = vpop.f32.mrb[0].mxu0
        %v3784 = vpop.f32.mrb[0].mxu0
        %v3785 = vadd.f32 0.0, %v3784
        %v3786 = vpop.f32.mrb[0].mxu0
        %3787 = vmatprep.mubr.bf16.mxu0 0
        %3788 = vmatmul.mubr.bf16.gmra.mrb[0].mxu0 %v3455
        %v3789 = vpop.f32.mrb[0].mxu0
        %v3790 = vadd.f32 0.0, %v3789
        %v3791 = vpop.f32.mrb[0].mxu0
        %v3792 = vpop.f32.mrb[0].mxu0
        %v3793 = vadd.f32 0.0, %v3792
        %v3794 = vpop.f32.mrb[0].mxu0
        %3795 = vmatprep.mubr.bf16.mxu0 0
        %3796 = vmatmul.mubr.bf16.gmra.mrb[0].mxu0 %v3458
        %v3797 = vpop.f32.mrb[0].mxu0
        %v3798 = vadd.f32 0.0, %v3797
        %v3799 = vpop.f32.mrb[0].mxu0
        %v3800 = vpop.f32.mrb[0].mxu0
        %v3801 = vadd.f32 0.0, %v3800
        %v3802 = vpop.f32.mrb[0].mxu0
        %3803 = vmatprep.mubr.bf16.mxu0 0
        %3804 = vmatmul.mubr.bf16.gmra.mrb[0].mxu0 %v3461
        %v3805 = vpop.f32.mrb[0].mxu0
        %v3806 = vadd.f32 0.0, %v3805
        %v3807 = vpop.f32.mrb[0].mxu0
        %v3808 = vpop.f32.mrb[0].mxu0
        %v3809 = vadd.f32 0.0, %v3808
        %v3810 = vpop.f32.mrb[0].mxu0
        %3811 = vmatprep.mubr.bf16.mxu0 0
        %3812 = vmatmul.mubr.bf16.gmra.mrb[0].mxu0 %v3464
        %v3813 = vpop.f32.mrb[0].mxu0
        %v3814 = vadd.f32 0.0, %v3813
        %v3815 = vpop.f32.mrb[0].mxu0
        %v3816 = vpop.f32.mrb[0].mxu0
        %v3817 = vadd.f32 0.0, %v3816
        %v3818 = vpop.f32.mrb[0].mxu0
        %3819 = vmatprep.mubr.bf16.mxu0 0
        %3820 = vmatmul.mubr.bf16.gmra.mrb[0].mxu0 %v3467
        %v3821 = vpop.f32.mrb[0].mxu0
        %v3822 = vadd.f32 0.0, %v3821
        %v3823 = vpop.f32.mrb[0].mxu0
        %v3824 = vpop.f32.mrb[0].mxu0
        %v3825 = vadd.f32 0.0, %v3824
        %v3826 = vpop.f32.mrb[0].mxu0
        %3827 = vmatprep.mubr.bf16.mxu0 0
        %3828 = vmatmul.mubr.bf16.gmra.mrb[0].mxu0 %v3470
        %v3829 = vpop.f32.mrb[0].mxu0
        %v3830 = vadd.f32 0.0, %v3829
        %v3831 = vpop.f32.mrb[0].mxu0
        %v3832 = vpop.f32.mrb[0].mxu0
        %v3833 = vadd.f32 0.0, %v3832
        %v3834 = vpop.f32.mrb[0].mxu0
        %3835 = vmatprep.mubr.bf16.mxu0 0
        %3836 = vmatmul.mubr.bf16.gmra.mrb[0].mxu0 %v3473
        %v3837 = vpop.f32.mrb[0].mxu0
        %v3838 = vadd.f32 0.0, %v3837
        %v3839 = vpop.f32.mrb[0].mxu0
        %v3840 = vpop.f32.mrb[0].mxu0
        %v3841 = vadd.f32 0.0, %v3840
        %v3842 = vpop.f32.mrb[0].mxu0
        %3843 = vmatprep.mubr.bf16.mxu0 0
        %3844 = vmatmul.mubr.bf16.gmra.mrb[0].mxu0 %v3476
        %v3845 = vpop.f32.mrb[0].mxu0
        %v3846 = vadd.f32 0.0, %v3845
        %v3847 = vpop.f32.mrb[0].mxu0
        %v3848 = vpop.f32.mrb[0].mxu0
        %v3849 = vadd.f32 0.0, %v3848
        %v3850 = vpop.f32.mrb[0].mxu0
        %3851 = vmatprep.mubr.bf16.mxu0 0
        %3852 = vmatmul.mubr.bf16.gmra.mrb[0].mxu0 %v3479
        %v3853 = vpop.f32.mrb[0].mxu0
        %v3854 = vadd.f32 0.0, %v3853
        %v3855 = vpop.f32.mrb[0].mxu0
        %v3856 = vpop.f32.mrb[0].mxu0
        %v3857 = vadd.f32 0.0, %v3856
        %v3858 = vpop.f32.mrb[0].mxu0
        %3859 = vmatprep.mubr.bf16.mxu0 0
        %3860 = vmatmul.mubr.bf16.gmra.mrb[0].mxu0 %v3482
        %v3861 = vpop.f32.mrb[0].mxu0
        %v3862 = vadd.f32 0.0, %v3861
        %v3863 = vpop.f32.mrb[0].mxu0
        %v3864 = vpop.f32.mrb[0].mxu0
        %v3865 = vadd.f32 0.0, %v3864
        %v3866 = vpop.f32.mrb[0].mxu0
        %3867 = vmatprep.mubr.bf16.mxu0 0
        %3868 = vmatmul.mubr.bf16.gmra.mrb[0].mxu0 %v3485
        %v3869 = vpop.f32.mrb[0].mxu0
        %v3870 = vadd.f32 0.0, %v3869
        %v3871 = vpop.f32.mrb[0].mxu0
        %v3872 = vpop.f32.mrb[0].mxu0
        %v3873 = vadd.f32 0.0, %v3872
        %v3874 = vpop.f32.mrb[0].mxu0
        %3875 = vmatprep.mubr.bf16.mxu0 0
        %3876 = vmatmul.mubr.bf16.gmra.mrb[0].mxu0 %v3488
        %v3877 = vpop.f32.mrb[0].mxu0
        %v3878 = vadd.f32 0.0, %v3877
        %v3879 = vpop.f32.mrb[0].mxu0
        %v3880 = vpop.f32.mrb[0].mxu0
        %v3881 = vadd.f32 0.0, %v3880
        %v3882 = vpop.f32.mrb[0].mxu0
        %3883 = vmatprep.mubr.bf16.mxu0 0
        %3884 = vmatmul.mubr.bf16.gmra.mrb[0].mxu0 %v3491
        %v3885 = vpop.f32.mrb[0].mxu0
        %v3886 = vadd.f32 0.0, %v3885
        %v3887 = vpop.f32.mrb[0].mxu0
        %v3888 = vpop.f32.mrb[0].mxu0
        %v3889 = vadd.f32 0.0, %v3888
        %v3890 = vpop.f32.mrb[0].mxu0
        %3891 = vmatprep.mubr.bf16.mxu0 0
        %3892 = vmatmul.mubr.bf16.gmra.mrb[0].mxu0 %v3494
        %v3893 = vpop.f32.mrb[0].mxu0
        %v3894 = vadd.f32 0.0, %v3893
        %v3895 = vpop.f32.mrb[0].mxu0
        %v3896 = vpop.f32.mrb[0].mxu0
        %v3897 = vadd.f32 0.0, %v3896
        %v3898 = vpop.f32.mrb[0].mxu0
        %3899 = vmatprep.mubr.bf16.mxu0 0
        %3900 = vmatmul.mubr.bf16.gmra.mrb[0].mxu0 %v3497
        %v3901 = vpop.f32.mrb[0].mxu0
        %v3902 = vadd.f32 0.0, %v3901
        %v3903 = vpop.f32.mrb[0].mxu0
        %v3904 = vpop.f32.mrb[0].mxu0
        %v3905 = vadd.f32 0.0, %v3904
        %v3906 = vpop.f32.mrb[0].mxu0
        %3907 = vmatprep.mubr.bf16.mxu0 0
        %3908 = vmatmul.mubr.bf16.gmra.mrb[0].mxu0 %v3500
        %v3909 = vpop.f32.mrb[0].mxu0
        %v3910 = vadd.f32 0.0, %v3909
        %v3911 = vpop.f32.mrb[0].mxu0
        %v3912 = vpop.f32.mrb[0].mxu0
        %v3913 = vadd.f32 0.0, %v3912
        %v3914 = vpop.f32.mrb[0].mxu0
        %3915 = vmatprep.mubr.bf16.mxu0 0
        %3916 = vmatmul.mubr.bf16.gmra.mrb[0].mxu0 %v3503
        %v3917 = vpop.f32.mrb[0].mxu0
        %v3918 = vadd.f32 0.0, %v3917
        %v3919 = vpop.f32.mrb[0].mxu0
        %v3920 = vpop.f32.mrb[0].mxu0
        %v3921 = vadd.f32 0.0, %v3920
        %v3922 = vpop.f32.mrb[0].mxu0
        %3923 = vmatprep.mubr.bf16.mxu0 0
        %3924 = vmatmul.mubr.bf16.gmra.mrb[0].mxu0 %v3506
        %v3925 = vpop.f32.mrb[0].mxu0
        %v3926 = vadd.f32 0.0, %v3925
        %v3927 = vpop.f32.mrb[0].mxu0
        %v3928 = vpop.f32.mrb[0].mxu0
        %v3929 = vadd.f32 0.0, %v3928
        %v3930 = vpop.f32.mrb[0].mxu0
        %3931 = vmatprep.mubr.bf16.mxu0 0
        %3932 = vmatmul.mubr.bf16.gmra.mrb[0].mxu0 %v3509
        %v3933 = vpop.f32.mrb[0].mxu0
        %v3934 = vadd.f32 0.0, %v3933
        %v3935 = vpop.f32.mrb[0].mxu0
        %v3936 = vpop.f32.mrb[0].mxu0
        %v3937 = vadd.f32 0.0, %v3936
        %v3938 = vpop.f32.mrb[0].mxu0
        %3939 = vmatprep.mubr.bf16.mxu0 0
        %3940 = vmatmul.mubr.bf16.gmra.mrb[0].mxu0 %v3512
        %v3941 = vpop.f32.mrb[0].mxu0
        %v3942 = vadd.f32 0.0, %v3941
        %v3943 = vpop.f32.mrb[0].mxu0
        %v3944 = vpop.f32.mrb[0].mxu0
        %v3945 = vadd.f32 0.0, %v3944
        %v3946 = vpop.f32.mrb[0].mxu0
        %3947 = vmatprep.mubr.bf16.mxu0 0
        %3948 = vmatmul.mubr.bf16.gmra.mrb[0].mxu0 %v3515
        %v3949 = vpop.f32.mrb[0].mxu0
        %v3950 = vadd.f32 0.0, %v3949
        %v3951 = vpop.f32.mrb[0].mxu0
        %v3952 = vpop.f32.mrb[0].mxu0
        %v3953 = vadd.f32 0.0, %v3952
        %v3954 = vpop.f32.mrb[0].mxu0
        %3955 = vmatprep.mubr.bf16.mxu0 0
        %3956 = vmatmul.mubr.bf16.gmra.mrb[0].mxu0 %v3518
        %v3957 = vpop.f32.mrb[0].mxu0
        %v3958 = vadd.f32 0.0, %v3957
        %v3959 = vpop.f32.mrb[0].mxu0
        %v3960 = vpop.f32.mrb[0].mxu0
        %v3961 = vadd.f32 0.0, %v3960
        %v3962 = vpop.f32.mrb[0].mxu0
        %3963 = vmatprep.mubr.bf16.mxu0 0
        %3964 = vmatmul.mubr.bf16.gmra.mrb[0].mxu0 %v3521
        %v3965 = vpop.f32.mrb[0].mxu0
        %v3966 = vadd.f32 0.0, %v3965
        %v3967 = vpop.f32.mrb[0].mxu0
        %v3968 = vpop.f32.mrb[0].mxu0
        %v3969 = vadd.f32 0.0, %v3968
        %v3970 = vpop.f32.mrb[0].mxu0
        %3971 = vmatprep.mubr.bf16.mxu0 0
        %3972 = vmatmul.mubr.bf16.gmra.mrb[0].mxu0 %v3524
        %v3973 = vpop.f32.mrb[0].mxu0
        %v3974 = vadd.f32 0.0, %v3973
        %v3975 = vpop.f32.mrb[0].mxu0
        %v3976 = vpop.f32.mrb[0].mxu0
        %v3977 = vadd.f32 0.0, %v3976
        %v3978 = vpop.f32.mrb[0].mxu0
        %3979 = vmatprep.mubr.bf16.mxu0 0
        %3980 = vmatmul.mubr.bf16.gmra.mrb[0].mxu0 %v3527
        %v3981 = vpop.f32.mrb[0].mxu0
        %v3982 = vadd.f32 0.0, %v3981
        %v3983 = vpop.f32.mrb[0].mxu0
        %v3984 = vpop.f32.mrb[0].mxu0
        %v3985 = vadd.f32 0.0, %v3984
        %v3986 = vpop.f32.mrb[0].mxu0
        %3987 = vmatprep.mubr.bf16.mxu0 0
        %3988 = vmatmul.mubr.bf16.gmra.mrb[0].mxu0 %v3530
        %v3989 = vpop.f32.mrb[0].mxu0
        %v3990 = vadd.f32 0.0, %v3989
        %v3991 = vpop.f32.mrb[0].mxu0
        %v3992 = vpop.f32.mrb[0].mxu0
        %v3993 = vadd.f32 0.0, %v3992
        %v3994 = vpop.f32.mrb[0].mxu0
        %3995 = vmatprep.mubr.bf16.mxu0 0
        %3996 = vmatmul.mubr.bf16.gmra.mrb[0].mxu0 %v3533
        %v3997 = vpop.f32.mrb[0].mxu0
        %v3998 = vadd.f32 0.0, %v3997
        %v3999 = vpop.f32.mrb[0].mxu0
        %v4000 = vpop.f32.mrb[0].mxu0
        %v4001 = vadd.f32 0.0, %v4000
        %v4002 = vpop.f32.mrb[0].mxu0
        %4003 = vmatprep.mubr.bf16.mxu0 0
        %4004 = vmatmul.mubr.bf16.gmra.mrb[0].mxu0 %v3536
        %v4005 = vpop.f32.mrb[0].mxu0
        %v4006 = vadd.f32 0.0, %v4005
        %v4007 = vpop.f32.mrb[0].mxu0
        %v4008 = vpop.f32.mrb[0].mxu0
        %v4009 = vadd.f32 0.0, %v4008
        %v4010 = vpop.f32.mrb[0].mxu0
        %4011 = vmatprep.mubr.bf16.mxu0 0
        %4012 = vmatmul.mubr.bf16.gmra.mrb[0].mxu0 %v3539
        %v4013 = vpop.f32.mrb[0].mxu0
        %v4014 = vadd.f32 0.0, %v4013
        %v4015 = vpop.f32.mrb[0].mxu0
        %v4016 = vpop.f32.mrb[0].mxu0
        %v4017 = vadd.f32 0.0, %v4016
        %v4018 = vpop.f32.mrb[0].mxu0
        %4019 = vmatprep.mubr.bf16.mxu0 0
        %4020 = vmatmul.mubr.bf16.gmra.mrb[0].mxu0 %v3542
        %v4021 = vpop.f32.mrb[0].mxu0
        %v4022 = vadd.f32 0.0, %v4021
        %v4023 = vpop.f32.mrb[0].mxu0
        %v4024 = vpop.f32.mrb[0].mxu0
        %v4025 = vadd.f32 0.0, %v4024
        %v4026 = vpop.f32.mrb[0].mxu0
        %4027 = vmatprep.mubr.bf16.mxu0 0
        %4028 = vmatmul.mubr.bf16.gmra.mrb[0].mxu0 %v3545
        %v4029 = vpop.f32.mrb[0].mxu0
        %v4030 = vadd.f32 0.0, %v4029
        %v4031 = vpop.f32.mrb[0].mxu0
        %v4032 = vpop.f32.mrb[0].mxu0
        %v4033 = vadd.f32 0.0, %v4032
        %v4034 = vpop.f32.mrb[0].mxu0
        %4035 = vmatprep.mubr.bf16.mxu0 0
        %4036 = vmatmul.mubr.bf16.gmra.mrb[0].mxu0 %v3548
        %v4037 = vpop.f32.mrb[0].mxu0
        %v4038 = vadd.f32 0.0, %v4037
        %v4039 = vpop.f32.mrb[0].mxu0
        %v4040 = vpop.f32.mrb[0].mxu0
        %v4041 = vadd.f32 0.0, %v4040
        %v4042 = vpop.f32.mrb[0].mxu0
        %4043 = vmatprep.mubr.bf16.mxu0 0
        %4044 = vmatmul.mubr.bf16.gmra.mrb[0].mxu0 %v3551
        %v4045 = vpop.f32.mrb[0].mxu0
        %v4046 = vadd.f32 0.0, %v4045
        %v4047 = vpop.f32.mrb[0].mxu0
        %v4048 = vpop.f32.mrb[0].mxu0
        %v4049 = vadd.f32 0.0, %v4048
        %v4050 = vpop.f32.mrb[0].mxu0
        %4051 = vmatprep.mubr.bf16.mxu0 0
        %4052 = vmatmul.mubr.bf16.gmra.mrb[0].mxu0 %v3554
        %v4053 = vpop.f32.mrb[0].mxu0
        %v4054 = vadd.f32 0.0, %v4053
        %v4055 = vpop.f32.mrb[0].mxu0
        %v4056 = vpop.f32.mrb[0].mxu0
        %v4057 = vadd.f32 0.0, %v4056
        %v4058 = vpop.f32.mrb[0].mxu0
        %4059 = vmatprep.mubr.bf16.mxu0 0
        %4060 = vmatmul.mubr.bf16.gmra.mrb[0].mxu0 %v3557
        %v4061 = vpop.f32.mrb[0].mxu0
        %v4062 = vadd.f32 0.0, %v4061
        %v4063 = vpop.f32.mrb[0].mxu0
        %v4064 = vpop.f32.mrb[0].mxu0
        %v4065 = vadd.f32 0.0, %v4064
        %v4066 = vpop.f32.mrb[0].mxu0
        %4067 = vmatprep.mubr.bf16.mxu0 0
        %4068 = vmatmul.mubr.bf16.gmra.mrb[0].mxu0 %v3560
        %v4069 = vpop.f32.mrb[0].mxu0
        %v4070 = vadd.f32 0.0, %v4069
        %v4071 = vpop.f32.mrb[0].mxu0
        %v4072 = vpop.f32.mrb[0].mxu0
        %v4073 = vadd.f32 0.0, %v4072
        %v4074 = vpop.f32.mrb[0].mxu0
        %4075 = vmatprep.mubr.bf16.mxu0 0
        %4076 = vmatmul.mubr.bf16.gmra.mrb[0].mxu0 %v3563
        %v4077 = vpop.f32.mrb[0].mxu0
        %v4078 = vadd.f32 0.0, %v4077
        %v4079 = vpop.f32.mrb[0].mxu0
        %v4080 = vpop.f32.mrb[0].mxu0
        %v4081 = vadd.f32 0.0, %v4080
        %v4082 = vpop.f32.mrb[0].mxu0
        %4083 = vmatprep.mubr.bf16.mxu0 0
        %4084 = vmatmul.mubr.bf16.gmra.mrb[0].mxu0 %v3566
        %v4085 = vpop.f32.mrb[0].mxu0
        %v4086 = vadd.f32 0.0, %v4085
        %v4087 = vpop.f32.mrb[0].mxu0
        %v4088 = vpop.f32.mrb[0].mxu0
        %v4089 = vadd.f32 0.0, %v4088
        %v4090 = vpop.f32.mrb[0].mxu0
        %4091 = vmatprep.mubr.bf16.mxu0 0
        %4092 = vmatmul.mubr.bf16.gmra.mrb[0].mxu0 %v3569
        %v4093 = vpop.f32.mrb[0].mxu0
        %v4094 = vadd.f32 0.0, %v4093
        %v4095 = vpop.f32.mrb[0].mxu0
        %v4096 = vpop.f32.mrb[0].mxu0
        %v4097 = vadd.f32 0.0, %v4096
        %v4098 = vpop.f32.mrb[0].mxu0
        %4099 = vmatprep.mubr.bf16.mxu0 0
        %4100 = vmatmul.mubr.bf16.gmra.mrb[0].mxu0 %v3572
        %v4101 = vpop.f32.mrb[0].mxu0
        %v4102 = vadd.f32 0.0, %v4101
        %v4103 = vpop.f32.mrb[0].mxu0
        %v4104 = vpop.f32.mrb[0].mxu0
        %v4105 = vadd.f32 0.0, %v4104
        %v4106 = vpop.f32.mrb[0].mxu0
        %4107 = vmatprep.mubr.bf16.mxu0 0
        %4108 = vmatmul.mubr.bf16.gmra.mrb[0].mxu0 %v3575
        %v4109 = vpop.f32.mrb[0].mxu0
        %v4110 = vadd.f32 0.0, %v4109
        %v4111 = vpop.f32.mrb[0].mxu0
        %v4112 = vpop.f32.mrb[0].mxu0
        %v4113 = vadd.f32 0.0, %v4112
        %v4114 = vpop.f32.mrb[0].mxu0
        %4115 = vmatprep.mubr.bf16.mxu0 0
        %4116 = vmatmul.mubr.bf16.gmra.mrb[0].mxu0 %v3578
        %v4117 = vpop.f32.mrb[0].mxu0
        %v4118 = vadd.f32 0.0, %v4117
        %v4119 = vpop.f32.mrb[0].mxu0
        %v4120 = vpop.f32.mrb[0].mxu0
        %v4121 = vadd.f32 0.0, %v4120
        %v4122 = vpop.f32.mrb[0].mxu0
        %4123 = vmatprep.mubr.bf16.mxu0 0
        %4124 = vmatmul.mubr.bf16.gmra.mrb[0].mxu0 %v3581
        %v4125 = vpop.f32.mrb[0].mxu0
        %v4126 = vadd.f32 0.0, %v4125
        %v4127 = vpop.f32.mrb[0].mxu0
        %v4128 = vpop.f32.mrb[0].mxu0
        %v4129 = vadd.f32 0.0, %v4128
        %v4130 = vpop.f32.mrb[0].mxu0
        %4131 = vmatprep.mubr.bf16.mxu0 0
        %4132 = vmatmul.mubr.bf16.gmra.mrb[0].mxu0 %v3584
        %v4133 = vpop.f32.mrb[0].mxu0
        %v4134 = vadd.f32 0.0, %v4133
        %v4135 = vpop.f32.mrb[0].mxu0
        %v4136 = vpop.f32.mrb[0].mxu0
        %v4137 = vadd.f32 0.0, %v4136
        %v4138 = vpop.f32.mrb[0].mxu0
        %4139 = vmatprep.mubr.bf16.mxu0 0
        %4140 = vmatmul.mubr.bf16.gmra.mrb[0].mxu0 %v3587
        %v4141 = vpop.f32.mrb[0].mxu0
        %v4142 = vadd.f32 0.0, %v4141
        %v4143 = vpop.f32.mrb[0].mxu0
        %v4144 = vpop.f32.mrb[0].mxu0
        %v4145 = vadd.f32 0.0, %v4144
        %v4146 = vpop.f32.mrb[0].mxu0
        %4147 = vmatprep.mubr.bf16.mxu0 0
        %4148 = vmatmul.mubr.bf16.gmra.mrb[0].mxu0 %v3590
        %v4149 = vpop.f32.mrb[0].mxu0
        %v4150 = vadd.f32 0.0, %v4149
        %v4151 = vpop.f32.mrb[0].mxu0
        %v4152 = vpop.f32.mrb[0].mxu0
        %v4153 = vadd.f32 0.0, %v4152
        %v4154 = vpop.f32.mrb[0].mxu0
        %4155 = vdwg.mxu0
        %v4156 = vadd.f32 %v3061, %v3630
        %v4157 = vadd.f32 %v3062, %v3633
        %v4158 = vadd.f32 %v3063, %v3638
        %v4159 = vadd.f32 %v3064, %v3641
        %v4160 = vadd.f32 %v3065, %v3646
        %v4161 = vadd.f32 %v3066, %v3649
        %v4162 = vadd.f32 %v3067, %v3654
        %v4163 = vadd.f32 %v3068, %v3657
        %v4164 = vadd.f32 %v3069, %v3662
        %v4165 = vadd.f32 %v3070, %v3665
        %v4166 = vadd.f32 %v3071, %v3670
        %v4167 = vadd.f32 %v3072, %v3673
        %v4168 = vadd.f32 %v3073, %v3678
        %v4169 = vadd.f32 %v3074, %v3681
        %v4170 = vadd.f32 %v3075, %v3686
        %v4171 = vadd.f32 %v3076, %v3689
        %v4172 = vadd.f32 %v3077, %v3694
        %v4173 = vadd.f32 %v3078, %v3697
        %v4174 = vadd.f32 %v3079, %v3702
        %v4175 = vadd.f32 %v3080, %v3705
        %v4176 = vadd.f32 %v3081, %v3710
        %v4177 = vadd.f32 %v3082, %v3713
        %v4178 = vadd.f32 %v3083, %v3718
        %v4179 = vadd.f32 %v3084, %v3721
        %v4180 = vadd.f32 %v3085, %v3726
        %v4181 = vadd.f32 %v3086, %v3729
        %v4182 = vadd.f32 %v3087, %v3734
        %v4183 = vadd.f32 %v3088, %v3737
        %v4184 = vadd.f32 %v3089, %v3742
        %v4185 = vadd.f32 %v3090, %v3745
        %v4186 = vadd.f32 %v3091, %v3750
        %v4187 = vadd.f32 %v3092, %v3753
        %v4188 = vadd.f32 %v3093, %v3758
        %v4189 = vadd.f32 %v3094, %v3761
        %v4190 = vadd.f32 %v3095, %v3766
        %v4191 = vadd.f32 %v3096, %v3769
        %v4192 = vadd.f32 %v3097, %v3774
        %v4193 = vadd.f32 %v3098, %v3777
        %v4194 = vadd.f32 %v3099, %v3782
        %v4195 = vadd.f32 %v3100, %v3785
        %v4196 = vadd.f32 %v3101, %v3790
        %v4197 = vadd.f32 %v3102, %v3793
        %v4198 = vadd.f32 %v3103, %v3798
        %v4199 = vadd.f32 %v3104, %v3801
        %v4200 = vadd.f32 %v3105, %v3806
        %v4201 = vadd.f32 %v3106, %v3809
        %v4202 = vadd.f32 %v3107, %v3814
        %v4203 = vadd.f32 %v3108, %v3817
        %v4204 = vadd.f32 %v3109, %v3822
        %v4205 = vadd.f32 %v3110, %v3825
        %v4206 = vadd.f32 %v3111, %v3830
        %v4207 = vadd.f32 %v3112, %v3833
        %v4208 = vadd.f32 %v3113, %v3838
        %v4209 = vadd.f32 %v3114, %v3841
        %v4210 = vadd.f32 %v3115, %v3846
        %v4211 = vadd.f32 %v3116, %v3849
        %v4212 = vadd.f32 %v3117, %v3854
        %v4213 = vadd.f32 %v3118, %v3857
        %v4214 = vadd.f32 %v3119, %v3862
        %v4215 = vadd.f32 %v3120, %v3865
        %v4216 = vadd.f32 %v3121, %v3870
        %v4217 = vadd.f32 %v3122, %v3873
        %v4218 = vadd.f32 %v3123, %v3878
        %v4219 = vadd.f32 %v3124, %v3881
        %v4220 = vadd.f32 %v3125, %v3886
        %v4221 = vadd.f32 %v3126, %v3889
        %v4222 = vadd.f32 %v3127, %v3894
        %v4223 = vadd.f32 %v3128, %v3897
        %v4224 = vadd.f32 %v3129, %v3902
        %v4225 = vadd.f32 %v3130, %v3905
        %v4226 = vadd.f32 %v3131, %v3910
        %v4227 = vadd.f32 %v3132, %v3913
        %v4228 = vadd.f32 %v3133, %v3918
        %v4229 = vadd.f32 %v3134, %v3921
        %v4230 = vadd.f32 %v3135, %v3926
        %v4231 = vadd.f32 %v3136, %v3929
        %v4232 = vadd.f32 %v3137, %v3934
        %v4233 = vadd.f32 %v3138, %v3937
        %v4234 = vadd.f32 %v3139, %v3942
        %v4235 = vadd.f32 %v3140, %v3945
        %v4236 = vadd.f32 %v3141, %v3950
        %v4237 = vadd.f32 %v3142, %v3953
        %v4238 = vadd.f32 %v3143, %v3958
        %v4239 = vadd.f32 %v3144, %v3961
        %v4240 = vadd.f32 %v3145, %v3966
        %v4241 = vadd.f32 %v3146, %v3969
        %v4242 = vadd.f32 %v3147, %v3974
        %v4243 = vadd.f32 %v3148, %v3977
        %v4244 = vadd.f32 %v3149, %v3982
        %v4245 = vadd.f32 %v3150, %v3985
        %v4246 = vadd.f32 %v3151, %v3990
        %v4247 = vadd.f32 %v3152, %v3993
        %v4248 = vadd.f32 %v3153, %v3998
        %v4249 = vadd.f32 %v3154, %v4001
        %v4250 = vadd.f32 %v3155, %v4006
        %v4251 = vadd.f32 %v3156, %v4009
        %v4252 = vadd.f32 %v3157, %v4014
        %v4253 = vadd.f32 %v3158, %v4017
        %v4254 = vadd.f32 %v3159, %v4022
        %v4255 = vadd.f32 %v3160, %v4025
        %v4256 = vadd.f32 %v3161, %v4030
        %v4257 = vadd.f32 %v3162, %v4033
        %v4258 = vadd.f32 %v3163, %v4038
        %v4259 = vadd.f32 %v3164, %v4041
        %v4260 = vadd.f32 %v3165, %v4046
        %v4261 = vadd.f32 %v3166, %v4049
        %v4262 = vadd.f32 %v3167, %v4054
        %v4263 = vadd.f32 %v3168, %v4057
        %v4264 = vadd.f32 %v3169, %v4062
        %v4265 = vadd.f32 %v3170, %v4065
        %v4266 = vadd.f32 %v3171, %v4070
        %v4267 = vadd.f32 %v3172, %v4073
        %v4268 = vadd.f32 %v3173, %v4078
        %v4269 = vadd.f32 %v3174, %v4081
        %v4270 = vadd.f32 %v3175, %v4086
        %v4271 = vadd.f32 %v3176, %v4089
        %v4272 = vadd.f32 %v3177, %v4094
        %v4273 = vadd.f32 %v3178, %v4097
        %v4274 = vadd.f32 %v3179, %v4102
        %v4275 = vadd.f32 %v3180, %v4105
        %v4276 = vadd.f32 %v3181, %v4110
        %v4277 = vadd.f32 %v3182, %v4113
        %v4278 = vadd.f32 %v3183, %v4118
        %v4279 = vadd.f32 %v3184, %v4121
        %v4280 = vadd.f32 %v3185, %v4126
        %v4281 = vadd.f32 %v3186, %v4129
        %v4282 = vadd.f32 %v3187, %v4134
        %v4283 = vadd.f32 %v3188, %v4137
        %v4284 = vadd.f32 %v3189, %v4142
        %v4285 = vadd.f32 %v3190, %v4145
        %v4286 = vadd.f32 %v3191, %v4150
        %v4287 = vadd.f32 %v3192, %v4153
        %s4288 = scalar_lea.vmem %s168, 3384
        %v4289 = vld [vmem:[%s4288] sm:$0xff]
        %v4290 = vld [vmem:[%s4288 + $0x8] sm:$0xff]
        %v4291 = vld [vmem:[%s4288 + $0x10] sm:$0xff]
        %v4292 = vld [vmem:[%s4288 + $0x18] sm:$0xff]
        %v4293 = vld [vmem:[%s4288 + $0x20] sm:$0xff]
        %v4294 = vld [vmem:[%s4288 + $0x28] sm:$0xff]
        %v4295 = vld [vmem:[%s4288 + $0x30] sm:$0xff]
        %v4296 = vld [vmem:[%s4288 + $0x38] sm:$0xff]
        %v4297 = vld [vmem:[%s4288 + $0x40] sm:$0xff]
        %v4298 = vld [vmem:[%s4288 + $0x48] sm:$0xff]
        %v4299 = vld [vmem:[%s4288 + $0x50] sm:$0xff]
        %v4300 = vld [vmem:[%s4288 + $0x58] sm:$0xff]
        %v4301 = vld [vmem:[%s4288 + $0x60] sm:$0xff]
        %v4302 = vld [vmem:[%s4288 + $0x68] sm:$0xff]
        %v4303 = vld [vmem:[%s4288 + $0x70] sm:$0xff]
        %v4304 = vld [vmem:[%s4288 + $0x78] sm:$0xff]
        %v4305 = vld [vmem:[%s4288 + $0x80] sm:$0xff]
        %v4306 = vld [vmem:[%s4288 + $0x88] sm:$0xff]
        %v4307 = vld [vmem:[%s4288 + $0x90] sm:$0xff]
        %v4308 = vld [vmem:[%s4288 + $0x98] sm:$0xff]
        %v4309 = vld [vmem:[%s4288 + $0xa0] sm:$0xff]
        %v4310 = vld [vmem:[%s4288 + $0xa8] sm:$0xff]
        %v4311 = vld [vmem:[%s4288 + $0xb0] sm:$0xff]
        %v4312 = vld [vmem:[%s4288 + $0xb8] sm:$0xff]
        %v4313 = vld [vmem:[%s4288 + $0xc0] sm:$0xff]
        %v4314 = vld [vmem:[%s4288 + $0xc8] sm:$0xff]
        %v4315 = vld [vmem:[%s4288 + $0xd0] sm:$0xff]
        %v4316 = vld [vmem:[%s4288 + $0xd8] sm:$0xff]
        %v4317 = vld [vmem:[%s4288 + $0xe0] sm:$0xff]
        %v4318 = vld [vmem:[%s4288 + $0xe8] sm:$0xff]
        %v4319 = vld [vmem:[%s4288 + $0xf0] sm:$0xff]
        %v4320 = vld [vmem:[%s4288 + $0xf8] sm:$0xff]
        %v4321 = vld [vmem:[%s4288 + $0x100] sm:$0xff]
        %v4322 = vld [vmem:[%s4288 + $0x108] sm:$0xff]
        %v4323 = vld [vmem:[%s4288 + $0x110] sm:$0xff]
        %v4324 = vld [vmem:[%s4288 + $0x118] sm:$0xff]
        %v4325 = vld [vmem:[%s4288 + $0x120] sm:$0xff]
        %v4326 = vld [vmem:[%s4288 + $0x128] sm:$0xff]
        %v4327 = vld [vmem:[%s4288 + $0x130] sm:$0xff]
        %v4328 = vld [vmem:[%s4288 + $0x138] sm:$0xff]
        %v4329 = vld [vmem:[%s4288 + $0x140] sm:$0xff]
        %v4330 = vld [vmem:[%s4288 + $0x148] sm:$0xff]
        %v4331 = vld [vmem:[%s4288 + $0x150] sm:$0xff]
        %v4332 = vld [vmem:[%s4288 + $0x158] sm:$0xff]
        %v4333 = vld [vmem:[%s4288 + $0x160] sm:$0xff]
        %v4334 = vld [vmem:[%s4288 + $0x168] sm:$0xff]
        %v4335 = vld [vmem:[%s4288 + $0x170] sm:$0xff]
        %v4336 = vld [vmem:[%s4288 + $0x178] sm:$0xff]
        %v4337 = vld [vmem:[%s4288 + $0x180] sm:$0xff]
        %v4338 = vld [vmem:[%s4288 + $0x188] sm:$0xff]
        %v4339 = vld [vmem:[%s4288 + $0x190] sm:$0xff]
        %v4340 = vld [vmem:[%s4288 + $0x198] sm:$0xff]
        %v4341 = vld [vmem:[%s4288 + $0x1a0] sm:$0xff]
        %v4342 = vld [vmem:[%s4288 + $0x1a8] sm:$0xff]
        %v4343 = vld [vmem:[%s4288 + $0x1b0] sm:$0xff]
        %v4344 = vld [vmem:[%s4288 + $0x1b8] sm:$0xff]
        %v4345 = vld [vmem:[%s4288 + $0x1c0] sm:$0xff]
        %v4346 = vld [vmem:[%s4288 + $0x1c8] sm:$0xff]
        %v4347 = vld [vmem:[%s4288 + $0x1d0] sm:$0xff]
        %v4348 = vld [vmem:[%s4288 + $0x1d8] sm:$0xff]
        %v4349 = vld [vmem:[%s4288 + $0x1e0] sm:$0xff]
        %v4350 = vld [vmem:[%s4288 + $0x1e8] sm:$0xff]
        %v4351 = vld [vmem:[%s4288 + $0x1f0] sm:$0xff]
        %v4352 = vld [vmem:[%s4288 + $0x1f8] sm:$0xff]
        %v4353 = vld [vmem:[%s4288 + $0x200] sm:$0xff]
        %v4354 = vld [vmem:[%s4288 + $0x208] sm:$0xff]
        %v4355 = vld [vmem:[%s4288 + $0x210] sm:$0xff]
        %v4356 = vld [vmem:[%s4288 + $0x218] sm:$0xff]
        %v4357 = vld [vmem:[%s4288 + $0x220] sm:$0xff]
        %v4358 = vld [vmem:[%s4288 + $0x228] sm:$0xff]
        %v4359 = vld [vmem:[%s4288 + $0x230] sm:$0xff]
        %v4360 = vld [vmem:[%s4288 + $0x238] sm:$0xff]
        %v4361 = vld [vmem:[%s4288 + $0x240] sm:$0xff]
        %v4362 = vld [vmem:[%s4288 + $0x248] sm:$0xff]
        %v4363 = vld [vmem:[%s4288 + $0x250] sm:$0xff]
        %v4364 = vld [vmem:[%s4288 + $0x258] sm:$0xff]
        %v4365 = vld [vmem:[%s4288 + $0x260] sm:$0xff]
        %v4366 = vld [vmem:[%s4288 + $0x268] sm:$0xff]
        %v4367 = vld [vmem:[%s4288 + $0x270] sm:$0xff]
        %v4368 = vld [vmem:[%s4288 + $0x278] sm:$0xff]
        %v4369 = vld [vmem:[%s4288 + $0x280] sm:$0xff]
        %v4370 = vld [vmem:[%s4288 + $0x288] sm:$0xff]
        %v4371 = vld [vmem:[%s4288 + $0x290] sm:$0xff]
        %v4372 = vld [vmem:[%s4288 + $0x298] sm:$0xff]
        %v4373 = vld [vmem:[%s4288 + $0x2a0] sm:$0xff]
        %v4374 = vld [vmem:[%s4288 + $0x2a8] sm:$0xff]
        %v4375 = vld [vmem:[%s4288 + $0x2b0] sm:$0xff]
        %v4376 = vld [vmem:[%s4288 + $0x2b8] sm:$0xff]
        %v4377 = vld [vmem:[%s4288 + $0x2c0] sm:$0xff]
        %v4378 = vld [vmem:[%s4288 + $0x2c8] sm:$0xff]
        %v4379 = vld [vmem:[%s4288 + $0x2d0] sm:$0xff]
        %v4380 = vld [vmem:[%s4288 + $0x2d8] sm:$0xff]
        %v4381 = vld [vmem:[%s4288 + $0x2e0] sm:$0xff]
        %v4382 = vld [vmem:[%s4288 + $0x2e8] sm:$0xff]
        %v4383 = vld [vmem:[%s4288 + $0x2f0] sm:$0xff]
        %v4384 = vld [vmem:[%s4288 + $0x2f8] sm:$0xff]
        %v4385 = vld [vmem:[%s4288 + $0x300] sm:$0xff]
        %v4386 = vld [vmem:[%s4288 + $0x308] sm:$0xff]
        %v4387 = vld [vmem:[%s4288 + $0x310] sm:$0xff]
        %v4388 = vld [vmem:[%s4288 + $0x318] sm:$0xff]
        %v4389 = vld [vmem:[%s4288 + $0x320] sm:$0xff]
        %v4390 = vld [vmem:[%s4288 + $0x328] sm:$0xff]
        %v4391 = vld [vmem:[%s4288 + $0x330] sm:$0xff]
        %v4392 = vld [vmem:[%s4288 + $0x338] sm:$0xff]
        %v4393 = vld [vmem:[%s4288 + $0x340] sm:$0xff]
        %v4394 = vld [vmem:[%s4288 + $0x348] sm:$0xff]
        %v4395 = vld [vmem:[%s4288 + $0x350] sm:$0xff]
        %v4396 = vld [vmem:[%s4288 + $0x358] sm:$0xff]
        %v4397 = vld [vmem:[%s4288 + $0x360] sm:$0xff]
        %v4398 = vld [vmem:[%s4288 + $0x368] sm:$0xff]
        %v4399 = vld [vmem:[%s4288 + $0x370] sm:$0xff]
        %v4400 = vld [vmem:[%s4288 + $0x378] sm:$0xff]
        %v4401 = vld [vmem:[%s4288 + $0x380] sm:$0xff]
        %v4402 = vld [vmem:[%s4288 + $0x388] sm:$0xff]
        %v4403 = vld [vmem:[%s4288 + $0x390] sm:$0xff]
        %v4404 = vld [vmem:[%s4288 + $0x398] sm:$0xff]
        %v4405 = vld [vmem:[%s4288 + $0x3a0] sm:$0xff]
        %v4406 = vld [vmem:[%s4288 + $0x3a8] sm:$0xff]
        %v4407 = vld [vmem:[%s4288 + $0x3b0] sm:$0xff]
        %v4408 = vld [vmem:[%s4288 + $0x3b8] sm:$0xff]
        %v4409 = vld [vmem:[%s4288 + $0x3c0] sm:$0xff]
        %v4410 = vld [vmem:[%s4288 + $0x3c8] sm:$0xff]
        %v4411 = vld [vmem:[%s4288 + $0x3d0] sm:$0xff]
        %v4412 = vld [vmem:[%s4288 + $0x3d8] sm:$0xff]
        %v4413 = vld [vmem:[%s4288 + $0x3e0] sm:$0xff]
        %v4414 = vld [vmem:[%s4288 + $0x3e8] sm:$0xff]
        %v4415 = vld [vmem:[%s4288 + $0x3f0] sm:$0xff]
        %v4416 = vld [vmem:[%s4288 + $0x3f8] sm:$0xff]
        %v4417 = vld [vmem:[%s4288 + $0x400] sm:$0xff]
        %v4418 = vld [vmem:[%s4288 + $0x408] sm:$0xff]
        %v4419 = vld [vmem:[%s4288 + $0x410] sm:$0xff]
        %v4420 = vld [vmem:[%s4288 + $0x418] sm:$0xff]
        %v4421 = vpack.c.bf16 %v4290, %v4289
        %v4422 = vpack.c.bf16 %v4292, %v4291
        %v4423 = vpack.c.bf16 %v4294, %v4293
        %v4424 = vpack.c.bf16 %v4296, %v4295
        %v4425 = vpack.c.bf16 %v4298, %v4297
        %v4426 = vpack.c.bf16 %v4300, %v4299
        %v4427 = vpack.c.bf16 %v4302, %v4301
        %v4428 = vpack.c.bf16 %v4304, %v4303
        %v4429 = vpack.c.bf16 %v4306, %v4305
        %v4430 = vpack.c.bf16 %v4308, %v4307
        %v4431 = vpack.c.bf16 %v4310, %v4309
        %v4432 = vpack.c.bf16 %v4312, %v4311
        %v4433 = vpack.c.bf16 %v4314, %v4313
        %v4434 = vpack.c.bf16 %v4316, %v4315
        %v4435 = vpack.c.bf16 %v4318, %v4317
        %v4436 = vpack.c.bf16 %v4320, %v4319
        %v4437 = vpack.c.bf16 %v4322, %v4321
        %v4438 = vpack.c.bf16 %v4324, %v4323
        %v4439 = vpack.c.bf16 %v4326, %v4325
        %v4440 = vpack.c.bf16 %v4328, %v4327
        %v4441 = vpack.c.bf16 %v4330, %v4329
        %v4442 = vpack.c.bf16 %v4332, %v4331
        %v4443 = vpack.c.bf16 %v4334, %v4333
        %v4444 = vpack.c.bf16 %v4336, %v4335
        %v4445 = vpack.c.bf16 %v4338, %v4337
        %v4446 = vpack.c.bf16 %v4340, %v4339
        %v4447 = vpack.c.bf16 %v4342, %v4341
        %v4448 = vpack.c.bf16 %v4344, %v4343
        %v4449 = vpack.c.bf16 %v4346, %v4345
        %v4450 = vpack.c.bf16 %v4348, %v4347
        %v4451 = vpack.c.bf16 %v4350, %v4349
        %v4452 = vpack.c.bf16 %v4352, %v4351
        %v4453 = vpack.c.bf16 %v4354, %v4353
        %v4454 = vpack.c.bf16 %v4356, %v4355
        %v4455 = vpack.c.bf16 %v4358, %v4357
        %v4456 = vpack.c.bf16 %v4360, %v4359
        %v4457 = vpack.c.bf16 %v4362, %v4361
        %v4458 = vpack.c.bf16 %v4364, %v4363
        %v4459 = vpack.c.bf16 %v4366, %v4365
        %v4460 = vpack.c.bf16 %v4368, %v4367
        %v4461 = vpack.c.bf16 %v4370, %v4369
        %v4462 = vpack.c.bf16 %v4372, %v4371
        %v4463 = vpack.c.bf16 %v4374, %v4373
        %v4464 = vpack.c.bf16 %v4376, %v4375
        %v4465 = vpack.c.bf16 %v4378, %v4377
        %v4466 = vpack.c.bf16 %v4380, %v4379
        %v4467 = vpack.c.bf16 %v4382, %v4381
        %v4468 = vpack.c.bf16 %v4384, %v4383
        %v4469 = vpack.c.bf16 %v4386, %v4385
        %v4470 = vpack.c.bf16 %v4388, %v4387
        %v4471 = vpack.c.bf16 %v4390, %v4389
        %v4472 = vpack.c.bf16 %v4392, %v4391
        %v4473 = vpack.c.bf16 %v4394, %v4393
        %v4474 = vpack.c.bf16 %v4396, %v4395
        %v4475 = vpack.c.bf16 %v4398, %v4397
        %v4476 = vpack.c.bf16 %v4400, %v4399
        %v4477 = vpack.c.bf16 %v4402, %v4401
        %v4478 = vpack.c.bf16 %v4404, %v4403
        %v4479 = vpack.c.bf16 %v4406, %v4405
        %v4480 = vpack.c.bf16 %v4408, %v4407
        %v4481 = vpack.c.bf16 %v4410, %v4409
        %v4482 = vpack.c.bf16 %v4412, %v4411
        %v4483 = vpack.c.bf16 %v4414, %v4413
        %v4484 = vpack.c.bf16 %v4416, %v4415
        %v4485 = vpack.c.bf16 %v4418, %v4417
        %v4486 = vpack.c.bf16 %v4420, %v4419
        %s4487 = scalar_lea.vmem %s1, 8
        %v4488 = vld [vmem:[%s4487] sm:$0x3]
        %v4490 = vsel %vm570, %v4421, 0
        %v4493 = vsel %vm570, %v4422, 0
        %v4496 = vsel %vm570, %v4423, 0
        %v4499 = vsel %vm570, %v4424, 0
        %v4502 = vsel %vm570, %v4425, 0
        %v4505 = vsel %vm570, %v4426, 0
        %v4508 = vsel %vm570, %v4427, 0
        %v4511 = vsel %vm570, %v4428, 0
        %v4514 = vsel %vm570, %v4429, 0
        %v4517 = vsel %vm570, %v4430, 0
        %v4520 = vsel %vm570, %v4431, 0
        %v4523 = vsel %vm570, %v4432, 0
        %v4526 = vsel %vm570, %v4433, 0
        %v4529 = vsel %vm570, %v4434, 0
        %v4532 = vsel %vm570, %v4435, 0
        %v4535 = vsel %vm570, %v4436, 0
        %v4538 = vsel %vm570, %v4437, 0
        %v4541 = vsel %vm570, %v4438, 0
        %v4544 = vsel %vm570, %v4439, 0
        %v4547 = vsel %vm570, %v4440, 0
        %v4550 = vsel %vm570, %v4441, 0
        %v4553 = vsel %vm570, %v4442, 0
        %v4556 = vsel %vm570, %v4443, 0
        %v4559 = vsel %vm570, %v4444, 0
        %v4562 = vsel %vm570, %v4445, 0
        %v4565 = vsel %vm570, %v4446, 0
        %v4568 = vsel %vm570, %v4447, 0
        %v4571 = vsel %vm570, %v4448, 0
        %v4574 = vsel %vm570, %v4449, 0
        %v4577 = vsel %vm570, %v4450, 0
        %v4580 = vsel %vm570, %v4451, 0
        %v4583 = vsel %vm570, %v4452, 0
        %v4586 = vsel %vm570, %v4453, 0
        %v4589 = vsel %vm570, %v4454, 0
        %v4592 = vsel %vm570, %v4455, 0
        %v4595 = vsel %vm570, %v4456, 0
        %v4598 = vsel %vm570, %v4457, 0
        %v4601 = vsel %vm570, %v4458, 0
        %v4604 = vsel %vm570, %v4459, 0
        %v4607 = vsel %vm570, %v4460, 0
        %v4610 = vsel %vm570, %v4461, 0
        %v4613 = vsel %vm570, %v4462, 0
        %v4616 = vsel %vm570, %v4463, 0
        %v4619 = vsel %vm570, %v4464, 0
        %v4622 = vsel %vm570, %v4465, 0
        %v4625 = vsel %vm570, %v4466, 0
        %v4628 = vsel %vm570, %v4467, 0
        %v4631 = vsel %vm570, %v4468, 0
        %v4634 = vsel %vm570, %v4469, 0
        %v4637 = vsel %vm570, %v4470, 0
        %v4640 = vsel %vm570, %v4471, 0
        %v4643 = vsel %vm570, %v4472, 0
        %v4646 = vsel %vm570, %v4473, 0
        %v4649 = vsel %vm570, %v4474, 0
        %v4652 = vsel %vm570, %v4475, 0
        %v4655 = vsel %vm570, %v4476, 0
        %v4658 = vsel %vm570, %v4477, 0
        %v4661 = vsel %vm570, %v4478, 0
        %v4664 = vsel %vm570, %v4479, 0
        %v4667 = vsel %vm570, %v4480, 0
        %v4670 = vsel %vm570, %v4481, 0
        %v4673 = vsel %vm570, %v4482, 0
        %v4676 = vsel %vm570, %v4483, 0
        %v4679 = vsel %vm570, %v4484, 0
        %v4682 = vsel %vm570, %v4485, 0
        %v4685 = vsel %vm570, %v4486, 0
        %v4688 = vand.u32 %v4488, %v772
        %4690 = vmatprep.subr.bf16.mxu0 0
        %4691 = vmatpush1.bf16.msra.mxu0 %v4688
        %4692 = vmatprep.subr.bf16.mxu0 0
        %4693 = vmatpush1.bf16.msra.mxu0 0
        %4694 = vmatprep.subr.bf16.mxu0 0
        %4695 = vmatpush1.bf16.msra.mxu0 0
        %4696 = vmatprep.subr.bf16.mxu0 0
        %4697 = vmatpush1.bf16.msra.mxu0 0
        %4698 = vmatprep.subr.bf16.mxu0 0
        %4699 = vmatpush1.bf16.msra.mxu0 0
        %4700 = vmatprep.subr.bf16.mxu0 0
        %4701 = vmatpush1.bf16.msra.mxu0 0
        %4702 = vmatprep.subr.bf16.mxu0 0
        %4703 = vmatpush1.bf16.msra.mxu0 0
        %4704 = vmatprep.subr.bf16.mxu0 0
        %4705 = vmatpush1.bf16.msra.mxu0 0
        %4706 = vmatprep.subr.bf16.mxu0 0
        %4707 = vmatpush1.bf16.msra.mxu0 0
        %4708 = vmatprep.subr.bf16.mxu0 0
        %4709 = vmatpush1.bf16.msra.mxu0 0
        %4710 = vmatprep.subr.bf16.mxu0 0
        %4711 = vmatpush1.bf16.msra.mxu0 0
        %4712 = vmatprep.subr.bf16.mxu0 0
        %4713 = vmatpush1.bf16.msra.mxu0 0
        %4714 = vmatprep.subr.bf16.mxu0 0
        %4715 = vmatpush1.bf16.msra.mxu0 0
        %4716 = vmatprep.subr.bf16.mxu0 0
        %4717 = vmatpush1.bf16.msra.mxu0 0
        %4718 = vmatprep.subr.bf16.mxu0 0
        %4719 = vmatpush1.bf16.msra.mxu0 0
        %4720 = vmatprep.subr.bf16.mxu0 0
        %4721 = vmatpush1.bf16.msra.mxu0 0
        %4722 = vmatprep.mubr.bf16.mxu0 0
        %4723 = vmatmul.mubr.bf16.gmra.mrb[0].mxu0 %v4490
        %v4724 = vpop.f32.mrb[0].mxu0
        %v4725 = vadd.f32 0.0, %v4724
        %v4726 = vpop.f32.mrb[0].mxu0
        %v4727 = vpop.f32.mrb[0].mxu0
        %v4728 = vadd.f32 0.0, %v4727
        %v4729 = vpop.f32.mrb[0].mxu0
        %4730 = vmatprep.mubr.bf16.mxu0 0
        %4731 = vmatmul.mubr.bf16.gmra.mrb[0].mxu0 %v4493
        %v4732 = vpop.f32.mrb[0].mxu0
        %v4733 = vadd.f32 0.0, %v4732
        %v4734 = vpop.f32.mrb[0].mxu0
        %v4735 = vpop.f32.mrb[0].mxu0
        %v4736 = vadd.f32 0.0, %v4735
        %v4737 = vpop.f32.mrb[0].mxu0
        %4738 = vmatprep.mubr.bf16.mxu0 0
        %4739 = vmatmul.mubr.bf16.gmra.mrb[0].mxu0 %v4496
        %v4740 = vpop.f32.mrb[0].mxu0
        %v4741 = vadd.f32 0.0, %v4740
        %v4742 = vpop.f32.mrb[0].mxu0
        %v4743 = vpop.f32.mrb[0].mxu0
        %v4744 = vadd.f32 0.0, %v4743
        %v4745 = vpop.f32.mrb[0].mxu0
        %4746 = vmatprep.mubr.bf16.mxu0 0
        %4747 = vmatmul.mubr.bf16.gmra.mrb[0].mxu0 %v4499
        %v4748 = vpop.f32.mrb[0].mxu0
        %v4749 = vadd.f32 0.0, %v4748
        %v4750 = vpop.f32.mrb[0].mxu0
        %v4751 = vpop.f32.mrb[0].mxu0
        %v4752 = vadd.f32 0.0, %v4751
        %v4753 = vpop.f32.mrb[0].mxu0
        %4754 = vmatprep.mubr.bf16.mxu0 0
        %4755 = vmatmul.mubr.bf16.gmra.mrb[0].mxu0 %v4502
        %v4756 = vpop.f32.mrb[0].mxu0
        %v4757 = vadd.f32 0.0, %v4756
        %v4758 = vpop.f32.mrb[0].mxu0
        %v4759 = vpop.f32.mrb[0].mxu0
        %v4760 = vadd.f32 0.0, %v4759
        %v4761 = vpop.f32.mrb[0].mxu0
        %4762 = vmatprep.mubr.bf16.mxu0 0
        %4763 = vmatmul.mubr.bf16.gmra.mrb[0].mxu0 %v4505
        %v4764 = vpop.f32.mrb[0].mxu0
        %v4765 = vadd.f32 0.0, %v4764
        %v4766 = vpop.f32.mrb[0].mxu0
        %v4767 = vpop.f32.mrb[0].mxu0
        %v4768 = vadd.f32 0.0, %v4767
        %v4769 = vpop.f32.mrb[0].mxu0
        %4770 = vmatprep.mubr.bf16.mxu0 0
        %4771 = vmatmul.mubr.bf16.gmra.mrb[0].mxu0 %v4508
        %v4772 = vpop.f32.mrb[0].mxu0
        %v4773 = vadd.f32 0.0, %v4772
        %v4774 = vpop.f32.mrb[0].mxu0
        %v4775 = vpop.f32.mrb[0].mxu0
        %v4776 = vadd.f32 0.0, %v4775
        %v4777 = vpop.f32.mrb[0].mxu0
        %4778 = vmatprep.mubr.bf16.mxu0 0
        %4779 = vmatmul.mubr.bf16.gmra.mrb[0].mxu0 %v4511
        %v4780 = vpop.f32.mrb[0].mxu0
        %v4781 = vadd.f32 0.0, %v4780
        %v4782 = vpop.f32.mrb[0].mxu0
        %v4783 = vpop.f32.mrb[0].mxu0
        %v4784 = vadd.f32 0.0, %v4783
        %v4785 = vpop.f32.mrb[0].mxu0
        %4786 = vmatprep.mubr.bf16.mxu0 0
        %4787 = vmatmul.mubr.bf16.gmra.mrb[0].mxu0 %v4514
        %v4788 = vpop.f32.mrb[0].mxu0
        %v4789 = vadd.f32 0.0, %v4788
        %v4790 = vpop.f32.mrb[0].mxu0
        %v4791 = vpop.f32.mrb[0].mxu0
        %v4792 = vadd.f32 0.0, %v4791
        %v4793 = vpop.f32.mrb[0].mxu0
        %4794 = vmatprep.mubr.bf16.mxu0 0
        %4795 = vmatmul.mubr.bf16.gmra.mrb[0].mxu0 %v4517
        %v4796 = vpop.f32.mrb[0].mxu0
        %v4797 = vadd.f32 0.0, %v4796
        %v4798 = vpop.f32.mrb[0].mxu0
        %v4799 = vpop.f32.mrb[0].mxu0
        %v4800 = vadd.f32 0.0, %v4799
        %v4801 = vpop.f32.mrb[0].mxu0
        %4802 = vmatprep.mubr.bf16.mxu0 0
        %4803 = vmatmul.mubr.bf16.gmra.mrb[0].mxu0 %v4520
        %v4804 = vpop.f32.mrb[0].mxu0
        %v4805 = vadd.f32 0.0, %v4804
        %v4806 = vpop.f32.mrb[0].mxu0
        %v4807 = vpop.f32.mrb[0].mxu0
        %v4808 = vadd.f32 0.0, %v4807
        %v4809 = vpop.f32.mrb[0].mxu0
        %4810 = vmatprep.mubr.bf16.mxu0 0
        %4811 = vmatmul.mubr.bf16.gmra.mrb[0].mxu0 %v4523
        %v4812 = vpop.f32.mrb[0].mxu0
        %v4813 = vadd.f32 0.0, %v4812
        %v4814 = vpop.f32.mrb[0].mxu0
        %v4815 = vpop.f32.mrb[0].mxu0
        %v4816 = vadd.f32 0.0, %v4815
        %v4817 = vpop.f32.mrb[0].mxu0
        %4818 = vmatprep.mubr.bf16.mxu0 0
        %4819 = vmatmul.mubr.bf16.gmra.mrb[0].mxu0 %v4526
        %v4820 = vpop.f32.mrb[0].mxu0
        %v4821 = vadd.f32 0.0, %v4820
        %v4822 = vpop.f32.mrb[0].mxu0
        %v4823 = vpop.f32.mrb[0].mxu0
        %v4824 = vadd.f32 0.0, %v4823
        %v4825 = vpop.f32.mrb[0].mxu0
        %4826 = vmatprep.mubr.bf16.mxu0 0
        %4827 = vmatmul.mubr.bf16.gmra.mrb[0].mxu0 %v4529
        %v4828 = vpop.f32.mrb[0].mxu0
        %v4829 = vadd.f32 0.0, %v4828
        %v4830 = vpop.f32.mrb[0].mxu0
        %v4831 = vpop.f32.mrb[0].mxu0
        %v4832 = vadd.f32 0.0, %v4831
        %v4833 = vpop.f32.mrb[0].mxu0
        %4834 = vmatprep.mubr.bf16.mxu0 0
        %4835 = vmatmul.mubr.bf16.gmra.mrb[0].mxu0 %v4532
        %v4836 = vpop.f32.mrb[0].mxu0
        %v4837 = vadd.f32 0.0, %v4836
        %v4838 = vpop.f32.mrb[0].mxu0
        %v4839 = vpop.f32.mrb[0].mxu0
        %v4840 = vadd.f32 0.0, %v4839
        %v4841 = vpop.f32.mrb[0].mxu0
        %4842 = vmatprep.mubr.bf16.mxu0 0
        %4843 = vmatmul.mubr.bf16.gmra.mrb[0].mxu0 %v4535
        %v4844 = vpop.f32.mrb[0].mxu0
        %v4845 = vadd.f32 0.0, %v4844
        %v4846 = vpop.f32.mrb[0].mxu0
        %v4847 = vpop.f32.mrb[0].mxu0
        %v4848 = vadd.f32 0.0, %v4847
        %v4849 = vpop.f32.mrb[0].mxu0
        %4850 = vmatprep.mubr.bf16.mxu0 0
        %4851 = vmatmul.mubr.bf16.gmra.mrb[0].mxu0 %v4538
        %v4852 = vpop.f32.mrb[0].mxu0
        %v4853 = vadd.f32 0.0, %v4852
        %v4854 = vpop.f32.mrb[0].mxu0
        %v4855 = vpop.f32.mrb[0].mxu0
        %v4856 = vadd.f32 0.0, %v4855
        %v4857 = vpop.f32.mrb[0].mxu0
        %4858 = vmatprep.mubr.bf16.mxu0 0
        %4859 = vmatmul.mubr.bf16.gmra.mrb[0].mxu0 %v4541
        %v4860 = vpop.f32.mrb[0].mxu0
        %v4861 = vadd.f32 0.0, %v4860
        %v4862 = vpop.f32.mrb[0].mxu0
        %v4863 = vpop.f32.mrb[0].mxu0
        %v4864 = vadd.f32 0.0, %v4863
        %v4865 = vpop.f32.mrb[0].mxu0
        %4866 = vmatprep.mubr.bf16.mxu0 0
        %4867 = vmatmul.mubr.bf16.gmra.mrb[0].mxu0 %v4544
        %v4868 = vpop.f32.mrb[0].mxu0
        %v4869 = vadd.f32 0.0, %v4868
        %v4870 = vpop.f32.mrb[0].mxu0
        %v4871 = vpop.f32.mrb[0].mxu0
        %v4872 = vadd.f32 0.0, %v4871
        %v4873 = vpop.f32.mrb[0].mxu0
        %4874 = vmatprep.mubr.bf16.mxu0 0
        %4875 = vmatmul.mubr.bf16.gmra.mrb[0].mxu0 %v4547
        %v4876 = vpop.f32.mrb[0].mxu0
        %v4877 = vadd.f32 0.0, %v4876
        %v4878 = vpop.f32.mrb[0].mxu0
        %v4879 = vpop.f32.mrb[0].mxu0
        %v4880 = vadd.f32 0.0, %v4879
        %v4881 = vpop.f32.mrb[0].mxu0
        %4882 = vmatprep.mubr.bf16.mxu0 0
        %4883 = vmatmul.mubr.bf16.gmra.mrb[0].mxu0 %v4550
        %v4884 = vpop.f32.mrb[0].mxu0
        %v4885 = vadd.f32 0.0, %v4884
        %v4886 = vpop.f32.mrb[0].mxu0
        %v4887 = vpop.f32.mrb[0].mxu0
        %v4888 = vadd.f32 0.0, %v4887
        %v4889 = vpop.f32.mrb[0].mxu0
        %4890 = vmatprep.mubr.bf16.mxu0 0
        %4891 = vmatmul.mubr.bf16.gmra.mrb[0].mxu0 %v4553
        %v4892 = vpop.f32.mrb[0].mxu0
        %v4893 = vadd.f32 0.0, %v4892
        %v4894 = vpop.f32.mrb[0].mxu0
        %v4895 = vpop.f32.mrb[0].mxu0
        %v4896 = vadd.f32 0.0, %v4895
        %v4897 = vpop.f32.mrb[0].mxu0
        %4898 = vmatprep.mubr.bf16.mxu0 0
        %4899 = vmatmul.mubr.bf16.gmra.mrb[0].mxu0 %v4556
        %v4900 = vpop.f32.mrb[0].mxu0
        %v4901 = vadd.f32 0.0, %v4900
        %v4902 = vpop.f32.mrb[0].mxu0
        %v4903 = vpop.f32.mrb[0].mxu0
        %v4904 = vadd.f32 0.0, %v4903
        %v4905 = vpop.f32.mrb[0].mxu0
        %4906 = vmatprep.mubr.bf16.mxu0 0
        %4907 = vmatmul.mubr.bf16.gmra.mrb[0].mxu0 %v4559
        %v4908 = vpop.f32.mrb[0].mxu0
        %v4909 = vadd.f32 0.0, %v4908
        %v4910 = vpop.f32.mrb[0].mxu0
        %v4911 = vpop.f32.mrb[0].mxu0
        %v4912 = vadd.f32 0.0, %v4911
        %v4913 = vpop.f32.mrb[0].mxu0
        %4914 = vmatprep.mubr.bf16.mxu0 0
        %4915 = vmatmul.mubr.bf16.gmra.mrb[0].mxu0 %v4562
        %v4916 = vpop.f32.mrb[0].mxu0
        %v4917 = vadd.f32 0.0, %v4916
        %v4918 = vpop.f32.mrb[0].mxu0
        %v4919 = vpop.f32.mrb[0].mxu0
        %v4920 = vadd.f32 0.0, %v4919
        %v4921 = vpop.f32.mrb[0].mxu0
        %4922 = vmatprep.mubr.bf16.mxu0 0
        %4923 = vmatmul.mubr.bf16.gmra.mrb[0].mxu0 %v4565
        %v4924 = vpop.f32.mrb[0].mxu0
        %v4925 = vadd.f32 0.0, %v4924
        %v4926 = vpop.f32.mrb[0].mxu0
        %v4927 = vpop.f32.mrb[0].mxu0
        %v4928 = vadd.f32 0.0, %v4927
        %v4929 = vpop.f32.mrb[0].mxu0
        %4930 = vmatprep.mubr.bf16.mxu0 0
        %4931 = vmatmul.mubr.bf16.gmra.mrb[0].mxu0 %v4568
        %v4932 = vpop.f32.mrb[0].mxu0
        %v4933 = vadd.f32 0.0, %v4932
        %v4934 = vpop.f32.mrb[0].mxu0
        %v4935 = vpop.f32.mrb[0].mxu0
        %v4936 = vadd.f32 0.0, %v4935
        %v4937 = vpop.f32.mrb[0].mxu0
        %4938 = vmatprep.mubr.bf16.mxu0 0
        %4939 = vmatmul.mubr.bf16.gmra.mrb[0].mxu0 %v4571
        %v4940 = vpop.f32.mrb[0].mxu0
        %v4941 = vadd.f32 0.0, %v4940
        %v4942 = vpop.f32.mrb[0].mxu0
        %v4943 = vpop.f32.mrb[0].mxu0
        %v4944 = vadd.f32 0.0, %v4943
        %v4945 = vpop.f32.mrb[0].mxu0
        %4946 = vmatprep.mubr.bf16.mxu0 0
        %4947 = vmatmul.mubr.bf16.gmra.mrb[0].mxu0 %v4574
        %v4948 = vpop.f32.mrb[0].mxu0
        %v4949 = vadd.f32 0.0, %v4948
        %v4950 = vpop.f32.mrb[0].mxu0
        %v4951 = vpop.f32.mrb[0].mxu0
        %v4952 = vadd.f32 0.0, %v4951
        %v4953 = vpop.f32.mrb[0].mxu0
        %4954 = vmatprep.mubr.bf16.mxu0 0
        %4955 = vmatmul.mubr.bf16.gmra.mrb[0].mxu0 %v4577
        %v4956 = vpop.f32.mrb[0].mxu0
        %v4957 = vadd.f32 0.0, %v4956
        %v4958 = vpop.f32.mrb[0].mxu0
        %v4959 = vpop.f32.mrb[0].mxu0
        %v4960 = vadd.f32 0.0, %v4959
        %v4961 = vpop.f32.mrb[0].mxu0
        %4962 = vmatprep.mubr.bf16.mxu0 0
        %4963 = vmatmul.mubr.bf16.gmra.mrb[0].mxu0 %v4580
        %v4964 = vpop.f32.mrb[0].mxu0
        %v4965 = vadd.f32 0.0, %v4964
        %v4966 = vpop.f32.mrb[0].mxu0
        %v4967 = vpop.f32.mrb[0].mxu0
        %v4968 = vadd.f32 0.0, %v4967
        %v4969 = vpop.f32.mrb[0].mxu0
        %4970 = vmatprep.mubr.bf16.mxu0 0
        %4971 = vmatmul.mubr.bf16.gmra.mrb[0].mxu0 %v4583
        %v4972 = vpop.f32.mrb[0].mxu0
        %v4973 = vadd.f32 0.0, %v4972
        %v4974 = vpop.f32.mrb[0].mxu0
        %v4975 = vpop.f32.mrb[0].mxu0
        %v4976 = vadd.f32 0.0, %v4975
        %v4977 = vpop.f32.mrb[0].mxu0
        %4978 = vmatprep.mubr.bf16.mxu0 0
        %4979 = vmatmul.mubr.bf16.gmra.mrb[0].mxu0 %v4586
        %v4980 = vpop.f32.mrb[0].mxu0
        %v4981 = vadd.f32 0.0, %v4980
        %v4982 = vpop.f32.mrb[0].mxu0
        %v4983 = vpop.f32.mrb[0].mxu0
        %v4984 = vadd.f32 0.0, %v4983
        %v4985 = vpop.f32.mrb[0].mxu0
        %4986 = vmatprep.mubr.bf16.mxu0 0
        %4987 = vmatmul.mubr.bf16.gmra.mrb[0].mxu0 %v4589
        %v4988 = vpop.f32.mrb[0].mxu0
        %v4989 = vadd.f32 0.0, %v4988
        %v4990 = vpop.f32.mrb[0].mxu0
        %v4991 = vpop.f32.mrb[0].mxu0
        %v4992 = vadd.f32 0.0, %v4991
        %v4993 = vpop.f32.mrb[0].mxu0
        %4994 = vmatprep.mubr.bf16.mxu0 0
        %4995 = vmatmul.mubr.bf16.gmra.mrb[0].mxu0 %v4592
        %v4996 = vpop.f32.mrb[0].mxu0
        %v4997 = vadd.f32 0.0, %v4996
        %v4998 = vpop.f32.mrb[0].mxu0
        %v4999 = vpop.f32.mrb[0].mxu0
        %v5000 = vadd.f32 0.0, %v4999
        %v5001 = vpop.f32.mrb[0].mxu0
        %5002 = vmatprep.mubr.bf16.mxu0 0
        %5003 = vmatmul.mubr.bf16.gmra.mrb[0].mxu0 %v4595
        %v5004 = vpop.f32.mrb[0].mxu0
        %v5005 = vadd.f32 0.0, %v5004
        %v5006 = vpop.f32.mrb[0].mxu0
        %v5007 = vpop.f32.mrb[0].mxu0
        %v5008 = vadd.f32 0.0, %v5007
        %v5009 = vpop.f32.mrb[0].mxu0
        %5010 = vmatprep.mubr.bf16.mxu0 0
        %5011 = vmatmul.mubr.bf16.gmra.mrb[0].mxu0 %v4598
        %v5012 = vpop.f32.mrb[0].mxu0
        %v5013 = vadd.f32 0.0, %v5012
        %v5014 = vpop.f32.mrb[0].mxu0
        %v5015 = vpop.f32.mrb[0].mxu0
        %v5016 = vadd.f32 0.0, %v5015
        %v5017 = vpop.f32.mrb[0].mxu0
        %5018 = vmatprep.mubr.bf16.mxu0 0
        %5019 = vmatmul.mubr.bf16.gmra.mrb[0].mxu0 %v4601
        %v5020 = vpop.f32.mrb[0].mxu0
        %v5021 = vadd.f32 0.0, %v5020
        %v5022 = vpop.f32.mrb[0].mxu0
        %v5023 = vpop.f32.mrb[0].mxu0
        %v5024 = vadd.f32 0.0, %v5023
        %v5025 = vpop.f32.mrb[0].mxu0
        %5026 = vmatprep.mubr.bf16.mxu0 0
        %5027 = vmatmul.mubr.bf16.gmra.mrb[0].mxu0 %v4604
        %v5028 = vpop.f32.mrb[0].mxu0
        %v5029 = vadd.f32 0.0, %v5028
        %v5030 = vpop.f32.mrb[0].mxu0
        %v5031 = vpop.f32.mrb[0].mxu0
        %v5032 = vadd.f32 0.0, %v5031
        %v5033 = vpop.f32.mrb[0].mxu0
        %5034 = vmatprep.mubr.bf16.mxu0 0
        %5035 = vmatmul.mubr.bf16.gmra.mrb[0].mxu0 %v4607
        %v5036 = vpop.f32.mrb[0].mxu0
        %v5037 = vadd.f32 0.0, %v5036
        %v5038 = vpop.f32.mrb[0].mxu0
        %v5039 = vpop.f32.mrb[0].mxu0
        %v5040 = vadd.f32 0.0, %v5039
        %v5041 = vpop.f32.mrb[0].mxu0
        %5042 = vmatprep.mubr.bf16.mxu0 0
        %5043 = vmatmul.mubr.bf16.gmra.mrb[0].mxu0 %v4610
        %v5044 = vpop.f32.mrb[0].mxu0
        %v5045 = vadd.f32 0.0, %v5044
        %v5046 = vpop.f32.mrb[0].mxu0
        %v5047 = vpop.f32.mrb[0].mxu0
        %v5048 = vadd.f32 0.0, %v5047
        %v5049 = vpop.f32.mrb[0].mxu0
        %5050 = vmatprep.mubr.bf16.mxu0 0
        %5051 = vmatmul.mubr.bf16.gmra.mrb[0].mxu0 %v4613
        %v5052 = vpop.f32.mrb[0].mxu0
        %v5053 = vadd.f32 0.0, %v5052
        %v5054 = vpop.f32.mrb[0].mxu0
        %v5055 = vpop.f32.mrb[0].mxu0
        %v5056 = vadd.f32 0.0, %v5055
        %v5057 = vpop.f32.mrb[0].mxu0
        %5058 = vmatprep.mubr.bf16.mxu0 0
        %5059 = vmatmul.mubr.bf16.gmra.mrb[0].mxu0 %v4616
        %v5060 = vpop.f32.mrb[0].mxu0
        %v5061 = vadd.f32 0.0, %v5060
        %v5062 = vpop.f32.mrb[0].mxu0
        %v5063 = vpop.f32.mrb[0].mxu0
        %v5064 = vadd.f32 0.0, %v5063
        %v5065 = vpop.f32.mrb[0].mxu0
        %5066 = vmatprep.mubr.bf16.mxu0 0
        %5067 = vmatmul.mubr.bf16.gmra.mrb[0].mxu0 %v4619
        %v5068 = vpop.f32.mrb[0].mxu0
        %v5069 = vadd.f32 0.0, %v5068
        %v5070 = vpop.f32.mrb[0].mxu0
        %v5071 = vpop.f32.mrb[0].mxu0
        %v5072 = vadd.f32 0.0, %v5071
        %v5073 = vpop.f32.mrb[0].mxu0
        %5074 = vmatprep.mubr.bf16.mxu0 0
        %5075 = vmatmul.mubr.bf16.gmra.mrb[0].mxu0 %v4622
        %v5076 = vpop.f32.mrb[0].mxu0
        %v5077 = vadd.f32 0.0, %v5076
        %v5078 = vpop.f32.mrb[0].mxu0
        %v5079 = vpop.f32.mrb[0].mxu0
        %v5080 = vadd.f32 0.0, %v5079
        %v5081 = vpop.f32.mrb[0].mxu0
        %5082 = vmatprep.mubr.bf16.mxu0 0
        %5083 = vmatmul.mubr.bf16.gmra.mrb[0].mxu0 %v4625
        %v5084 = vpop.f32.mrb[0].mxu0
        %v5085 = vadd.f32 0.0, %v5084
        %v5086 = vpop.f32.mrb[0].mxu0
        %v5087 = vpop.f32.mrb[0].mxu0
        %v5088 = vadd.f32 0.0, %v5087
        %v5089 = vpop.f32.mrb[0].mxu0
        %5090 = vmatprep.mubr.bf16.mxu0 0
        %5091 = vmatmul.mubr.bf16.gmra.mrb[0].mxu0 %v4628
        %v5092 = vpop.f32.mrb[0].mxu0
        %v5093 = vadd.f32 0.0, %v5092
        %v5094 = vpop.f32.mrb[0].mxu0
        %v5095 = vpop.f32.mrb[0].mxu0
        %v5096 = vadd.f32 0.0, %v5095
        %v5097 = vpop.f32.mrb[0].mxu0
        %5098 = vmatprep.mubr.bf16.mxu0 0
        %5099 = vmatmul.mubr.bf16.gmra.mrb[0].mxu0 %v4631
        %v5100 = vpop.f32.mrb[0].mxu0
        %v5101 = vadd.f32 0.0, %v5100
        %v5102 = vpop.f32.mrb[0].mxu0
        %v5103 = vpop.f32.mrb[0].mxu0
        %v5104 = vadd.f32 0.0, %v5103
        %v5105 = vpop.f32.mrb[0].mxu0
        %5106 = vmatprep.mubr.bf16.mxu0 0
        %5107 = vmatmul.mubr.bf16.gmra.mrb[0].mxu0 %v4634
        %v5108 = vpop.f32.mrb[0].mxu0
        %v5109 = vadd.f32 0.0, %v5108
        %v5110 = vpop.f32.mrb[0].mxu0
        %v5111 = vpop.f32.mrb[0].mxu0
        %v5112 = vadd.f32 0.0, %v5111
        %v5113 = vpop.f32.mrb[0].mxu0
        %5114 = vmatprep.mubr.bf16.mxu0 0
        %5115 = vmatmul.mubr.bf16.gmra.mrb[0].mxu0 %v4637
        %v5116 = vpop.f32.mrb[0].mxu0
        %v5117 = vadd.f32 0.0, %v5116
        %v5118 = vpop.f32.mrb[0].mxu0
        %v5119 = vpop.f32.mrb[0].mxu0
        %v5120 = vadd.f32 0.0, %v5119
        %v5121 = vpop.f32.mrb[0].mxu0
        %5122 = vmatprep.mubr.bf16.mxu0 0
        %5123 = vmatmul.mubr.bf16.gmra.mrb[0].mxu0 %v4640
        %v5124 = vpop.f32.mrb[0].mxu0
        %v5125 = vadd.f32 0.0, %v5124
        %v5126 = vpop.f32.mrb[0].mxu0
        %v5127 = vpop.f32.mrb[0].mxu0
        %v5128 = vadd.f32 0.0, %v5127
        %v5129 = vpop.f32.mrb[0].mxu0
        %5130 = vmatprep.mubr.bf16.mxu0 0
        %5131 = vmatmul.mubr.bf16.gmra.mrb[0].mxu0 %v4643
        %v5132 = vpop.f32.mrb[0].mxu0
        %v5133 = vadd.f32 0.0, %v5132
        %v5134 = vpop.f32.mrb[0].mxu0
        %v5135 = vpop.f32.mrb[0].mxu0
        %v5136 = vadd.f32 0.0, %v5135
        %v5137 = vpop.f32.mrb[0].mxu0
        %5138 = vmatprep.mubr.bf16.mxu0 0
        %5139 = vmatmul.mubr.bf16.gmra.mrb[0].mxu0 %v4646
        %v5140 = vpop.f32.mrb[0].mxu0
        %v5141 = vadd.f32 0.0, %v5140
        %v5142 = vpop.f32.mrb[0].mxu0
        %v5143 = vpop.f32.mrb[0].mxu0
        %v5144 = vadd.f32 0.0, %v5143
        %v5145 = vpop.f32.mrb[0].mxu0
        %5146 = vmatprep.mubr.bf16.mxu0 0
        %5147 = vmatmul.mubr.bf16.gmra.mrb[0].mxu0 %v4649
        %v5148 = vpop.f32.mrb[0].mxu0
        %v5149 = vadd.f32 0.0, %v5148
        %v5150 = vpop.f32.mrb[0].mxu0
        %v5151 = vpop.f32.mrb[0].mxu0
        %v5152 = vadd.f32 0.0, %v5151
        %v5153 = vpop.f32.mrb[0].mxu0
        %5154 = vmatprep.mubr.bf16.mxu0 0
        %5155 = vmatmul.mubr.bf16.gmra.mrb[0].mxu0 %v4652
        %v5156 = vpop.f32.mrb[0].mxu0
        %v5157 = vadd.f32 0.0, %v5156
        %v5158 = vpop.f32.mrb[0].mxu0
        %v5159 = vpop.f32.mrb[0].mxu0
        %v5160 = vadd.f32 0.0, %v5159
        %v5161 = vpop.f32.mrb[0].mxu0
        %5162 = vmatprep.mubr.bf16.mxu0 0
        %5163 = vmatmul.mubr.bf16.gmra.mrb[0].mxu0 %v4655
        %v5164 = vpop.f32.mrb[0].mxu0
        %v5165 = vadd.f32 0.0, %v5164
        %v5166 = vpop.f32.mrb[0].mxu0
        %v5167 = vpop.f32.mrb[0].mxu0
        %v5168 = vadd.f32 0.0, %v5167
        %v5169 = vpop.f32.mrb[0].mxu0
        %5170 = vmatprep.mubr.bf16.mxu0 0
        %5171 = vmatmul.mubr.bf16.gmra.mrb[0].mxu0 %v4658
        %v5172 = vpop.f32.mrb[0].mxu0
        %v5173 = vadd.f32 0.0, %v5172
        %v5174 = vpop.f32.mrb[0].mxu0
        %v5175 = vpop.f32.mrb[0].mxu0
        %v5176 = vadd.f32 0.0, %v5175
        %v5177 = vpop.f32.mrb[0].mxu0
        %5178 = vmatprep.mubr.bf16.mxu0 0
        %5179 = vmatmul.mubr.bf16.gmra.mrb[0].mxu0 %v4661
        %v5180 = vpop.f32.mrb[0].mxu0
        %v5181 = vadd.f32 0.0, %v5180
        %v5182 = vpop.f32.mrb[0].mxu0
        %v5183 = vpop.f32.mrb[0].mxu0
        %v5184 = vadd.f32 0.0, %v5183
        %v5185 = vpop.f32.mrb[0].mxu0
        %5186 = vmatprep.mubr.bf16.mxu0 0
        %5187 = vmatmul.mubr.bf16.gmra.mrb[0].mxu0 %v4664
        %v5188 = vpop.f32.mrb[0].mxu0
        %v5189 = vadd.f32 0.0, %v5188
        %v5190 = vpop.f32.mrb[0].mxu0
        %v5191 = vpop.f32.mrb[0].mxu0
        %v5192 = vadd.f32 0.0, %v5191
        %v5193 = vpop.f32.mrb[0].mxu0
        %5194 = vmatprep.mubr.bf16.mxu0 0
        %5195 = vmatmul.mubr.bf16.gmra.mrb[0].mxu0 %v4667
        %v5196 = vpop.f32.mrb[0].mxu0
        %v5197 = vadd.f32 0.0, %v5196
        %v5198 = vpop.f32.mrb[0].mxu0
        %v5199 = vpop.f32.mrb[0].mxu0
        %v5200 = vadd.f32 0.0, %v5199
        %v5201 = vpop.f32.mrb[0].mxu0
        %5202 = vmatprep.mubr.bf16.mxu0 0
        %5203 = vmatmul.mubr.bf16.gmra.mrb[0].mxu0 %v4670
        %v5204 = vpop.f32.mrb[0].mxu0
        %v5205 = vadd.f32 0.0, %v5204
        %v5206 = vpop.f32.mrb[0].mxu0
        %v5207 = vpop.f32.mrb[0].mxu0
        %v5208 = vadd.f32 0.0, %v5207
        %v5209 = vpop.f32.mrb[0].mxu0
        %5210 = vmatprep.mubr.bf16.mxu0 0
        %5211 = vmatmul.mubr.bf16.gmra.mrb[0].mxu0 %v4673
        %v5212 = vpop.f32.mrb[0].mxu0
        %v5213 = vadd.f32 0.0, %v5212
        %v5214 = vpop.f32.mrb[0].mxu0
        %v5215 = vpop.f32.mrb[0].mxu0
        %v5216 = vadd.f32 0.0, %v5215
        %v5217 = vpop.f32.mrb[0].mxu0
        %5218 = vmatprep.mubr.bf16.mxu0 0
        %5219 = vmatmul.mubr.bf16.gmra.mrb[0].mxu0 %v4676
        %v5220 = vpop.f32.mrb[0].mxu0
        %v5221 = vadd.f32 0.0, %v5220
        %v5222 = vpop.f32.mrb[0].mxu0
        %v5223 = vpop.f32.mrb[0].mxu0
        %v5224 = vadd.f32 0.0, %v5223
        %v5225 = vpop.f32.mrb[0].mxu0
        %5226 = vmatprep.mubr.bf16.mxu0 0
        %5227 = vmatmul.mubr.bf16.gmra.mrb[0].mxu0 %v4679
        %v5228 = vpop.f32.mrb[0].mxu0
        %v5229 = vadd.f32 0.0, %v5228
        %v5230 = vpop.f32.mrb[0].mxu0
        %v5231 = vpop.f32.mrb[0].mxu0
        %v5232 = vadd.f32 0.0, %v5231
        %v5233 = vpop.f32.mrb[0].mxu0
        %5234 = vmatprep.mubr.bf16.mxu0 0
        %5235 = vmatmul.mubr.bf16.gmra.mrb[0].mxu0 %v4682
        %v5236 = vpop.f32.mrb[0].mxu0
        %v5237 = vadd.f32 0.0, %v5236
        %v5238 = vpop.f32.mrb[0].mxu0
        %v5239 = vpop.f32.mrb[0].mxu0
        %v5240 = vadd.f32 0.0, %v5239
        %v5241 = vpop.f32.mrb[0].mxu0
        %5242 = vmatprep.mubr.bf16.mxu0 0
        %5243 = vmatmul.mubr.bf16.gmra.mrb[0].mxu0 %v4685
        %v5244 = vpop.f32.mrb[0].mxu0
        %v5245 = vadd.f32 0.0, %v5244
        %v5246 = vpop.f32.mrb[0].mxu0
        %v5247 = vpop.f32.mrb[0].mxu0
        %v5248 = vadd.f32 0.0, %v5247
        %v5249 = vpop.f32.mrb[0].mxu0
        %5250 = vdwg.mxu0
        %v5251 = vadd.f32 %v4156, %v4725
        %v5252 = vadd.f32 %v4157, %v4728
        %v5253 = vadd.f32 %v4158, %v4733
        %v5254 = vadd.f32 %v4159, %v4736
        %v5255 = vadd.f32 %v4160, %v4741
        %v5256 = vadd.f32 %v4161, %v4744
        %v5257 = vadd.f32 %v4162, %v4749
        %v5258 = vadd.f32 %v4163, %v4752
        %v5259 = vadd.f32 %v4164, %v4757
        %v5260 = vadd.f32 %v4165, %v4760
        %v5261 = vadd.f32 %v4166, %v4765
        %v5262 = vadd.f32 %v4167, %v4768
        %v5263 = vadd.f32 %v4168, %v4773
        %v5264 = vadd.f32 %v4169, %v4776
        %v5265 = vadd.f32 %v4170, %v4781
        %v5266 = vadd.f32 %v4171, %v4784
        %v5267 = vadd.f32 %v4172, %v4789
        %v5268 = vadd.f32 %v4173, %v4792
        %v5269 = vadd.f32 %v4174, %v4797
        %v5270 = vadd.f32 %v4175, %v4800
        %v5271 = vadd.f32 %v4176, %v4805
        %v5272 = vadd.f32 %v4177, %v4808
        %v5273 = vadd.f32 %v4178, %v4813
        %v5274 = vadd.f32 %v4179, %v4816
        %v5275 = vadd.f32 %v4180, %v4821
        %v5276 = vadd.f32 %v4181, %v4824
        %v5277 = vadd.f32 %v4182, %v4829
        %v5278 = vadd.f32 %v4183, %v4832
        %v5279 = vadd.f32 %v4184, %v4837
        %v5280 = vadd.f32 %v4185, %v4840
        %v5281 = vadd.f32 %v4186, %v4845
        %v5282 = vadd.f32 %v4187, %v4848
        %v5283 = vadd.f32 %v4188, %v4853
        %v5284 = vadd.f32 %v4189, %v4856
        %v5285 = vadd.f32 %v4190, %v4861
        %v5286 = vadd.f32 %v4191, %v4864
        %v5287 = vadd.f32 %v4192, %v4869
        %v5288 = vadd.f32 %v4193, %v4872
        %v5289 = vadd.f32 %v4194, %v4877
        %v5290 = vadd.f32 %v4195, %v4880
        %v5291 = vadd.f32 %v4196, %v4885
        %v5292 = vadd.f32 %v4197, %v4888
        %v5293 = vadd.f32 %v4198, %v4893
        %v5294 = vadd.f32 %v4199, %v4896
        %v5295 = vadd.f32 %v4200, %v4901
        %v5296 = vadd.f32 %v4201, %v4904
        %v5297 = vadd.f32 %v4202, %v4909
        %v5298 = vadd.f32 %v4203, %v4912
        %v5299 = vadd.f32 %v4204, %v4917
        %v5300 = vadd.f32 %v4205, %v4920
        %v5301 = vadd.f32 %v4206, %v4925
        %v5302 = vadd.f32 %v4207, %v4928
        %v5303 = vadd.f32 %v4208, %v4933
        %v5304 = vadd.f32 %v4209, %v4936
        %v5305 = vadd.f32 %v4210, %v4941
        %v5306 = vadd.f32 %v4211, %v4944
        %v5307 = vadd.f32 %v4212, %v4949
        %v5308 = vadd.f32 %v4213, %v4952
        %v5309 = vadd.f32 %v4214, %v4957
        %v5310 = vadd.f32 %v4215, %v4960
        %v5311 = vadd.f32 %v4216, %v4965
        %v5312 = vadd.f32 %v4217, %v4968
        %v5313 = vadd.f32 %v4218, %v4973
        %v5314 = vadd.f32 %v4219, %v4976
        %v5315 = vadd.f32 %v4220, %v4981
        %v5316 = vadd.f32 %v4221, %v4984
        %v5317 = vadd.f32 %v4222, %v4989
        %v5318 = vadd.f32 %v4223, %v4992
        %v5319 = vadd.f32 %v4224, %v4997
        %v5320 = vadd.f32 %v4225, %v5000
        %v5321 = vadd.f32 %v4226, %v5005
        %v5322 = vadd.f32 %v4227, %v5008
        %v5323 = vadd.f32 %v4228, %v5013
        %v5324 = vadd.f32 %v4229, %v5016
        %v5325 = vadd.f32 %v4230, %v5021
        %v5326 = vadd.f32 %v4231, %v5024
        %v5327 = vadd.f32 %v4232, %v5029
        %v5328 = vadd.f32 %v4233, %v5032
        %v5329 = vadd.f32 %v4234, %v5037
        %v5330 = vadd.f32 %v4235, %v5040
        %v5331 = vadd.f32 %v4236, %v5045
        %v5332 = vadd.f32 %v4237, %v5048
        %v5333 = vadd.f32 %v4238, %v5053
        %v5334 = vadd.f32 %v4239, %v5056
        %v5335 = vadd.f32 %v4240, %v5061
        %v5336 = vadd.f32 %v4241, %v5064
        %v5337 = vadd.f32 %v4242, %v5069
        %v5338 = vadd.f32 %v4243, %v5072
        %v5339 = vadd.f32 %v4244, %v5077
        %v5340 = vadd.f32 %v4245, %v5080
        %v5341 = vadd.f32 %v4246, %v5085
        %v5342 = vadd.f32 %v4247, %v5088
        %v5343 = vadd.f32 %v4248, %v5093
        %v5344 = vadd.f32 %v4249, %v5096
        %v5345 = vadd.f32 %v4250, %v5101
        %v5346 = vadd.f32 %v4251, %v5104
        %v5347 = vadd.f32 %v4252, %v5109
        %v5348 = vadd.f32 %v4253, %v5112
        %v5349 = vadd.f32 %v4254, %v5117
        %v5350 = vadd.f32 %v4255, %v5120
        %v5351 = vadd.f32 %v4256, %v5125
        %v5352 = vadd.f32 %v4257, %v5128
        %v5353 = vadd.f32 %v4258, %v5133
        %v5354 = vadd.f32 %v4259, %v5136
        %v5355 = vadd.f32 %v4260, %v5141
        %v5356 = vadd.f32 %v4261, %v5144
        %v5357 = vadd.f32 %v4262, %v5149
        %v5358 = vadd.f32 %v4263, %v5152
        %v5359 = vadd.f32 %v4264, %v5157
        %v5360 = vadd.f32 %v4265, %v5160
        %v5361 = vadd.f32 %v4266, %v5165
        %v5362 = vadd.f32 %v4267, %v5168
        %v5363 = vadd.f32 %v4268, %v5173
        %v5364 = vadd.f32 %v4269, %v5176
        %v5365 = vadd.f32 %v4270, %v5181
        %v5366 = vadd.f32 %v4271, %v5184
        %v5367 = vadd.f32 %v4272, %v5189
        %v5368 = vadd.f32 %v4273, %v5192
        %v5369 = vadd.f32 %v4274, %v5197
        %v5370 = vadd.f32 %v4275, %v5200
        %v5371 = vadd.f32 %v4276, %v5205
        %v5372 = vadd.f32 %v4277, %v5208
        %v5373 = vadd.f32 %v4278, %v5213
        %v5374 = vadd.f32 %v4279, %v5216
        %v5375 = vadd.f32 %v4280, %v5221
        %v5376 = vadd.f32 %v4281, %v5224
        %v5377 = vadd.f32 %v4282, %v5229
        %v5378 = vadd.f32 %v4283, %v5232
        %v5379 = vadd.f32 %v4284, %v5237
        %v5380 = vadd.f32 %v4285, %v5240
        %v5381 = vadd.f32 %v4286, %v5245
        %v5382 = vadd.f32 %v4287, %v5248
        %v5383 = vld [vmem:[%s3193 + $0x1] sm:$0xff]
        %v5384 = vld [vmem:[%s3193 + $0x9] sm:$0xff]
        %v5385 = vld [vmem:[%s3193 + $0x11] sm:$0xff]
        %v5386 = vld [vmem:[%s3193 + $0x19] sm:$0xff]
        %v5387 = vld [vmem:[%s3193 + $0x21] sm:$0xff]
        %v5388 = vld [vmem:[%s3193 + $0x29] sm:$0xff]
        %v5389 = vld [vmem:[%s3193 + $0x31] sm:$0xff]
        %v5390 = vld [vmem:[%s3193 + $0x39] sm:$0xff]
        %v5391 = vld [vmem:[%s3193 + $0x41] sm:$0xff]
        %v5392 = vld [vmem:[%s3193 + $0x49] sm:$0xff]
        %v5393 = vld [vmem:[%s3193 + $0x51] sm:$0xff]
        %v5394 = vld [vmem:[%s3193 + $0x59] sm:$0xff]
        %v5395 = vld [vmem:[%s3193 + $0x61] sm:$0xff]
        %v5396 = vld [vmem:[%s3193 + $0x69] sm:$0xff]
        %v5397 = vld [vmem:[%s3193 + $0x71] sm:$0xff]
        %v5398 = vld [vmem:[%s3193 + $0x79] sm:$0xff]
        %v5399 = vld [vmem:[%s3193 + $0x81] sm:$0xff]
        %v5400 = vld [vmem:[%s3193 + $0x89] sm:$0xff]
        %v5401 = vld [vmem:[%s3193 + $0x91] sm:$0xff]
        %v5402 = vld [vmem:[%s3193 + $0x99] sm:$0xff]
        %v5403 = vld [vmem:[%s3193 + $0xa1] sm:$0xff]
        %v5404 = vld [vmem:[%s3193 + $0xa9] sm:$0xff]
        %v5405 = vld [vmem:[%s3193 + $0xb1] sm:$0xff]
        %v5406 = vld [vmem:[%s3193 + $0xb9] sm:$0xff]
        %v5407 = vld [vmem:[%s3193 + $0xc1] sm:$0xff]
        %v5408 = vld [vmem:[%s3193 + $0xc9] sm:$0xff]
        %v5409 = vld [vmem:[%s3193 + $0xd1] sm:$0xff]
        %v5410 = vld [vmem:[%s3193 + $0xd9] sm:$0xff]
        %v5411 = vld [vmem:[%s3193 + $0xe1] sm:$0xff]
        %v5412 = vld [vmem:[%s3193 + $0xe9] sm:$0xff]
        %v5413 = vld [vmem:[%s3193 + $0xf1] sm:$0xff]
        %v5414 = vld [vmem:[%s3193 + $0xf9] sm:$0xff]
        %v5415 = vld [vmem:[%s3193 + $0x101] sm:$0xff]
        %v5416 = vld [vmem:[%s3193 + $0x109] sm:$0xff]
        %v5417 = vld [vmem:[%s3193 + $0x111] sm:$0xff]
        %v5418 = vld [vmem:[%s3193 + $0x119] sm:$0xff]
        %v5419 = vld [vmem:[%s3193 + $0x121] sm:$0xff]
        %v5420 = vld [vmem:[%s3193 + $0x129] sm:$0xff]
        %v5421 = vld [vmem:[%s3193 + $0x131] sm:$0xff]
        %v5422 = vld [vmem:[%s3193 + $0x139] sm:$0xff]
        %v5423 = vld [vmem:[%s3193 + $0x141] sm:$0xff]
        %v5424 = vld [vmem:[%s3193 + $0x149] sm:$0xff]
        %v5425 = vld [vmem:[%s3193 + $0x151] sm:$0xff]
        %v5426 = vld [vmem:[%s3193 + $0x159] sm:$0xff]
        %v5427 = vld [vmem:[%s3193 + $0x161] sm:$0xff]
        %v5428 = vld [vmem:[%s3193 + $0x169] sm:$0xff]
        %v5429 = vld [vmem:[%s3193 + $0x171] sm:$0xff]
        %v5430 = vld [vmem:[%s3193 + $0x179] sm:$0xff]
        %v5431 = vld [vmem:[%s3193 + $0x181] sm:$0xff]
        %v5432 = vld [vmem:[%s3193 + $0x189] sm:$0xff]
        %v5433 = vld [vmem:[%s3193 + $0x191] sm:$0xff]
        %v5434 = vld [vmem:[%s3193 + $0x199] sm:$0xff]
        %v5435 = vld [vmem:[%s3193 + $0x1a1] sm:$0xff]
        %v5436 = vld [vmem:[%s3193 + $0x1a9] sm:$0xff]
        %v5437 = vld [vmem:[%s3193 + $0x1b1] sm:$0xff]
        %v5438 = vld [vmem:[%s3193 + $0x1b9] sm:$0xff]
        %v5439 = vld [vmem:[%s3193 + $0x1c1] sm:$0xff]
        %v5440 = vld [vmem:[%s3193 + $0x1c9] sm:$0xff]
        %v5441 = vld [vmem:[%s3193 + $0x1d1] sm:$0xff]
        %v5442 = vld [vmem:[%s3193 + $0x1d9] sm:$0xff]
        %v5443 = vld [vmem:[%s3193 + $0x1e1] sm:$0xff]
        %v5444 = vld [vmem:[%s3193 + $0x1e9] sm:$0xff]
        %v5445 = vld [vmem:[%s3193 + $0x1f1] sm:$0xff]
        %v5446 = vld [vmem:[%s3193 + $0x1f9] sm:$0xff]
        %v5447 = vld [vmem:[%s3193 + $0x201] sm:$0xff]
        %v5448 = vld [vmem:[%s3193 + $0x209] sm:$0xff]
        %v5449 = vld [vmem:[%s3193 + $0x211] sm:$0xff]
        %v5450 = vld [vmem:[%s3193 + $0x219] sm:$0xff]
        %v5451 = vld [vmem:[%s3193 + $0x221] sm:$0xff]
        %v5452 = vld [vmem:[%s3193 + $0x229] sm:$0xff]
        %v5453 = vld [vmem:[%s3193 + $0x231] sm:$0xff]
        %v5454 = vld [vmem:[%s3193 + $0x239] sm:$0xff]
        %v5455 = vld [vmem:[%s3193 + $0x241] sm:$0xff]
        %v5456 = vld [vmem:[%s3193 + $0x249] sm:$0xff]
        %v5457 = vld [vmem:[%s3193 + $0x251] sm:$0xff]
        %v5458 = vld [vmem:[%s3193 + $0x259] sm:$0xff]
        %v5459 = vld [vmem:[%s3193 + $0x261] sm:$0xff]
        %v5460 = vld [vmem:[%s3193 + $0x269] sm:$0xff]
        %v5461 = vld [vmem:[%s3193 + $0x271] sm:$0xff]
        %v5462 = vld [vmem:[%s3193 + $0x279] sm:$0xff]
        %v5463 = vld [vmem:[%s3193 + $0x281] sm:$0xff]
        %v5464 = vld [vmem:[%s3193 + $0x289] sm:$0xff]
        %v5465 = vld [vmem:[%s3193 + $0x291] sm:$0xff]
        %v5466 = vld [vmem:[%s3193 + $0x299] sm:$0xff]
        %v5467 = vld [vmem:[%s3193 + $0x2a1] sm:$0xff]
        %v5468 = vld [vmem:[%s3193 + $0x2a9] sm:$0xff]
        %v5469 = vld [vmem:[%s3193 + $0x2b1] sm:$0xff]
        %v5470 = vld [vmem:[%s3193 + $0x2b9] sm:$0xff]
        %v5471 = vld [vmem:[%s3193 + $0x2c1] sm:$0xff]
        %v5472 = vld [vmem:[%s3193 + $0x2c9] sm:$0xff]
        %v5473 = vld [vmem:[%s3193 + $0x2d1] sm:$0xff]
        %v5474 = vld [vmem:[%s3193 + $0x2d9] sm:$0xff]
        %v5475 = vld [vmem:[%s3193 + $0x2e1] sm:$0xff]
        %v5476 = vld [vmem:[%s3193 + $0x2e9] sm:$0xff]
        %v5477 = vld [vmem:[%s3193 + $0x2f1] sm:$0xff]
        %v5478 = vld [vmem:[%s3193 + $0x2f9] sm:$0xff]
        %v5479 = vld [vmem:[%s3193 + $0x301] sm:$0xff]
        %v5480 = vld [vmem:[%s3193 + $0x309] sm:$0xff]
        %v5481 = vld [vmem:[%s3193 + $0x311] sm:$0xff]
        %v5482 = vld [vmem:[%s3193 + $0x319] sm:$0xff]
        %v5483 = vld [vmem:[%s3193 + $0x321] sm:$0xff]
        %v5484 = vld [vmem:[%s3193 + $0x329] sm:$0xff]
        %v5485 = vld [vmem:[%s3193 + $0x331] sm:$0xff]
        %v5486 = vld [vmem:[%s3193 + $0x339] sm:$0xff]
        %v5487 = vld [vmem:[%s3193 + $0x341] sm:$0xff]
        %v5488 = vld [vmem:[%s3193 + $0x349] sm:$0xff]
        %v5489 = vld [vmem:[%s3193 + $0x351] sm:$0xff]
        %v5490 = vld [vmem:[%s3193 + $0x359] sm:$0xff]
        %v5491 = vld [vmem:[%s3193 + $0x361] sm:$0xff]
        %v5492 = vld [vmem:[%s3193 + $0x369] sm:$0xff]
        %v5493 = vld [vmem:[%s3193 + $0x371] sm:$0xff]
        %v5494 = vld [vmem:[%s3193 + $0x379] sm:$0xff]
        %v5495 = vld [vmem:[%s3193 + $0x381] sm:$0xff]
        %v5496 = vld [vmem:[%s3193 + $0x389] sm:$0xff]
        %v5497 = vld [vmem:[%s3193 + $0x391] sm:$0xff]
        %v5498 = vld [vmem:[%s3193 + $0x399] sm:$0xff]
        %v5499 = vld [vmem:[%s3193 + $0x3a1] sm:$0xff]
        %v5500 = vld [vmem:[%s3193 + $0x3a9] sm:$0xff]
        %v5501 = vld [vmem:[%s3193 + $0x3b1] sm:$0xff]
        %v5502 = vld [vmem:[%s3193 + $0x3b9] sm:$0xff]
        %v5503 = vld [vmem:[%s3193 + $0x3c1] sm:$0xff]
        %v5504 = vld [vmem:[%s3193 + $0x3c9] sm:$0xff]
        %v5505 = vld [vmem:[%s3193 + $0x3d1] sm:$0xff]
        %v5506 = vld [vmem:[%s3193 + $0x3d9] sm:$0xff]
        %v5507 = vld [vmem:[%s3193 + $0x3e1] sm:$0xff]
        %v5508 = vld [vmem:[%s3193 + $0x3e9] sm:$0xff]
        %v5509 = vld [vmem:[%s3193 + $0x3f1] sm:$0xff]
        %v5510 = vld [vmem:[%s3193 + $0x3f9] sm:$0xff]
        %v5511 = vld [vmem:[%s3193 + $0x401] sm:$0xff]
        %v5512 = vld [vmem:[%s3193 + $0x409] sm:$0xff]
        %v5513 = vld [vmem:[%s3193 + $0x411] sm:$0xff]
        %v5514 = vld [vmem:[%s3193 + $0x419] sm:$0xff]
        %v5515 = vpack.c.bf16 %v5384, %v5383
        %v5516 = vpack.c.bf16 %v5386, %v5385
        %v5517 = vpack.c.bf16 %v5388, %v5387
        %v5518 = vpack.c.bf16 %v5390, %v5389
        %v5519 = vpack.c.bf16 %v5392, %v5391
        %v5520 = vpack.c.bf16 %v5394, %v5393
        %v5521 = vpack.c.bf16 %v5396, %v5395
        %v5522 = vpack.c.bf16 %v5398, %v5397
        %v5523 = vpack.c.bf16 %v5400, %v5399
        %v5524 = vpack.c.bf16 %v5402, %v5401
        %v5525 = vpack.c.bf16 %v5404, %v5403
        %v5526 = vpack.c.bf16 %v5406, %v5405
        %v5527 = vpack.c.bf16 %v5408, %v5407
        %v5528 = vpack.c.bf16 %v5410, %v5409
        %v5529 = vpack.c.bf16 %v5412, %v5411
        %v5530 = vpack.c.bf16 %v5414, %v5413
        %v5531 = vpack.c.bf16 %v5416, %v5415
        %v5532 = vpack.c.bf16 %v5418, %v5417
        %v5533 = vpack.c.bf16 %v5420, %v5419
        %v5534 = vpack.c.bf16 %v5422, %v5421
        %v5535 = vpack.c.bf16 %v5424, %v5423
        %v5536 = vpack.c.bf16 %v5426, %v5425
        %v5537 = vpack.c.bf16 %v5428, %v5427
        %v5538 = vpack.c.bf16 %v5430, %v5429
        %v5539 = vpack.c.bf16 %v5432, %v5431
        %v5540 = vpack.c.bf16 %v5434, %v5433
        %v5541 = vpack.c.bf16 %v5436, %v5435
        %v5542 = vpack.c.bf16 %v5438, %v5437
        %v5543 = vpack.c.bf16 %v5440, %v5439
        %v5544 = vpack.c.bf16 %v5442, %v5441
        %v5545 = vpack.c.bf16 %v5444, %v5443
        %v5546 = vpack.c.bf16 %v5446, %v5445
        %v5547 = vpack.c.bf16 %v5448, %v5447
        %v5548 = vpack.c.bf16 %v5450, %v5449
        %v5549 = vpack.c.bf16 %v5452, %v5451
        %v5550 = vpack.c.bf16 %v5454, %v5453
        %v5551 = vpack.c.bf16 %v5456, %v5455
        %v5552 = vpack.c.bf16 %v5458, %v5457
        %v5553 = vpack.c.bf16 %v5460, %v5459
        %v5554 = vpack.c.bf16 %v5462, %v5461
        %v5555 = vpack.c.bf16 %v5464, %v5463
        %v5556 = vpack.c.bf16 %v5466, %v5465
        %v5557 = vpack.c.bf16 %v5468, %v5467
        %v5558 = vpack.c.bf16 %v5470, %v5469
        %v5559 = vpack.c.bf16 %v5472, %v5471
        %v5560 = vpack.c.bf16 %v5474, %v5473
        %v5561 = vpack.c.bf16 %v5476, %v5475
        %v5562 = vpack.c.bf16 %v5478, %v5477
        %v5563 = vpack.c.bf16 %v5480, %v5479
        %v5564 = vpack.c.bf16 %v5482, %v5481
        %v5565 = vpack.c.bf16 %v5484, %v5483
        %v5566 = vpack.c.bf16 %v5486, %v5485
        %v5567 = vpack.c.bf16 %v5488, %v5487
        %v5568 = vpack.c.bf16 %v5490, %v5489
        %v5569 = vpack.c.bf16 %v5492, %v5491
        %v5570 = vpack.c.bf16 %v5494, %v5493
        %v5571 = vpack.c.bf16 %v5496, %v5495
        %v5572 = vpack.c.bf16 %v5498, %v5497
        %v5573 = vpack.c.bf16 %v5500, %v5499
        %v5574 = vpack.c.bf16 %v5502, %v5501
        %v5575 = vpack.c.bf16 %v5504, %v5503
        %v5576 = vpack.c.bf16 %v5506, %v5505
        %v5577 = vpack.c.bf16 %v5508, %v5507
        %v5578 = vpack.c.bf16 %v5510, %v5509
        %v5579 = vpack.c.bf16 %v5512, %v5511
        %v5580 = vpack.c.bf16 %v5514, %v5513
        %s5581 = scalar_lea.vmem %s1, 10
        %v5582 = vld [vmem:[%s5581] sm:$0x3]
        %v5584 = vsel %vm570, %v5515, 0
        %v5587 = vsel %vm570, %v5516, 0
        %v5590 = vsel %vm570, %v5517, 0
        %v5593 = vsel %vm570, %v5518, 0
        %v5596 = vsel %vm570, %v5519, 0
        %v5599 = vsel %vm570, %v5520, 0
        %v5602 = vsel %vm570, %v5521, 0
        %v5605 = vsel %vm570, %v5522, 0
        %v5608 = vsel %vm570, %v5523, 0
        %v5611 = vsel %vm570, %v5524, 0
        %v5614 = vsel %vm570, %v5525, 0
        %v5617 = vsel %vm570, %v5526, 0
        %v5620 = vsel %vm570, %v5527, 0
        %v5623 = vsel %vm570, %v5528, 0
        %v5626 = vsel %vm570, %v5529, 0
        %v5629 = vsel %vm570, %v5530, 0
        %v5632 = vsel %vm570, %v5531, 0
        %v5635 = vsel %vm570, %v5532, 0
        %v5638 = vsel %vm570, %v5533, 0
        %v5641 = vsel %vm570, %v5534, 0
        %v5644 = vsel %vm570, %v5535, 0
        %v5647 = vsel %vm570, %v5536, 0
        %v5650 = vsel %vm570, %v5537, 0
        %v5653 = vsel %vm570, %v5538, 0
        %v5656 = vsel %vm570, %v5539, 0
        %v5659 = vsel %vm570, %v5540, 0
        %v5662 = vsel %vm570, %v5541, 0
        %v5665 = vsel %vm570, %v5542, 0
        %v5668 = vsel %vm570, %v5543, 0
        %v5671 = vsel %vm570, %v5544, 0
        %v5674 = vsel %vm570, %v5545, 0
        %v5677 = vsel %vm570, %v5546, 0
        %v5680 = vsel %vm570, %v5547, 0
        %v5683 = vsel %vm570, %v5548, 0
        %v5686 = vsel %vm570, %v5549, 0
        %v5689 = vsel %vm570, %v5550, 0
        %v5692 = vsel %vm570, %v5551, 0
        %v5695 = vsel %vm570, %v5552, 0
        %v5698 = vsel %vm570, %v5553, 0
        %v5701 = vsel %vm570, %v5554, 0
        %v5704 = vsel %vm570, %v5555, 0
        %v5707 = vsel %vm570, %v5556, 0
        %v5710 = vsel %vm570, %v5557, 0
        %v5713 = vsel %vm570, %v5558, 0
        %v5716 = vsel %vm570, %v5559, 0
        %v5719 = vsel %vm570, %v5560, 0
        %v5722 = vsel %vm570, %v5561, 0
        %v5725 = vsel %vm570, %v5562, 0
        %v5728 = vsel %vm570, %v5563, 0
        %v5731 = vsel %vm570, %v5564, 0
        %v5734 = vsel %vm570, %v5565, 0
        %v5737 = vsel %vm570, %v5566, 0
        %v5740 = vsel %vm570, %v5567, 0
        %v5743 = vsel %vm570, %v5568, 0
        %v5746 = vsel %vm570, %v5569, 0
        %v5749 = vsel %vm570, %v5570, 0
        %v5752 = vsel %vm570, %v5571, 0
        %v5755 = vsel %vm570, %v5572, 0
        %v5758 = vsel %vm570, %v5573, 0
        %v5761 = vsel %vm570, %v5574, 0
        %v5764 = vsel %vm570, %v5575, 0
        %v5767 = vsel %vm570, %v5576, 0
        %v5770 = vsel %vm570, %v5577, 0
        %v5773 = vsel %vm570, %v5578, 0
        %v5776 = vsel %vm570, %v5579, 0
        %v5779 = vsel %vm570, %v5580, 0
        %v5782 = vand.u32 %v5582, %v772
        %5784 = vmatprep.subr.bf16.mxu0 0
        %5785 = vmatpush1.bf16.msra.mxu0 %v5782
        %5786 = vmatprep.subr.bf16.mxu0 0
        %5787 = vmatpush1.bf16.msra.mxu0 0
        %5788 = vmatprep.subr.bf16.mxu0 0
        %5789 = vmatpush1.bf16.msra.mxu0 0
        %5790 = vmatprep.subr.bf16.mxu0 0
        %5791 = vmatpush1.bf16.msra.mxu0 0
        %5792 = vmatprep.subr.bf16.mxu0 0
        %5793 = vmatpush1.bf16.msra.mxu0 0
        %5794 = vmatprep.subr.bf16.mxu0 0
        %5795 = vmatpush1.bf16.msra.mxu0 0
        %5796 = vmatprep.subr.bf16.mxu0 0
        %5797 = vmatpush1.bf16.msra.mxu0 0
        %5798 = vmatprep.subr.bf16.mxu0 0
        %5799 = vmatpush1.bf16.msra.mxu0 0
        %5800 = vmatprep.subr.bf16.mxu0 0
        %5801 = vmatpush1.bf16.msra.mxu0 0
        %5802 = vmatprep.subr.bf16.mxu0 0
        %5803 = vmatpush1.bf16.msra.mxu0 0
        %5804 = vmatprep.subr.bf16.mxu0 0
        %5805 = vmatpush1.bf16.msra.mxu0 0
        %5806 = vmatprep.subr.bf16.mxu0 0
        %5807 = vmatpush1.bf16.msra.mxu0 0
        %5808 = vmatprep.subr.bf16.mxu0 0
        %5809 = vmatpush1.bf16.msra.mxu0 0
        %5810 = vmatprep.subr.bf16.mxu0 0
        %5811 = vmatpush1.bf16.msra.mxu0 0
        %5812 = vmatprep.subr.bf16.mxu0 0
        %5813 = vmatpush1.bf16.msra.mxu0 0
        %5814 = vmatprep.subr.bf16.mxu0 0
        %5815 = vmatpush1.bf16.msra.mxu0 0
        %5816 = vmatprep.mubr.bf16.mxu0 0
        %5817 = vmatmul.mubr.bf16.gmra.mrb[0].mxu0 %v5584
        %v5818 = vpop.f32.mrb[0].mxu0
        %v5819 = vadd.f32 0.0, %v5818
        %v5820 = vpop.f32.mrb[0].mxu0
        %v5821 = vpop.f32.mrb[0].mxu0
        %v5822 = vadd.f32 0.0, %v5821
        %v5823 = vpop.f32.mrb[0].mxu0
        %5824 = vmatprep.mubr.bf16.mxu0 0
        %5825 = vmatmul.mubr.bf16.gmra.mrb[0].mxu0 %v5587
        %v5826 = vpop.f32.mrb[0].mxu0
        %v5827 = vadd.f32 0.0, %v5826
        %v5828 = vpop.f32.mrb[0].mxu0
        %v5829 = vpop.f32.mrb[0].mxu0
        %v5830 = vadd.f32 0.0, %v5829
        %v5831 = vpop.f32.mrb[0].mxu0
        %5832 = vmatprep.mubr.bf16.mxu0 0
        %5833 = vmatmul.mubr.bf16.gmra.mrb[0].mxu0 %v5590
        %v5834 = vpop.f32.mrb[0].mxu0
        %v5835 = vadd.f32 0.0, %v5834
        %v5836 = vpop.f32.mrb[0].mxu0
        %v5837 = vpop.f32.mrb[0].mxu0
        %v5838 = vadd.f32 0.0, %v5837
        %v5839 = vpop.f32.mrb[0].mxu0
        %5840 = vmatprep.mubr.bf16.mxu0 0
        %5841 = vmatmul.mubr.bf16.gmra.mrb[0].mxu0 %v5593
        %v5842 = vpop.f32.mrb[0].mxu0
        %v5843 = vadd.f32 0.0, %v5842
        %v5844 = vpop.f32.mrb[0].mxu0
        %v5845 = vpop.f32.mrb[0].mxu0
        %v5846 = vadd.f32 0.0, %v5845
        %v5847 = vpop.f32.mrb[0].mxu0
        %5848 = vmatprep.mubr.bf16.mxu0 0
        %5849 = vmatmul.mubr.bf16.gmra.mrb[0].mxu0 %v5596
        %v5850 = vpop.f32.mrb[0].mxu0
        %v5851 = vadd.f32 0.0, %v5850
        %v5852 = vpop.f32.mrb[0].mxu0
        %v5853 = vpop.f32.mrb[0].mxu0
        %v5854 = vadd.f32 0.0, %v5853
        %v5855 = vpop.f32.mrb[0].mxu0
        %5856 = vmatprep.mubr.bf16.mxu0 0
        %5857 = vmatmul.mubr.bf16.gmra.mrb[0].mxu0 %v5599
        %v5858 = vpop.f32.mrb[0].mxu0
        %v5859 = vadd.f32 0.0, %v5858
        %v5860 = vpop.f32.mrb[0].mxu0
        %v5861 = vpop.f32.mrb[0].mxu0
        %v5862 = vadd.f32 0.0, %v5861
        %v5863 = vpop.f32.mrb[0].mxu0
        %5864 = vmatprep.mubr.bf16.mxu0 0
        %5865 = vmatmul.mubr.bf16.gmra.mrb[0].mxu0 %v5602
        %v5866 = vpop.f32.mrb[0].mxu0
        %v5867 = vadd.f32 0.0, %v5866
        %v5868 = vpop.f32.mrb[0].mxu0
        %v5869 = vpop.f32.mrb[0].mxu0
        %v5870 = vadd.f32 0.0, %v5869
        %v5871 = vpop.f32.mrb[0].mxu0
        %5872 = vmatprep.mubr.bf16.mxu0 0
        %5873 = vmatmul.mubr.bf16.gmra.mrb[0].mxu0 %v5605
        %v5874 = vpop.f32.mrb[0].mxu0
        %v5875 = vadd.f32 0.0, %v5874
        %v5876 = vpop.f32.mrb[0].mxu0
        %v5877 = vpop.f32.mrb[0].mxu0
        %v5878 = vadd.f32 0.0, %v5877
        %v5879 = vpop.f32.mrb[0].mxu0
        %5880 = vmatprep.mubr.bf16.mxu0 0
        %5881 = vmatmul.mubr.bf16.gmra.mrb[0].mxu0 %v5608
        %v5882 = vpop.f32.mrb[0].mxu0
        %v5883 = vadd.f32 0.0, %v5882
        %v5884 = vpop.f32.mrb[0].mxu0
        %v5885 = vpop.f32.mrb[0].mxu0
        %v5886 = vadd.f32 0.0, %v5885
        %v5887 = vpop.f32.mrb[0].mxu0
        %5888 = vmatprep.mubr.bf16.mxu0 0
        %5889 = vmatmul.mubr.bf16.gmra.mrb[0].mxu0 %v5611
        %v5890 = vpop.f32.mrb[0].mxu0
        %v5891 = vadd.f32 0.0, %v5890
        %v5892 = vpop.f32.mrb[0].mxu0
        %v5893 = vpop.f32.mrb[0].mxu0
        %v5894 = vadd.f32 0.0, %v5893
        %v5895 = vpop.f32.mrb[0].mxu0
        %5896 = vmatprep.mubr.bf16.mxu0 0
        %5897 = vmatmul.mubr.bf16.gmra.mrb[0].mxu0 %v5614
        %v5898 = vpop.f32.mrb[0].mxu0
        %v5899 = vadd.f32 0.0, %v5898
        %v5900 = vpop.f32.mrb[0].mxu0
        %v5901 = vpop.f32.mrb[0].mxu0
        %v5902 = vadd.f32 0.0, %v5901
        %v5903 = vpop.f32.mrb[0].mxu0
        %5904 = vmatprep.mubr.bf16.mxu0 0
        %5905 = vmatmul.mubr.bf16.gmra.mrb[0].mxu0 %v5617
        %v5906 = vpop.f32.mrb[0].mxu0
        %v5907 = vadd.f32 0.0, %v5906
        %v5908 = vpop.f32.mrb[0].mxu0
        %v5909 = vpop.f32.mrb[0].mxu0
        %v5910 = vadd.f32 0.0, %v5909
        %v5911 = vpop.f32.mrb[0].mxu0
        %5912 = vmatprep.mubr.bf16.mxu0 0
        %5913 = vmatmul.mubr.bf16.gmra.mrb[0].mxu0 %v5620
        %v5914 = vpop.f32.mrb[0].mxu0
        %v5915 = vadd.f32 0.0, %v5914
        %v5916 = vpop.f32.mrb[0].mxu0
        %v5917 = vpop.f32.mrb[0].mxu0
        %v5918 = vadd.f32 0.0, %v5917
        %v5919 = vpop.f32.mrb[0].mxu0
        %5920 = vmatprep.mubr.bf16.mxu0 0
        %5921 = vmatmul.mubr.bf16.gmra.mrb[0].mxu0 %v5623
        %v5922 = vpop.f32.mrb[0].mxu0
        %v5923 = vadd.f32 0.0, %v5922
        %v5924 = vpop.f32.mrb[0].mxu0
        %v5925 = vpop.f32.mrb[0].mxu0
        %v5926 = vadd.f32 0.0, %v5925
        %v5927 = vpop.f32.mrb[0].mxu0
        %5928 = vmatprep.mubr.bf16.mxu0 0
        %5929 = vmatmul.mubr.bf16.gmra.mrb[0].mxu0 %v5626
        %v5930 = vpop.f32.mrb[0].mxu0
        %v5931 = vadd.f32 0.0, %v5930
        %v5932 = vpop.f32.mrb[0].mxu0
        %v5933 = vpop.f32.mrb[0].mxu0
        %v5934 = vadd.f32 0.0, %v5933
        %v5935 = vpop.f32.mrb[0].mxu0
        %5936 = vmatprep.mubr.bf16.mxu0 0
        %5937 = vmatmul.mubr.bf16.gmra.mrb[0].mxu0 %v5629
        %v5938 = vpop.f32.mrb[0].mxu0
        %v5939 = vadd.f32 0.0, %v5938
        %v5940 = vpop.f32.mrb[0].mxu0
        %v5941 = vpop.f32.mrb[0].mxu0
        %v5942 = vadd.f32 0.0, %v5941
        %v5943 = vpop.f32.mrb[0].mxu0
        %5944 = vmatprep.mubr.bf16.mxu0 0
        %5945 = vmatmul.mubr.bf16.gmra.mrb[0].mxu0 %v5632
        %v5946 = vpop.f32.mrb[0].mxu0
        %v5947 = vadd.f32 0.0, %v5946
        %v5948 = vpop.f32.mrb[0].mxu0
        %v5949 = vpop.f32.mrb[0].mxu0
        %v5950 = vadd.f32 0.0, %v5949
        %v5951 = vpop.f32.mrb[0].mxu0
        %5952 = vmatprep.mubr.bf16.mxu0 0
        %5953 = vmatmul.mubr.bf16.gmra.mrb[0].mxu0 %v5635
        %v5954 = vpop.f32.mrb[0].mxu0
        %v5955 = vadd.f32 0.0, %v5954
        %v5956 = vpop.f32.mrb[0].mxu0
        %v5957 = vpop.f32.mrb[0].mxu0
        %v5958 = vadd.f32 0.0, %v5957
        %v5959 = vpop.f32.mrb[0].mxu0
        %5960 = vmatprep.mubr.bf16.mxu0 0
        %5961 = vmatmul.mubr.bf16.gmra.mrb[0].mxu0 %v5638
        %v5962 = vpop.f32.mrb[0].mxu0
        %v5963 = vadd.f32 0.0, %v5962
        %v5964 = vpop.f32.mrb[0].mxu0
        %v5965 = vpop.f32.mrb[0].mxu0
        %v5966 = vadd.f32 0.0, %v5965
        %v5967 = vpop.f32.mrb[0].mxu0
        %5968 = vmatprep.mubr.bf16.mxu0 0
        %5969 = vmatmul.mubr.bf16.gmra.mrb[0].mxu0 %v5641
        %v5970 = vpop.f32.mrb[0].mxu0
        %v5971 = vadd.f32 0.0, %v5970
        %v5972 = vpop.f32.mrb[0].mxu0
        %v5973 = vpop.f32.mrb[0].mxu0
        %v5974 = vadd.f32 0.0, %v5973
        %v5975 = vpop.f32.mrb[0].mxu0
        %5976 = vmatprep.mubr.bf16.mxu0 0
        %5977 = vmatmul.mubr.bf16.gmra.mrb[0].mxu0 %v5644
        %v5978 = vpop.f32.mrb[0].mxu0
        %v5979 = vadd.f32 0.0, %v5978
        %v5980 = vpop.f32.mrb[0].mxu0
        %v5981 = vpop.f32.mrb[0].mxu0
        %v5982 = vadd.f32 0.0, %v5981
        %v5983 = vpop.f32.mrb[0].mxu0
        %5984 = vmatprep.mubr.bf16.mxu0 0
        %5985 = vmatmul.mubr.bf16.gmra.mrb[0].mxu0 %v5647
        %v5986 = vpop.f32.mrb[0].mxu0
        %v5987 = vadd.f32 0.0, %v5986
        %v5988 = vpop.f32.mrb[0].mxu0
        %v5989 = vpop.f32.mrb[0].mxu0
        %v5990 = vadd.f32 0.0, %v5989
        %v5991 = vpop.f32.mrb[0].mxu0
        %5992 = vmatprep.mubr.bf16.mxu0 0
        %5993 = vmatmul.mubr.bf16.gmra.mrb[0].mxu0 %v5650
        %v5994 = vpop.f32.mrb[0].mxu0
        %v5995 = vadd.f32 0.0, %v5994
        %v5996 = vpop.f32.mrb[0].mxu0
        %v5997 = vpop.f32.mrb[0].mxu0
        %v5998 = vadd.f32 0.0, %v5997
        %v5999 = vpop.f32.mrb[0].mxu0
        %6000 = vmatprep.mubr.bf16.mxu0 0
        %6001 = vmatmul.mubr.bf16.gmra.mrb[0].mxu0 %v5653
        %v6002 = vpop.f32.mrb[0].mxu0
        %v6003 = vadd.f32 0.0, %v6002
        %v6004 = vpop.f32.mrb[0].mxu0
        %v6005 = vpop.f32.mrb[0].mxu0
        %v6006 = vadd.f32 0.0, %v6005
        %v6007 = vpop.f32.mrb[0].mxu0
        %6008 = vmatprep.mubr.bf16.mxu0 0
        %6009 = vmatmul.mubr.bf16.gmra.mrb[0].mxu0 %v5656
        %v6010 = vpop.f32.mrb[0].mxu0
        %v6011 = vadd.f32 0.0, %v6010
        %v6012 = vpop.f32.mrb[0].mxu0
        %v6013 = vpop.f32.mrb[0].mxu0
        %v6014 = vadd.f32 0.0, %v6013
        %v6015 = vpop.f32.mrb[0].mxu0
        %6016 = vmatprep.mubr.bf16.mxu0 0
        %6017 = vmatmul.mubr.bf16.gmra.mrb[0].mxu0 %v5659
        %v6018 = vpop.f32.mrb[0].mxu0
        %v6019 = vadd.f32 0.0, %v6018
        %v6020 = vpop.f32.mrb[0].mxu0
        %v6021 = vpop.f32.mrb[0].mxu0
        %v6022 = vadd.f32 0.0, %v6021
        %v6023 = vpop.f32.mrb[0].mxu0
        %6024 = vmatprep.mubr.bf16.mxu0 0
        %6025 = vmatmul.mubr.bf16.gmra.mrb[0].mxu0 %v5662
        %v6026 = vpop.f32.mrb[0].mxu0
        %v6027 = vadd.f32 0.0, %v6026
        %v6028 = vpop.f32.mrb[0].mxu0
        %v6029 = vpop.f32.mrb[0].mxu0
        %v6030 = vadd.f32 0.0, %v6029
        %v6031 = vpop.f32.mrb[0].mxu0
        %6032 = vmatprep.mubr.bf16.mxu0 0
        %6033 = vmatmul.mubr.bf16.gmra.mrb[0].mxu0 %v5665
        %v6034 = vpop.f32.mrb[0].mxu0
        %v6035 = vadd.f32 0.0, %v6034
        %v6036 = vpop.f32.mrb[0].mxu0
        %v6037 = vpop.f32.mrb[0].mxu0
        %v6038 = vadd.f32 0.0, %v6037
        %v6039 = vpop.f32.mrb[0].mxu0
        %6040 = vmatprep.mubr.bf16.mxu0 0
        %6041 = vmatmul.mubr.bf16.gmra.mrb[0].mxu0 %v5668
        %v6042 = vpop.f32.mrb[0].mxu0
        %v6043 = vadd.f32 0.0, %v6042
        %v6044 = vpop.f32.mrb[0].mxu0
        %v6045 = vpop.f32.mrb[0].mxu0
        %v6046 = vadd.f32 0.0, %v6045
        %v6047 = vpop.f32.mrb[0].mxu0
        %6048 = vmatprep.mubr.bf16.mxu0 0
        %6049 = vmatmul.mubr.bf16.gmra.mrb[0].mxu0 %v5671
        %v6050 = vpop.f32.mrb[0].mxu0
        %v6051 = vadd.f32 0.0, %v6050
        %v6052 = vpop.f32.mrb[0].mxu0
        %v6053 = vpop.f32.mrb[0].mxu0
        %v6054 = vadd.f32 0.0, %v6053
        %v6055 = vpop.f32.mrb[0].mxu0
        %6056 = vmatprep.mubr.bf16.mxu0 0
        %6057 = vmatmul.mubr.bf16.gmra.mrb[0].mxu0 %v5674
        %v6058 = vpop.f32.mrb[0].mxu0
        %v6059 = vadd.f32 0.0, %v6058
        %v6060 = vpop.f32.mrb[0].mxu0
        %v6061 = vpop.f32.mrb[0].mxu0
        %v6062 = vadd.f32 0.0, %v6061
        %v6063 = vpop.f32.mrb[0].mxu0
        %6064 = vmatprep.mubr.bf16.mxu0 0
        %6065 = vmatmul.mubr.bf16.gmra.mrb[0].mxu0 %v5677
        %v6066 = vpop.f32.mrb[0].mxu0
        %v6067 = vadd.f32 0.0, %v6066
        %v6068 = vpop.f32.mrb[0].mxu0
        %v6069 = vpop.f32.mrb[0].mxu0
        %v6070 = vadd.f32 0.0, %v6069
        %v6071 = vpop.f32.mrb[0].mxu0
        %6072 = vmatprep.mubr.bf16.mxu0 0
        %6073 = vmatmul.mubr.bf16.gmra.mrb[0].mxu0 %v5680
        %v6074 = vpop.f32.mrb[0].mxu0
        %v6075 = vadd.f32 0.0, %v6074
        %v6076 = vpop.f32.mrb[0].mxu0
        %v6077 = vpop.f32.mrb[0].mxu0
        %v6078 = vadd.f32 0.0, %v6077
        %v6079 = vpop.f32.mrb[0].mxu0
        %6080 = vmatprep.mubr.bf16.mxu0 0
        %6081 = vmatmul.mubr.bf16.gmra.mrb[0].mxu0 %v5683
        %v6082 = vpop.f32.mrb[0].mxu0
        %v6083 = vadd.f32 0.0, %v6082
        %v6084 = vpop.f32.mrb[0].mxu0
        %v6085 = vpop.f32.mrb[0].mxu0
        %v6086 = vadd.f32 0.0, %v6085
        %v6087 = vpop.f32.mrb[0].mxu0
        %6088 = vmatprep.mubr.bf16.mxu0 0
        %6089 = vmatmul.mubr.bf16.gmra.mrb[0].mxu0 %v5686
        %v6090 = vpop.f32.mrb[0].mxu0
        %v6091 = vadd.f32 0.0, %v6090
        %v6092 = vpop.f32.mrb[0].mxu0
        %v6093 = vpop.f32.mrb[0].mxu0
        %v6094 = vadd.f32 0.0, %v6093
        %v6095 = vpop.f32.mrb[0].mxu0
        %6096 = vmatprep.mubr.bf16.mxu0 0
        %6097 = vmatmul.mubr.bf16.gmra.mrb[0].mxu0 %v5689
        %v6098 = vpop.f32.mrb[0].mxu0
        %v6099 = vadd.f32 0.0, %v6098
        %v6100 = vpop.f32.mrb[0].mxu0
        %v6101 = vpop.f32.mrb[0].mxu0
        %v6102 = vadd.f32 0.0, %v6101
        %v6103 = vpop.f32.mrb[0].mxu0
        %6104 = vmatprep.mubr.bf16.mxu0 0
        %6105 = vmatmul.mubr.bf16.gmra.mrb[0].mxu0 %v5692
        %v6106 = vpop.f32.mrb[0].mxu0
        %v6107 = vadd.f32 0.0, %v6106
        %v6108 = vpop.f32.mrb[0].mxu0
        %v6109 = vpop.f32.mrb[0].mxu0
        %v6110 = vadd.f32 0.0, %v6109
        %v6111 = vpop.f32.mrb[0].mxu0
        %6112 = vmatprep.mubr.bf16.mxu0 0
        %6113 = vmatmul.mubr.bf16.gmra.mrb[0].mxu0 %v5695
        %v6114 = vpop.f32.mrb[0].mxu0
        %v6115 = vadd.f32 0.0, %v6114
        %v6116 = vpop.f32.mrb[0].mxu0
        %v6117 = vpop.f32.mrb[0].mxu0
        %v6118 = vadd.f32 0.0, %v6117
        %v6119 = vpop.f32.mrb[0].mxu0
        %6120 = vmatprep.mubr.bf16.mxu0 0
        %6121 = vmatmul.mubr.bf16.gmra.mrb[0].mxu0 %v5698
        %v6122 = vpop.f32.mrb[0].mxu0
        %v6123 = vadd.f32 0.0, %v6122
        %v6124 = vpop.f32.mrb[0].mxu0
        %v6125 = vpop.f32.mrb[0].mxu0
        %v6126 = vadd.f32 0.0, %v6125
        %v6127 = vpop.f32.mrb[0].mxu0
        %6128 = vmatprep.mubr.bf16.mxu0 0
        %6129 = vmatmul.mubr.bf16.gmra.mrb[0].mxu0 %v5701
        %v6130 = vpop.f32.mrb[0].mxu0
        %v6131 = vadd.f32 0.0, %v6130
        %v6132 = vpop.f32.mrb[0].mxu0
        %v6133 = vpop.f32.mrb[0].mxu0
        %v6134 = vadd.f32 0.0, %v6133
        %v6135 = vpop.f32.mrb[0].mxu0
        %6136 = vmatprep.mubr.bf16.mxu0 0
        %6137 = vmatmul.mubr.bf16.gmra.mrb[0].mxu0 %v5704
        %v6138 = vpop.f32.mrb[0].mxu0
        %v6139 = vadd.f32 0.0, %v6138
        %v6140 = vpop.f32.mrb[0].mxu0
        %v6141 = vpop.f32.mrb[0].mxu0
        %v6142 = vadd.f32 0.0, %v6141
        %v6143 = vpop.f32.mrb[0].mxu0
        %6144 = vmatprep.mubr.bf16.mxu0 0
        %6145 = vmatmul.mubr.bf16.gmra.mrb[0].mxu0 %v5707
        %v6146 = vpop.f32.mrb[0].mxu0
        %v6147 = vadd.f32 0.0, %v6146
        %v6148 = vpop.f32.mrb[0].mxu0
        %v6149 = vpop.f32.mrb[0].mxu0
        %v6150 = vadd.f32 0.0, %v6149
        %v6151 = vpop.f32.mrb[0].mxu0
        %6152 = vmatprep.mubr.bf16.mxu0 0
        %6153 = vmatmul.mubr.bf16.gmra.mrb[0].mxu0 %v5710
        %v6154 = vpop.f32.mrb[0].mxu0
        %v6155 = vadd.f32 0.0, %v6154
        %v6156 = vpop.f32.mrb[0].mxu0
        %v6157 = vpop.f32.mrb[0].mxu0
        %v6158 = vadd.f32 0.0, %v6157
        %v6159 = vpop.f32.mrb[0].mxu0
        %6160 = vmatprep.mubr.bf16.mxu0 0
        %6161 = vmatmul.mubr.bf16.gmra.mrb[0].mxu0 %v5713
        %v6162 = vpop.f32.mrb[0].mxu0
        %v6163 = vadd.f32 0.0, %v6162
        %v6164 = vpop.f32.mrb[0].mxu0
        %v6165 = vpop.f32.mrb[0].mxu0
        %v6166 = vadd.f32 0.0, %v6165
        %v6167 = vpop.f32.mrb[0].mxu0
        %6168 = vmatprep.mubr.bf16.mxu0 0
        %6169 = vmatmul.mubr.bf16.gmra.mrb[0].mxu0 %v5716
        %v6170 = vpop.f32.mrb[0].mxu0
        %v6171 = vadd.f32 0.0, %v6170
        %v6172 = vpop.f32.mrb[0].mxu0
        %v6173 = vpop.f32.mrb[0].mxu0
        %v6174 = vadd.f32 0.0, %v6173
        %v6175 = vpop.f32.mrb[0].mxu0
        %6176 = vmatprep.mubr.bf16.mxu0 0
        %6177 = vmatmul.mubr.bf16.gmra.mrb[0].mxu0 %v5719
        %v6178 = vpop.f32.mrb[0].mxu0
        %v6179 = vadd.f32 0.0, %v6178
        %v6180 = vpop.f32.mrb[0].mxu0
        %v6181 = vpop.f32.mrb[0].mxu0
        %v6182 = vadd.f32 0.0, %v6181
        %v6183 = vpop.f32.mrb[0].mxu0
        %6184 = vmatprep.mubr.bf16.mxu0 0
        %6185 = vmatmul.mubr.bf16.gmra.mrb[0].mxu0 %v5722
        %v6186 = vpop.f32.mrb[0].mxu0
        %v6187 = vadd.f32 0.0, %v6186
        %v6188 = vpop.f32.mrb[0].mxu0
        %v6189 = vpop.f32.mrb[0].mxu0
        %v6190 = vadd.f32 0.0, %v6189
        %v6191 = vpop.f32.mrb[0].mxu0
        %6192 = vmatprep.mubr.bf16.mxu0 0
        %6193 = vmatmul.mubr.bf16.gmra.mrb[0].mxu0 %v5725
        %v6194 = vpop.f32.mrb[0].mxu0
        %v6195 = vadd.f32 0.0, %v6194
        %v6196 = vpop.f32.mrb[0].mxu0
        %v6197 = vpop.f32.mrb[0].mxu0
        %v6198 = vadd.f32 0.0, %v6197
        %v6199 = vpop.f32.mrb[0].mxu0
        %6200 = vmatprep.mubr.bf16.mxu0 0
        %6201 = vmatmul.mubr.bf16.gmra.mrb[0].mxu0 %v5728
        %v6202 = vpop.f32.mrb[0].mxu0
        %v6203 = vadd.f32 0.0, %v6202
        %v6204 = vpop.f32.mrb[0].mxu0
        %v6205 = vpop.f32.mrb[0].mxu0
        %v6206 = vadd.f32 0.0, %v6205
        %v6207 = vpop.f32.mrb[0].mxu0
        %6208 = vmatprep.mubr.bf16.mxu0 0
        %6209 = vmatmul.mubr.bf16.gmra.mrb[0].mxu0 %v5731
        %v6210 = vpop.f32.mrb[0].mxu0
        %v6211 = vadd.f32 0.0, %v6210
        %v6212 = vpop.f32.mrb[0].mxu0
        %v6213 = vpop.f32.mrb[0].mxu0
        %v6214 = vadd.f32 0.0, %v6213
        %v6215 = vpop.f32.mrb[0].mxu0
        %6216 = vmatprep.mubr.bf16.mxu0 0
        %6217 = vmatmul.mubr.bf16.gmra.mrb[0].mxu0 %v5734
        %v6218 = vpop.f32.mrb[0].mxu0
        %v6219 = vadd.f32 0.0, %v6218
        %v6220 = vpop.f32.mrb[0].mxu0
        %v6221 = vpop.f32.mrb[0].mxu0
        %v6222 = vadd.f32 0.0, %v6221
        %v6223 = vpop.f32.mrb[0].mxu0
        %6224 = vmatprep.mubr.bf16.mxu0 0
        %6225 = vmatmul.mubr.bf16.gmra.mrb[0].mxu0 %v5737
        %v6226 = vpop.f32.mrb[0].mxu0
        %v6227 = vadd.f32 0.0, %v6226
        %v6228 = vpop.f32.mrb[0].mxu0
        %v6229 = vpop.f32.mrb[0].mxu0
        %v6230 = vadd.f32 0.0, %v6229
        %v6231 = vpop.f32.mrb[0].mxu0
        %6232 = vmatprep.mubr.bf16.mxu0 0
        %6233 = vmatmul.mubr.bf16.gmra.mrb[0].mxu0 %v5740
        %v6234 = vpop.f32.mrb[0].mxu0
        %v6235 = vadd.f32 0.0, %v6234
        %v6236 = vpop.f32.mrb[0].mxu0
        %v6237 = vpop.f32.mrb[0].mxu0
        %v6238 = vadd.f32 0.0, %v6237
        %v6239 = vpop.f32.mrb[0].mxu0
        %6240 = vmatprep.mubr.bf16.mxu0 0
        %6241 = vmatmul.mubr.bf16.gmra.mrb[0].mxu0 %v5743
        %v6242 = vpop.f32.mrb[0].mxu0
        %v6243 = vadd.f32 0.0, %v6242
        %v6244 = vpop.f32.mrb[0].mxu0
        %v6245 = vpop.f32.mrb[0].mxu0
        %v6246 = vadd.f32 0.0, %v6245
        %v6247 = vpop.f32.mrb[0].mxu0
        %6248 = vmatprep.mubr.bf16.mxu0 0
        %6249 = vmatmul.mubr.bf16.gmra.mrb[0].mxu0 %v5746
        %v6250 = vpop.f32.mrb[0].mxu0
        %v6251 = vadd.f32 0.0, %v6250
        %v6252 = vpop.f32.mrb[0].mxu0
        %v6253 = vpop.f32.mrb[0].mxu0
        %v6254 = vadd.f32 0.0, %v6253
        %v6255 = vpop.f32.mrb[0].mxu0
        %6256 = vmatprep.mubr.bf16.mxu0 0
        %6257 = vmatmul.mubr.bf16.gmra.mrb[0].mxu0 %v5749
        %v6258 = vpop.f32.mrb[0].mxu0
        %v6259 = vadd.f32 0.0, %v6258
        %v6260 = vpop.f32.mrb[0].mxu0
        %v6261 = vpop.f32.mrb[0].mxu0
        %v6262 = vadd.f32 0.0, %v6261
        %v6263 = vpop.f32.mrb[0].mxu0
        %6264 = vmatprep.mubr.bf16.mxu0 0
        %6265 = vmatmul.mubr.bf16.gmra.mrb[0].mxu0 %v5752
        %v6266 = vpop.f32.mrb[0].mxu0
        %v6267 = vadd.f32 0.0, %v6266
        %v6268 = vpop.f32.mrb[0].mxu0
        %v6269 = vpop.f32.mrb[0].mxu0
        %v6270 = vadd.f32 0.0, %v6269
        %v6271 = vpop.f32.mrb[0].mxu0
        %6272 = vmatprep.mubr.bf16.mxu0 0
        %6273 = vmatmul.mubr.bf16.gmra.mrb[0].mxu0 %v5755
        %v6274 = vpop.f32.mrb[0].mxu0
        %v6275 = vadd.f32 0.0, %v6274
        %v6276 = vpop.f32.mrb[0].mxu0
        %v6277 = vpop.f32.mrb[0].mxu0
        %v6278 = vadd.f32 0.0, %v6277
        %v6279 = vpop.f32.mrb[0].mxu0
        %6280 = vmatprep.mubr.bf16.mxu0 0
        %6281 = vmatmul.mubr.bf16.gmra.mrb[0].mxu0 %v5758
        %v6282 = vpop.f32.mrb[0].mxu0
        %v6283 = vadd.f32 0.0, %v6282
        %v6284 = vpop.f32.mrb[0].mxu0
        %v6285 = vpop.f32.mrb[0].mxu0
        %v6286 = vadd.f32 0.0, %v6285
        %v6287 = vpop.f32.mrb[0].mxu0
        %6288 = vmatprep.mubr.bf16.mxu0 0
        %6289 = vmatmul.mubr.bf16.gmra.mrb[0].mxu0 %v5761
        %v6290 = vpop.f32.mrb[0].mxu0
        %v6291 = vadd.f32 0.0, %v6290
        %v6292 = vpop.f32.mrb[0].mxu0
        %v6293 = vpop.f32.mrb[0].mxu0
        %v6294 = vadd.f32 0.0, %v6293
        %v6295 = vpop.f32.mrb[0].mxu0
        %6296 = vmatprep.mubr.bf16.mxu0 0
        %6297 = vmatmul.mubr.bf16.gmra.mrb[0].mxu0 %v5764
        %v6298 = vpop.f32.mrb[0].mxu0
        %v6299 = vadd.f32 0.0, %v6298
        %v6300 = vpop.f32.mrb[0].mxu0
        %v6301 = vpop.f32.mrb[0].mxu0
        %v6302 = vadd.f32 0.0, %v6301
        %v6303 = vpop.f32.mrb[0].mxu0
        %6304 = vmatprep.mubr.bf16.mxu0 0
        %6305 = vmatmul.mubr.bf16.gmra.mrb[0].mxu0 %v5767
        %v6306 = vpop.f32.mrb[0].mxu0
        %v6307 = vadd.f32 0.0, %v6306
        %v6308 = vpop.f32.mrb[0].mxu0
        %v6309 = vpop.f32.mrb[0].mxu0
        %v6310 = vadd.f32 0.0, %v6309
        %v6311 = vpop.f32.mrb[0].mxu0
        %6312 = vmatprep.mubr.bf16.mxu0 0
        %6313 = vmatmul.mubr.bf16.gmra.mrb[0].mxu0 %v5770
        %v6314 = vpop.f32.mrb[0].mxu0
        %v6315 = vadd.f32 0.0, %v6314
        %v6316 = vpop.f32.mrb[0].mxu0
        %v6317 = vpop.f32.mrb[0].mxu0
        %v6318 = vadd.f32 0.0, %v6317
        %v6319 = vpop.f32.mrb[0].mxu0
        %6320 = vmatprep.mubr.bf16.mxu0 0
        %6321 = vmatmul.mubr.bf16.gmra.mrb[0].mxu0 %v5773
        %v6322 = vpop.f32.mrb[0].mxu0
        %v6323 = vadd.f32 0.0, %v6322
        %v6324 = vpop.f32.mrb[0].mxu0
        %v6325 = vpop.f32.mrb[0].mxu0
        %v6326 = vadd.f32 0.0, %v6325
        %v6327 = vpop.f32.mrb[0].mxu0
        %6328 = vmatprep.mubr.bf16.mxu0 0
        %6329 = vmatmul.mubr.bf16.gmra.mrb[0].mxu0 %v5776
        %v6330 = vpop.f32.mrb[0].mxu0
        %v6331 = vadd.f32 0.0, %v6330
        %v6332 = vpop.f32.mrb[0].mxu0
        %v6333 = vpop.f32.mrb[0].mxu0
        %v6334 = vadd.f32 0.0, %v6333
        %v6335 = vpop.f32.mrb[0].mxu0
        %6336 = vmatprep.mubr.bf16.mxu0 0
        %6337 = vmatmul.mubr.bf16.gmra.mrb[0].mxu0 %v5779
        %v6338 = vpop.f32.mrb[0].mxu0
        %v6339 = vadd.f32 0.0, %v6338
        %v6340 = vpop.f32.mrb[0].mxu0
        %v6341 = vpop.f32.mrb[0].mxu0
        %v6342 = vadd.f32 0.0, %v6341
        %v6343 = vpop.f32.mrb[0].mxu0
        %6344 = vdwg.mxu0
        %v6345 = vadd.f32 %v5251, %v5819
        %v6346 = vadd.f32 %v5252, %v5822
        %v6347 = vadd.f32 %v5253, %v5827
        %v6348 = vadd.f32 %v5254, %v5830
        %v6349 = vadd.f32 %v5255, %v5835
        %v6350 = vadd.f32 %v5256, %v5838
        %v6351 = vadd.f32 %v5257, %v5843
        %v6352 = vadd.f32 %v5258, %v5846
        %v6353 = vadd.f32 %v5259, %v5851
        %v6354 = vadd.f32 %v5260, %v5854
        %v6355 = vadd.f32 %v5261, %v5859
        %v6356 = vadd.f32 %v5262, %v5862
        %v6357 = vadd.f32 %v5263, %v5867
        %v6358 = vadd.f32 %v5264, %v5870
        %v6359 = vadd.f32 %v5265, %v5875
        %v6360 = vadd.f32 %v5266, %v5878
        %v6361 = vadd.f32 %v5267, %v5883
        %v6362 = vadd.f32 %v5268, %v5886
        %v6363 = vadd.f32 %v5269, %v5891
        %v6364 = vadd.f32 %v5270, %v5894
        %v6365 = vadd.f32 %v5271, %v5899
        %v6366 = vadd.f32 %v5272, %v5902
        %v6367 = vadd.f32 %v5273, %v5907
        %v6368 = vadd.f32 %v5274, %v5910
        %v6369 = vadd.f32 %v5275, %v5915
        %v6370 = vadd.f32 %v5276, %v5918
        %v6371 = vadd.f32 %v5277, %v5923
        %v6372 = vadd.f32 %v5278, %v5926
        %v6373 = vadd.f32 %v5279, %v5931
        %v6374 = vadd.f32 %v5280, %v5934
        %v6375 = vadd.f32 %v5281, %v5939
        %v6376 = vadd.f32 %v5282, %v5942
        %v6377 = vadd.f32 %v5283, %v5947
        %v6378 = vadd.f32 %v5284, %v5950
        %v6379 = vadd.f32 %v5285, %v5955
        %v6380 = vadd.f32 %v5286, %v5958
        %v6381 = vadd.f32 %v5287, %v5963
        %v6382 = vadd.f32 %v5288, %v5966
        %v6383 = vadd.f32 %v5289, %v5971
        %v6384 = vadd.f32 %v5290, %v5974
        %v6385 = vadd.f32 %v5291, %v5979
        %v6386 = vadd.f32 %v5292, %v5982
        %v6387 = vadd.f32 %v5293, %v5987
        %v6388 = vadd.f32 %v5294, %v5990
        %v6389 = vadd.f32 %v5295, %v5995
        %v6390 = vadd.f32 %v5296, %v5998
        %v6391 = vadd.f32 %v5297, %v6003
        %v6392 = vadd.f32 %v5298, %v6006
        %v6393 = vadd.f32 %v5299, %v6011
        %v6394 = vadd.f32 %v5300, %v6014
        %v6395 = vadd.f32 %v5301, %v6019
        %v6396 = vadd.f32 %v5302, %v6022
        %v6397 = vadd.f32 %v5303, %v6027
        %v6398 = vadd.f32 %v5304, %v6030
        %v6399 = vadd.f32 %v5305, %v6035
        %v6400 = vadd.f32 %v5306, %v6038
        %v6401 = vadd.f32 %v5307, %v6043
        %v6402 = vadd.f32 %v5308, %v6046
        %v6403 = vadd.f32 %v5309, %v6051
        %v6404 = vadd.f32 %v5310, %v6054
        %v6405 = vadd.f32 %v5311, %v6059
        %v6406 = vadd.f32 %v5312, %v6062
        %v6407 = vadd.f32 %v5313, %v6067
        %v6408 = vadd.f32 %v5314, %v6070
        %v6409 = vadd.f32 %v5315, %v6075
        %v6410 = vadd.f32 %v5316, %v6078
        %v6411 = vadd.f32 %v5317, %v6083
        %v6412 = vadd.f32 %v5318, %v6086
        %v6413 = vadd.f32 %v5319, %v6091
        %v6414 = vadd.f32 %v5320, %v6094
        %v6415 = vadd.f32 %v5321, %v6099
        %v6416 = vadd.f32 %v5322, %v6102
        %v6417 = vadd.f32 %v5323, %v6107
        %v6418 = vadd.f32 %v5324, %v6110
        %v6419 = vadd.f32 %v5325, %v6115
        %v6420 = vadd.f32 %v5326, %v6118
        %v6421 = vadd.f32 %v5327, %v6123
        %v6422 = vadd.f32 %v5328, %v6126
        %v6423 = vadd.f32 %v5329, %v6131
        %v6424 = vadd.f32 %v5330, %v6134
        %v6425 = vadd.f32 %v5331, %v6139
        %v6426 = vadd.f32 %v5332, %v6142
        %v6427 = vadd.f32 %v5333, %v6147
        %v6428 = vadd.f32 %v5334, %v6150
        %v6429 = vadd.f32 %v5335, %v6155
        %v6430 = vadd.f32 %v5336, %v6158
        %v6431 = vadd.f32 %v5337, %v6163
        %v6432 = vadd.f32 %v5338, %v6166
        %v6433 = vadd.f32 %v5339, %v6171
        %v6434 = vadd.f32 %v5340, %v6174
        %v6435 = vadd.f32 %v5341, %v6179
        %v6436 = vadd.f32 %v5342, %v6182
        %v6437 = vadd.f32 %v5343, %v6187
        %v6438 = vadd.f32 %v5344, %v6190
        %v6439 = vadd.f32 %v5345, %v6195
        %v6440 = vadd.f32 %v5346, %v6198
        %v6441 = vadd.f32 %v5347, %v6203
        %v6442 = vadd.f32 %v5348, %v6206
        %v6443 = vadd.f32 %v5349, %v6211
        %v6444 = vadd.f32 %v5350, %v6214
        %v6445 = vadd.f32 %v5351, %v6219
        %v6446 = vadd.f32 %v5352, %v6222
        %v6447 = vadd.f32 %v5353, %v6227
        %v6448 = vadd.f32 %v5354, %v6230
        %v6449 = vadd.f32 %v5355, %v6235
        %v6450 = vadd.f32 %v5356, %v6238
        %v6451 = vadd.f32 %v5357, %v6243
        %v6452 = vadd.f32 %v5358, %v6246
        %v6453 = vadd.f32 %v5359, %v6251
        %v6454 = vadd.f32 %v5360, %v6254
        %v6455 = vadd.f32 %v5361, %v6259
        %v6456 = vadd.f32 %v5362, %v6262
        %v6457 = vadd.f32 %v5363, %v6267
        %v6458 = vadd.f32 %v5364, %v6270
        %v6459 = vadd.f32 %v5365, %v6275
        %v6460 = vadd.f32 %v5366, %v6278
        %v6461 = vadd.f32 %v5367, %v6283
        %v6462 = vadd.f32 %v5368, %v6286
        %v6463 = vadd.f32 %v5369, %v6291
        %v6464 = vadd.f32 %v5370, %v6294
        %v6465 = vadd.f32 %v5371, %v6299
        %v6466 = vadd.f32 %v5372, %v6302
        %v6467 = vadd.f32 %v5373, %v6307
        %v6468 = vadd.f32 %v5374, %v6310
        %v6469 = vadd.f32 %v5375, %v6315
        %v6470 = vadd.f32 %v5376, %v6318
        %v6471 = vadd.f32 %v5377, %v6323
        %v6472 = vadd.f32 %v5378, %v6326
        %v6473 = vadd.f32 %v5379, %v6331
        %v6474 = vadd.f32 %v5380, %v6334
        %v6475 = vadd.f32 %v5381, %v6339
        %v6476 = vadd.f32 %v5382, %v6342
        %v6477 = vld [vmem:[%s168 + $0x21] sm:$0xff]
        %v6478 = vld [vmem:[%s168 + $0x29] sm:$0xff]
        %v6479 = vld [vmem:[%s168 + $0x31] sm:$0xff]
        %v6480 = vld [vmem:[%s168 + $0x39] sm:$0xff]
        %v6481 = vld [vmem:[%s168 + $0x41] sm:$0xff]
        %v6482 = vld [vmem:[%s168 + $0x49] sm:$0xff]
        %v6483 = vld [vmem:[%s168 + $0x51] sm:$0xff]
        %v6484 = vld [vmem:[%s168 + $0x59] sm:$0xff]
        %v6485 = vld [vmem:[%s168 + $0x61] sm:$0xff]
        %v6486 = vld [vmem:[%s168 + $0x69] sm:$0xff]
        %v6487 = vld [vmem:[%s168 + $0x71] sm:$0xff]
        %v6488 = vld [vmem:[%s168 + $0x79] sm:$0xff]
        %v6489 = vld [vmem:[%s168 + $0x81] sm:$0xff]
        %v6490 = vld [vmem:[%s168 + $0x89] sm:$0xff]
        %v6491 = vld [vmem:[%s168 + $0x91] sm:$0xff]
        %v6492 = vld [vmem:[%s168 + $0x99] sm:$0xff]
        %v6493 = vld [vmem:[%s168 + $0xa1] sm:$0xff]
        %v6494 = vld [vmem:[%s168 + $0xa9] sm:$0xff]
        %v6495 = vld [vmem:[%s168 + $0xb1] sm:$0xff]
        %v6496 = vld [vmem:[%s168 + $0xb9] sm:$0xff]
        %v6497 = vld [vmem:[%s168 + $0xc1] sm:$0xff]
        %v6498 = vld [vmem:[%s168 + $0xc9] sm:$0xff]
        %v6499 = vld [vmem:[%s168 + $0xd1] sm:$0xff]
        %v6500 = vld [vmem:[%s168 + $0xd9] sm:$0xff]
        %v6501 = vld [vmem:[%s168 + $0xe1] sm:$0xff]
        %v6502 = vld [vmem:[%s168 + $0xe9] sm:$0xff]
        %v6503 = vld [vmem:[%s168 + $0xf1] sm:$0xff]
        %v6504 = vld [vmem:[%s168 + $0xf9] sm:$0xff]
        %v6505 = vld [vmem:[%s168 + $0x101] sm:$0xff]
        %v6506 = vld [vmem:[%s168 + $0x109] sm:$0xff]
        %v6507 = vld [vmem:[%s168 + $0x111] sm:$0xff]
        %v6508 = vld [vmem:[%s168 + $0x119] sm:$0xff]
        %v6509 = vld [vmem:[%s168 + $0x121] sm:$0xff]
        %v6510 = vld [vmem:[%s168 + $0x129] sm:$0xff]
        %v6511 = vld [vmem:[%s168 + $0x131] sm:$0xff]
        %v6512 = vld [vmem:[%s168 + $0x139] sm:$0xff]
        %v6513 = vld [vmem:[%s168 + $0x141] sm:$0xff]
        %v6514 = vld [vmem:[%s168 + $0x149] sm:$0xff]
        %v6515 = vld [vmem:[%s168 + $0x151] sm:$0xff]
        %v6516 = vld [vmem:[%s168 + $0x159] sm:$0xff]
        %v6517 = vld [vmem:[%s168 + $0x161] sm:$0xff]
        %v6518 = vld [vmem:[%s168 + $0x169] sm:$0xff]
        %v6519 = vld [vmem:[%s168 + $0x171] sm:$0xff]
        %v6520 = vld [vmem:[%s168 + $0x179] sm:$0xff]
        %v6521 = vld [vmem:[%s168 + $0x181] sm:$0xff]
        %v6522 = vld [vmem:[%s168 + $0x189] sm:$0xff]
        %v6523 = vld [vmem:[%s168 + $0x191] sm:$0xff]
        %v6524 = vld [vmem:[%s168 + $0x199] sm:$0xff]
        %v6525 = vld [vmem:[%s168 + $0x1a1] sm:$0xff]
        %v6526 = vld [vmem:[%s168 + $0x1a9] sm:$0xff]
        %v6527 = vld [vmem:[%s168 + $0x1b1] sm:$0xff]
        %v6528 = vld [vmem:[%s168 + $0x1b9] sm:$0xff]
        %v6529 = vld [vmem:[%s168 + $0x1c1] sm:$0xff]
        %v6530 = vld [vmem:[%s168 + $0x1c9] sm:$0xff]
        %v6531 = vld [vmem:[%s168 + $0x1d1] sm:$0xff]
        %v6532 = vld [vmem:[%s168 + $0x1d9] sm:$0xff]
        %v6533 = vld [vmem:[%s168 + $0x1e1] sm:$0xff]
        %v6534 = vld [vmem:[%s168 + $0x1e9] sm:$0xff]
        %v6535 = vld [vmem:[%s168 + $0x1f1] sm:$0xff]
        %v6536 = vld [vmem:[%s168 + $0x1f9] sm:$0xff]
        %v6537 = vld [vmem:[%s168 + $0x201] sm:$0xff]
        %v6538 = vld [vmem:[%s168 + $0x209] sm:$0xff]
        %v6539 = vld [vmem:[%s168 + $0x211] sm:$0xff]
        %v6540 = vld [vmem:[%s168 + $0x219] sm:$0xff]
        %v6541 = vld [vmem:[%s168 + $0x221] sm:$0xff]
        %v6542 = vld [vmem:[%s168 + $0x229] sm:$0xff]
        %v6543 = vld [vmem:[%s168 + $0x231] sm:$0xff]
        %v6544 = vld [vmem:[%s168 + $0x239] sm:$0xff]
        %v6545 = vld [vmem:[%s168 + $0x241] sm:$0xff]
        %v6546 = vld [vmem:[%s168 + $0x249] sm:$0xff]
        %v6547 = vld [vmem:[%s168 + $0x251] sm:$0xff]
        %v6548 = vld [vmem:[%s168 + $0x259] sm:$0xff]
        %v6549 = vld [vmem:[%s168 + $0x261] sm:$0xff]
        %v6550 = vld [vmem:[%s168 + $0x269] sm:$0xff]
        %v6551 = vld [vmem:[%s168 + $0x271] sm:$0xff]
        %v6552 = vld [vmem:[%s168 + $0x279] sm:$0xff]
        %v6553 = vld [vmem:[%s168 + $0x281] sm:$0xff]
        %v6554 = vld [vmem:[%s168 + $0x289] sm:$0xff]
        %v6555 = vld [vmem:[%s168 + $0x291] sm:$0xff]
        %v6556 = vld [vmem:[%s168 + $0x299] sm:$0xff]
        %v6557 = vld [vmem:[%s168 + $0x2a1] sm:$0xff]
        %v6558 = vld [vmem:[%s168 + $0x2a9] sm:$0xff]
        %v6559 = vld [vmem:[%s168 + $0x2b1] sm:$0xff]
        %v6560 = vld [vmem:[%s168 + $0x2b9] sm:$0xff]
        %v6561 = vld [vmem:[%s168 + $0x2c1] sm:$0xff]
        %v6562 = vld [vmem:[%s168 + $0x2c9] sm:$0xff]
        %v6563 = vld [vmem:[%s168 + $0x2d1] sm:$0xff]
        %v6564 = vld [vmem:[%s168 + $0x2d9] sm:$0xff]
        %v6565 = vld [vmem:[%s168 + $0x2e1] sm:$0xff]
        %v6566 = vld [vmem:[%s168 + $0x2e9] sm:$0xff]
        %v6567 = vld [vmem:[%s168 + $0x2f1] sm:$0xff]
        %v6568 = vld [vmem:[%s168 + $0x2f9] sm:$0xff]
        %v6569 = vld [vmem:[%s168 + $0x301] sm:$0xff]
        %v6570 = vld [vmem:[%s168 + $0x309] sm:$0xff]
        %v6571 = vld [vmem:[%s168 + $0x311] sm:$0xff]
        %v6572 = vld [vmem:[%s168 + $0x319] sm:$0xff]
        %v6573 = vld [vmem:[%s168 + $0x321] sm:$0xff]
        %v6574 = vld [vmem:[%s168 + $0x329] sm:$0xff]
        %v6575 = vld [vmem:[%s168 + $0x331] sm:$0xff]
        %v6576 = vld [vmem:[%s168 + $0x339] sm:$0xff]
        %v6577 = vld [vmem:[%s168 + $0x341] sm:$0xff]
        %v6578 = vld [vmem:[%s168 + $0x349] sm:$0xff]
        %v6579 = vld [vmem:[%s168 + $0x351] sm:$0xff]
        %v6580 = vld [vmem:[%s168 + $0x359] sm:$0xff]
        %v6581 = vld [vmem:[%s168 + $0x361] sm:$0xff]
        %v6582 = vld [vmem:[%s168 + $0x369] sm:$0xff]
        %v6583 = vld [vmem:[%s168 + $0x371] sm:$0xff]
        %v6584 = vld [vmem:[%s168 + $0x379] sm:$0xff]
        %v6585 = vld [vmem:[%s168 + $0x381] sm:$0xff]
        %v6586 = vld [vmem:[%s168 + $0x389] sm:$0xff]
        %v6587 = vld [vmem:[%s168 + $0x391] sm:$0xff]
        %v6588 = vld [vmem:[%s168 + $0x399] sm:$0xff]
        %v6589 = vld [vmem:[%s168 + $0x3a1] sm:$0xff]
        %v6590 = vld [vmem:[%s168 + $0x3a9] sm:$0xff]
        %v6591 = vld [vmem:[%s168 + $0x3b1] sm:$0xff]
        %v6592 = vld [vmem:[%s168 + $0x3b9] sm:$0xff]
        %v6593 = vld [vmem:[%s168 + $0x3c1] sm:$0xff]
        %v6594 = vld [vmem:[%s168 + $0x3c9] sm:$0xff]
        %v6595 = vld [vmem:[%s168 + $0x3d1] sm:$0xff]
        %v6596 = vld [vmem:[%s168 + $0x3d9] sm:$0xff]
        %v6597 = vld [vmem:[%s168 + $0x3e1] sm:$0xff]
        %v6598 = vld [vmem:[%s168 + $0x3e9] sm:$0xff]
        %v6599 = vld [vmem:[%s168 + $0x3f1] sm:$0xff]
        %v6600 = vld [vmem:[%s168 + $0x3f9] sm:$0xff]
        %v6601 = vld [vmem:[%s168 + $0x401] sm:$0xff]
        %v6602 = vld [vmem:[%s168 + $0x409] sm:$0xff]
        %v6603 = vld [vmem:[%s168 + $0x411] sm:$0xff]
        %v6604 = vld [vmem:[%s168 + $0x419] sm:$0xff]
        %v6605 = vld [vmem:[%s168 + $0x421] sm:$0xff]
        %v6606 = vld [vmem:[%s168 + $0x429] sm:$0xff]
        %v6607 = vld [vmem:[%s168 + $0x431] sm:$0xff]
        %v6608 = vld [vmem:[%s168 + $0x439] sm:$0xff]
        %v6609 = vpack.c.bf16 %v6478, %v6477
        %v6610 = vpack.c.bf16 %v6480, %v6479
        %v6611 = vpack.c.bf16 %v6482, %v6481
        %v6612 = vpack.c.bf16 %v6484, %v6483
        %v6613 = vpack.c.bf16 %v6486, %v6485
        %v6614 = vpack.c.bf16 %v6488, %v6487
        %v6615 = vpack.c.bf16 %v6490, %v6489
        %v6616 = vpack.c.bf16 %v6492, %v6491
        %v6617 = vpack.c.bf16 %v6494, %v6493
        %v6618 = vpack.c.bf16 %v6496, %v6495
        %v6619 = vpack.c.bf16 %v6498, %v6497
        %v6620 = vpack.c.bf16 %v6500, %v6499
        %v6621 = vpack.c.bf16 %v6502, %v6501
        %v6622 = vpack.c.bf16 %v6504, %v6503
        %v6623 = vpack.c.bf16 %v6506, %v6505
        %v6624 = vpack.c.bf16 %v6508, %v6507
        %v6625 = vpack.c.bf16 %v6510, %v6509
        %v6626 = vpack.c.bf16 %v6512, %v6511
        %v6627 = vpack.c.bf16 %v6514, %v6513
        %v6628 = vpack.c.bf16 %v6516, %v6515
        %v6629 = vpack.c.bf16 %v6518, %v6517
        %v6630 = vpack.c.bf16 %v6520, %v6519
        %v6631 = vpack.c.bf16 %v6522, %v6521
        %v6632 = vpack.c.bf16 %v6524, %v6523
        %v6633 = vpack.c.bf16 %v6526, %v6525
        %v6634 = vpack.c.bf16 %v6528, %v6527
        %v6635 = vpack.c.bf16 %v6530, %v6529
        %v6636 = vpack.c.bf16 %v6532, %v6531
        %v6637 = vpack.c.bf16 %v6534, %v6533
        %v6638 = vpack.c.bf16 %v6536, %v6535
        %v6639 = vpack.c.bf16 %v6538, %v6537
        %v6640 = vpack.c.bf16 %v6540, %v6539
        %v6641 = vpack.c.bf16 %v6542, %v6541
        %v6642 = vpack.c.bf16 %v6544, %v6543
        %v6643 = vpack.c.bf16 %v6546, %v6545
        %v6644 = vpack.c.bf16 %v6548, %v6547
        %v6645 = vpack.c.bf16 %v6550, %v6549
        %v6646 = vpack.c.bf16 %v6552, %v6551
        %v6647 = vpack.c.bf16 %v6554, %v6553
        %v6648 = vpack.c.bf16 %v6556, %v6555
        %v6649 = vpack.c.bf16 %v6558, %v6557
        %v6650 = vpack.c.bf16 %v6560, %v6559
        %v6651 = vpack.c.bf16 %v6562, %v6561
        %v6652 = vpack.c.bf16 %v6564, %v6563
        %v6653 = vpack.c.bf16 %v6566, %v6565
        %v6654 = vpack.c.bf16 %v6568, %v6567
        %v6655 = vpack.c.bf16 %v6570, %v6569
        %v6656 = vpack.c.bf16 %v6572, %v6571
        %v6657 = vpack.c.bf16 %v6574, %v6573
        %v6658 = vpack.c.bf16 %v6576, %v6575
        %v6659 = vpack.c.bf16 %v6578, %v6577
        %v6660 = vpack.c.bf16 %v6580, %v6579
        %v6661 = vpack.c.bf16 %v6582, %v6581
        %v6662 = vpack.c.bf16 %v6584, %v6583
        %v6663 = vpack.c.bf16 %v6586, %v6585
        %v6664 = vpack.c.bf16 %v6588, %v6587
        %v6665 = vpack.c.bf16 %v6590, %v6589
        %v6666 = vpack.c.bf16 %v6592, %v6591
        %v6667 = vpack.c.bf16 %v6594, %v6593
        %v6668 = vpack.c.bf16 %v6596, %v6595
        %v6669 = vpack.c.bf16 %v6598, %v6597
        %v6670 = vpack.c.bf16 %v6600, %v6599
        %v6671 = vpack.c.bf16 %v6602, %v6601
        %v6672 = vpack.c.bf16 %v6604, %v6603
        %v6673 = vpack.c.bf16 %v6606, %v6605
        %v6674 = vpack.c.bf16 %v6608, %v6607
        %s6675 = scalar_lea.vmem %s1, 12
        %v6676 = vld [vmem:[%s6675] sm:$0x3]
        %v6678 = vsel %vm570, %v6609, 0
        %v6681 = vsel %vm570, %v6610, 0
        %v6684 = vsel %vm570, %v6611, 0
        %v6687 = vsel %vm570, %v6612, 0
        %v6690 = vsel %vm570, %v6613, 0
        %v6693 = vsel %vm570, %v6614, 0
        %v6696 = vsel %vm570, %v6615, 0
        %v6699 = vsel %vm570, %v6616, 0
        %v6702 = vsel %vm570, %v6617, 0
        %v6705 = vsel %vm570, %v6618, 0
        %v6708 = vsel %vm570, %v6619, 0
        %v6711 = vsel %vm570, %v6620, 0
        %v6714 = vsel %vm570, %v6621, 0
        %v6717 = vsel %vm570, %v6622, 0
        %v6720 = vsel %vm570, %v6623, 0
        %v6723 = vsel %vm570, %v6624, 0
        %v6726 = vsel %vm570, %v6625, 0
        %v6729 = vsel %vm570, %v6626, 0
        %v6732 = vsel %vm570, %v6627, 0
        %v6735 = vsel %vm570, %v6628, 0
        %v6738 = vsel %vm570, %v6629, 0
        %v6741 = vsel %vm570, %v6630, 0
        %v6744 = vsel %vm570, %v6631, 0
        %v6747 = vsel %vm570, %v6632, 0
        %v6750 = vsel %vm570, %v6633, 0
        %v6753 = vsel %vm570, %v6634, 0
        %v6756 = vsel %vm570, %v6635, 0
        %v6759 = vsel %vm570, %v6636, 0
        %v6762 = vsel %vm570, %v6637, 0
        %v6765 = vsel %vm570, %v6638, 0
        %v6768 = vsel %vm570, %v6639, 0
        %v6771 = vsel %vm570, %v6640, 0
        %v6774 = vsel %vm570, %v6641, 0
        %v6777 = vsel %vm570, %v6642, 0
        %v6780 = vsel %vm570, %v6643, 0
        %v6783 = vsel %vm570, %v6644, 0
        %v6786 = vsel %vm570, %v6645, 0
        %v6789 = vsel %vm570, %v6646, 0
        %v6792 = vsel %vm570, %v6647, 0
        %v6795 = vsel %vm570, %v6648, 0
        %v6798 = vsel %vm570, %v6649, 0
        %v6801 = vsel %vm570, %v6650, 0
        %v6804 = vsel %vm570, %v6651, 0
        %v6807 = vsel %vm570, %v6652, 0
        %v6810 = vsel %vm570, %v6653, 0
        %v6813 = vsel %vm570, %v6654, 0
        %v6816 = vsel %vm570, %v6655, 0
        %v6819 = vsel %vm570, %v6656, 0
        %v6822 = vsel %vm570, %v6657, 0
        %v6825 = vsel %vm570, %v6658, 0
        %v6828 = vsel %vm570, %v6659, 0
        %v6831 = vsel %vm570, %v6660, 0
        %v6834 = vsel %vm570, %v6661, 0
        %v6837 = vsel %vm570, %v6662, 0
        %v6840 = vsel %vm570, %v6663, 0
        %v6843 = vsel %vm570, %v6664, 0
        %v6846 = vsel %vm570, %v6665, 0
        %v6849 = vsel %vm570, %v6666, 0
        %v6852 = vsel %vm570, %v6667, 0
        %v6855 = vsel %vm570, %v6668, 0
        %v6858 = vsel %vm570, %v6669, 0
        %v6861 = vsel %vm570, %v6670, 0
        %v6864 = vsel %vm570, %v6671, 0
        %v6867 = vsel %vm570, %v6672, 0
        %v6870 = vsel %vm570, %v6673, 0
        %v6873 = vsel %vm570, %v6674, 0
        %v6876 = vand.u32 %v6676, %v772
        %6878 = vmatprep.subr.bf16.mxu0 0
        %6879 = vmatpush1.bf16.msra.mxu0 %v6876
        %6880 = vmatprep.subr.bf16.mxu0 0
        %6881 = vmatpush1.bf16.msra.mxu0 0
        %6882 = vmatprep.subr.bf16.mxu0 0
        %6883 = vmatpush1.bf16.msra.mxu0 0
        %6884 = vmatprep.subr.bf16.mxu0 0
        %6885 = vmatpush1.bf16.msra.mxu0 0
        %6886 = vmatprep.subr.bf16.mxu0 0
        %6887 = vmatpush1.bf16.msra.mxu0 0
        %6888 = vmatprep.subr.bf16.mxu0 0
        %6889 = vmatpush1.bf16.msra.mxu0 0
        %6890 = vmatprep.subr.bf16.mxu0 0
        %6891 = vmatpush1.bf16.msra.mxu0 0
        %6892 = vmatprep.subr.bf16.mxu0 0
        %6893 = vmatpush1.bf16.msra.mxu0 0
        %6894 = vmatprep.subr.bf16.mxu0 0
        %6895 = vmatpush1.bf16.msra.mxu0 0
        %6896 = vmatprep.subr.bf16.mxu0 0
        %6897 = vmatpush1.bf16.msra.mxu0 0
        %6898 = vmatprep.subr.bf16.mxu0 0
        %6899 = vmatpush1.bf16.msra.mxu0 0
        %6900 = vmatprep.subr.bf16.mxu0 0
        %6901 = vmatpush1.bf16.msra.mxu0 0
        %6902 = vmatprep.subr.bf16.mxu0 0
        %6903 = vmatpush1.bf16.msra.mxu0 0
        %6904 = vmatprep.subr.bf16.mxu0 0
        %6905 = vmatpush1.bf16.msra.mxu0 0
        %6906 = vmatprep.subr.bf16.mxu0 0
        %6907 = vmatpush1.bf16.msra.mxu0 0
        %6908 = vmatprep.subr.bf16.mxu0 0
        %6909 = vmatpush1.bf16.msra.mxu0 0
        %6910 = vmatprep.mubr.bf16.mxu0 0
        %6911 = vmatmul.mubr.bf16.gmra.mrb[0].mxu0 %v6678
        %v6912 = vpop.f32.mrb[0].mxu0
        %v6913 = vadd.f32 0.0, %v6912
        %v6914 = vpop.f32.mrb[0].mxu0
        %v6915 = vpop.f32.mrb[0].mxu0
        %v6916 = vadd.f32 0.0, %v6915
        %v6917 = vpop.f32.mrb[0].mxu0
        %6918 = vmatprep.mubr.bf16.mxu0 0
        %6919 = vmatmul.mubr.bf16.gmra.mrb[0].mxu0 %v6681
        %v6920 = vpop.f32.mrb[0].mxu0
        %v6921 = vadd.f32 0.0, %v6920
        %v6922 = vpop.f32.mrb[0].mxu0
        %v6923 = vpop.f32.mrb[0].mxu0
        %v6924 = vadd.f32 0.0, %v6923
        %v6925 = vpop.f32.mrb[0].mxu0
        %6926 = vmatprep.mubr.bf16.mxu0 0
        %6927 = vmatmul.mubr.bf16.gmra.mrb[0].mxu0 %v6684
        %v6928 = vpop.f32.mrb[0].mxu0
        %v6929 = vadd.f32 0.0, %v6928
        %v6930 = vpop.f32.mrb[0].mxu0
        %v6931 = vpop.f32.mrb[0].mxu0
        %v6932 = vadd.f32 0.0, %v6931
        %v6933 = vpop.f32.mrb[0].mxu0
        %6934 = vmatprep.mubr.bf16.mxu0 0
        %6935 = vmatmul.mubr.bf16.gmra.mrb[0].mxu0 %v6687
        %v6936 = vpop.f32.mrb[0].mxu0
        %v6937 = vadd.f32 0.0, %v6936
        %v6938 = vpop.f32.mrb[0].mxu0
        %v6939 = vpop.f32.mrb[0].mxu0
        %v6940 = vadd.f32 0.0, %v6939
        %v6941 = vpop.f32.mrb[0].mxu0
        %6942 = vmatprep.mubr.bf16.mxu0 0
        %6943 = vmatmul.mubr.bf16.gmra.mrb[0].mxu0 %v6690
        %v6944 = vpop.f32.mrb[0].mxu0
        %v6945 = vadd.f32 0.0, %v6944
        %v6946 = vpop.f32.mrb[0].mxu0
        %v6947 = vpop.f32.mrb[0].mxu0
        %v6948 = vadd.f32 0.0, %v6947
        %v6949 = vpop.f32.mrb[0].mxu0
        %6950 = vmatprep.mubr.bf16.mxu0 0
        %6951 = vmatmul.mubr.bf16.gmra.mrb[0].mxu0 %v6693
        %v6952 = vpop.f32.mrb[0].mxu0
        %v6953 = vadd.f32 0.0, %v6952
        %v6954 = vpop.f32.mrb[0].mxu0
        %v6955 = vpop.f32.mrb[0].mxu0
        %v6956 = vadd.f32 0.0, %v6955
        %v6957 = vpop.f32.mrb[0].mxu0
        %6958 = vmatprep.mubr.bf16.mxu0 0
        %6959 = vmatmul.mubr.bf16.gmra.mrb[0].mxu0 %v6696
        %v6960 = vpop.f32.mrb[0].mxu0
        %v6961 = vadd.f32 0.0, %v6960
        %v6962 = vpop.f32.mrb[0].mxu0
        %v6963 = vpop.f32.mrb[0].mxu0
        %v6964 = vadd.f32 0.0, %v6963
        %v6965 = vpop.f32.mrb[0].mxu0
        %6966 = vmatprep.mubr.bf16.mxu0 0
        %6967 = vmatmul.mubr.bf16.gmra.mrb[0].mxu0 %v6699
        %v6968 = vpop.f32.mrb[0].mxu0
        %v6969 = vadd.f32 0.0, %v6968
        %v6970 = vpop.f32.mrb[0].mxu0
        %v6971 = vpop.f32.mrb[0].mxu0
        %v6972 = vadd.f32 0.0, %v6971
        %v6973 = vpop.f32.mrb[0].mxu0
        %6974 = vmatprep.mubr.bf16.mxu0 0
        %6975 = vmatmul.mubr.bf16.gmra.mrb[0].mxu0 %v6702
        %v6976 = vpop.f32.mrb[0].mxu0
        %v6977 = vadd.f32 0.0, %v6976
        %v6978 = vpop.f32.mrb[0].mxu0
        %v6979 = vpop.f32.mrb[0].mxu0
        %v6980 = vadd.f32 0.0, %v6979
        %v6981 = vpop.f32.mrb[0].mxu0
        %6982 = vmatprep.mubr.bf16.mxu0 0
        %6983 = vmatmul.mubr.bf16.gmra.mrb[0].mxu0 %v6705
        %v6984 = vpop.f32.mrb[0].mxu0
        %v6985 = vadd.f32 0.0, %v6984
        %v6986 = vpop.f32.mrb[0].mxu0
        %v6987 = vpop.f32.mrb[0].mxu0
        %v6988 = vadd.f32 0.0, %v6987
        %v6989 = vpop.f32.mrb[0].mxu0
        %6990 = vmatprep.mubr.bf16.mxu0 0
        %6991 = vmatmul.mubr.bf16.gmra.mrb[0].mxu0 %v6708
        %v6992 = vpop.f32.mrb[0].mxu0
        %v6993 = vadd.f32 0.0, %v6992
        %v6994 = vpop.f32.mrb[0].mxu0
        %v6995 = vpop.f32.mrb[0].mxu0
        %v6996 = vadd.f32 0.0, %v6995
        %v6997 = vpop.f32.mrb[0].mxu0
        %6998 = vmatprep.mubr.bf16.mxu0 0
        %6999 = vmatmul.mubr.bf16.gmra.mrb[0].mxu0 %v6711
        %v7000 = vpop.f32.mrb[0].mxu0
        %v7001 = vadd.f32 0.0, %v7000
        %v7002 = vpop.f32.mrb[0].mxu0
        %v7003 = vpop.f32.mrb[0].mxu0
        %v7004 = vadd.f32 0.0, %v7003
        %v7005 = vpop.f32.mrb[0].mxu0
        %7006 = vmatprep.mubr.bf16.mxu0 0
        %7007 = vmatmul.mubr.bf16.gmra.mrb[0].mxu0 %v6714
        %v7008 = vpop.f32.mrb[0].mxu0
        %v7009 = vadd.f32 0.0, %v7008
        %v7010 = vpop.f32.mrb[0].mxu0
        %v7011 = vpop.f32.mrb[0].mxu0
        %v7012 = vadd.f32 0.0, %v7011
        %v7013 = vpop.f32.mrb[0].mxu0
        %7014 = vmatprep.mubr.bf16.mxu0 0
        %7015 = vmatmul.mubr.bf16.gmra.mrb[0].mxu0 %v6717
        %v7016 = vpop.f32.mrb[0].mxu0
        %v7017 = vadd.f32 0.0, %v7016
        %v7018 = vpop.f32.mrb[0].mxu0
        %v7019 = vpop.f32.mrb[0].mxu0
        %v7020 = vadd.f32 0.0, %v7019
        %v7021 = vpop.f32.mrb[0].mxu0
        %7022 = vmatprep.mubr.bf16.mxu0 0
        %7023 = vmatmul.mubr.bf16.gmra.mrb[0].mxu0 %v6720
        %v7024 = vpop.f32.mrb[0].mxu0
        %v7025 = vadd.f32 0.0, %v7024
        %v7026 = vpop.f32.mrb[0].mxu0
        %v7027 = vpop.f32.mrb[0].mxu0
        %v7028 = vadd.f32 0.0, %v7027
        %v7029 = vpop.f32.mrb[0].mxu0
        %7030 = vmatprep.mubr.bf16.mxu0 0
        %7031 = vmatmul.mubr.bf16.gmra.mrb[0].mxu0 %v6723
        %v7032 = vpop.f32.mrb[0].mxu0
        %v7033 = vadd.f32 0.0, %v7032
        %v7034 = vpop.f32.mrb[0].mxu0
        %v7035 = vpop.f32.mrb[0].mxu0
        %v7036 = vadd.f32 0.0, %v7035
        %v7037 = vpop.f32.mrb[0].mxu0
        %7038 = vmatprep.mubr.bf16.mxu0 0
        %7039 = vmatmul.mubr.bf16.gmra.mrb[0].mxu0 %v6726
        %v7040 = vpop.f32.mrb[0].mxu0
        %v7041 = vadd.f32 0.0, %v7040
        %v7042 = vpop.f32.mrb[0].mxu0
        %v7043 = vpop.f32.mrb[0].mxu0
        %v7044 = vadd.f32 0.0, %v7043
        %v7045 = vpop.f32.mrb[0].mxu0
        %7046 = vmatprep.mubr.bf16.mxu0 0
        %7047 = vmatmul.mubr.bf16.gmra.mrb[0].mxu0 %v6729
        %v7048 = vpop.f32.mrb[0].mxu0
        %v7049 = vadd.f32 0.0, %v7048
        %v7050 = vpop.f32.mrb[0].mxu0
        %v7051 = vpop.f32.mrb[0].mxu0
        %v7052 = vadd.f32 0.0, %v7051
        %v7053 = vpop.f32.mrb[0].mxu0
        %7054 = vmatprep.mubr.bf16.mxu0 0
        %7055 = vmatmul.mubr.bf16.gmra.mrb[0].mxu0 %v6732
        %v7056 = vpop.f32.mrb[0].mxu0
        %v7057 = vadd.f32 0.0, %v7056
        %v7058 = vpop.f32.mrb[0].mxu0
        %v7059 = vpop.f32.mrb[0].mxu0
        %v7060 = vadd.f32 0.0, %v7059
        %v7061 = vpop.f32.mrb[0].mxu0
        %7062 = vmatprep.mubr.bf16.mxu0 0
        %7063 = vmatmul.mubr.bf16.gmra.mrb[0].mxu0 %v6735
        %v7064 = vpop.f32.mrb[0].mxu0
        %v7065 = vadd.f32 0.0, %v7064
        %v7066 = vpop.f32.mrb[0].mxu0
        %v7067 = vpop.f32.mrb[0].mxu0
        %v7068 = vadd.f32 0.0, %v7067
        %v7069 = vpop.f32.mrb[0].mxu0
        %7070 = vmatprep.mubr.bf16.mxu0 0
        %7071 = vmatmul.mubr.bf16.gmra.mrb[0].mxu0 %v6738
        %v7072 = vpop.f32.mrb[0].mxu0
        %v7073 = vadd.f32 0.0, %v7072
        %v7074 = vpop.f32.mrb[0].mxu0
        %v7075 = vpop.f32.mrb[0].mxu0
        %v7076 = vadd.f32 0.0, %v7075
        %v7077 = vpop.f32.mrb[0].mxu0
        %7078 = vmatprep.mubr.bf16.mxu0 0
        %7079 = vmatmul.mubr.bf16.gmra.mrb[0].mxu0 %v6741
        %v7080 = vpop.f32.mrb[0].mxu0
        %v7081 = vadd.f32 0.0, %v7080
        %v7082 = vpop.f32.mrb[0].mxu0
        %v7083 = vpop.f32.mrb[0].mxu0
        %v7084 = vadd.f32 0.0, %v7083
        %v7085 = vpop.f32.mrb[0].mxu0
        %7086 = vmatprep.mubr.bf16.mxu0 0
        %7087 = vmatmul.mubr.bf16.gmra.mrb[0].mxu0 %v6744
        %v7088 = vpop.f32.mrb[0].mxu0
        %v7089 = vadd.f32 0.0, %v7088
        %v7090 = vpop.f32.mrb[0].mxu0
        %v7091 = vpop.f32.mrb[0].mxu0
        %v7092 = vadd.f32 0.0, %v7091
        %v7093 = vpop.f32.mrb[0].mxu0
        %7094 = vmatprep.mubr.bf16.mxu0 0
        %7095 = vmatmul.mubr.bf16.gmra.mrb[0].mxu0 %v6747
        %v7096 = vpop.f32.mrb[0].mxu0
        %v7097 = vadd.f32 0.0, %v7096
        %v7098 = vpop.f32.mrb[0].mxu0
        %v7099 = vpop.f32.mrb[0].mxu0
        %v7100 = vadd.f32 0.0, %v7099
        %v7101 = vpop.f32.mrb[0].mxu0
        %7102 = vmatprep.mubr.bf16.mxu0 0
        %7103 = vmatmul.mubr.bf16.gmra.mrb[0].mxu0 %v6750
        %v7104 = vpop.f32.mrb[0].mxu0
        %v7105 = vadd.f32 0.0, %v7104
        %v7106 = vpop.f32.mrb[0].mxu0
        %v7107 = vpop.f32.mrb[0].mxu0
        %v7108 = vadd.f32 0.0, %v7107
        %v7109 = vpop.f32.mrb[0].mxu0
        %7110 = vmatprep.mubr.bf16.mxu0 0
        %7111 = vmatmul.mubr.bf16.gmra.mrb[0].mxu0 %v6753
        %v7112 = vpop.f32.mrb[0].mxu0
        %v7113 = vadd.f32 0.0, %v7112
        %v7114 = vpop.f32.mrb[0].mxu0
        %v7115 = vpop.f32.mrb[0].mxu0
        %v7116 = vadd.f32 0.0, %v7115
        %v7117 = vpop.f32.mrb[0].mxu0
        %7118 = vmatprep.mubr.bf16.mxu0 0
        %7119 = vmatmul.mubr.bf16.gmra.mrb[0].mxu0 %v6756
        %v7120 = vpop.f32.mrb[0].mxu0
        %v7121 = vadd.f32 0.0, %v7120
        %v7122 = vpop.f32.mrb[0].mxu0
        %v7123 = vpop.f32.mrb[0].mxu0
        %v7124 = vadd.f32 0.0, %v7123
        %v7125 = vpop.f32.mrb[0].mxu0
        %7126 = vmatprep.mubr.bf16.mxu0 0
        %7127 = vmatmul.mubr.bf16.gmra.mrb[0].mxu0 %v6759
        %v7128 = vpop.f32.mrb[0].mxu0
        %v7129 = vadd.f32 0.0, %v7128
        %v7130 = vpop.f32.mrb[0].mxu0
        %v7131 = vpop.f32.mrb[0].mxu0
        %v7132 = vadd.f32 0.0, %v7131
        %v7133 = vpop.f32.mrb[0].mxu0
        %7134 = vmatprep.mubr.bf16.mxu0 0
        %7135 = vmatmul.mubr.bf16.gmra.mrb[0].mxu0 %v6762
        %v7136 = vpop.f32.mrb[0].mxu0
        %v7137 = vadd.f32 0.0, %v7136
        %v7138 = vpop.f32.mrb[0].mxu0
        %v7139 = vpop.f32.mrb[0].mxu0
        %v7140 = vadd.f32 0.0, %v7139
        %v7141 = vpop.f32.mrb[0].mxu0
        %7142 = vmatprep.mubr.bf16.mxu0 0
        %7143 = vmatmul.mubr.bf16.gmra.mrb[0].mxu0 %v6765
        %v7144 = vpop.f32.mrb[0].mxu0
        %v7145 = vadd.f32 0.0, %v7144
        %v7146 = vpop.f32.mrb[0].mxu0
        %v7147 = vpop.f32.mrb[0].mxu0
        %v7148 = vadd.f32 0.0, %v7147
        %v7149 = vpop.f32.mrb[0].mxu0
        %7150 = vmatprep.mubr.bf16.mxu0 0
        %7151 = vmatmul.mubr.bf16.gmra.mrb[0].mxu0 %v6768
        %v7152 = vpop.f32.mrb[0].mxu0
        %v7153 = vadd.f32 0.0, %v7152
        %v7154 = vpop.f32.mrb[0].mxu0
        %v7155 = vpop.f32.mrb[0].mxu0
        %v7156 = vadd.f32 0.0, %v7155
        %v7157 = vpop.f32.mrb[0].mxu0
        %7158 = vmatprep.mubr.bf16.mxu0 0
        %7159 = vmatmul.mubr.bf16.gmra.mrb[0].mxu0 %v6771
        %v7160 = vpop.f32.mrb[0].mxu0
        %v7161 = vadd.f32 0.0, %v7160
        %v7162 = vpop.f32.mrb[0].mxu0
        %v7163 = vpop.f32.mrb[0].mxu0
        %v7164 = vadd.f32 0.0, %v7163
        %v7165 = vpop.f32.mrb[0].mxu0
        %7166 = vmatprep.mubr.bf16.mxu0 0
        %7167 = vmatmul.mubr.bf16.gmra.mrb[0].mxu0 %v6774
        %v7168 = vpop.f32.mrb[0].mxu0
        %v7169 = vadd.f32 0.0, %v7168
        %v7170 = vpop.f32.mrb[0].mxu0
        %v7171 = vpop.f32.mrb[0].mxu0
        %v7172 = vadd.f32 0.0, %v7171
        %v7173 = vpop.f32.mrb[0].mxu0
        %7174 = vmatprep.mubr.bf16.mxu0 0
        %7175 = vmatmul.mubr.bf16.gmra.mrb[0].mxu0 %v6777
        %v7176 = vpop.f32.mrb[0].mxu0
        %v7177 = vadd.f32 0.0, %v7176
        %v7178 = vpop.f32.mrb[0].mxu0
        %v7179 = vpop.f32.mrb[0].mxu0
        %v7180 = vadd.f32 0.0, %v7179
        %v7181 = vpop.f32.mrb[0].mxu0
        %7182 = vmatprep.mubr.bf16.mxu0 0
        %7183 = vmatmul.mubr.bf16.gmra.mrb[0].mxu0 %v6780
        %v7184 = vpop.f32.mrb[0].mxu0
        %v7185 = vadd.f32 0.0, %v7184
        %v7186 = vpop.f32.mrb[0].mxu0
        %v7187 = vpop.f32.mrb[0].mxu0
        %v7188 = vadd.f32 0.0, %v7187
        %v7189 = vpop.f32.mrb[0].mxu0
        %7190 = vmatprep.mubr.bf16.mxu0 0
        %7191 = vmatmul.mubr.bf16.gmra.mrb[0].mxu0 %v6783
        %v7192 = vpop.f32.mrb[0].mxu0
        %v7193 = vadd.f32 0.0, %v7192
        %v7194 = vpop.f32.mrb[0].mxu0
        %v7195 = vpop.f32.mrb[0].mxu0
        %v7196 = vadd.f32 0.0, %v7195
        %v7197 = vpop.f32.mrb[0].mxu0
        %7198 = vmatprep.mubr.bf16.mxu0 0
        %7199 = vmatmul.mubr.bf16.gmra.mrb[0].mxu0 %v6786
        %v7200 = vpop.f32.mrb[0].mxu0
        %v7201 = vadd.f32 0.0, %v7200
        %v7202 = vpop.f32.mrb[0].mxu0
        %v7203 = vpop.f32.mrb[0].mxu0
        %v7204 = vadd.f32 0.0, %v7203
        %v7205 = vpop.f32.mrb[0].mxu0
        %7206 = vmatprep.mubr.bf16.mxu0 0
        %7207 = vmatmul.mubr.bf16.gmra.mrb[0].mxu0 %v6789
        %v7208 = vpop.f32.mrb[0].mxu0
        %v7209 = vadd.f32 0.0, %v7208
        %v7210 = vpop.f32.mrb[0].mxu0
        %v7211 = vpop.f32.mrb[0].mxu0
        %v7212 = vadd.f32 0.0, %v7211
        %v7213 = vpop.f32.mrb[0].mxu0
        %7214 = vmatprep.mubr.bf16.mxu0 0
        %7215 = vmatmul.mubr.bf16.gmra.mrb[0].mxu0 %v6792
        %v7216 = vpop.f32.mrb[0].mxu0
        %v7217 = vadd.f32 0.0, %v7216
        %v7218 = vpop.f32.mrb[0].mxu0
        %v7219 = vpop.f32.mrb[0].mxu0
        %v7220 = vadd.f32 0.0, %v7219
        %v7221 = vpop.f32.mrb[0].mxu0
        %7222 = vmatprep.mubr.bf16.mxu0 0
        %7223 = vmatmul.mubr.bf16.gmra.mrb[0].mxu0 %v6795
        %v7224 = vpop.f32.mrb[0].mxu0
        %v7225 = vadd.f32 0.0, %v7224
        %v7226 = vpop.f32.mrb[0].mxu0
        %v7227 = vpop.f32.mrb[0].mxu0
        %v7228 = vadd.f32 0.0, %v7227
        %v7229 = vpop.f32.mrb[0].mxu0
        %7230 = vmatprep.mubr.bf16.mxu0 0
        %7231 = vmatmul.mubr.bf16.gmra.mrb[0].mxu0 %v6798
        %v7232 = vpop.f32.mrb[0].mxu0
        %v7233 = vadd.f32 0.0, %v7232
        %v7234 = vpop.f32.mrb[0].mxu0
        %v7235 = vpop.f32.mrb[0].mxu0
        %v7236 = vadd.f32 0.0, %v7235
        %v7237 = vpop.f32.mrb[0].mxu0
        %7238 = vmatprep.mubr.bf16.mxu0 0
        %7239 = vmatmul.mubr.bf16.gmra.mrb[0].mxu0 %v6801
        %v7240 = vpop.f32.mrb[0].mxu0
        %v7241 = vadd.f32 0.0, %v7240
        %v7242 = vpop.f32.mrb[0].mxu0
        %v7243 = vpop.f32.mrb[0].mxu0
        %v7244 = vadd.f32 0.0, %v7243
        %v7245 = vpop.f32.mrb[0].mxu0
        %7246 = vmatprep.mubr.bf16.mxu0 0
        %7247 = vmatmul.mubr.bf16.gmra.mrb[0].mxu0 %v6804
        %v7248 = vpop.f32.mrb[0].mxu0
        %v7249 = vadd.f32 0.0, %v7248
        %v7250 = vpop.f32.mrb[0].mxu0
        %v7251 = vpop.f32.mrb[0].mxu0
        %v7252 = vadd.f32 0.0, %v7251
        %v7253 = vpop.f32.mrb[0].mxu0
        %7254 = vmatprep.mubr.bf16.mxu0 0
        %7255 = vmatmul.mubr.bf16.gmra.mrb[0].mxu0 %v6807
        %v7256 = vpop.f32.mrb[0].mxu0
        %v7257 = vadd.f32 0.0, %v7256
        %v7258 = vpop.f32.mrb[0].mxu0
        %v7259 = vpop.f32.mrb[0].mxu0
        %v7260 = vadd.f32 0.0, %v7259
        %v7261 = vpop.f32.mrb[0].mxu0
        %7262 = vmatprep.mubr.bf16.mxu0 0
        %7263 = vmatmul.mubr.bf16.gmra.mrb[0].mxu0 %v6810
        %v7264 = vpop.f32.mrb[0].mxu0
        %v7265 = vadd.f32 0.0, %v7264
        %v7266 = vpop.f32.mrb[0].mxu0
        %v7267 = vpop.f32.mrb[0].mxu0
        %v7268 = vadd.f32 0.0, %v7267
        %v7269 = vpop.f32.mrb[0].mxu0
        %7270 = vmatprep.mubr.bf16.mxu0 0
        %7271 = vmatmul.mubr.bf16.gmra.mrb[0].mxu0 %v6813
        %v7272 = vpop.f32.mrb[0].mxu0
        %v7273 = vadd.f32 0.0, %v7272
        %v7274 = vpop.f32.mrb[0].mxu0
        %v7275 = vpop.f32.mrb[0].mxu0
        %v7276 = vadd.f32 0.0, %v7275
        %v7277 = vpop.f32.mrb[0].mxu0
        %7278 = vmatprep.mubr.bf16.mxu0 0
        %7279 = vmatmul.mubr.bf16.gmra.mrb[0].mxu0 %v6816
        %v7280 = vpop.f32.mrb[0].mxu0
        %v7281 = vadd.f32 0.0, %v7280
        %v7282 = vpop.f32.mrb[0].mxu0
        %v7283 = vpop.f32.mrb[0].mxu0
        %v7284 = vadd.f32 0.0, %v7283
        %v7285 = vpop.f32.mrb[0].mxu0
        %7286 = vmatprep.mubr.bf16.mxu0 0
        %7287 = vmatmul.mubr.bf16.gmra.mrb[0].mxu0 %v6819
        %v7288 = vpop.f32.mrb[0].mxu0
        %v7289 = vadd.f32 0.0, %v7288
        %v7290 = vpop.f32.mrb[0].mxu0
        %v7291 = vpop.f32.mrb[0].mxu0
        %v7292 = vadd.f32 0.0, %v7291
        %v7293 = vpop.f32.mrb[0].mxu0
        %7294 = vmatprep.mubr.bf16.mxu0 0
        %7295 = vmatmul.mubr.bf16.gmra.mrb[0].mxu0 %v6822
        %v7296 = vpop.f32.mrb[0].mxu0
        %v7297 = vadd.f32 0.0, %v7296
        %v7298 = vpop.f32.mrb[0].mxu0
        %v7299 = vpop.f32.mrb[0].mxu0
        %v7300 = vadd.f32 0.0, %v7299
        %v7301 = vpop.f32.mrb[0].mxu0
        %7302 = vmatprep.mubr.bf16.mxu0 0
        %7303 = vmatmul.mubr.bf16.gmra.mrb[0].mxu0 %v6825
        %v7304 = vpop.f32.mrb[0].mxu0
        %v7305 = vadd.f32 0.0, %v7304
        %v7306 = vpop.f32.mrb[0].mxu0
        %v7307 = vpop.f32.mrb[0].mxu0
        %v7308 = vadd.f32 0.0, %v7307
        %v7309 = vpop.f32.mrb[0].mxu0
        %7310 = vmatprep.mubr.bf16.mxu0 0
        %7311 = vmatmul.mubr.bf16.gmra.mrb[0].mxu0 %v6828
        %v7312 = vpop.f32.mrb[0].mxu0
        %v7313 = vadd.f32 0.0, %v7312
        %v7314 = vpop.f32.mrb[0].mxu0
        %v7315 = vpop.f32.mrb[0].mxu0
        %v7316 = vadd.f32 0.0, %v7315
        %v7317 = vpop.f32.mrb[0].mxu0
        %7318 = vmatprep.mubr.bf16.mxu0 0
        %7319 = vmatmul.mubr.bf16.gmra.mrb[0].mxu0 %v6831
        %v7320 = vpop.f32.mrb[0].mxu0
        %v7321 = vadd.f32 0.0, %v7320
        %v7322 = vpop.f32.mrb[0].mxu0
        %v7323 = vpop.f32.mrb[0].mxu0
        %v7324 = vadd.f32 0.0, %v7323
        %v7325 = vpop.f32.mrb[0].mxu0
        %7326 = vmatprep.mubr.bf16.mxu0 0
        %7327 = vmatmul.mubr.bf16.gmra.mrb[0].mxu0 %v6834
        %v7328 = vpop.f32.mrb[0].mxu0
        %v7329 = vadd.f32 0.0, %v7328
        %v7330 = vpop.f32.mrb[0].mxu0
        %v7331 = vpop.f32.mrb[0].mxu0
        %v7332 = vadd.f32 0.0, %v7331
        %v7333 = vpop.f32.mrb[0].mxu0
        %7334 = vmatprep.mubr.bf16.mxu0 0
        %7335 = vmatmul.mubr.bf16.gmra.mrb[0].mxu0 %v6837
        %v7336 = vpop.f32.mrb[0].mxu0
        %v7337 = vadd.f32 0.0, %v7336
        %v7338 = vpop.f32.mrb[0].mxu0
        %v7339 = vpop.f32.mrb[0].mxu0
        %v7340 = vadd.f32 0.0, %v7339
        %v7341 = vpop.f32.mrb[0].mxu0
        %7342 = vmatprep.mubr.bf16.mxu0 0
        %7343 = vmatmul.mubr.bf16.gmra.mrb[0].mxu0 %v6840
        %v7344 = vpop.f32.mrb[0].mxu0
        %v7345 = vadd.f32 0.0, %v7344
        %v7346 = vpop.f32.mrb[0].mxu0
        %v7347 = vpop.f32.mrb[0].mxu0
        %v7348 = vadd.f32 0.0, %v7347
        %v7349 = vpop.f32.mrb[0].mxu0
        %7350 = vmatprep.mubr.bf16.mxu0 0
        %7351 = vmatmul.mubr.bf16.gmra.mrb[0].mxu0 %v6843
        %v7352 = vpop.f32.mrb[0].mxu0
        %v7353 = vadd.f32 0.0, %v7352
        %v7354 = vpop.f32.mrb[0].mxu0
        %v7355 = vpop.f32.mrb[0].mxu0
        %v7356 = vadd.f32 0.0, %v7355
        %v7357 = vpop.f32.mrb[0].mxu0
        %7358 = vmatprep.mubr.bf16.mxu0 0
        %7359 = vmatmul.mubr.bf16.gmra.mrb[0].mxu0 %v6846
        %v7360 = vpop.f32.mrb[0].mxu0
        %v7361 = vadd.f32 0.0, %v7360
        %v7362 = vpop.f32.mrb[0].mxu0
        %v7363 = vpop.f32.mrb[0].mxu0
        %v7364 = vadd.f32 0.0, %v7363
        %v7365 = vpop.f32.mrb[0].mxu0
        %7366 = vmatprep.mubr.bf16.mxu0 0
        %7367 = vmatmul.mubr.bf16.gmra.mrb[0].mxu0 %v6849
        %v7368 = vpop.f32.mrb[0].mxu0
        %v7369 = vadd.f32 0.0, %v7368
        %v7370 = vpop.f32.mrb[0].mxu0
        %v7371 = vpop.f32.mrb[0].mxu0
        %v7372 = vadd.f32 0.0, %v7371
        %v7373 = vpop.f32.mrb[0].mxu0
        %7374 = vmatprep.mubr.bf16.mxu0 0
        %7375 = vmatmul.mubr.bf16.gmra.mrb[0].mxu0 %v6852
        %v7376 = vpop.f32.mrb[0].mxu0
        %v7377 = vadd.f32 0.0, %v7376
        %v7378 = vpop.f32.mrb[0].mxu0
        %v7379 = vpop.f32.mrb[0].mxu0
        %v7380 = vadd.f32 0.0, %v7379
        %v7381 = vpop.f32.mrb[0].mxu0
        %7382 = vmatprep.mubr.bf16.mxu0 0
        %7383 = vmatmul.mubr.bf16.gmra.mrb[0].mxu0 %v6855
        %v7384 = vpop.f32.mrb[0].mxu0
        %v7385 = vadd.f32 0.0, %v7384
        %v7386 = vpop.f32.mrb[0].mxu0
        %v7387 = vpop.f32.mrb[0].mxu0
        %v7388 = vadd.f32 0.0, %v7387
        %v7389 = vpop.f32.mrb[0].mxu0
        %7390 = vmatprep.mubr.bf16.mxu0 0
        %7391 = vmatmul.mubr.bf16.gmra.mrb[0].mxu0 %v6858
        %v7392 = vpop.f32.mrb[0].mxu0
        %v7393 = vadd.f32 0.0, %v7392
        %v7394 = vpop.f32.mrb[0].mxu0
        %v7395 = vpop.f32.mrb[0].mxu0
        %v7396 = vadd.f32 0.0, %v7395
        %v7397 = vpop.f32.mrb[0].mxu0
        %7398 = vmatprep.mubr.bf16.mxu0 0
        %7399 = vmatmul.mubr.bf16.gmra.mrb[0].mxu0 %v6861
        %v7400 = vpop.f32.mrb[0].mxu0
        %v7401 = vadd.f32 0.0, %v7400
        %v7402 = vpop.f32.mrb[0].mxu0
        %v7403 = vpop.f32.mrb[0].mxu0
        %v7404 = vadd.f32 0.0, %v7403
        %v7405 = vpop.f32.mrb[0].mxu0
        %7406 = vmatprep.mubr.bf16.mxu0 0
        %7407 = vmatmul.mubr.bf16.gmra.mrb[0].mxu0 %v6864
        %v7408 = vpop.f32.mrb[0].mxu0
        %v7409 = vadd.f32 0.0, %v7408
        %v7410 = vpop.f32.mrb[0].mxu0
        %v7411 = vpop.f32.mrb[0].mxu0
        %v7412 = vadd.f32 0.0, %v7411
        %v7413 = vpop.f32.mrb[0].mxu0
        %7414 = vmatprep.mubr.bf16.mxu0 0
        %7415 = vmatmul.mubr.bf16.gmra.mrb[0].mxu0 %v6867
        %v7416 = vpop.f32.mrb[0].mxu0
        %v7417 = vadd.f32 0.0, %v7416
        %v7418 = vpop.f32.mrb[0].mxu0
        %v7419 = vpop.f32.mrb[0].mxu0
        %v7420 = vadd.f32 0.0, %v7419
        %v7421 = vpop.f32.mrb[0].mxu0
        %7422 = vmatprep.mubr.bf16.mxu0 0
        %7423 = vmatmul.mubr.bf16.gmra.mrb[0].mxu0 %v6870
        %v7424 = vpop.f32.mrb[0].mxu0
        %v7425 = vadd.f32 0.0, %v7424
        %v7426 = vpop.f32.mrb[0].mxu0
        %v7427 = vpop.f32.mrb[0].mxu0
        %v7428 = vadd.f32 0.0, %v7427
        %v7429 = vpop.f32.mrb[0].mxu0
        %7430 = vmatprep.mubr.bf16.mxu0 0
        %7431 = vmatmul.mubr.bf16.gmra.mrb[0].mxu0 %v6873
        %v7432 = vpop.f32.mrb[0].mxu0
        %v7433 = vadd.f32 0.0, %v7432
        %v7434 = vpop.f32.mrb[0].mxu0
        %v7435 = vpop.f32.mrb[0].mxu0
        %v7436 = vadd.f32 0.0, %v7435
        %v7437 = vpop.f32.mrb[0].mxu0
        %7438 = vdwg.mxu0
        %v7439 = vadd.f32 %v6345, %v6913
        %v7440 = vadd.f32 %v6346, %v6916
        %v7441 = vadd.f32 %v6347, %v6921
        %v7442 = vadd.f32 %v6348, %v6924
        %v7443 = vadd.f32 %v6349, %v6929
        %v7444 = vadd.f32 %v6350, %v6932
        %v7445 = vadd.f32 %v6351, %v6937
        %v7446 = vadd.f32 %v6352, %v6940
        %v7447 = vadd.f32 %v6353, %v6945
        %v7448 = vadd.f32 %v6354, %v6948
        %v7449 = vadd.f32 %v6355, %v6953
        %v7450 = vadd.f32 %v6356, %v6956
        %v7451 = vadd.f32 %v6357, %v6961
        %v7452 = vadd.f32 %v6358, %v6964
        %v7453 = vadd.f32 %v6359, %v6969
        %v7454 = vadd.f32 %v6360, %v6972
        %v7455 = vadd.f32 %v6361, %v6977
        %v7456 = vadd.f32 %v6362, %v6980
        %v7457 = vadd.f32 %v6363, %v6985
        %v7458 = vadd.f32 %v6364, %v6988
        %v7459 = vadd.f32 %v6365, %v6993
        %v7460 = vadd.f32 %v6366, %v6996
        %v7461 = vadd.f32 %v6367, %v7001
        %v7462 = vadd.f32 %v6368, %v7004
        %v7463 = vadd.f32 %v6369, %v7009
        %v7464 = vadd.f32 %v6370, %v7012
        %v7465 = vadd.f32 %v6371, %v7017
        %v7466 = vadd.f32 %v6372, %v7020
        %v7467 = vadd.f32 %v6373, %v7025
        %v7468 = vadd.f32 %v6374, %v7028
        %v7469 = vadd.f32 %v6375, %v7033
        %v7470 = vadd.f32 %v6376, %v7036
        %v7471 = vadd.f32 %v6377, %v7041
        %v7472 = vadd.f32 %v6378, %v7044
        %v7473 = vadd.f32 %v6379, %v7049
        %v7474 = vadd.f32 %v6380, %v7052
        %v7475 = vadd.f32 %v6381, %v7057
        %v7476 = vadd.f32 %v6382, %v7060
        %v7477 = vadd.f32 %v6383, %v7065
        %v7478 = vadd.f32 %v6384, %v7068
        %v7479 = vadd.f32 %v6385, %v7073
        %v7480 = vadd.f32 %v6386, %v7076
        %v7481 = vadd.f32 %v6387, %v7081
        %v7482 = vadd.f32 %v6388, %v7084
        %v7483 = vadd.f32 %v6389, %v7089
        %v7484 = vadd.f32 %v6390, %v7092
        %v7485 = vadd.f32 %v6391, %v7097
        %v7486 = vadd.f32 %v6392, %v7100
        %v7487 = vadd.f32 %v6393, %v7105
        %v7488 = vadd.f32 %v6394, %v7108
        %v7489 = vadd.f32 %v6395, %v7113
        %v7490 = vadd.f32 %v6396, %v7116
        %v7491 = vadd.f32 %v6397, %v7121
        %v7492 = vadd.f32 %v6398, %v7124
        %v7493 = vadd.f32 %v6399, %v7129
        %v7494 = vadd.f32 %v6400, %v7132
        %v7495 = vadd.f32 %v6401, %v7137
        %v7496 = vadd.f32 %v6402, %v7140
        %v7497 = vadd.f32 %v6403, %v7145
        %v7498 = vadd.f32 %v6404, %v7148
        %v7499 = vadd.f32 %v6405, %v7153
        %v7500 = vadd.f32 %v6406, %v7156
        %v7501 = vadd.f32 %v6407, %v7161
        %v7502 = vadd.f32 %v6408, %v7164
        %v7503 = vadd.f32 %v6409, %v7169
        %v7504 = vadd.f32 %v6410, %v7172
        %v7505 = vadd.f32 %v6411, %v7177
        %v7506 = vadd.f32 %v6412, %v7180
        %v7507 = vadd.f32 %v6413, %v7185
        %v7508 = vadd.f32 %v6414, %v7188
        %v7509 = vadd.f32 %v6415, %v7193
        %v7510 = vadd.f32 %v6416, %v7196
        %v7511 = vadd.f32 %v6417, %v7201
        %v7512 = vadd.f32 %v6418, %v7204
        %v7513 = vadd.f32 %v6419, %v7209
        %v7514 = vadd.f32 %v6420, %v7212
        %v7515 = vadd.f32 %v6421, %v7217
        %v7516 = vadd.f32 %v6422, %v7220
        %v7517 = vadd.f32 %v6423, %v7225
        %v7518 = vadd.f32 %v6424, %v7228
        %v7519 = vadd.f32 %v6425, %v7233
        %v7520 = vadd.f32 %v6426, %v7236
        %v7521 = vadd.f32 %v6427, %v7241
        %v7522 = vadd.f32 %v6428, %v7244
        %v7523 = vadd.f32 %v6429, %v7249
        %v7524 = vadd.f32 %v6430, %v7252
        %v7525 = vadd.f32 %v6431, %v7257
        %v7526 = vadd.f32 %v6432, %v7260
        %v7527 = vadd.f32 %v6433, %v7265
        %v7528 = vadd.f32 %v6434, %v7268
        %v7529 = vadd.f32 %v6435, %v7273
        %v7530 = vadd.f32 %v6436, %v7276
        %v7531 = vadd.f32 %v6437, %v7281
        %v7532 = vadd.f32 %v6438, %v7284
        %v7533 = vadd.f32 %v6439, %v7289
        %v7534 = vadd.f32 %v6440, %v7292
        %v7535 = vadd.f32 %v6441, %v7297
        %v7536 = vadd.f32 %v6442, %v7300
        %v7537 = vadd.f32 %v6443, %v7305
        %v7538 = vadd.f32 %v6444, %v7308
        %v7539 = vadd.f32 %v6445, %v7313
        %v7540 = vadd.f32 %v6446, %v7316
        %v7541 = vadd.f32 %v6447, %v7321
        %v7542 = vadd.f32 %v6448, %v7324
        %v7543 = vadd.f32 %v6449, %v7329
        %v7544 = vadd.f32 %v6450, %v7332
        %v7545 = vadd.f32 %v6451, %v7337
        %v7546 = vadd.f32 %v6452, %v7340
        %v7547 = vadd.f32 %v6453, %v7345
        %v7548 = vadd.f32 %v6454, %v7348
        %v7549 = vadd.f32 %v6455, %v7353
        %v7550 = vadd.f32 %v6456, %v7356
        %v7551 = vadd.f32 %v6457, %v7361
        %v7552 = vadd.f32 %v6458, %v7364
        %v7553 = vadd.f32 %v6459, %v7369
        %v7554 = vadd.f32 %v6460, %v7372
        %v7555 = vadd.f32 %v6461, %v7377
        %v7556 = vadd.f32 %v6462, %v7380
        %v7557 = vadd.f32 %v6463, %v7385
        %v7558 = vadd.f32 %v6464, %v7388
        %v7559 = vadd.f32 %v6465, %v7393
        %v7560 = vadd.f32 %v6466, %v7396
        %v7561 = vadd.f32 %v6467, %v7401
        %v7562 = vadd.f32 %v6468, %v7404
        %v7563 = vadd.f32 %v6469, %v7409
        %v7564 = vadd.f32 %v6470, %v7412
        %v7565 = vadd.f32 %v6471, %v7417
        %v7566 = vadd.f32 %v6472, %v7420
        %v7567 = vadd.f32 %v6473, %v7425
        %v7568 = vadd.f32 %v6474, %v7428
        %v7569 = vadd.f32 %v6475, %v7433
        %v7570 = vadd.f32 %v6476, %v7436
        %v7571 = vld [vmem:[%s369 + $0x21] sm:$0xff]
        %v7572 = vld [vmem:[%s369 + $0x29] sm:$0xff]
        %v7573 = vld [vmem:[%s369 + $0x31] sm:$0xff]
        %v7574 = vld [vmem:[%s369 + $0x39] sm:$0xff]
        %v7575 = vld [vmem:[%s369 + $0x41] sm:$0xff]
        %v7576 = vld [vmem:[%s369 + $0x49] sm:$0xff]
        %v7577 = vld [vmem:[%s369 + $0x51] sm:$0xff]
        %v7578 = vld [vmem:[%s369 + $0x59] sm:$0xff]
        %v7579 = vld [vmem:[%s369 + $0x61] sm:$0xff]
        %v7580 = vld [vmem:[%s369 + $0x69] sm:$0xff]
        %v7581 = vld [vmem:[%s369 + $0x71] sm:$0xff]
        %v7582 = vld [vmem:[%s369 + $0x79] sm:$0xff]
        %v7583 = vld [vmem:[%s369 + $0x81] sm:$0xff]
        %v7584 = vld [vmem:[%s369 + $0x89] sm:$0xff]
        %v7585 = vld [vmem:[%s369 + $0x91] sm:$0xff]
        %v7586 = vld [vmem:[%s369 + $0x99] sm:$0xff]
        %v7587 = vld [vmem:[%s369 + $0xa1] sm:$0xff]
        %v7588 = vld [vmem:[%s369 + $0xa9] sm:$0xff]
        %v7589 = vld [vmem:[%s369 + $0xb1] sm:$0xff]
        %v7590 = vld [vmem:[%s369 + $0xb9] sm:$0xff]
        %v7591 = vld [vmem:[%s369 + $0xc1] sm:$0xff]
        %v7592 = vld [vmem:[%s369 + $0xc9] sm:$0xff]
        %v7593 = vld [vmem:[%s369 + $0xd1] sm:$0xff]
        %v7594 = vld [vmem:[%s369 + $0xd9] sm:$0xff]
        %v7595 = vld [vmem:[%s369 + $0xe1] sm:$0xff]
        %v7596 = vld [vmem:[%s369 + $0xe9] sm:$0xff]
        %v7597 = vld [vmem:[%s369 + $0xf1] sm:$0xff]
        %v7598 = vld [vmem:[%s369 + $0xf9] sm:$0xff]
        %v7599 = vld [vmem:[%s369 + $0x101] sm:$0xff]
        %v7600 = vld [vmem:[%s369 + $0x109] sm:$0xff]
        %v7601 = vld [vmem:[%s369 + $0x111] sm:$0xff]
        %v7602 = vld [vmem:[%s369 + $0x119] sm:$0xff]
        %v7603 = vld [vmem:[%s369 + $0x121] sm:$0xff]
        %v7604 = vld [vmem:[%s369 + $0x129] sm:$0xff]
        %v7605 = vld [vmem:[%s369 + $0x131] sm:$0xff]
        %v7606 = vld [vmem:[%s369 + $0x139] sm:$0xff]
        %v7607 = vld [vmem:[%s369 + $0x141] sm:$0xff]
        %v7608 = vld [vmem:[%s369 + $0x149] sm:$0xff]
        %v7609 = vld [vmem:[%s369 + $0x151] sm:$0xff]
        %v7610 = vld [vmem:[%s369 + $0x159] sm:$0xff]
        %v7611 = vld [vmem:[%s369 + $0x161] sm:$0xff]
        %v7612 = vld [vmem:[%s369 + $0x169] sm:$0xff]
        %v7613 = vld [vmem:[%s369 + $0x171] sm:$0xff]
        %v7614 = vld [vmem:[%s369 + $0x179] sm:$0xff]
        %v7615 = vld [vmem:[%s369 + $0x181] sm:$0xff]
        %v7616 = vld [vmem:[%s369 + $0x189] sm:$0xff]
        %v7617 = vld [vmem:[%s369 + $0x191] sm:$0xff]
        %v7618 = vld [vmem:[%s369 + $0x199] sm:$0xff]
        %v7619 = vld [vmem:[%s369 + $0x1a1] sm:$0xff]
        %v7620 = vld [vmem:[%s369 + $0x1a9] sm:$0xff]
        %v7621 = vld [vmem:[%s369 + $0x1b1] sm:$0xff]
        %v7622 = vld [vmem:[%s369 + $0x1b9] sm:$0xff]
        %v7623 = vld [vmem:[%s369 + $0x1c1] sm:$0xff]
        %v7624 = vld [vmem:[%s369 + $0x1c9] sm:$0xff]
        %v7625 = vld [vmem:[%s369 + $0x1d1] sm:$0xff]
        %v7626 = vld [vmem:[%s369 + $0x1d9] sm:$0xff]
        %v7627 = vld [vmem:[%s369 + $0x1e1] sm:$0xff]
        %v7628 = vld [vmem:[%s369 + $0x1e9] sm:$0xff]
        %v7629 = vld [vmem:[%s369 + $0x1f1] sm:$0xff]
        %v7630 = vld [vmem:[%s369 + $0x1f9] sm:$0xff]
        %v7631 = vld [vmem:[%s369 + $0x201] sm:$0xff]
        %v7632 = vld [vmem:[%s369 + $0x209] sm:$0xff]
        %v7633 = vld [vmem:[%s369 + $0x211] sm:$0xff]
        %v7634 = vld [vmem:[%s369 + $0x219] sm:$0xff]
        %v7635 = vld [vmem:[%s369 + $0x221] sm:$0xff]
        %v7636 = vld [vmem:[%s369 + $0x229] sm:$0xff]
        %v7637 = vld [vmem:[%s369 + $0x231] sm:$0xff]
        %v7638 = vld [vmem:[%s369 + $0x239] sm:$0xff]
        %v7639 = vld [vmem:[%s369 + $0x241] sm:$0xff]
        %v7640 = vld [vmem:[%s369 + $0x249] sm:$0xff]
        %v7641 = vld [vmem:[%s369 + $0x251] sm:$0xff]
        %v7642 = vld [vmem:[%s369 + $0x259] sm:$0xff]
        %v7643 = vld [vmem:[%s369 + $0x261] sm:$0xff]
        %v7644 = vld [vmem:[%s369 + $0x269] sm:$0xff]
        %v7645 = vld [vmem:[%s369 + $0x271] sm:$0xff]
        %v7646 = vld [vmem:[%s369 + $0x279] sm:$0xff]
        %v7647 = vld [vmem:[%s369 + $0x281] sm:$0xff]
        %v7648 = vld [vmem:[%s369 + $0x289] sm:$0xff]
        %v7649 = vld [vmem:[%s369 + $0x291] sm:$0xff]
        %v7650 = vld [vmem:[%s369 + $0x299] sm:$0xff]
        %v7651 = vld [vmem:[%s369 + $0x2a1] sm:$0xff]
        %v7652 = vld [vmem:[%s369 + $0x2a9] sm:$0xff]
        %v7653 = vld [vmem:[%s369 + $0x2b1] sm:$0xff]
        %v7654 = vld [vmem:[%s369 + $0x2b9] sm:$0xff]
        %v7655 = vld [vmem:[%s369 + $0x2c1] sm:$0xff]
        %v7656 = vld [vmem:[%s369 + $0x2c9] sm:$0xff]
        %v7657 = vld [vmem:[%s369 + $0x2d1] sm:$0xff]
        %v7658 = vld [vmem:[%s369 + $0x2d9] sm:$0xff]
        %v7659 = vld [vmem:[%s369 + $0x2e1] sm:$0xff]
        %v7660 = vld [vmem:[%s369 + $0x2e9] sm:$0xff]
        %v7661 = vld [vmem:[%s369 + $0x2f1] sm:$0xff]
        %v7662 = vld [vmem:[%s369 + $0x2f9] sm:$0xff]
        %v7663 = vld [vmem:[%s369 + $0x301] sm:$0xff]
        %v7664 = vld [vmem:[%s369 + $0x309] sm:$0xff]
        %v7665 = vld [vmem:[%s369 + $0x311] sm:$0xff]
        %v7666 = vld [vmem:[%s369 + $0x319] sm:$0xff]
        %v7667 = vld [vmem:[%s369 + $0x321] sm:$0xff]
        %v7668 = vld [vmem:[%s369 + $0x329] sm:$0xff]
        %v7669 = vld [vmem:[%s369 + $0x331] sm:$0xff]
        %v7670 = vld [vmem:[%s369 + $0x339] sm:$0xff]
        %v7671 = vld [vmem:[%s369 + $0x341] sm:$0xff]
        %v7672 = vld [vmem:[%s369 + $0x349] sm:$0xff]
        %v7673 = vld [vmem:[%s369 + $0x351] sm:$0xff]
        %v7674 = vld [vmem:[%s369 + $0x359] sm:$0xff]
        %v7675 = vld [vmem:[%s369 + $0x361] sm:$0xff]
        %v7676 = vld [vmem:[%s369 + $0x369] sm:$0xff]
        %v7677 = vld [vmem:[%s369 + $0x371] sm:$0xff]
        %v7678 = vld [vmem:[%s369 + $0x379] sm:$0xff]
        %v7679 = vld [vmem:[%s369 + $0x381] sm:$0xff]
        %v7680 = vld [vmem:[%s369 + $0x389] sm:$0xff]
        %v7681 = vld [vmem:[%s369 + $0x391] sm:$0xff]
        %v7682 = vld [vmem:[%s369 + $0x399] sm:$0xff]
        %v7683 = vld [vmem:[%s369 + $0x3a1] sm:$0xff]
        %v7684 = vld [vmem:[%s369 + $0x3a9] sm:$0xff]
        %v7685 = vld [vmem:[%s369 + $0x3b1] sm:$0xff]
        %v7686 = vld [vmem:[%s369 + $0x3b9] sm:$0xff]
        %v7687 = vld [vmem:[%s369 + $0x3c1] sm:$0xff]
        %v7688 = vld [vmem:[%s369 + $0x3c9] sm:$0xff]
        %v7689 = vld [vmem:[%s369 + $0x3d1] sm:$0xff]
        %v7690 = vld [vmem:[%s369 + $0x3d9] sm:$0xff]
        %v7691 = vld [vmem:[%s369 + $0x3e1] sm:$0xff]
        %v7692 = vld [vmem:[%s369 + $0x3e9] sm:$0xff]
        %v7693 = vld [vmem:[%s369 + $0x3f1] sm:$0xff]
        %v7694 = vld [vmem:[%s369 + $0x3f9] sm:$0xff]
        %v7695 = vld [vmem:[%s369 + $0x401] sm:$0xff]
        %v7696 = vld [vmem:[%s369 + $0x409] sm:$0xff]
        %v7697 = vld [vmem:[%s369 + $0x411] sm:$0xff]
        %v7698 = vld [vmem:[%s369 + $0x419] sm:$0xff]
        %v7699 = vld [vmem:[%s369 + $0x421] sm:$0xff]
        %v7700 = vld [vmem:[%s369 + $0x429] sm:$0xff]
        %v7701 = vld [vmem:[%s369 + $0x431] sm:$0xff]
        %v7702 = vld [vmem:[%s369 + $0x439] sm:$0xff]
        %v7703 = vpack.c.bf16 %v7572, %v7571
        %v7704 = vpack.c.bf16 %v7574, %v7573
        %v7705 = vpack.c.bf16 %v7576, %v7575
        %v7706 = vpack.c.bf16 %v7578, %v7577
        %v7707 = vpack.c.bf16 %v7580, %v7579
        %v7708 = vpack.c.bf16 %v7582, %v7581
        %v7709 = vpack.c.bf16 %v7584, %v7583
        %v7710 = vpack.c.bf16 %v7586, %v7585
        %v7711 = vpack.c.bf16 %v7588, %v7587
        %v7712 = vpack.c.bf16 %v7590, %v7589
        %v7713 = vpack.c.bf16 %v7592, %v7591
        %v7714 = vpack.c.bf16 %v7594, %v7593
        %v7715 = vpack.c.bf16 %v7596, %v7595
        %v7716 = vpack.c.bf16 %v7598, %v7597
        %v7717 = vpack.c.bf16 %v7600, %v7599
        %v7718 = vpack.c.bf16 %v7602, %v7601
        %v7719 = vpack.c.bf16 %v7604, %v7603
        %v7720 = vpack.c.bf16 %v7606, %v7605
        %v7721 = vpack.c.bf16 %v7608, %v7607
        %v7722 = vpack.c.bf16 %v7610, %v7609
        %v7723 = vpack.c.bf16 %v7612, %v7611
        %v7724 = vpack.c.bf16 %v7614, %v7613
        %v7725 = vpack.c.bf16 %v7616, %v7615
        %v7726 = vpack.c.bf16 %v7618, %v7617
        %v7727 = vpack.c.bf16 %v7620, %v7619
        %v7728 = vpack.c.bf16 %v7622, %v7621
        %v7729 = vpack.c.bf16 %v7624, %v7623
        %v7730 = vpack.c.bf16 %v7626, %v7625
        %v7731 = vpack.c.bf16 %v7628, %v7627
        %v7732 = vpack.c.bf16 %v7630, %v7629
        %v7733 = vpack.c.bf16 %v7632, %v7631
        %v7734 = vpack.c.bf16 %v7634, %v7633
        %v7735 = vpack.c.bf16 %v7636, %v7635
        %v7736 = vpack.c.bf16 %v7638, %v7637
        %v7737 = vpack.c.bf16 %v7640, %v7639
        %v7738 = vpack.c.bf16 %v7642, %v7641
        %v7739 = vpack.c.bf16 %v7644, %v7643
        %v7740 = vpack.c.bf16 %v7646, %v7645
        %v7741 = vpack.c.bf16 %v7648, %v7647
        %v7742 = vpack.c.bf16 %v7650, %v7649
        %v7743 = vpack.c.bf16 %v7652, %v7651
        %v7744 = vpack.c.bf16 %v7654, %v7653
        %v7745 = vpack.c.bf16 %v7656, %v7655
        %v7746 = vpack.c.bf16 %v7658, %v7657
        %v7747 = vpack.c.bf16 %v7660, %v7659
        %v7748 = vpack.c.bf16 %v7662, %v7661
        %v7749 = vpack.c.bf16 %v7664, %v7663
        %v7750 = vpack.c.bf16 %v7666, %v7665
        %v7751 = vpack.c.bf16 %v7668, %v7667
        %v7752 = vpack.c.bf16 %v7670, %v7669
        %v7753 = vpack.c.bf16 %v7672, %v7671
        %v7754 = vpack.c.bf16 %v7674, %v7673
        %v7755 = vpack.c.bf16 %v7676, %v7675
        %v7756 = vpack.c.bf16 %v7678, %v7677
        %v7757 = vpack.c.bf16 %v7680, %v7679
        %v7758 = vpack.c.bf16 %v7682, %v7681
        %v7759 = vpack.c.bf16 %v7684, %v7683
        %v7760 = vpack.c.bf16 %v7686, %v7685
        %v7761 = vpack.c.bf16 %v7688, %v7687
        %v7762 = vpack.c.bf16 %v7690, %v7689
        %v7763 = vpack.c.bf16 %v7692, %v7691
        %v7764 = vpack.c.bf16 %v7694, %v7693
        %v7765 = vpack.c.bf16 %v7696, %v7695
        %v7766 = vpack.c.bf16 %v7698, %v7697
        %v7767 = vpack.c.bf16 %v7700, %v7699
        %v7768 = vpack.c.bf16 %v7702, %v7701
        %s7769 = scalar_lea.vmem %s1, 14
        %v7770 = vld [vmem:[%s7769] sm:$0x3]
        %v7772 = vsel %vm570, %v7703, 0
        %v7775 = vsel %vm570, %v7704, 0
        %v7778 = vsel %vm570, %v7705, 0
        %v7781 = vsel %vm570, %v7706, 0
        %v7784 = vsel %vm570, %v7707, 0
        %v7787 = vsel %vm570, %v7708, 0
        %v7790 = vsel %vm570, %v7709, 0
        %v7793 = vsel %vm570, %v7710, 0
        %v7796 = vsel %vm570, %v7711, 0
        %v7799 = vsel %vm570, %v7712, 0
        %v7802 = vsel %vm570, %v7713, 0
        %v7805 = vsel %vm570, %v7714, 0
        %v7808 = vsel %vm570, %v7715, 0
        %v7811 = vsel %vm570, %v7716, 0
        %v7814 = vsel %vm570, %v7717, 0
        %v7817 = vsel %vm570, %v7718, 0
        %v7820 = vsel %vm570, %v7719, 0
        %v7823 = vsel %vm570, %v7720, 0
        %v7826 = vsel %vm570, %v7721, 0
        %v7829 = vsel %vm570, %v7722, 0
        %v7832 = vsel %vm570, %v7723, 0
        %v7835 = vsel %vm570, %v7724, 0
        %v7838 = vsel %vm570, %v7725, 0
        %v7841 = vsel %vm570, %v7726, 0
        %v7844 = vsel %vm570, %v7727, 0
        %v7847 = vsel %vm570, %v7728, 0
        %v7850 = vsel %vm570, %v7729, 0
        %v7853 = vsel %vm570, %v7730, 0
        %v7856 = vsel %vm570, %v7731, 0
        %v7859 = vsel %vm570, %v7732, 0
        %v7862 = vsel %vm570, %v7733, 0
        %v7865 = vsel %vm570, %v7734, 0
        %v7868 = vsel %vm570, %v7735, 0
        %v7871 = vsel %vm570, %v7736, 0
        %v7874 = vsel %vm570, %v7737, 0
        %v7877 = vsel %vm570, %v7738, 0
        %v7880 = vsel %vm570, %v7739, 0
        %v7883 = vsel %vm570, %v7740, 0
        %v7886 = vsel %vm570, %v7741, 0
        %v7889 = vsel %vm570, %v7742, 0
        %v7892 = vsel %vm570, %v7743, 0
        %v7895 = vsel %vm570, %v7744, 0
        %v7898 = vsel %vm570, %v7745, 0
        %v7901 = vsel %vm570, %v7746, 0
        %v7904 = vsel %vm570, %v7747, 0
        %v7907 = vsel %vm570, %v7748, 0
        %v7910 = vsel %vm570, %v7749, 0
        %v7913 = vsel %vm570, %v7750, 0
        %v7916 = vsel %vm570, %v7751, 0
        %v7919 = vsel %vm570, %v7752, 0
        %v7922 = vsel %vm570, %v7753, 0
        %v7925 = vsel %vm570, %v7754, 0
        %v7928 = vsel %vm570, %v7755, 0
        %v7931 = vsel %vm570, %v7756, 0
        %v7934 = vsel %vm570, %v7757, 0
        %v7937 = vsel %vm570, %v7758, 0
        %v7940 = vsel %vm570, %v7759, 0
        %v7943 = vsel %vm570, %v7760, 0
        %v7946 = vsel %vm570, %v7761, 0
        %v7949 = vsel %vm570, %v7762, 0
        %v7952 = vsel %vm570, %v7763, 0
        %v7955 = vsel %vm570, %v7764, 0
        %v7958 = vsel %vm570, %v7765, 0
        %v7961 = vsel %vm570, %v7766, 0
        %v7964 = vsel %vm570, %v7767, 0
        %v7967 = vsel %vm570, %v7768, 0
        %v7970 = vand.u32 %v7770, %v772
        %7972 = vmatprep.subr.bf16.mxu0 0
        %7973 = vmatpush1.bf16.msra.mxu0 %v7970
        %7974 = vmatprep.subr.bf16.mxu0 0
        %7975 = vmatpush1.bf16.msra.mxu0 0
        %7976 = vmatprep.subr.bf16.mxu0 0
        %7977 = vmatpush1.bf16.msra.mxu0 0
        %7978 = vmatprep.subr.bf16.mxu0 0
        %7979 = vmatpush1.bf16.msra.mxu0 0
        %7980 = vmatprep.subr.bf16.mxu0 0
        %7981 = vmatpush1.bf16.msra.mxu0 0
        %7982 = vmatprep.subr.bf16.mxu0 0
        %7983 = vmatpush1.bf16.msra.mxu0 0
        %7984 = vmatprep.subr.bf16.mxu0 0
        %7985 = vmatpush1.bf16.msra.mxu0 0
        %7986 = vmatprep.subr.bf16.mxu0 0
        %7987 = vmatpush1.bf16.msra.mxu0 0
        %7988 = vmatprep.subr.bf16.mxu0 0
        %7989 = vmatpush1.bf16.msra.mxu0 0
        %7990 = vmatprep.subr.bf16.mxu0 0
        %7991 = vmatpush1.bf16.msra.mxu0 0
        %7992 = vmatprep.subr.bf16.mxu0 0
        %7993 = vmatpush1.bf16.msra.mxu0 0
        %7994 = vmatprep.subr.bf16.mxu0 0
        %7995 = vmatpush1.bf16.msra.mxu0 0
        %7996 = vmatprep.subr.bf16.mxu0 0
        %7997 = vmatpush1.bf16.msra.mxu0 0
        %7998 = vmatprep.subr.bf16.mxu0 0
        %7999 = vmatpush1.bf16.msra.mxu0 0
        %8000 = vmatprep.subr.bf16.mxu0 0
        %8001 = vmatpush1.bf16.msra.mxu0 0
        %8002 = vmatprep.subr.bf16.mxu0 0
        %8003 = vmatpush1.bf16.msra.mxu0 0
        %8004 = vmatprep.mubr.bf16.mxu0 0
        %8005 = vmatmul.mubr.bf16.gmra.mrb[0].mxu0 %v7772
        %v8006 = vpop.f32.mrb[0].mxu0
        %v8007 = vadd.f32 0.0, %v8006
        %v8008 = vpop.f32.mrb[0].mxu0
        %v8009 = vpop.f32.mrb[0].mxu0
        %v8010 = vadd.f32 0.0, %v8009
        %v8011 = vpop.f32.mrb[0].mxu0
        %8012 = vmatprep.mubr.bf16.mxu0 0
        %8013 = vmatmul.mubr.bf16.gmra.mrb[0].mxu0 %v7775
        %v8014 = vpop.f32.mrb[0].mxu0
        %v8015 = vadd.f32 0.0, %v8014
        %v8016 = vpop.f32.mrb[0].mxu0
        %v8017 = vpop.f32.mrb[0].mxu0
        %v8018 = vadd.f32 0.0, %v8017
        %v8019 = vpop.f32.mrb[0].mxu0
        %8020 = vmatprep.mubr.bf16.mxu0 0
        %8021 = vmatmul.mubr.bf16.gmra.mrb[0].mxu0 %v7778
        %v8022 = vpop.f32.mrb[0].mxu0
        %v8023 = vadd.f32 0.0, %v8022
        %v8024 = vpop.f32.mrb[0].mxu0
        %v8025 = vpop.f32.mrb[0].mxu0
        %v8026 = vadd.f32 0.0, %v8025
        %v8027 = vpop.f32.mrb[0].mxu0
        %8028 = vmatprep.mubr.bf16.mxu0 0
        %8029 = vmatmul.mubr.bf16.gmra.mrb[0].mxu0 %v7781
        %v8030 = vpop.f32.mrb[0].mxu0
        %v8031 = vadd.f32 0.0, %v8030
        %v8032 = vpop.f32.mrb[0].mxu0
        %v8033 = vpop.f32.mrb[0].mxu0
        %v8034 = vadd.f32 0.0, %v8033
        %v8035 = vpop.f32.mrb[0].mxu0
        %8036 = vmatprep.mubr.bf16.mxu0 0
        %8037 = vmatmul.mubr.bf16.gmra.mrb[0].mxu0 %v7784
        %v8038 = vpop.f32.mrb[0].mxu0
        %v8039 = vadd.f32 0.0, %v8038
        %v8040 = vpop.f32.mrb[0].mxu0
        %v8041 = vpop.f32.mrb[0].mxu0
        %v8042 = vadd.f32 0.0, %v8041
        %v8043 = vpop.f32.mrb[0].mxu0
        %8044 = vmatprep.mubr.bf16.mxu0 0
        %8045 = vmatmul.mubr.bf16.gmra.mrb[0].mxu0 %v7787
        %v8046 = vpop.f32.mrb[0].mxu0
        %v8047 = vadd.f32 0.0, %v8046
        %v8048 = vpop.f32.mrb[0].mxu0
        %v8049 = vpop.f32.mrb[0].mxu0
        %v8050 = vadd.f32 0.0, %v8049
        %v8051 = vpop.f32.mrb[0].mxu0
        %8052 = vmatprep.mubr.bf16.mxu0 0
        %8053 = vmatmul.mubr.bf16.gmra.mrb[0].mxu0 %v7790
        %v8054 = vpop.f32.mrb[0].mxu0
        %v8055 = vadd.f32 0.0, %v8054
        %v8056 = vpop.f32.mrb[0].mxu0
        %v8057 = vpop.f32.mrb[0].mxu0
        %v8058 = vadd.f32 0.0, %v8057
        %v8059 = vpop.f32.mrb[0].mxu0
        %8060 = vmatprep.mubr.bf16.mxu0 0
        %8061 = vmatmul.mubr.bf16.gmra.mrb[0].mxu0 %v7793
        %v8062 = vpop.f32.mrb[0].mxu0
        %v8063 = vadd.f32 0.0, %v8062
        %v8064 = vpop.f32.mrb[0].mxu0
        %v8065 = vpop.f32.mrb[0].mxu0
        %v8066 = vadd.f32 0.0, %v8065
        %v8067 = vpop.f32.mrb[0].mxu0
        %8068 = vmatprep.mubr.bf16.mxu0 0
        %8069 = vmatmul.mubr.bf16.gmra.mrb[0].mxu0 %v7796
        %v8070 = vpop.f32.mrb[0].mxu0
        %v8071 = vadd.f32 0.0, %v8070
        %v8072 = vpop.f32.mrb[0].mxu0
        %v8073 = vpop.f32.mrb[0].mxu0
        %v8074 = vadd.f32 0.0, %v8073
        %v8075 = vpop.f32.mrb[0].mxu0
        %8076 = vmatprep.mubr.bf16.mxu0 0
        %8077 = vmatmul.mubr.bf16.gmra.mrb[0].mxu0 %v7799
        %v8078 = vpop.f32.mrb[0].mxu0
        %v8079 = vadd.f32 0.0, %v8078
        %v8080 = vpop.f32.mrb[0].mxu0
        %v8081 = vpop.f32.mrb[0].mxu0
        %v8082 = vadd.f32 0.0, %v8081
        %v8083 = vpop.f32.mrb[0].mxu0
        %8084 = vmatprep.mubr.bf16.mxu0 0
        %8085 = vmatmul.mubr.bf16.gmra.mrb[0].mxu0 %v7802
        %v8086 = vpop.f32.mrb[0].mxu0
        %v8087 = vadd.f32 0.0, %v8086
        %v8088 = vpop.f32.mrb[0].mxu0
        %v8089 = vpop.f32.mrb[0].mxu0
        %v8090 = vadd.f32 0.0, %v8089
        %v8091 = vpop.f32.mrb[0].mxu0
        %8092 = vmatprep.mubr.bf16.mxu0 0
        %8093 = vmatmul.mubr.bf16.gmra.mrb[0].mxu0 %v7805
        %v8094 = vpop.f32.mrb[0].mxu0
        %v8095 = vadd.f32 0.0, %v8094
        %v8096 = vpop.f32.mrb[0].mxu0
        %v8097 = vpop.f32.mrb[0].mxu0
        %v8098 = vadd.f32 0.0, %v8097
        %v8099 = vpop.f32.mrb[0].mxu0
        %8100 = vmatprep.mubr.bf16.mxu0 0
        %8101 = vmatmul.mubr.bf16.gmra.mrb[0].mxu0 %v7808
        %v8102 = vpop.f32.mrb[0].mxu0
        %v8103 = vadd.f32 0.0, %v8102
        %v8104 = vpop.f32.mrb[0].mxu0
        %v8105 = vpop.f32.mrb[0].mxu0
        %v8106 = vadd.f32 0.0, %v8105
        %v8107 = vpop.f32.mrb[0].mxu0
        %8108 = vmatprep.mubr.bf16.mxu0 0
        %8109 = vmatmul.mubr.bf16.gmra.mrb[0].mxu0 %v7811
        %v8110 = vpop.f32.mrb[0].mxu0
        %v8111 = vadd.f32 0.0, %v8110
        %v8112 = vpop.f32.mrb[0].mxu0
        %v8113 = vpop.f32.mrb[0].mxu0
        %v8114 = vadd.f32 0.0, %v8113
        %v8115 = vpop.f32.mrb[0].mxu0
        %8116 = vmatprep.mubr.bf16.mxu0 0
        %8117 = vmatmul.mubr.bf16.gmra.mrb[0].mxu0 %v7814
        %v8118 = vpop.f32.mrb[0].mxu0
        %v8119 = vadd.f32 0.0, %v8118
        %v8120 = vpop.f32.mrb[0].mxu0
        %v8121 = vpop.f32.mrb[0].mxu0
        %v8122 = vadd.f32 0.0, %v8121
        %v8123 = vpop.f32.mrb[0].mxu0
        %8124 = vmatprep.mubr.bf16.mxu0 0
        %8125 = vmatmul.mubr.bf16.gmra.mrb[0].mxu0 %v7817
        %v8126 = vpop.f32.mrb[0].mxu0
        %v8127 = vadd.f32 0.0, %v8126
        %v8128 = vpop.f32.mrb[0].mxu0
        %v8129 = vpop.f32.mrb[0].mxu0
        %v8130 = vadd.f32 0.0, %v8129
        %v8131 = vpop.f32.mrb[0].mxu0
        %8132 = vmatprep.mubr.bf16.mxu0 0
        %8133 = vmatmul.mubr.bf16.gmra.mrb[0].mxu0 %v7820
        %v8134 = vpop.f32.mrb[0].mxu0
        %v8135 = vadd.f32 0.0, %v8134
        %v8136 = vpop.f32.mrb[0].mxu0
        %v8137 = vpop.f32.mrb[0].mxu0
        %v8138 = vadd.f32 0.0, %v8137
        %v8139 = vpop.f32.mrb[0].mxu0
        %8140 = vmatprep.mubr.bf16.mxu0 0
        %8141 = vmatmul.mubr.bf16.gmra.mrb[0].mxu0 %v7823
        %v8142 = vpop.f32.mrb[0].mxu0
        %v8143 = vadd.f32 0.0, %v8142
        %v8144 = vpop.f32.mrb[0].mxu0
        %v8145 = vpop.f32.mrb[0].mxu0
        %v8146 = vadd.f32 0.0, %v8145
        %v8147 = vpop.f32.mrb[0].mxu0
        %8148 = vmatprep.mubr.bf16.mxu0 0
        %8149 = vmatmul.mubr.bf16.gmra.mrb[0].mxu0 %v7826
        %v8150 = vpop.f32.mrb[0].mxu0
        %v8151 = vadd.f32 0.0, %v8150
        %v8152 = vpop.f32.mrb[0].mxu0
        %v8153 = vpop.f32.mrb[0].mxu0
        %v8154 = vadd.f32 0.0, %v8153
        %v8155 = vpop.f32.mrb[0].mxu0
        %8156 = vmatprep.mubr.bf16.mxu0 0
        %8157 = vmatmul.mubr.bf16.gmra.mrb[0].mxu0 %v7829
        %v8158 = vpop.f32.mrb[0].mxu0
        %v8159 = vadd.f32 0.0, %v8158
        %v8160 = vpop.f32.mrb[0].mxu0
        %v8161 = vpop.f32.mrb[0].mxu0
        %v8162 = vadd.f32 0.0, %v8161
        %v8163 = vpop.f32.mrb[0].mxu0
        %8164 = vmatprep.mubr.bf16.mxu0 0
        %8165 = vmatmul.mubr.bf16.gmra.mrb[0].mxu0 %v7832
        %v8166 = vpop.f32.mrb[0].mxu0
        %v8167 = vadd.f32 0.0, %v8166
        %v8168 = vpop.f32.mrb[0].mxu0
        %v8169 = vpop.f32.mrb[0].mxu0
        %v8170 = vadd.f32 0.0, %v8169
        %v8171 = vpop.f32.mrb[0].mxu0
        %8172 = vmatprep.mubr.bf16.mxu0 0
        %8173 = vmatmul.mubr.bf16.gmra.mrb[0].mxu0 %v7835
        %v8174 = vpop.f32.mrb[0].mxu0
        %v8175 = vadd.f32 0.0, %v8174
        %v8176 = vpop.f32.mrb[0].mxu0
        %v8177 = vpop.f32.mrb[0].mxu0
        %v8178 = vadd.f32 0.0, %v8177
        %v8179 = vpop.f32.mrb[0].mxu0
        %8180 = vmatprep.mubr.bf16.mxu0 0
        %8181 = vmatmul.mubr.bf16.gmra.mrb[0].mxu0 %v7838
        %v8182 = vpop.f32.mrb[0].mxu0
        %v8183 = vadd.f32 0.0, %v8182
        %v8184 = vpop.f32.mrb[0].mxu0
        %v8185 = vpop.f32.mrb[0].mxu0
        %v8186 = vadd.f32 0.0, %v8185
        %v8187 = vpop.f32.mrb[0].mxu0
        %8188 = vmatprep.mubr.bf16.mxu0 0
        %8189 = vmatmul.mubr.bf16.gmra.mrb[0].mxu0 %v7841
        %v8190 = vpop.f32.mrb[0].mxu0
        %v8191 = vadd.f32 0.0, %v8190
        %v8192 = vpop.f32.mrb[0].mxu0
        %v8193 = vpop.f32.mrb[0].mxu0
        %v8194 = vadd.f32 0.0, %v8193
        %v8195 = vpop.f32.mrb[0].mxu0
        %8196 = vmatprep.mubr.bf16.mxu0 0
        %8197 = vmatmul.mubr.bf16.gmra.mrb[0].mxu0 %v7844
        %v8198 = vpop.f32.mrb[0].mxu0
        %v8199 = vadd.f32 0.0, %v8198
        %v8200 = vpop.f32.mrb[0].mxu0
        %v8201 = vpop.f32.mrb[0].mxu0
        %v8202 = vadd.f32 0.0, %v8201
        %v8203 = vpop.f32.mrb[0].mxu0
        %8204 = vmatprep.mubr.bf16.mxu0 0
        %8205 = vmatmul.mubr.bf16.gmra.mrb[0].mxu0 %v7847
        %v8206 = vpop.f32.mrb[0].mxu0
        %v8207 = vadd.f32 0.0, %v8206
        %v8208 = vpop.f32.mrb[0].mxu0
        %v8209 = vpop.f32.mrb[0].mxu0
        %v8210 = vadd.f32 0.0, %v8209
        %v8211 = vpop.f32.mrb[0].mxu0
        %8212 = vmatprep.mubr.bf16.mxu0 0
        %8213 = vmatmul.mubr.bf16.gmra.mrb[0].mxu0 %v7850
        %v8214 = vpop.f32.mrb[0].mxu0
        %v8215 = vadd.f32 0.0, %v8214
        %v8216 = vpop.f32.mrb[0].mxu0
        %v8217 = vpop.f32.mrb[0].mxu0
        %v8218 = vadd.f32 0.0, %v8217
        %v8219 = vpop.f32.mrb[0].mxu0
        %8220 = vmatprep.mubr.bf16.mxu0 0
        %8221 = vmatmul.mubr.bf16.gmra.mrb[0].mxu0 %v7853
        %v8222 = vpop.f32.mrb[0].mxu0
        %v8223 = vadd.f32 0.0, %v8222
        %v8224 = vpop.f32.mrb[0].mxu0
        %v8225 = vpop.f32.mrb[0].mxu0
        %v8226 = vadd.f32 0.0, %v8225
        %v8227 = vpop.f32.mrb[0].mxu0
        %8228 = vmatprep.mubr.bf16.mxu0 0
        %8229 = vmatmul.mubr.bf16.gmra.mrb[0].mxu0 %v7856
        %v8230 = vpop.f32.mrb[0].mxu0
        %v8231 = vadd.f32 0.0, %v8230
        %v8232 = vpop.f32.mrb[0].mxu0
        %v8233 = vpop.f32.mrb[0].mxu0
        %v8234 = vadd.f32 0.0, %v8233
        %v8235 = vpop.f32.mrb[0].mxu0
        %8236 = vmatprep.mubr.bf16.mxu0 0
        %8237 = vmatmul.mubr.bf16.gmra.mrb[0].mxu0 %v7859
        %v8238 = vpop.f32.mrb[0].mxu0
        %v8239 = vadd.f32 0.0, %v8238
        %v8240 = vpop.f32.mrb[0].mxu0
        %v8241 = vpop.f32.mrb[0].mxu0
        %v8242 = vadd.f32 0.0, %v8241
        %v8243 = vpop.f32.mrb[0].mxu0
        %8244 = vmatprep.mubr.bf16.mxu0 0
        %8245 = vmatmul.mubr.bf16.gmra.mrb[0].mxu0 %v7862
        %v8246 = vpop.f32.mrb[0].mxu0
        %v8247 = vadd.f32 0.0, %v8246
        %v8248 = vpop.f32.mrb[0].mxu0
        %v8249 = vpop.f32.mrb[0].mxu0
        %v8250 = vadd.f32 0.0, %v8249
        %v8251 = vpop.f32.mrb[0].mxu0
        %8252 = vmatprep.mubr.bf16.mxu0 0
        %8253 = vmatmul.mubr.bf16.gmra.mrb[0].mxu0 %v7865
        %v8254 = vpop.f32.mrb[0].mxu0
        %v8255 = vadd.f32 0.0, %v8254
        %v8256 = vpop.f32.mrb[0].mxu0
        %v8257 = vpop.f32.mrb[0].mxu0
        %v8258 = vadd.f32 0.0, %v8257
        %v8259 = vpop.f32.mrb[0].mxu0
        %8260 = vmatprep.mubr.bf16.mxu0 0
        %8261 = vmatmul.mubr.bf16.gmra.mrb[0].mxu0 %v7868
        %v8262 = vpop.f32.mrb[0].mxu0
        %v8263 = vadd.f32 0.0, %v8262
        %v8264 = vpop.f32.mrb[0].mxu0
        %v8265 = vpop.f32.mrb[0].mxu0
        %v8266 = vadd.f32 0.0, %v8265
        %v8267 = vpop.f32.mrb[0].mxu0
        %8268 = vmatprep.mubr.bf16.mxu0 0
        %8269 = vmatmul.mubr.bf16.gmra.mrb[0].mxu0 %v7871
        %v8270 = vpop.f32.mrb[0].mxu0
        %v8271 = vadd.f32 0.0, %v8270
        %v8272 = vpop.f32.mrb[0].mxu0
        %v8273 = vpop.f32.mrb[0].mxu0
        %v8274 = vadd.f32 0.0, %v8273
        %v8275 = vpop.f32.mrb[0].mxu0
        %8276 = vmatprep.mubr.bf16.mxu0 0
        %8277 = vmatmul.mubr.bf16.gmra.mrb[0].mxu0 %v7874
        %v8278 = vpop.f32.mrb[0].mxu0
        %v8279 = vadd.f32 0.0, %v8278
        %v8280 = vpop.f32.mrb[0].mxu0
        %v8281 = vpop.f32.mrb[0].mxu0
        %v8282 = vadd.f32 0.0, %v8281
        %v8283 = vpop.f32.mrb[0].mxu0
        %8284 = vmatprep.mubr.bf16.mxu0 0
        %8285 = vmatmul.mubr.bf16.gmra.mrb[0].mxu0 %v7877
        %v8286 = vpop.f32.mrb[0].mxu0
        %v8287 = vadd.f32 0.0, %v8286
        %v8288 = vpop.f32.mrb[0].mxu0
        %v8289 = vpop.f32.mrb[0].mxu0
        %v8290 = vadd.f32 0.0, %v8289
        %v8291 = vpop.f32.mrb[0].mxu0
        %8292 = vmatprep.mubr.bf16.mxu0 0
        %8293 = vmatmul.mubr.bf16.gmra.mrb[0].mxu0 %v7880
        %v8294 = vpop.f32.mrb[0].mxu0
        %v8295 = vadd.f32 0.0, %v8294
        %v8296 = vpop.f32.mrb[0].mxu0
        %v8297 = vpop.f32.mrb[0].mxu0
        %v8298 = vadd.f32 0.0, %v8297
        %v8299 = vpop.f32.mrb[0].mxu0
        %8300 = vmatprep.mubr.bf16.mxu0 0
        %8301 = vmatmul.mubr.bf16.gmra.mrb[0].mxu0 %v7883
        %v8302 = vpop.f32.mrb[0].mxu0
        %v8303 = vadd.f32 0.0, %v8302
        %v8304 = vpop.f32.mrb[0].mxu0
        %v8305 = vpop.f32.mrb[0].mxu0
        %v8306 = vadd.f32 0.0, %v8305
        %v8307 = vpop.f32.mrb[0].mxu0
        %8308 = vmatprep.mubr.bf16.mxu0 0
        %8309 = vmatmul.mubr.bf16.gmra.mrb[0].mxu0 %v7886
        %v8310 = vpop.f32.mrb[0].mxu0
        %v8311 = vadd.f32 0.0, %v8310
        %v8312 = vpop.f32.mrb[0].mxu0
        %v8313 = vpop.f32.mrb[0].mxu0
        %v8314 = vadd.f32 0.0, %v8313
        %v8315 = vpop.f32.mrb[0].mxu0
        %8316 = vmatprep.mubr.bf16.mxu0 0
        %8317 = vmatmul.mubr.bf16.gmra.mrb[0].mxu0 %v7889
        %v8318 = vpop.f32.mrb[0].mxu0
        %v8319 = vadd.f32 0.0, %v8318
        %v8320 = vpop.f32.mrb[0].mxu0
        %v8321 = vpop.f32.mrb[0].mxu0
        %v8322 = vadd.f32 0.0, %v8321
        %v8323 = vpop.f32.mrb[0].mxu0
        %8324 = vmatprep.mubr.bf16.mxu0 0
        %8325 = vmatmul.mubr.bf16.gmra.mrb[0].mxu0 %v7892
        %v8326 = vpop.f32.mrb[0].mxu0
        %v8327 = vadd.f32 0.0, %v8326
        %v8328 = vpop.f32.mrb[0].mxu0
        %v8329 = vpop.f32.mrb[0].mxu0
        %v8330 = vadd.f32 0.0, %v8329
        %v8331 = vpop.f32.mrb[0].mxu0
        %8332 = vmatprep.mubr.bf16.mxu0 0
        %8333 = vmatmul.mubr.bf16.gmra.mrb[0].mxu0 %v7895
        %v8334 = vpop.f32.mrb[0].mxu0
        %v8335 = vadd.f32 0.0, %v8334
        %v8336 = vpop.f32.mrb[0].mxu0
        %v8337 = vpop.f32.mrb[0].mxu0
        %v8338 = vadd.f32 0.0, %v8337
        %v8339 = vpop.f32.mrb[0].mxu0
        %8340 = vmatprep.mubr.bf16.mxu0 0
        %8341 = vmatmul.mubr.bf16.gmra.mrb[0].mxu0 %v7898
        %v8342 = vpop.f32.mrb[0].mxu0
        %v8343 = vadd.f32 0.0, %v8342
        %v8344 = vpop.f32.mrb[0].mxu0
        %v8345 = vpop.f32.mrb[0].mxu0
        %v8346 = vadd.f32 0.0, %v8345
        %v8347 = vpop.f32.mrb[0].mxu0
        %8348 = vmatprep.mubr.bf16.mxu0 0
        %8349 = vmatmul.mubr.bf16.gmra.mrb[0].mxu0 %v7901
        %v8350 = vpop.f32.mrb[0].mxu0
        %v8351 = vadd.f32 0.0, %v8350
        %v8352 = vpop.f32.mrb[0].mxu0
        %v8353 = vpop.f32.mrb[0].mxu0
        %v8354 = vadd.f32 0.0, %v8353
        %v8355 = vpop.f32.mrb[0].mxu0
        %8356 = vmatprep.mubr.bf16.mxu0 0
        %8357 = vmatmul.mubr.bf16.gmra.mrb[0].mxu0 %v7904
        %v8358 = vpop.f32.mrb[0].mxu0
        %v8359 = vadd.f32 0.0, %v8358
        %v8360 = vpop.f32.mrb[0].mxu0
        %v8361 = vpop.f32.mrb[0].mxu0
        %v8362 = vadd.f32 0.0, %v8361
        %v8363 = vpop.f32.mrb[0].mxu0
        %8364 = vmatprep.mubr.bf16.mxu0 0
        %8365 = vmatmul.mubr.bf16.gmra.mrb[0].mxu0 %v7907
        %v8366 = vpop.f32.mrb[0].mxu0
        %v8367 = vadd.f32 0.0, %v8366
        %v8368 = vpop.f32.mrb[0].mxu0
        %v8369 = vpop.f32.mrb[0].mxu0
        %v8370 = vadd.f32 0.0, %v8369
        %v8371 = vpop.f32.mrb[0].mxu0
        %8372 = vmatprep.mubr.bf16.mxu0 0
        %8373 = vmatmul.mubr.bf16.gmra.mrb[0].mxu0 %v7910
        %v8374 = vpop.f32.mrb[0].mxu0
        %v8375 = vadd.f32 0.0, %v8374
        %v8376 = vpop.f32.mrb[0].mxu0
        %v8377 = vpop.f32.mrb[0].mxu0
        %v8378 = vadd.f32 0.0, %v8377
        %v8379 = vpop.f32.mrb[0].mxu0
        %8380 = vmatprep.mubr.bf16.mxu0 0
        %8381 = vmatmul.mubr.bf16.gmra.mrb[0].mxu0 %v7913
        %v8382 = vpop.f32.mrb[0].mxu0
        %v8383 = vadd.f32 0.0, %v8382
        %v8384 = vpop.f32.mrb[0].mxu0
        %v8385 = vpop.f32.mrb[0].mxu0
        %v8386 = vadd.f32 0.0, %v8385
        %v8387 = vpop.f32.mrb[0].mxu0
        %8388 = vmatprep.mubr.bf16.mxu0 0
        %8389 = vmatmul.mubr.bf16.gmra.mrb[0].mxu0 %v7916
        %v8390 = vpop.f32.mrb[0].mxu0
        %v8391 = vadd.f32 0.0, %v8390
        %v8392 = vpop.f32.mrb[0].mxu0
        %v8393 = vpop.f32.mrb[0].mxu0
        %v8394 = vadd.f32 0.0, %v8393
        %v8395 = vpop.f32.mrb[0].mxu0
        %8396 = vmatprep.mubr.bf16.mxu0 0
        %8397 = vmatmul.mubr.bf16.gmra.mrb[0].mxu0 %v7919
        %v8398 = vpop.f32.mrb[0].mxu0
        %v8399 = vadd.f32 0.0, %v8398
        %v8400 = vpop.f32.mrb[0].mxu0
        %v8401 = vpop.f32.mrb[0].mxu0
        %v8402 = vadd.f32 0.0, %v8401
        %v8403 = vpop.f32.mrb[0].mxu0
        %8404 = vmatprep.mubr.bf16.mxu0 0
        %8405 = vmatmul.mubr.bf16.gmra.mrb[0].mxu0 %v7922
        %v8406 = vpop.f32.mrb[0].mxu0
        %v8407 = vadd.f32 0.0, %v8406
        %v8408 = vpop.f32.mrb[0].mxu0
        %v8409 = vpop.f32.mrb[0].mxu0
        %v8410 = vadd.f32 0.0, %v8409
        %v8411 = vpop.f32.mrb[0].mxu0
        %8412 = vmatprep.mubr.bf16.mxu0 0
        %8413 = vmatmul.mubr.bf16.gmra.mrb[0].mxu0 %v7925
        %v8414 = vpop.f32.mrb[0].mxu0
        %v8415 = vadd.f32 0.0, %v8414
        %v8416 = vpop.f32.mrb[0].mxu0
        %v8417 = vpop.f32.mrb[0].mxu0
        %v8418 = vadd.f32 0.0, %v8417
        %v8419 = vpop.f32.mrb[0].mxu0
        %8420 = vmatprep.mubr.bf16.mxu0 0
        %8421 = vmatmul.mubr.bf16.gmra.mrb[0].mxu0 %v7928
        %v8422 = vpop.f32.mrb[0].mxu0
        %v8423 = vadd.f32 0.0, %v8422
        %v8424 = vpop.f32.mrb[0].mxu0
        %v8425 = vpop.f32.mrb[0].mxu0
        %v8426 = vadd.f32 0.0, %v8425
        %v8427 = vpop.f32.mrb[0].mxu0
        %8428 = vmatprep.mubr.bf16.mxu0 0
        %8429 = vmatmul.mubr.bf16.gmra.mrb[0].mxu0 %v7931
        %v8430 = vpop.f32.mrb[0].mxu0
        %v8431 = vadd.f32 0.0, %v8430
        %v8432 = vpop.f32.mrb[0].mxu0
        %v8433 = vpop.f32.mrb[0].mxu0
        %v8434 = vadd.f32 0.0, %v8433
        %v8435 = vpop.f32.mrb[0].mxu0
        %8436 = vmatprep.mubr.bf16.mxu0 0
        %8437 = vmatmul.mubr.bf16.gmra.mrb[0].mxu0 %v7934
        %v8438 = vpop.f32.mrb[0].mxu0
        %v8439 = vadd.f32 0.0, %v8438
        %v8440 = vpop.f32.mrb[0].mxu0
        %v8441 = vpop.f32.mrb[0].mxu0
        %v8442 = vadd.f32 0.0, %v8441
        %v8443 = vpop.f32.mrb[0].mxu0
        %8444 = vmatprep.mubr.bf16.mxu0 0
        %8445 = vmatmul.mubr.bf16.gmra.mrb[0].mxu0 %v7937
        %v8446 = vpop.f32.mrb[0].mxu0
        %v8447 = vadd.f32 0.0, %v8446
        %v8448 = vpop.f32.mrb[0].mxu0
        %v8449 = vpop.f32.mrb[0].mxu0
        %v8450 = vadd.f32 0.0, %v8449
        %v8451 = vpop.f32.mrb[0].mxu0
        %8452 = vmatprep.mubr.bf16.mxu0 0
        %8453 = vmatmul.mubr.bf16.gmra.mrb[0].mxu0 %v7940
        %v8454 = vpop.f32.mrb[0].mxu0
        %v8455 = vadd.f32 0.0, %v8454
        %v8456 = vpop.f32.mrb[0].mxu0
        %v8457 = vpop.f32.mrb[0].mxu0
        %v8458 = vadd.f32 0.0, %v8457
        %v8459 = vpop.f32.mrb[0].mxu0
        %8460 = vmatprep.mubr.bf16.mxu0 0
        %8461 = vmatmul.mubr.bf16.gmra.mrb[0].mxu0 %v7943
        %v8462 = vpop.f32.mrb[0].mxu0
        %v8463 = vadd.f32 0.0, %v8462
        %v8464 = vpop.f32.mrb[0].mxu0
        %v8465 = vpop.f32.mrb[0].mxu0
        %v8466 = vadd.f32 0.0, %v8465
        %v8467 = vpop.f32.mrb[0].mxu0
        %8468 = vmatprep.mubr.bf16.mxu0 0
        %8469 = vmatmul.mubr.bf16.gmra.mrb[0].mxu0 %v7946
        %v8470 = vpop.f32.mrb[0].mxu0
        %v8471 = vadd.f32 0.0, %v8470
        %v8472 = vpop.f32.mrb[0].mxu0
        %v8473 = vpop.f32.mrb[0].mxu0
        %v8474 = vadd.f32 0.0, %v8473
        %v8475 = vpop.f32.mrb[0].mxu0
        %8476 = vmatprep.mubr.bf16.mxu0 0
        %8477 = vmatmul.mubr.bf16.gmra.mrb[0].mxu0 %v7949
        %v8478 = vpop.f32.mrb[0].mxu0
        %v8479 = vadd.f32 0.0, %v8478
        %v8480 = vpop.f32.mrb[0].mxu0
        %v8481 = vpop.f32.mrb[0].mxu0
        %v8482 = vadd.f32 0.0, %v8481
        %v8483 = vpop.f32.mrb[0].mxu0
        %8484 = vmatprep.mubr.bf16.mxu0 0
        %8485 = vmatmul.mubr.bf16.gmra.mrb[0].mxu0 %v7952
        %v8486 = vpop.f32.mrb[0].mxu0
        %v8487 = vadd.f32 0.0, %v8486
        %v8488 = vpop.f32.mrb[0].mxu0
        %v8489 = vpop.f32.mrb[0].mxu0
        %v8490 = vadd.f32 0.0, %v8489
        %v8491 = vpop.f32.mrb[0].mxu0
        %8492 = vmatprep.mubr.bf16.mxu0 0
        %8493 = vmatmul.mubr.bf16.gmra.mrb[0].mxu0 %v7955
        %v8494 = vpop.f32.mrb[0].mxu0
        %v8495 = vadd.f32 0.0, %v8494
        %v8496 = vpop.f32.mrb[0].mxu0
        %v8497 = vpop.f32.mrb[0].mxu0
        %v8498 = vadd.f32 0.0, %v8497
        %v8499 = vpop.f32.mrb[0].mxu0
        %8500 = vmatprep.mubr.bf16.mxu0 0
        %8501 = vmatmul.mubr.bf16.gmra.mrb[0].mxu0 %v7958
        %v8502 = vpop.f32.mrb[0].mxu0
        %v8503 = vadd.f32 0.0, %v8502
        %v8504 = vpop.f32.mrb[0].mxu0
        %v8505 = vpop.f32.mrb[0].mxu0
        %v8506 = vadd.f32 0.0, %v8505
        %v8507 = vpop.f32.mrb[0].mxu0
        %8508 = vmatprep.mubr.bf16.mxu0 0
        %8509 = vmatmul.mubr.bf16.gmra.mrb[0].mxu0 %v7961
        %v8510 = vpop.f32.mrb[0].mxu0
        %v8511 = vadd.f32 0.0, %v8510
        %v8512 = vpop.f32.mrb[0].mxu0
        %v8513 = vpop.f32.mrb[0].mxu0
        %v8514 = vadd.f32 0.0, %v8513
        %v8515 = vpop.f32.mrb[0].mxu0
        %8516 = vmatprep.mubr.bf16.mxu0 0
        %8517 = vmatmul.mubr.bf16.gmra.mrb[0].mxu0 %v7964
        %v8518 = vpop.f32.mrb[0].mxu0
        %v8519 = vadd.f32 0.0, %v8518
        %v8520 = vpop.f32.mrb[0].mxu0
        %v8521 = vpop.f32.mrb[0].mxu0
        %v8522 = vadd.f32 0.0, %v8521
        %v8523 = vpop.f32.mrb[0].mxu0
        %8524 = vmatprep.mubr.bf16.mxu0 0
        %8525 = vmatmul.mubr.bf16.gmra.mrb[0].mxu0 %v7967
        %v8526 = vpop.f32.mrb[0].mxu0
        %v8527 = vadd.f32 0.0, %v8526
        %v8528 = vpop.f32.mrb[0].mxu0
        %v8529 = vpop.f32.mrb[0].mxu0
        %v8530 = vadd.f32 0.0, %v8529
        %v8531 = vpop.f32.mrb[0].mxu0
        %8532 = vdwg.mxu0
        %v8533 = vadd.f32 %v7439, %v8007
        %v8534 = vadd.f32 %v7440, %v8010
        %v8535 = vadd.f32 %v7441, %v8015
        %v8536 = vadd.f32 %v7442, %v8018
        %v8537 = vadd.f32 %v7443, %v8023
        %v8538 = vadd.f32 %v7444, %v8026
        %v8539 = vadd.f32 %v7445, %v8031
        %v8540 = vadd.f32 %v7446, %v8034
        %v8541 = vadd.f32 %v7447, %v8039
        %v8542 = vadd.f32 %v7448, %v8042
        %v8543 = vadd.f32 %v7449, %v8047
        %v8544 = vadd.f32 %v7450, %v8050
        %v8545 = vadd.f32 %v7451, %v8055
        %v8546 = vadd.f32 %v7452, %v8058
        %v8547 = vadd.f32 %v7453, %v8063
        %v8548 = vadd.f32 %v7454, %v8066
        %v8549 = vadd.f32 %v7455, %v8071
        %v8550 = vadd.f32 %v7456, %v8074
        %v8551 = vadd.f32 %v7457, %v8079
        %v8552 = vadd.f32 %v7458, %v8082
        %v8553 = vadd.f32 %v7459, %v8087
        %v8554 = vadd.f32 %v7460, %v8090
        %v8555 = vadd.f32 %v7461, %v8095
        %v8556 = vadd.f32 %v7462, %v8098
        %v8557 = vadd.f32 %v7463, %v8103
        %v8558 = vadd.f32 %v7464, %v8106
        %v8559 = vadd.f32 %v7465, %v8111
        %v8560 = vadd.f32 %v7466, %v8114
        %v8561 = vadd.f32 %v7467, %v8119
        %v8562 = vadd.f32 %v7468, %v8122
        %v8563 = vadd.f32 %v7469, %v8127
        %v8564 = vadd.f32 %v7470, %v8130
        %v8565 = vadd.f32 %v7471, %v8135
        %v8566 = vadd.f32 %v7472, %v8138
        %v8567 = vadd.f32 %v7473, %v8143
        %v8568 = vadd.f32 %v7474, %v8146
        %v8569 = vadd.f32 %v7475, %v8151
        %v8570 = vadd.f32 %v7476, %v8154
        %v8571 = vadd.f32 %v7477, %v8159
        %v8572 = vadd.f32 %v7478, %v8162
        %v8573 = vadd.f32 %v7479, %v8167
        %v8574 = vadd.f32 %v7480, %v8170
        %v8575 = vadd.f32 %v7481, %v8175
        %v8576 = vadd.f32 %v7482, %v8178
        %v8577 = vadd.f32 %v7483, %v8183
        %v8578 = vadd.f32 %v7484, %v8186
        %v8579 = vadd.f32 %v7485, %v8191
        %v8580 = vadd.f32 %v7486, %v8194
        %v8581 = vadd.f32 %v7487, %v8199
        %v8582 = vadd.f32 %v7488, %v8202
        %v8583 = vadd.f32 %v7489, %v8207
        %v8584 = vadd.f32 %v7490, %v8210
        %v8585 = vadd.f32 %v7491, %v8215
        %v8586 = vadd.f32 %v7492, %v8218
        %v8587 = vadd.f32 %v7493, %v8223
        %v8588 = vadd.f32 %v7494, %v8226
        %v8589 = vadd.f32 %v7495, %v8231
        %v8590 = vadd.f32 %v7496, %v8234
        %v8591 = vadd.f32 %v7497, %v8239
        %v8592 = vadd.f32 %v7498, %v8242
        %v8593 = vadd.f32 %v7499, %v8247
        %v8594 = vadd.f32 %v7500, %v8250
        %v8595 = vadd.f32 %v7501, %v8255
        %v8596 = vadd.f32 %v7502, %v8258
        %v8597 = vadd.f32 %v7503, %v8263
        %v8598 = vadd.f32 %v7504, %v8266
        %v8599 = vadd.f32 %v7505, %v8271
        %v8600 = vadd.f32 %v7506, %v8274
        %v8601 = vadd.f32 %v7507, %v8279
        %v8602 = vadd.f32 %v7508, %v8282
        %v8603 = vadd.f32 %v7509, %v8287
        %v8604 = vadd.f32 %v7510, %v8290
        %v8605 = vadd.f32 %v7511, %v8295
        %v8606 = vadd.f32 %v7512, %v8298
        %v8607 = vadd.f32 %v7513, %v8303
        %v8608 = vadd.f32 %v7514, %v8306
        %v8609 = vadd.f32 %v7515, %v8311
        %v8610 = vadd.f32 %v7516, %v8314
        %v8611 = vadd.f32 %v7517, %v8319
        %v8612 = vadd.f32 %v7518, %v8322
        %v8613 = vadd.f32 %v7519, %v8327
        %v8614 = vadd.f32 %v7520, %v8330
        %v8615 = vadd.f32 %v7521, %v8335
        %v8616 = vadd.f32 %v7522, %v8338
        %v8617 = vadd.f32 %v7523, %v8343
        %v8618 = vadd.f32 %v7524, %v8346
        %v8619 = vadd.f32 %v7525, %v8351
        %v8620 = vadd.f32 %v7526, %v8354
        %v8621 = vadd.f32 %v7527, %v8359
        %v8622 = vadd.f32 %v7528, %v8362
        %v8623 = vadd.f32 %v7529, %v8367
        %v8624 = vadd.f32 %v7530, %v8370
        %v8625 = vadd.f32 %v7531, %v8375
        %v8626 = vadd.f32 %v7532, %v8378
        %v8627 = vadd.f32 %v7533, %v8383
        %v8628 = vadd.f32 %v7534, %v8386
        %v8629 = vadd.f32 %v7535, %v8391
        %v8630 = vadd.f32 %v7536, %v8394
        %v8631 = vadd.f32 %v7537, %v8399
        %v8632 = vadd.f32 %v7538, %v8402
        %v8633 = vadd.f32 %v7539, %v8407
        %v8634 = vadd.f32 %v7540, %v8410
        %v8635 = vadd.f32 %v7541, %v8415
        %v8636 = vadd.f32 %v7542, %v8418
        %v8637 = vadd.f32 %v7543, %v8423
        %v8638 = vadd.f32 %v7544, %v8426
        %v8639 = vadd.f32 %v7545, %v8431
        %v8640 = vadd.f32 %v7546, %v8434
        %v8641 = vadd.f32 %v7547, %v8439
        %v8642 = vadd.f32 %v7548, %v8442
        %v8643 = vadd.f32 %v7549, %v8447
        %v8644 = vadd.f32 %v7550, %v8450
        %v8645 = vadd.f32 %v7551, %v8455
        %v8646 = vadd.f32 %v7552, %v8458
        %v8647 = vadd.f32 %v7553, %v8463
        %v8648 = vadd.f32 %v7554, %v8466
        %v8649 = vadd.f32 %v7555, %v8471
        %v8650 = vadd.f32 %v7556, %v8474
        %v8651 = vadd.f32 %v7557, %v8479
        %v8652 = vadd.f32 %v7558, %v8482
        %v8653 = vadd.f32 %v7559, %v8487
        %v8654 = vadd.f32 %v7560, %v8490
        %v8655 = vadd.f32 %v7561, %v8495
        %v8656 = vadd.f32 %v7562, %v8498
        %v8657 = vadd.f32 %v7563, %v8503
        %v8658 = vadd.f32 %v7564, %v8506
        %v8659 = vadd.f32 %v7565, %v8511
        %v8660 = vadd.f32 %v7566, %v8514
        %v8661 = vadd.f32 %v7567, %v8519
        %v8662 = vadd.f32 %v7568, %v8522
        %v8663 = vadd.f32 %v7569, %v8527
        %v8664 = vadd.f32 %v7570, %v8530
        %v8665 = vld [vmem:[%s168 + $0x22] sm:$0xff]
        %v8666 = vld [vmem:[%s168 + $0x2a] sm:$0xff]
        %v8667 = vld [vmem:[%s168 + $0x32] sm:$0xff]
        %v8668 = vld [vmem:[%s168 + $0x3a] sm:$0xff]
        %v8669 = vld [vmem:[%s168 + $0x42] sm:$0xff]
        %v8670 = vld [vmem:[%s168 + $0x4a] sm:$0xff]
        %v8671 = vld [vmem:[%s168 + $0x52] sm:$0xff]
        %v8672 = vld [vmem:[%s168 + $0x5a] sm:$0xff]
        %v8673 = vld [vmem:[%s168 + $0x62] sm:$0xff]
        %v8674 = vld [vmem:[%s168 + $0x6a] sm:$0xff]
        %v8675 = vld [vmem:[%s168 + $0x72] sm:$0xff]
        %v8676 = vld [vmem:[%s168 + $0x7a] sm:$0xff]
        %v8677 = vld [vmem:[%s168 + $0x82] sm:$0xff]
        %v8678 = vld [vmem:[%s168 + $0x8a] sm:$0xff]
        %v8679 = vld [vmem:[%s168 + $0x92] sm:$0xff]
        %v8680 = vld [vmem:[%s168 + $0x9a] sm:$0xff]
        %v8681 = vld [vmem:[%s168 + $0xa2] sm:$0xff]
        %v8682 = vld [vmem:[%s168 + $0xaa] sm:$0xff]
        %v8683 = vld [vmem:[%s168 + $0xb2] sm:$0xff]
        %v8684 = vld [vmem:[%s168 + $0xba] sm:$0xff]
        %v8685 = vld [vmem:[%s168 + $0xc2] sm:$0xff]
        %v8686 = vld [vmem:[%s168 + $0xca] sm:$0xff]
        %v8687 = vld [vmem:[%s168 + $0xd2] sm:$0xff]
        %v8688 = vld [vmem:[%s168 + $0xda] sm:$0xff]
        %v8689 = vld [vmem:[%s168 + $0xe2] sm:$0xff]
        %v8690 = vld [vmem:[%s168 + $0xea] sm:$0xff]
        %v8691 = vld [vmem:[%s168 + $0xf2] sm:$0xff]
        %v8692 = vld [vmem:[%s168 + $0xfa] sm:$0xff]
        %v8693 = vld [vmem:[%s168 + $0x102] sm:$0xff]
        %v8694 = vld [vmem:[%s168 + $0x10a] sm:$0xff]
        %v8695 = vld [vmem:[%s168 + $0x112] sm:$0xff]
        %v8696 = vld [vmem:[%s168 + $0x11a] sm:$0xff]
        %v8697 = vld [vmem:[%s168 + $0x122] sm:$0xff]
        %v8698 = vld [vmem:[%s168 + $0x12a] sm:$0xff]
        %v8699 = vld [vmem:[%s168 + $0x132] sm:$0xff]
        %v8700 = vld [vmem:[%s168 + $0x13a] sm:$0xff]
        %v8701 = vld [vmem:[%s168 + $0x142] sm:$0xff]
        %v8702 = vld [vmem:[%s168 + $0x14a] sm:$0xff]
        %v8703 = vld [vmem:[%s168 + $0x152] sm:$0xff]
        %v8704 = vld [vmem:[%s168 + $0x15a] sm:$0xff]
        %v8705 = vld [vmem:[%s168 + $0x162] sm:$0xff]
        %v8706 = vld [vmem:[%s168 + $0x16a] sm:$0xff]
        %v8707 = vld [vmem:[%s168 + $0x172] sm:$0xff]
        %v8708 = vld [vmem:[%s168 + $0x17a] sm:$0xff]
        %v8709 = vld [vmem:[%s168 + $0x182] sm:$0xff]
        %v8710 = vld [vmem:[%s168 + $0x18a] sm:$0xff]
        %v8711 = vld [vmem:[%s168 + $0x192] sm:$0xff]
        %v8712 = vld [vmem:[%s168 + $0x19a] sm:$0xff]
        %v8713 = vld [vmem:[%s168 + $0x1a2] sm:$0xff]
        %v8714 = vld [vmem:[%s168 + $0x1aa] sm:$0xff]
        %v8715 = vld [vmem:[%s168 + $0x1b2] sm:$0xff]
        %v8716 = vld [vmem:[%s168 + $0x1ba] sm:$0xff]
        %v8717 = vld [vmem:[%s168 + $0x1c2] sm:$0xff]
        %v8718 = vld [vmem:[%s168 + $0x1ca] sm:$0xff]
        %v8719 = vld [vmem:[%s168 + $0x1d2] sm:$0xff]
        %v8720 = vld [vmem:[%s168 + $0x1da] sm:$0xff]
        %v8721 = vld [vmem:[%s168 + $0x1e2] sm:$0xff]
        %v8722 = vld [vmem:[%s168 + $0x1ea] sm:$0xff]
        %v8723 = vld [vmem:[%s168 + $0x1f2] sm:$0xff]
        %v8724 = vld [vmem:[%s168 + $0x1fa] sm:$0xff]
        %v8725 = vld [vmem:[%s168 + $0x202] sm:$0xff]
        %v8726 = vld [vmem:[%s168 + $0x20a] sm:$0xff]
        %v8727 = vld [vmem:[%s168 + $0x212] sm:$0xff]
        %v8728 = vld [vmem:[%s168 + $0x21a] sm:$0xff]
        %v8729 = vld [vmem:[%s168 + $0x222] sm:$0xff]
        %v8730 = vld [vmem:[%s168 + $0x22a] sm:$0xff]
        %v8731 = vld [vmem:[%s168 + $0x232] sm:$0xff]
        %v8732 = vld [vmem:[%s168 + $0x23a] sm:$0xff]
        %v8733 = vld [vmem:[%s168 + $0x242] sm:$0xff]
        %v8734 = vld [vmem:[%s168 + $0x24a] sm:$0xff]
        %v8735 = vld [vmem:[%s168 + $0x252] sm:$0xff]
        %v8736 = vld [vmem:[%s168 + $0x25a] sm:$0xff]
        %v8737 = vld [vmem:[%s168 + $0x262] sm:$0xff]
        %v8738 = vld [vmem:[%s168 + $0x26a] sm:$0xff]
        %v8739 = vld [vmem:[%s168 + $0x272] sm:$0xff]
        %v8740 = vld [vmem:[%s168 + $0x27a] sm:$0xff]
        %v8741 = vld [vmem:[%s168 + $0x282] sm:$0xff]
        %v8742 = vld [vmem:[%s168 + $0x28a] sm:$0xff]
        %v8743 = vld [vmem:[%s168 + $0x292] sm:$0xff]
        %v8744 = vld [vmem:[%s168 + $0x29a] sm:$0xff]
        %v8745 = vld [vmem:[%s168 + $0x2a2] sm:$0xff]
        %v8746 = vld [vmem:[%s168 + $0x2aa] sm:$0xff]
        %v8747 = vld [vmem:[%s168 + $0x2b2] sm:$0xff]
        %v8748 = vld [vmem:[%s168 + $0x2ba] sm:$0xff]
        %v8749 = vld [vmem:[%s168 + $0x2c2] sm:$0xff]
        %v8750 = vld [vmem:[%s168 + $0x2ca] sm:$0xff]
        %v8751 = vld [vmem:[%s168 + $0x2d2] sm:$0xff]
        %v8752 = vld [vmem:[%s168 + $0x2da] sm:$0xff]
        %v8753 = vld [vmem:[%s168 + $0x2e2] sm:$0xff]
        %v8754 = vld [vmem:[%s168 + $0x2ea] sm:$0xff]
        %v8755 = vld [vmem:[%s168 + $0x2f2] sm:$0xff]
        %v8756 = vld [vmem:[%s168 + $0x2fa] sm:$0xff]
        %v8757 = vld [vmem:[%s168 + $0x302] sm:$0xff]
        %v8758 = vld [vmem:[%s168 + $0x30a] sm:$0xff]
        %v8759 = vld [vmem:[%s168 + $0x312] sm:$0xff]
        %v8760 = vld [vmem:[%s168 + $0x31a] sm:$0xff]
        %v8761 = vld [vmem:[%s168 + $0x322] sm:$0xff]
        %v8762 = vld [vmem:[%s168 + $0x32a] sm:$0xff]
        %v8763 = vld [vmem:[%s168 + $0x332] sm:$0xff]
        %v8764 = vld [vmem:[%s168 + $0x33a] sm:$0xff]
        %v8765 = vld [vmem:[%s168 + $0x342] sm:$0xff]
        %v8766 = vld [vmem:[%s168 + $0x34a] sm:$0xff]
        %v8767 = vld [vmem:[%s168 + $0x352] sm:$0xff]
        %v8768 = vld [vmem:[%s168 + $0x35a] sm:$0xff]
        %v8769 = vld [vmem:[%s168 + $0x362] sm:$0xff]
        %v8770 = vld [vmem:[%s168 + $0x36a] sm:$0xff]
        %v8771 = vld [vmem:[%s168 + $0x372] sm:$0xff]
        %v8772 = vld [vmem:[%s168 + $0x37a] sm:$0xff]
        %v8773 = vld [vmem:[%s168 + $0x382] sm:$0xff]
        %v8774 = vld [vmem:[%s168 + $0x38a] sm:$0xff]
        %v8775 = vld [vmem:[%s168 + $0x392] sm:$0xff]
        %v8776 = vld [vmem:[%s168 + $0x39a] sm:$0xff]
        %v8777 = vld [vmem:[%s168 + $0x3a2] sm:$0xff]
        %v8778 = vld [vmem:[%s168 + $0x3aa] sm:$0xff]
        %v8779 = vld [vmem:[%s168 + $0x3b2] sm:$0xff]
        %v8780 = vld [vmem:[%s168 + $0x3ba] sm:$0xff]
        %v8781 = vld [vmem:[%s168 + $0x3c2] sm:$0xff]
        %v8782 = vld [vmem:[%s168 + $0x3ca] sm:$0xff]
        %v8783 = vld [vmem:[%s168 + $0x3d2] sm:$0xff]
        %v8784 = vld [vmem:[%s168 + $0x3da] sm:$0xff]
        %v8785 = vld [vmem:[%s168 + $0x3e2] sm:$0xff]
        %v8786 = vld [vmem:[%s168 + $0x3ea] sm:$0xff]
        %v8787 = vld [vmem:[%s168 + $0x3f2] sm:$0xff]
        %v8788 = vld [vmem:[%s168 + $0x3fa] sm:$0xff]
        %v8789 = vld [vmem:[%s168 + $0x402] sm:$0xff]
        %v8790 = vld [vmem:[%s168 + $0x40a] sm:$0xff]
        %v8791 = vld [vmem:[%s168 + $0x412] sm:$0xff]
        %v8792 = vld [vmem:[%s168 + $0x41a] sm:$0xff]
        %v8793 = vld [vmem:[%s168 + $0x422] sm:$0xff]
        %v8794 = vld [vmem:[%s168 + $0x42a] sm:$0xff]
        %v8795 = vld [vmem:[%s168 + $0x432] sm:$0xff]
        %v8796 = vld [vmem:[%s168 + $0x43a] sm:$0xff]
        %v8797 = vpack.c.bf16 %v8666, %v8665
        %v8798 = vpack.c.bf16 %v8668, %v8667
        %v8799 = vpack.c.bf16 %v8670, %v8669
        %v8800 = vpack.c.bf16 %v8672, %v8671
        %v8801 = vpack.c.bf16 %v8674, %v8673
        %v8802 = vpack.c.bf16 %v8676, %v8675
        %v8803 = vpack.c.bf16 %v8678, %v8677
        %v8804 = vpack.c.bf16 %v8680, %v8679
        %v8805 = vpack.c.bf16 %v8682, %v8681
        %v8806 = vpack.c.bf16 %v8684, %v8683
        %v8807 = vpack.c.bf16 %v8686, %v8685
        %v8808 = vpack.c.bf16 %v8688, %v8687
        %v8809 = vpack.c.bf16 %v8690, %v8689
        %v8810 = vpack.c.bf16 %v8692, %v8691
        %v8811 = vpack.c.bf16 %v8694, %v8693
        %v8812 = vpack.c.bf16 %v8696, %v8695
        %v8813 = vpack.c.bf16 %v8698, %v8697
        %v8814 = vpack.c.bf16 %v8700, %v8699
        %v8815 = vpack.c.bf16 %v8702, %v8701
        %v8816 = vpack.c.bf16 %v8704, %v8703
        %v8817 = vpack.c.bf16 %v8706, %v8705
        %v8818 = vpack.c.bf16 %v8708, %v8707
        %v8819 = vpack.c.bf16 %v8710, %v8709
        %v8820 = vpack.c.bf16 %v8712, %v8711
        %v8821 = vpack.c.bf16 %v8714, %v8713
        %v8822 = vpack.c.bf16 %v8716, %v8715
        %v8823 = vpack.c.bf16 %v8718, %v8717
        %v8824 = vpack.c.bf16 %v8720, %v8719
        %v8825 = vpack.c.bf16 %v8722, %v8721
        %v8826 = vpack.c.bf16 %v8724, %v8723
        %v8827 = vpack.c.bf16 %v8726, %v8725
        %v8828 = vpack.c.bf16 %v8728, %v8727
        %v8829 = vpack.c.bf16 %v8730, %v8729
        %v8830 = vpack.c.bf16 %v8732, %v8731
        %v8831 = vpack.c.bf16 %v8734, %v8733
        %v8832 = vpack.c.bf16 %v8736, %v8735
        %v8833 = vpack.c.bf16 %v8738, %v8737
        %v8834 = vpack.c.bf16 %v8740, %v8739
        %v8835 = vpack.c.bf16 %v8742, %v8741
        %v8836 = vpack.c.bf16 %v8744, %v8743
        %v8837 = vpack.c.bf16 %v8746, %v8745
        %v8838 = vpack.c.bf16 %v8748, %v8747
        %v8839 = vpack.c.bf16 %v8750, %v8749
        %v8840 = vpack.c.bf16 %v8752, %v8751
        %v8841 = vpack.c.bf16 %v8754, %v8753
        %v8842 = vpack.c.bf16 %v8756, %v8755
        %v8843 = vpack.c.bf16 %v8758, %v8757
        %v8844 = vpack.c.bf16 %v8760, %v8759
        %v8845 = vpack.c.bf16 %v8762, %v8761
        %v8846 = vpack.c.bf16 %v8764, %v8763
        %v8847 = vpack.c.bf16 %v8766, %v8765
        %v8848 = vpack.c.bf16 %v8768, %v8767
        %v8849 = vpack.c.bf16 %v8770, %v8769
        %v8850 = vpack.c.bf16 %v8772, %v8771
        %v8851 = vpack.c.bf16 %v8774, %v8773
        %v8852 = vpack.c.bf16 %v8776, %v8775
        %v8853 = vpack.c.bf16 %v8778, %v8777
        %v8854 = vpack.c.bf16 %v8780, %v8779
        %v8855 = vpack.c.bf16 %v8782, %v8781
        %v8856 = vpack.c.bf16 %v8784, %v8783
        %v8857 = vpack.c.bf16 %v8786, %v8785
        %v8858 = vpack.c.bf16 %v8788, %v8787
        %v8859 = vpack.c.bf16 %v8790, %v8789
        %v8860 = vpack.c.bf16 %v8792, %v8791
        %v8861 = vpack.c.bf16 %v8794, %v8793
        %v8862 = vpack.c.bf16 %v8796, %v8795
        %s8863 = scalar_lea.vmem %s1, 16
        %v8864 = vld [vmem:[%s8863] sm:$0x3]
        %v8866 = vsel %vm570, %v8797, 0
        %v8869 = vsel %vm570, %v8798, 0
        %v8872 = vsel %vm570, %v8799, 0
        %v8875 = vsel %vm570, %v8800, 0
        %v8878 = vsel %vm570, %v8801, 0
        %v8881 = vsel %vm570, %v8802, 0
        %v8884 = vsel %vm570, %v8803, 0
        %v8887 = vsel %vm570, %v8804, 0
        %v8890 = vsel %vm570, %v8805, 0
        %v8893 = vsel %vm570, %v8806, 0
        %v8896 = vsel %vm570, %v8807, 0
        %v8899 = vsel %vm570, %v8808, 0
        %v8902 = vsel %vm570, %v8809, 0
        %v8905 = vsel %vm570, %v8810, 0
        %v8908 = vsel %vm570, %v8811, 0
        %v8911 = vsel %vm570, %v8812, 0
        %v8914 = vsel %vm570, %v8813, 0
        %v8917 = vsel %vm570, %v8814, 0
        %v8920 = vsel %vm570, %v8815, 0
        %v8923 = vsel %vm570, %v8816, 0
        %v8926 = vsel %vm570, %v8817, 0
        %v8929 = vsel %vm570, %v8818, 0
        %v8932 = vsel %vm570, %v8819, 0
        %v8935 = vsel %vm570, %v8820, 0
        %v8938 = vsel %vm570, %v8821, 0
        %v8941 = vsel %vm570, %v8822, 0
        %v8944 = vsel %vm570, %v8823, 0
        %v8947 = vsel %vm570, %v8824, 0
        %v8950 = vsel %vm570, %v8825, 0
        %v8953 = vsel %vm570, %v8826, 0
        %v8956 = vsel %vm570, %v8827, 0
        %v8959 = vsel %vm570, %v8828, 0
        %v8962 = vsel %vm570, %v8829, 0
        %v8965 = vsel %vm570, %v8830, 0
        %v8968 = vsel %vm570, %v8831, 0
        %v8971 = vsel %vm570, %v8832, 0
        %v8974 = vsel %vm570, %v8833, 0
        %v8977 = vsel %vm570, %v8834, 0
        %v8980 = vsel %vm570, %v8835, 0
        %v8983 = vsel %vm570, %v8836, 0
        %v8986 = vsel %vm570, %v8837, 0
        %v8989 = vsel %vm570, %v8838, 0
        %v8992 = vsel %vm570, %v8839, 0
        %v8995 = vsel %vm570, %v8840, 0
        %v8998 = vsel %vm570, %v8841, 0
        %v9001 = vsel %vm570, %v8842, 0
        %v9004 = vsel %vm570, %v8843, 0
        %v9007 = vsel %vm570, %v8844, 0
        %v9010 = vsel %vm570, %v8845, 0
        %v9013 = vsel %vm570, %v8846, 0
        %v9016 = vsel %vm570, %v8847, 0
        %v9019 = vsel %vm570, %v8848, 0
        %v9022 = vsel %vm570, %v8849, 0
        %v9025 = vsel %vm570, %v8850, 0
        %v9028 = vsel %vm570, %v8851, 0
        %v9031 = vsel %vm570, %v8852, 0
        %v9034 = vsel %vm570, %v8853, 0
        %v9037 = vsel %vm570, %v8854, 0
        %v9040 = vsel %vm570, %v8855, 0
        %v9043 = vsel %vm570, %v8856, 0
        %v9046 = vsel %vm570, %v8857, 0
        %v9049 = vsel %vm570, %v8858, 0
        %v9052 = vsel %vm570, %v8859, 0
        %v9055 = vsel %vm570, %v8860, 0
        %v9058 = vsel %vm570, %v8861, 0
        %v9061 = vsel %vm570, %v8862, 0
        %v9064 = vand.u32 %v8864, %v772
        %9066 = vmatprep.subr.bf16.mxu0 0
        %9067 = vmatpush1.bf16.msra.mxu0 %v9064
        %9068 = vmatprep.subr.bf16.mxu0 0
        %9069 = vmatpush1.bf16.msra.mxu0 0
        %9070 = vmatprep.subr.bf16.mxu0 0
        %9071 = vmatpush1.bf16.msra.mxu0 0
        %9072 = vmatprep.subr.bf16.mxu0 0
        %9073 = vmatpush1.bf16.msra.mxu0 0
        %9074 = vmatprep.subr.bf16.mxu0 0
        %9075 = vmatpush1.bf16.msra.mxu0 0
        %9076 = vmatprep.subr.bf16.mxu0 0
        %9077 = vmatpush1.bf16.msra.mxu0 0
        %9078 = vmatprep.subr.bf16.mxu0 0
        %9079 = vmatpush1.bf16.msra.mxu0 0
        %9080 = vmatprep.subr.bf16.mxu0 0
        %9081 = vmatpush1.bf16.msra.mxu0 0
        %9082 = vmatprep.subr.bf16.mxu0 0
        %9083 = vmatpush1.bf16.msra.mxu0 0
        %9084 = vmatprep.subr.bf16.mxu0 0
        %9085 = vmatpush1.bf16.msra.mxu0 0
        %9086 = vmatprep.subr.bf16.mxu0 0
        %9087 = vmatpush1.bf16.msra.mxu0 0
        %9088 = vmatprep.subr.bf16.mxu0 0
        %9089 = vmatpush1.bf16.msra.mxu0 0
        %9090 = vmatprep.subr.bf16.mxu0 0
        %9091 = vmatpush1.bf16.msra.mxu0 0
        %9092 = vmatprep.subr.bf16.mxu0 0
        %9093 = vmatpush1.bf16.msra.mxu0 0
        %9094 = vmatprep.subr.bf16.mxu0 0
        %9095 = vmatpush1.bf16.msra.mxu0 0
        %9096 = vmatprep.subr.bf16.mxu0 0
        %9097 = vmatpush1.bf16.msra.mxu0 0
        %9098 = vmatprep.mubr.bf16.mxu0 0
        %9099 = vmatmul.mubr.bf16.gmra.mrb[0].mxu0 %v8866
        %v9100 = vpop.f32.mrb[0].mxu0
        %v9101 = vadd.f32 0.0, %v9100
        %v9102 = vpop.f32.mrb[0].mxu0
        %v9103 = vpop.f32.mrb[0].mxu0
        %v9104 = vadd.f32 0.0, %v9103
        %v9105 = vpop.f32.mrb[0].mxu0
        %9106 = vmatprep.mubr.bf16.mxu0 0
        %9107 = vmatmul.mubr.bf16.gmra.mrb[0].mxu0 %v8869
        %v9108 = vpop.f32.mrb[0].mxu0
        %v9109 = vadd.f32 0.0, %v9108
        %v9110 = vpop.f32.mrb[0].mxu0
        %v9111 = vpop.f32.mrb[0].mxu0
        %v9112 = vadd.f32 0.0, %v9111
        %v9113 = vpop.f32.mrb[0].mxu0
        %9114 = vmatprep.mubr.bf16.mxu0 0
        %9115 = vmatmul.mubr.bf16.gmra.mrb[0].mxu0 %v8872
        %v9116 = vpop.f32.mrb[0].mxu0
        %v9117 = vadd.f32 0.0, %v9116
        %v9118 = vpop.f32.mrb[0].mxu0
        %v9119 = vpop.f32.mrb[0].mxu0
        %v9120 = vadd.f32 0.0, %v9119
        %v9121 = vpop.f32.mrb[0].mxu0
        %9122 = vmatprep.mubr.bf16.mxu0 0
        %9123 = vmatmul.mubr.bf16.gmra.mrb[0].mxu0 %v8875
        %v9124 = vpop.f32.mrb[0].mxu0
        %v9125 = vadd.f32 0.0, %v9124
        %v9126 = vpop.f32.mrb[0].mxu0
        %v9127 = vpop.f32.mrb[0].mxu0
        %v9128 = vadd.f32 0.0, %v9127
        %v9129 = vpop.f32.mrb[0].mxu0
        %9130 = vmatprep.mubr.bf16.mxu0 0
        %9131 = vmatmul.mubr.bf16.gmra.mrb[0].mxu0 %v8878
        %v9132 = vpop.f32.mrb[0].mxu0
        %v9133 = vadd.f32 0.0, %v9132
        %v9134 = vpop.f32.mrb[0].mxu0
        %v9135 = vpop.f32.mrb[0].mxu0
        %v9136 = vadd.f32 0.0, %v9135
        %v9137 = vpop.f32.mrb[0].mxu0
        %9138 = vmatprep.mubr.bf16.mxu0 0
        %9139 = vmatmul.mubr.bf16.gmra.mrb[0].mxu0 %v8881
        %v9140 = vpop.f32.mrb[0].mxu0
        %v9141 = vadd.f32 0.0, %v9140
        %v9142 = vpop.f32.mrb[0].mxu0
        %v9143 = vpop.f32.mrb[0].mxu0
        %v9144 = vadd.f32 0.0, %v9143
        %v9145 = vpop.f32.mrb[0].mxu0
        %9146 = vmatprep.mubr.bf16.mxu0 0
        %9147 = vmatmul.mubr.bf16.gmra.mrb[0].mxu0 %v8884
        %v9148 = vpop.f32.mrb[0].mxu0
        %v9149 = vadd.f32 0.0, %v9148
        %v9150 = vpop.f32.mrb[0].mxu0
        %v9151 = vpop.f32.mrb[0].mxu0
        %v9152 = vadd.f32 0.0, %v9151
        %v9153 = vpop.f32.mrb[0].mxu0
        %9154 = vmatprep.mubr.bf16.mxu0 0
        %9155 = vmatmul.mubr.bf16.gmra.mrb[0].mxu0 %v8887
        %v9156 = vpop.f32.mrb[0].mxu0
        %v9157 = vadd.f32 0.0, %v9156
        %v9158 = vpop.f32.mrb[0].mxu0
        %v9159 = vpop.f32.mrb[0].mxu0
        %v9160 = vadd.f32 0.0, %v9159
        %v9161 = vpop.f32.mrb[0].mxu0
        %9162 = vmatprep.mubr.bf16.mxu0 0
        %9163 = vmatmul.mubr.bf16.gmra.mrb[0].mxu0 %v8890
        %v9164 = vpop.f32.mrb[0].mxu0
        %v9165 = vadd.f32 0.0, %v9164
        %v9166 = vpop.f32.mrb[0].mxu0
        %v9167 = vpop.f32.mrb[0].mxu0
        %v9168 = vadd.f32 0.0, %v9167
        %v9169 = vpop.f32.mrb[0].mxu0
        %9170 = vmatprep.mubr.bf16.mxu0 0
        %9171 = vmatmul.mubr.bf16.gmra.mrb[0].mxu0 %v8893
        %v9172 = vpop.f32.mrb[0].mxu0
        %v9173 = vadd.f32 0.0, %v9172
        %v9174 = vpop.f32.mrb[0].mxu0
        %v9175 = vpop.f32.mrb[0].mxu0
        %v9176 = vadd.f32 0.0, %v9175
        %v9177 = vpop.f32.mrb[0].mxu0
        %9178 = vmatprep.mubr.bf16.mxu0 0
        %9179 = vmatmul.mubr.bf16.gmra.mrb[0].mxu0 %v8896
        %v9180 = vpop.f32.mrb[0].mxu0
        %v9181 = vadd.f32 0.0, %v9180
        %v9182 = vpop.f32.mrb[0].mxu0
        %v9183 = vpop.f32.mrb[0].mxu0
        %v9184 = vadd.f32 0.0, %v9183
        %v9185 = vpop.f32.mrb[0].mxu0
        %9186 = vmatprep.mubr.bf16.mxu0 0
        %9187 = vmatmul.mubr.bf16.gmra.mrb[0].mxu0 %v8899
        %v9188 = vpop.f32.mrb[0].mxu0
        %v9189 = vadd.f32 0.0, %v9188
        %v9190 = vpop.f32.mrb[0].mxu0
        %v9191 = vpop.f32.mrb[0].mxu0
        %v9192 = vadd.f32 0.0, %v9191
        %v9193 = vpop.f32.mrb[0].mxu0
        %9194 = vmatprep.mubr.bf16.mxu0 0
        %9195 = vmatmul.mubr.bf16.gmra.mrb[0].mxu0 %v8902
        %v9196 = vpop.f32.mrb[0].mxu0
        %v9197 = vadd.f32 0.0, %v9196
        %v9198 = vpop.f32.mrb[0].mxu0
        %v9199 = vpop.f32.mrb[0].mxu0
        %v9200 = vadd.f32 0.0, %v9199
        %v9201 = vpop.f32.mrb[0].mxu0
        %9202 = vmatprep.mubr.bf16.mxu0 0
        %9203 = vmatmul.mubr.bf16.gmra.mrb[0].mxu0 %v8905
        %v9204 = vpop.f32.mrb[0].mxu0
        %v9205 = vadd.f32 0.0, %v9204
        %v9206 = vpop.f32.mrb[0].mxu0
        %v9207 = vpop.f32.mrb[0].mxu0
        %v9208 = vadd.f32 0.0, %v9207
        %v9209 = vpop.f32.mrb[0].mxu0
        %9210 = vmatprep.mubr.bf16.mxu0 0
        %9211 = vmatmul.mubr.bf16.gmra.mrb[0].mxu0 %v8908
        %v9212 = vpop.f32.mrb[0].mxu0
        %v9213 = vadd.f32 0.0, %v9212
        %v9214 = vpop.f32.mrb[0].mxu0
        %v9215 = vpop.f32.mrb[0].mxu0
        %v9216 = vadd.f32 0.0, %v9215
        %v9217 = vpop.f32.mrb[0].mxu0
        %9218 = vmatprep.mubr.bf16.mxu0 0
        %9219 = vmatmul.mubr.bf16.gmra.mrb[0].mxu0 %v8911
        %v9220 = vpop.f32.mrb[0].mxu0
        %v9221 = vadd.f32 0.0, %v9220
        %v9222 = vpop.f32.mrb[0].mxu0
        %v9223 = vpop.f32.mrb[0].mxu0
        %v9224 = vadd.f32 0.0, %v9223
        %v9225 = vpop.f32.mrb[0].mxu0
        %9226 = vmatprep.mubr.bf16.mxu0 0
        %9227 = vmatmul.mubr.bf16.gmra.mrb[0].mxu0 %v8914
        %v9228 = vpop.f32.mrb[0].mxu0
        %v9229 = vadd.f32 0.0, %v9228
        %v9230 = vpop.f32.mrb[0].mxu0
        %v9231 = vpop.f32.mrb[0].mxu0
        %v9232 = vadd.f32 0.0, %v9231
        %v9233 = vpop.f32.mrb[0].mxu0
        %9234 = vmatprep.mubr.bf16.mxu0 0
        %9235 = vmatmul.mubr.bf16.gmra.mrb[0].mxu0 %v8917
        %v9236 = vpop.f32.mrb[0].mxu0
        %v9237 = vadd.f32 0.0, %v9236
        %v9238 = vpop.f32.mrb[0].mxu0
        %v9239 = vpop.f32.mrb[0].mxu0
        %v9240 = vadd.f32 0.0, %v9239
        %v9241 = vpop.f32.mrb[0].mxu0
        %9242 = vmatprep.mubr.bf16.mxu0 0
        %9243 = vmatmul.mubr.bf16.gmra.mrb[0].mxu0 %v8920
        %v9244 = vpop.f32.mrb[0].mxu0
        %v9245 = vadd.f32 0.0, %v9244
        %v9246 = vpop.f32.mrb[0].mxu0
        %v9247 = vpop.f32.mrb[0].mxu0
        %v9248 = vadd.f32 0.0, %v9247
        %v9249 = vpop.f32.mrb[0].mxu0
        %9250 = vmatprep.mubr.bf16.mxu0 0
        %9251 = vmatmul.mubr.bf16.gmra.mrb[0].mxu0 %v8923
        %v9252 = vpop.f32.mrb[0].mxu0
        %v9253 = vadd.f32 0.0, %v9252
        %v9254 = vpop.f32.mrb[0].mxu0
        %v9255 = vpop.f32.mrb[0].mxu0
        %v9256 = vadd.f32 0.0, %v9255
        %v9257 = vpop.f32.mrb[0].mxu0
        %9258 = vmatprep.mubr.bf16.mxu0 0
        %9259 = vmatmul.mubr.bf16.gmra.mrb[0].mxu0 %v8926
        %v9260 = vpop.f32.mrb[0].mxu0
        %v9261 = vadd.f32 0.0, %v9260
        %v9262 = vpop.f32.mrb[0].mxu0
        %v9263 = vpop.f32.mrb[0].mxu0
        %v9264 = vadd.f32 0.0, %v9263
        %v9265 = vpop.f32.mrb[0].mxu0
        %9266 = vmatprep.mubr.bf16.mxu0 0
        %9267 = vmatmul.mubr.bf16.gmra.mrb[0].mxu0 %v8929
        %v9268 = vpop.f32.mrb[0].mxu0
        %v9269 = vadd.f32 0.0, %v9268
        %v9270 = vpop.f32.mrb[0].mxu0
        %v9271 = vpop.f32.mrb[0].mxu0
        %v9272 = vadd.f32 0.0, %v9271
        %v9273 = vpop.f32.mrb[0].mxu0
        %9274 = vmatprep.mubr.bf16.mxu0 0
        %9275 = vmatmul.mubr.bf16.gmra.mrb[0].mxu0 %v8932
        %v9276 = vpop.f32.mrb[0].mxu0
        %v9277 = vadd.f32 0.0, %v9276
        %v9278 = vpop.f32.mrb[0].mxu0
        %v9279 = vpop.f32.mrb[0].mxu0
        %v9280 = vadd.f32 0.0, %v9279
        %v9281 = vpop.f32.mrb[0].mxu0
        %9282 = vmatprep.mubr.bf16.mxu0 0
        %9283 = vmatmul.mubr.bf16.gmra.mrb[0].mxu0 %v8935
        %v9284 = vpop.f32.mrb[0].mxu0
        %v9285 = vadd.f32 0.0, %v9284
        %v9286 = vpop.f32.mrb[0].mxu0
        %v9287 = vpop.f32.mrb[0].mxu0
        %v9288 = vadd.f32 0.0, %v9287
        %v9289 = vpop.f32.mrb[0].mxu0
        %9290 = vmatprep.mubr.bf16.mxu0 0
        %9291 = vmatmul.mubr.bf16.gmra.mrb[0].mxu0 %v8938
        %v9292 = vpop.f32.mrb[0].mxu0
        %v9293 = vadd.f32 0.0, %v9292
        %v9294 = vpop.f32.mrb[0].mxu0
        %v9295 = vpop.f32.mrb[0].mxu0
        %v9296 = vadd.f32 0.0, %v9295
        %v9297 = vpop.f32.mrb[0].mxu0
        %9298 = vmatprep.mubr.bf16.mxu0 0
        %9299 = vmatmul.mubr.bf16.gmra.mrb[0].mxu0 %v8941
        %v9300 = vpop.f32.mrb[0].mxu0
        %v9301 = vadd.f32 0.0, %v9300
        %v9302 = vpop.f32.mrb[0].mxu0
        %v9303 = vpop.f32.mrb[0].mxu0
        %v9304 = vadd.f32 0.0, %v9303
        %v9305 = vpop.f32.mrb[0].mxu0
        %9306 = vmatprep.mubr.bf16.mxu0 0
        %9307 = vmatmul.mubr.bf16.gmra.mrb[0].mxu0 %v8944
        %v9308 = vpop.f32.mrb[0].mxu0
        %v9309 = vadd.f32 0.0, %v9308
        %v9310 = vpop.f32.mrb[0].mxu0
        %v9311 = vpop.f32.mrb[0].mxu0
        %v9312 = vadd.f32 0.0, %v9311
        %v9313 = vpop.f32.mrb[0].mxu0
        %9314 = vmatprep.mubr.bf16.mxu0 0
        %9315 = vmatmul.mubr.bf16.gmra.mrb[0].mxu0 %v8947
        %v9316 = vpop.f32.mrb[0].mxu0
        %v9317 = vadd.f32 0.0, %v9316
        %v9318 = vpop.f32.mrb[0].mxu0
        %v9319 = vpop.f32.mrb[0].mxu0
        %v9320 = vadd.f32 0.0, %v9319
        %v9321 = vpop.f32.mrb[0].mxu0
        %9322 = vmatprep.mubr.bf16.mxu0 0
        %9323 = vmatmul.mubr.bf16.gmra.mrb[0].mxu0 %v8950
        %v9324 = vpop.f32.mrb[0].mxu0
        %v9325 = vadd.f32 0.0, %v9324
        %v9326 = vpop.f32.mrb[0].mxu0
        %v9327 = vpop.f32.mrb[0].mxu0
        %v9328 = vadd.f32 0.0, %v9327
        %v9329 = vpop.f32.mrb[0].mxu0
        %9330 = vmatprep.mubr.bf16.mxu0 0
        %9331 = vmatmul.mubr.bf16.gmra.mrb[0].mxu0 %v8953
        %v9332 = vpop.f32.mrb[0].mxu0
        %v9333 = vadd.f32 0.0, %v9332
        %v9334 = vpop.f32.mrb[0].mxu0
        %v9335 = vpop.f32.mrb[0].mxu0
        %v9336 = vadd.f32 0.0, %v9335
        %v9337 = vpop.f32.mrb[0].mxu0
        %9338 = vmatprep.mubr.bf16.mxu0 0
        %9339 = vmatmul.mubr.bf16.gmra.mrb[0].mxu0 %v8956
        %v9340 = vpop.f32.mrb[0].mxu0
        %v9341 = vadd.f32 0.0, %v9340
        %v9342 = vpop.f32.mrb[0].mxu0
        %v9343 = vpop.f32.mrb[0].mxu0
        %v9344 = vadd.f32 0.0, %v9343
        %v9345 = vpop.f32.mrb[0].mxu0
        %9346 = vmatprep.mubr.bf16.mxu0 0
        %9347 = vmatmul.mubr.bf16.gmra.mrb[0].mxu0 %v8959
        %v9348 = vpop.f32.mrb[0].mxu0
        %v9349 = vadd.f32 0.0, %v9348
        %v9350 = vpop.f32.mrb[0].mxu0
        %v9351 = vpop.f32.mrb[0].mxu0
        %v9352 = vadd.f32 0.0, %v9351
        %v9353 = vpop.f32.mrb[0].mxu0
        %9354 = vmatprep.mubr.bf16.mxu0 0
        %9355 = vmatmul.mubr.bf16.gmra.mrb[0].mxu0 %v8962
        %v9356 = vpop.f32.mrb[0].mxu0
        %v9357 = vadd.f32 0.0, %v9356
        %v9358 = vpop.f32.mrb[0].mxu0
        %v9359 = vpop.f32.mrb[0].mxu0
        %v9360 = vadd.f32 0.0, %v9359
        %v9361 = vpop.f32.mrb[0].mxu0
        %9362 = vmatprep.mubr.bf16.mxu0 0
        %9363 = vmatmul.mubr.bf16.gmra.mrb[0].mxu0 %v8965
        %v9364 = vpop.f32.mrb[0].mxu0
        %v9365 = vadd.f32 0.0, %v9364
        %v9366 = vpop.f32.mrb[0].mxu0
        %v9367 = vpop.f32.mrb[0].mxu0
        %v9368 = vadd.f32 0.0, %v9367
        %v9369 = vpop.f32.mrb[0].mxu0
        %9370 = vmatprep.mubr.bf16.mxu0 0
        %9371 = vmatmul.mubr.bf16.gmra.mrb[0].mxu0 %v8968
        %v9372 = vpop.f32.mrb[0].mxu0
        %v9373 = vadd.f32 0.0, %v9372
        %v9374 = vpop.f32.mrb[0].mxu0
        %v9375 = vpop.f32.mrb[0].mxu0
        %v9376 = vadd.f32 0.0, %v9375
        %v9377 = vpop.f32.mrb[0].mxu0
        %9378 = vmatprep.mubr.bf16.mxu0 0
        %9379 = vmatmul.mubr.bf16.gmra.mrb[0].mxu0 %v8971
        %v9380 = vpop.f32.mrb[0].mxu0
        %v9381 = vadd.f32 0.0, %v9380
        %v9382 = vpop.f32.mrb[0].mxu0
        %v9383 = vpop.f32.mrb[0].mxu0
        %v9384 = vadd.f32 0.0, %v9383
        %v9385 = vpop.f32.mrb[0].mxu0
        %9386 = vmatprep.mubr.bf16.mxu0 0
        %9387 = vmatmul.mubr.bf16.gmra.mrb[0].mxu0 %v8974
        %v9388 = vpop.f32.mrb[0].mxu0
        %v9389 = vadd.f32 0.0, %v9388
        %v9390 = vpop.f32.mrb[0].mxu0
        %v9391 = vpop.f32.mrb[0].mxu0
        %v9392 = vadd.f32 0.0, %v9391
        %v9393 = vpop.f32.mrb[0].mxu0
        %9394 = vmatprep.mubr.bf16.mxu0 0
        %9395 = vmatmul.mubr.bf16.gmra.mrb[0].mxu0 %v8977
        %v9396 = vpop.f32.mrb[0].mxu0
        %v9397 = vadd.f32 0.0, %v9396
        %v9398 = vpop.f32.mrb[0].mxu0
        %v9399 = vpop.f32.mrb[0].mxu0
        %v9400 = vadd.f32 0.0, %v9399
        %v9401 = vpop.f32.mrb[0].mxu0
        %9402 = vmatprep.mubr.bf16.mxu0 0
        %9403 = vmatmul.mubr.bf16.gmra.mrb[0].mxu0 %v8980
        %v9404 = vpop.f32.mrb[0].mxu0
        %v9405 = vadd.f32 0.0, %v9404
        %v9406 = vpop.f32.mrb[0].mxu0
        %v9407 = vpop.f32.mrb[0].mxu0
        %v9408 = vadd.f32 0.0, %v9407
        %v9409 = vpop.f32.mrb[0].mxu0
        %9410 = vmatprep.mubr.bf16.mxu0 0
        %9411 = vmatmul.mubr.bf16.gmra.mrb[0].mxu0 %v8983
        %v9412 = vpop.f32.mrb[0].mxu0
        %v9413 = vadd.f32 0.0, %v9412
        %v9414 = vpop.f32.mrb[0].mxu0
        %v9415 = vpop.f32.mrb[0].mxu0
        %v9416 = vadd.f32 0.0, %v9415
        %v9417 = vpop.f32.mrb[0].mxu0
        %9418 = vmatprep.mubr.bf16.mxu0 0
        %9419 = vmatmul.mubr.bf16.gmra.mrb[0].mxu0 %v8986
        %v9420 = vpop.f32.mrb[0].mxu0
        %v9421 = vadd.f32 0.0, %v9420
        %v9422 = vpop.f32.mrb[0].mxu0
        %v9423 = vpop.f32.mrb[0].mxu0
        %v9424 = vadd.f32 0.0, %v9423
        %v9425 = vpop.f32.mrb[0].mxu0
        %9426 = vmatprep.mubr.bf16.mxu0 0
        %9427 = vmatmul.mubr.bf16.gmra.mrb[0].mxu0 %v8989
        %v9428 = vpop.f32.mrb[0].mxu0
        %v9429 = vadd.f32 0.0, %v9428
        %v9430 = vpop.f32.mrb[0].mxu0
        %v9431 = vpop.f32.mrb[0].mxu0
        %v9432 = vadd.f32 0.0, %v9431
        %v9433 = vpop.f32.mrb[0].mxu0
        %9434 = vmatprep.mubr.bf16.mxu0 0
        %9435 = vmatmul.mubr.bf16.gmra.mrb[0].mxu0 %v8992
        %v9436 = vpop.f32.mrb[0].mxu0
        %v9437 = vadd.f32 0.0, %v9436
        %v9438 = vpop.f32.mrb[0].mxu0
        %v9439 = vpop.f32.mrb[0].mxu0
        %v9440 = vadd.f32 0.0, %v9439
        %v9441 = vpop.f32.mrb[0].mxu0
        %9442 = vmatprep.mubr.bf16.mxu0 0
        %9443 = vmatmul.mubr.bf16.gmra.mrb[0].mxu0 %v8995
        %v9444 = vpop.f32.mrb[0].mxu0
        %v9445 = vadd.f32 0.0, %v9444
        %v9446 = vpop.f32.mrb[0].mxu0
        %v9447 = vpop.f32.mrb[0].mxu0
        %v9448 = vadd.f32 0.0, %v9447
        %v9449 = vpop.f32.mrb[0].mxu0
        %9450 = vmatprep.mubr.bf16.mxu0 0
        %9451 = vmatmul.mubr.bf16.gmra.mrb[0].mxu0 %v8998
        %v9452 = vpop.f32.mrb[0].mxu0
        %v9453 = vadd.f32 0.0, %v9452
        %v9454 = vpop.f32.mrb[0].mxu0
        %v9455 = vpop.f32.mrb[0].mxu0
        %v9456 = vadd.f32 0.0, %v9455
        %v9457 = vpop.f32.mrb[0].mxu0
        %9458 = vmatprep.mubr.bf16.mxu0 0
        %9459 = vmatmul.mubr.bf16.gmra.mrb[0].mxu0 %v9001
        %v9460 = vpop.f32.mrb[0].mxu0
        %v9461 = vadd.f32 0.0, %v9460
        %v9462 = vpop.f32.mrb[0].mxu0
        %v9463 = vpop.f32.mrb[0].mxu0
        %v9464 = vadd.f32 0.0, %v9463
        %v9465 = vpop.f32.mrb[0].mxu0
        %9466 = vmatprep.mubr.bf16.mxu0 0
        %9467 = vmatmul.mubr.bf16.gmra.mrb[0].mxu0 %v9004
        %v9468 = vpop.f32.mrb[0].mxu0
        %v9469 = vadd.f32 0.0, %v9468
        %v9470 = vpop.f32.mrb[0].mxu0
        %v9471 = vpop.f32.mrb[0].mxu0
        %v9472 = vadd.f32 0.0, %v9471
        %v9473 = vpop.f32.mrb[0].mxu0
        %9474 = vmatprep.mubr.bf16.mxu0 0
        %9475 = vmatmul.mubr.bf16.gmra.mrb[0].mxu0 %v9007
        %v9476 = vpop.f32.mrb[0].mxu0
        %v9477 = vadd.f32 0.0, %v9476
        %v9478 = vpop.f32.mrb[0].mxu0
        %v9479 = vpop.f32.mrb[0].mxu0
        %v9480 = vadd.f32 0.0, %v9479
        %v9481 = vpop.f32.mrb[0].mxu0
        %9482 = vmatprep.mubr.bf16.mxu0 0
        %9483 = vmatmul.mubr.bf16.gmra.mrb[0].mxu0 %v9010
        %v9484 = vpop.f32.mrb[0].mxu0
        %v9485 = vadd.f32 0.0, %v9484
        %v9486 = vpop.f32.mrb[0].mxu0
        %v9487 = vpop.f32.mrb[0].mxu0
        %v9488 = vadd.f32 0.0, %v9487
        %v9489 = vpop.f32.mrb[0].mxu0
        %9490 = vmatprep.mubr.bf16.mxu0 0
        %9491 = vmatmul.mubr.bf16.gmra.mrb[0].mxu0 %v9013
        %v9492 = vpop.f32.mrb[0].mxu0
        %v9493 = vadd.f32 0.0, %v9492
        %v9494 = vpop.f32.mrb[0].mxu0
        %v9495 = vpop.f32.mrb[0].mxu0
        %v9496 = vadd.f32 0.0, %v9495
        %v9497 = vpop.f32.mrb[0].mxu0
        %9498 = vmatprep.mubr.bf16.mxu0 0
        %9499 = vmatmul.mubr.bf16.gmra.mrb[0].mxu0 %v9016
        %v9500 = vpop.f32.mrb[0].mxu0
        %v9501 = vadd.f32 0.0, %v9500
        %v9502 = vpop.f32.mrb[0].mxu0
        %v9503 = vpop.f32.mrb[0].mxu0
        %v9504 = vadd.f32 0.0, %v9503
        %v9505 = vpop.f32.mrb[0].mxu0
        %9506 = vmatprep.mubr.bf16.mxu0 0
        %9507 = vmatmul.mubr.bf16.gmra.mrb[0].mxu0 %v9019
        %v9508 = vpop.f32.mrb[0].mxu0
        %v9509 = vadd.f32 0.0, %v9508
        %v9510 = vpop.f32.mrb[0].mxu0
        %v9511 = vpop.f32.mrb[0].mxu0
        %v9512 = vadd.f32 0.0, %v9511
        %v9513 = vpop.f32.mrb[0].mxu0
        %9514 = vmatprep.mubr.bf16.mxu0 0
        %9515 = vmatmul.mubr.bf16.gmra.mrb[0].mxu0 %v9022
        %v9516 = vpop.f32.mrb[0].mxu0
        %v9517 = vadd.f32 0.0, %v9516
        %v9518 = vpop.f32.mrb[0].mxu0
        %v9519 = vpop.f32.mrb[0].mxu0
        %v9520 = vadd.f32 0.0, %v9519
        %v9521 = vpop.f32.mrb[0].mxu0
        %9522 = vmatprep.mubr.bf16.mxu0 0
        %9523 = vmatmul.mubr.bf16.gmra.mrb[0].mxu0 %v9025
        %v9524 = vpop.f32.mrb[0].mxu0
        %v9525 = vadd.f32 0.0, %v9524
        %v9526 = vpop.f32.mrb[0].mxu0
        %v9527 = vpop.f32.mrb[0].mxu0
        %v9528 = vadd.f32 0.0, %v9527
        %v9529 = vpop.f32.mrb[0].mxu0
        %9530 = vmatprep.mubr.bf16.mxu0 0
        %9531 = vmatmul.mubr.bf16.gmra.mrb[0].mxu0 %v9028
        %v9532 = vpop.f32.mrb[0].mxu0
        %v9533 = vadd.f32 0.0, %v9532
        %v9534 = vpop.f32.mrb[0].mxu0
        %v9535 = vpop.f32.mrb[0].mxu0
        %v9536 = vadd.f32 0.0, %v9535
        %v9537 = vpop.f32.mrb[0].mxu0
        %9538 = vmatprep.mubr.bf16.mxu0 0
        %9539 = vmatmul.mubr.bf16.gmra.mrb[0].mxu0 %v9031
        %v9540 = vpop.f32.mrb[0].mxu0
        %v9541 = vadd.f32 0.0, %v9540
        %v9542 = vpop.f32.mrb[0].mxu0
        %v9543 = vpop.f32.mrb[0].mxu0
        %v9544 = vadd.f32 0.0, %v9543
        %v9545 = vpop.f32.mrb[0].mxu0
        %9546 = vmatprep.mubr.bf16.mxu0 0
        %9547 = vmatmul.mubr.bf16.gmra.mrb[0].mxu0 %v9034
        %v9548 = vpop.f32.mrb[0].mxu0
        %v9549 = vadd.f32 0.0, %v9548
        %v9550 = vpop.f32.mrb[0].mxu0
        %v9551 = vpop.f32.mrb[0].mxu0
        %v9552 = vadd.f32 0.0, %v9551
        %v9553 = vpop.f32.mrb[0].mxu0
        %9554 = vmatprep.mubr.bf16.mxu0 0
        %9555 = vmatmul.mubr.bf16.gmra.mrb[0].mxu0 %v9037
        %v9556 = vpop.f32.mrb[0].mxu0
        %v9557 = vadd.f32 0.0, %v9556
        %v9558 = vpop.f32.mrb[0].mxu0
        %v9559 = vpop.f32.mrb[0].mxu0
        %v9560 = vadd.f32 0.0, %v9559
        %v9561 = vpop.f32.mrb[0].mxu0
        %9562 = vmatprep.mubr.bf16.mxu0 0
        %9563 = vmatmul.mubr.bf16.gmra.mrb[0].mxu0 %v9040
        %v9564 = vpop.f32.mrb[0].mxu0
        %v9565 = vadd.f32 0.0, %v9564
        %v9566 = vpop.f32.mrb[0].mxu0
        %v9567 = vpop.f32.mrb[0].mxu0
        %v9568 = vadd.f32 0.0, %v9567
        %v9569 = vpop.f32.mrb[0].mxu0
        %9570 = vmatprep.mubr.bf16.mxu0 0
        %9571 = vmatmul.mubr.bf16.gmra.mrb[0].mxu0 %v9043
        %v9572 = vpop.f32.mrb[0].mxu0
        %v9573 = vadd.f32 0.0, %v9572
        %v9574 = vpop.f32.mrb[0].mxu0
        %v9575 = vpop.f32.mrb[0].mxu0
        %v9576 = vadd.f32 0.0, %v9575
        %v9577 = vpop.f32.mrb[0].mxu0
        %9578 = vmatprep.mubr.bf16.mxu0 0
        %9579 = vmatmul.mubr.bf16.gmra.mrb[0].mxu0 %v9046
        %v9580 = vpop.f32.mrb[0].mxu0
        %v9581 = vadd.f32 0.0, %v9580
        %v9582 = vpop.f32.mrb[0].mxu0
        %v9583 = vpop.f32.mrb[0].mxu0
        %v9584 = vadd.f32 0.0, %v9583
        %v9585 = vpop.f32.mrb[0].mxu0
        %9586 = vmatprep.mubr.bf16.mxu0 0
        %9587 = vmatmul.mubr.bf16.gmra.mrb[0].mxu0 %v9049
        %v9588 = vpop.f32.mrb[0].mxu0
        %v9589 = vadd.f32 0.0, %v9588
        %v9590 = vpop.f32.mrb[0].mxu0
        %v9591 = vpop.f32.mrb[0].mxu0
        %v9592 = vadd.f32 0.0, %v9591
        %v9593 = vpop.f32.mrb[0].mxu0
        %9594 = vmatprep.mubr.bf16.mxu0 0
        %9595 = vmatmul.mubr.bf16.gmra.mrb[0].mxu0 %v9052
        %v9596 = vpop.f32.mrb[0].mxu0
        %v9597 = vadd.f32 0.0, %v9596
        %v9598 = vpop.f32.mrb[0].mxu0
        %v9599 = vpop.f32.mrb[0].mxu0
        %v9600 = vadd.f32 0.0, %v9599
        %v9601 = vpop.f32.mrb[0].mxu0
        %9602 = vmatprep.mubr.bf16.mxu0 0
        %9603 = vmatmul.mubr.bf16.gmra.mrb[0].mxu0 %v9055
        %v9604 = vpop.f32.mrb[0].mxu0
        %v9605 = vadd.f32 0.0, %v9604
        %v9606 = vpop.f32.mrb[0].mxu0
        %v9607 = vpop.f32.mrb[0].mxu0
        %v9608 = vadd.f32 0.0, %v9607
        %v9609 = vpop.f32.mrb[0].mxu0
        %9610 = vmatprep.mubr.bf16.mxu0 0
        %9611 = vmatmul.mubr.bf16.gmra.mrb[0].mxu0 %v9058
        %v9612 = vpop.f32.mrb[0].mxu0
        %v9613 = vadd.f32 0.0, %v9612
        %v9614 = vpop.f32.mrb[0].mxu0
        %v9615 = vpop.f32.mrb[0].mxu0
        %v9616 = vadd.f32 0.0, %v9615
        %v9617 = vpop.f32.mrb[0].mxu0
        %9618 = vmatprep.mubr.bf16.mxu0 0
        %9619 = vmatmul.mubr.bf16.gmra.mrb[0].mxu0 %v9061
        %v9620 = vpop.f32.mrb[0].mxu0
        %v9621 = vadd.f32 0.0, %v9620
        %v9622 = vpop.f32.mrb[0].mxu0
        %v9623 = vpop.f32.mrb[0].mxu0
        %v9624 = vadd.f32 0.0, %v9623
        %v9625 = vpop.f32.mrb[0].mxu0
        %9626 = vdwg.mxu0
        %v9627 = vadd.f32 %v8533, %v9101
        %v9628 = vadd.f32 %v8534, %v9104
        %v9629 = vadd.f32 %v8535, %v9109
        %v9630 = vadd.f32 %v8536, %v9112
        %v9631 = vadd.f32 %v8537, %v9117
        %v9632 = vadd.f32 %v8538, %v9120
        %v9633 = vadd.f32 %v8539, %v9125
        %v9634 = vadd.f32 %v8540, %v9128
        %v9635 = vadd.f32 %v8541, %v9133
        %v9636 = vadd.f32 %v8542, %v9136
        %v9637 = vadd.f32 %v8543, %v9141
        %v9638 = vadd.f32 %v8544, %v9144
        %v9639 = vadd.f32 %v8545, %v9149
        %v9640 = vadd.f32 %v8546, %v9152
        %v9641 = vadd.f32 %v8547, %v9157
        %v9642 = vadd.f32 %v8548, %v9160
        %v9643 = vadd.f32 %v8549, %v9165
        %v9644 = vadd.f32 %v8550, %v9168
        %v9645 = vadd.f32 %v8551, %v9173
        %v9646 = vadd.f32 %v8552, %v9176
        %v9647 = vadd.f32 %v8553, %v9181
        %v9648 = vadd.f32 %v8554, %v9184
        %v9649 = vadd.f32 %v8555, %v9189
        %v9650 = vadd.f32 %v8556, %v9192
        %v9651 = vadd.f32 %v8557, %v9197
        %v9652 = vadd.f32 %v8558, %v9200
        %v9653 = vadd.f32 %v8559, %v9205
        %v9654 = vadd.f32 %v8560, %v9208
        %v9655 = vadd.f32 %v8561, %v9213
        %v9656 = vadd.f32 %v8562, %v9216
        %v9657 = vadd.f32 %v8563, %v9221
        %v9658 = vadd.f32 %v8564, %v9224
        %v9659 = vadd.f32 %v8565, %v9229
        %v9660 = vadd.f32 %v8566, %v9232
        %v9661 = vadd.f32 %v8567, %v9237
        %v9662 = vadd.f32 %v8568, %v9240
        %v9663 = vadd.f32 %v8569, %v9245
        %v9664 = vadd.f32 %v8570, %v9248
        %v9665 = vadd.f32 %v8571, %v9253
        %v9666 = vadd.f32 %v8572, %v9256
        %v9667 = vadd.f32 %v8573, %v9261
        %v9668 = vadd.f32 %v8574, %v9264
        %v9669 = vadd.f32 %v8575, %v9269
        %v9670 = vadd.f32 %v8576, %v9272
        %v9671 = vadd.f32 %v8577, %v9277
        %v9672 = vadd.f32 %v8578, %v9280
        %v9673 = vadd.f32 %v8579, %v9285
        %v9674 = vadd.f32 %v8580, %v9288
        %v9675 = vadd.f32 %v8581, %v9293
        %v9676 = vadd.f32 %v8582, %v9296
        %v9677 = vadd.f32 %v8583, %v9301
        %v9678 = vadd.f32 %v8584, %v9304
        %v9679 = vadd.f32 %v8585, %v9309
        %v9680 = vadd.f32 %v8586, %v9312
        %v9681 = vadd.f32 %v8587, %v9317
        %v9682 = vadd.f32 %v8588, %v9320
        %v9683 = vadd.f32 %v8589, %v9325
        %v9684 = vadd.f32 %v8590, %v9328
        %v9685 = vadd.f32 %v8591, %v9333
        %v9686 = vadd.f32 %v8592, %v9336
        %v9687 = vadd.f32 %v8593, %v9341
        %v9688 = vadd.f32 %v8594, %v9344
        %v9689 = vadd.f32 %v8595, %v9349
        %v9690 = vadd.f32 %v8596, %v9352
        %v9691 = vadd.f32 %v8597, %v9357
        %v9692 = vadd.f32 %v8598, %v9360
        %v9693 = vadd.f32 %v8599, %v9365
        %v9694 = vadd.f32 %v8600, %v9368
        %v9695 = vadd.f32 %v8601, %v9373
        %v9696 = vadd.f32 %v8602, %v9376
        %v9697 = vadd.f32 %v8603, %v9381
        %v9698 = vadd.f32 %v8604, %v9384
        %v9699 = vadd.f32 %v8605, %v9389
        %v9700 = vadd.f32 %v8606, %v9392
        %v9701 = vadd.f32 %v8607, %v9397
        %v9702 = vadd.f32 %v8608, %v9400
        %v9703 = vadd.f32 %v8609, %v9405
        %v9704 = vadd.f32 %v8610, %v9408
        %v9705 = vadd.f32 %v8611, %v9413
        %v9706 = vadd.f32 %v8612, %v9416
        %v9707 = vadd.f32 %v8613, %v9421
        %v9708 = vadd.f32 %v8614, %v9424
        %v9709 = vadd.f32 %v8615, %v9429
        %v9710 = vadd.f32 %v8616, %v9432
        %v9711 = vadd.f32 %v8617, %v9437
        %v9712 = vadd.f32 %v8618, %v9440
        %v9713 = vadd.f32 %v8619, %v9445
        %v9714 = vadd.f32 %v8620, %v9448
        %v9715 = vadd.f32 %v8621, %v9453
        %v9716 = vadd.f32 %v8622, %v9456
        %v9717 = vadd.f32 %v8623, %v9461
        %v9718 = vadd.f32 %v8624, %v9464
        %v9719 = vadd.f32 %v8625, %v9469
        %v9720 = vadd.f32 %v8626, %v9472
        %v9721 = vadd.f32 %v8627, %v9477
        %v9722 = vadd.f32 %v8628, %v9480
        %v9723 = vadd.f32 %v8629, %v9485
        %v9724 = vadd.f32 %v8630, %v9488
        %v9725 = vadd.f32 %v8631, %v9493
        %v9726 = vadd.f32 %v8632, %v9496
        %v9727 = vadd.f32 %v8633, %v9501
        %v9728 = vadd.f32 %v8634, %v9504
        %v9729 = vadd.f32 %v8635, %v9509
        %v9730 = vadd.f32 %v8636, %v9512
        %v9731 = vadd.f32 %v8637, %v9517
        %v9732 = vadd.f32 %v8638, %v9520
        %v9733 = vadd.f32 %v8639, %v9525
        %v9734 = vadd.f32 %v8640, %v9528
        %v9735 = vadd.f32 %v8641, %v9533
        %v9736 = vadd.f32 %v8642, %v9536
        %v9737 = vadd.f32 %v8643, %v9541
        %v9738 = vadd.f32 %v8644, %v9544
        %v9739 = vadd.f32 %v8645, %v9549
        %v9740 = vadd.f32 %v8646, %v9552
        %v9741 = vadd.f32 %v8647, %v9557
        %v9742 = vadd.f32 %v8648, %v9560
        %v9743 = vadd.f32 %v8649, %v9565
        %v9744 = vadd.f32 %v8650, %v9568
        %v9745 = vadd.f32 %v8651, %v9573
        %v9746 = vadd.f32 %v8652, %v9576
        %v9747 = vadd.f32 %v8653, %v9581
        %v9748 = vadd.f32 %v8654, %v9584
        %v9749 = vadd.f32 %v8655, %v9589
        %v9750 = vadd.f32 %v8656, %v9592
        %v9751 = vadd.f32 %v8657, %v9597
        %v9752 = vadd.f32 %v8658, %v9600
        %v9753 = vadd.f32 %v8659, %v9605
        %v9754 = vadd.f32 %v8660, %v9608
        %v9755 = vadd.f32 %v8661, %v9613
        %v9756 = vadd.f32 %v8662, %v9616
        %v9757 = vadd.f32 %v8663, %v9621
        %v9758 = vadd.f32 %v8664, %v9624
        %v9759 = vld [vmem:[%s2] sm:$0x1]
        %v9761 = vlaneseq
        %v9762 = vshrl.u32 %v9761, 7
        %v9763 = vsub.s32 0, %v9762
        %v9764 = vrot.slane %v9759, %v9763
        %v9766 = vadd.f32 %v9627, %v9764
        %v9767 = vadd.f32 %v9628, %v9764
        %v9768 = vadd.f32 %v9629, %v9764
        %v9769 = vadd.f32 %v9630, %v9764
        %v9770 = vadd.f32 %v9631, %v9764
        %v9771 = vadd.f32 %v9632, %v9764
        %v9772 = vadd.f32 %v9633, %v9764
        %v9773 = vadd.f32 %v9634, %v9764
        %v9774 = vadd.f32 %v9635, %v9764
        %v9775 = vadd.f32 %v9636, %v9764
        %v9776 = vadd.f32 %v9637, %v9764
        %v9777 = vadd.f32 %v9638, %v9764
        %v9778 = vadd.f32 %v9639, %v9764
        %v9779 = vadd.f32 %v9640, %v9764
        %v9780 = vadd.f32 %v9641, %v9764
        %v9781 = vadd.f32 %v9642, %v9764
        %v9782 = vadd.f32 %v9643, %v9764
        %v9783 = vadd.f32 %v9644, %v9764
        %v9784 = vadd.f32 %v9645, %v9764
        %v9785 = vadd.f32 %v9646, %v9764
        %v9786 = vadd.f32 %v9647, %v9764
        %v9787 = vadd.f32 %v9648, %v9764
        %v9788 = vadd.f32 %v9649, %v9764
        %v9789 = vadd.f32 %v9650, %v9764
        %v9790 = vadd.f32 %v9651, %v9764
        %v9791 = vadd.f32 %v9652, %v9764
        %v9792 = vadd.f32 %v9653, %v9764
        %v9793 = vadd.f32 %v9654, %v9764
        %v9794 = vadd.f32 %v9655, %v9764
        %v9795 = vadd.f32 %v9656, %v9764
        %v9796 = vadd.f32 %v9657, %v9764
        %v9797 = vadd.f32 %v9658, %v9764
        %v9798 = vadd.f32 %v9659, %v9764
        %v9799 = vadd.f32 %v9660, %v9764
        %v9800 = vadd.f32 %v9661, %v9764
        %v9801 = vadd.f32 %v9662, %v9764
        %v9802 = vadd.f32 %v9663, %v9764
        %v9803 = vadd.f32 %v9664, %v9764
        %v9804 = vadd.f32 %v9665, %v9764
        %v9805 = vadd.f32 %v9666, %v9764
        %v9806 = vadd.f32 %v9667, %v9764
        %v9807 = vadd.f32 %v9668, %v9764
        %v9808 = vadd.f32 %v9669, %v9764
        %v9809 = vadd.f32 %v9670, %v9764
        %v9810 = vadd.f32 %v9671, %v9764
        %v9811 = vadd.f32 %v9672, %v9764
        %v9812 = vadd.f32 %v9673, %v9764
        %v9813 = vadd.f32 %v9674, %v9764
        %v9814 = vadd.f32 %v9675, %v9764
        %v9815 = vadd.f32 %v9676, %v9764
        %v9816 = vadd.f32 %v9677, %v9764
        %v9817 = vadd.f32 %v9678, %v9764
        %v9818 = vadd.f32 %v9679, %v9764
        %v9819 = vadd.f32 %v9680, %v9764
        %v9820 = vadd.f32 %v9681, %v9764
        %v9821 = vadd.f32 %v9682, %v9764
        %v9822 = vadd.f32 %v9683, %v9764
        %v9823 = vadd.f32 %v9684, %v9764
        %v9824 = vadd.f32 %v9685, %v9764
        %v9825 = vadd.f32 %v9686, %v9764
        %v9826 = vadd.f32 %v9687, %v9764
        %v9827 = vadd.f32 %v9688, %v9764
        %v9828 = vadd.f32 %v9689, %v9764
        %v9829 = vadd.f32 %v9690, %v9764
        %v9830 = vadd.f32 %v9691, %v9764
        %v9831 = vadd.f32 %v9692, %v9764
        %v9832 = vadd.f32 %v9693, %v9764
        %v9833 = vadd.f32 %v9694, %v9764
        %v9834 = vadd.f32 %v9695, %v9764
        %v9835 = vadd.f32 %v9696, %v9764
        %v9836 = vadd.f32 %v9697, %v9764
        %v9837 = vadd.f32 %v9698, %v9764
        %v9838 = vadd.f32 %v9699, %v9764
        %v9839 = vadd.f32 %v9700, %v9764
        %v9840 = vadd.f32 %v9701, %v9764
        %v9841 = vadd.f32 %v9702, %v9764
        %v9842 = vadd.f32 %v9703, %v9764
        %v9843 = vadd.f32 %v9704, %v9764
        %v9844 = vadd.f32 %v9705, %v9764
        %v9845 = vadd.f32 %v9706, %v9764
        %v9846 = vadd.f32 %v9707, %v9764
        %v9847 = vadd.f32 %v9708, %v9764
        %v9848 = vadd.f32 %v9709, %v9764
        %v9849 = vadd.f32 %v9710, %v9764
        %v9850 = vadd.f32 %v9711, %v9764
        %v9851 = vadd.f32 %v9712, %v9764
        %v9852 = vadd.f32 %v9713, %v9764
        %v9853 = vadd.f32 %v9714, %v9764
        %v9854 = vadd.f32 %v9715, %v9764
        %v9855 = vadd.f32 %v9716, %v9764
        %v9856 = vadd.f32 %v9717, %v9764
        %v9857 = vadd.f32 %v9718, %v9764
        %v9858 = vadd.f32 %v9719, %v9764
        %v9859 = vadd.f32 %v9720, %v9764
        %v9860 = vadd.f32 %v9721, %v9764
        %v9861 = vadd.f32 %v9722, %v9764
        %v9862 = vadd.f32 %v9723, %v9764
        %v9863 = vadd.f32 %v9724, %v9764
        %v9864 = vadd.f32 %v9725, %v9764
        %v9865 = vadd.f32 %v9726, %v9764
        %v9866 = vadd.f32 %v9727, %v9764
        %v9867 = vadd.f32 %v9728, %v9764
        %v9868 = vadd.f32 %v9729, %v9764
        %v9869 = vadd.f32 %v9730, %v9764
        %v9870 = vadd.f32 %v9731, %v9764
        %v9871 = vadd.f32 %v9732, %v9764
        %v9872 = vadd.f32 %v9733, %v9764
        %v9873 = vadd.f32 %v9734, %v9764
        %v9874 = vadd.f32 %v9735, %v9764
        %v9875 = vadd.f32 %v9736, %v9764
        %v9876 = vadd.f32 %v9737, %v9764
        %v9877 = vadd.f32 %v9738, %v9764
        %v9878 = vadd.f32 %v9739, %v9764
        %v9879 = vadd.f32 %v9740, %v9764
        %v9880 = vadd.f32 %v9741, %v9764
        %v9881 = vadd.f32 %v9742, %v9764
        %v9882 = vadd.f32 %v9743, %v9764
        %v9883 = vadd.f32 %v9744, %v9764
        %v9884 = vadd.f32 %v9745, %v9764
        %v9885 = vadd.f32 %v9746, %v9764
        %v9886 = vadd.f32 %v9747, %v9764
        %v9887 = vadd.f32 %v9748, %v9764
        %v9888 = vadd.f32 %v9749, %v9764
        %v9889 = vadd.f32 %v9750, %v9764
        %v9890 = vadd.f32 %v9751, %v9764
        %v9891 = vadd.f32 %v9752, %v9764
        %v9892 = vadd.f32 %v9753, %v9764
        %v9893 = vadd.f32 %v9754, %v9764
        %v9894 = vadd.f32 %v9755, %v9764
        %v9895 = vadd.f32 %v9756, %v9764
        %v9896 = vadd.f32 %v9757, %v9764
        %v9897 = vadd.f32 %v9758, %v9764
        %v9898 = vsub.f32 0.0, %v9766
        %v9899 = vsub.f32 0.0, %v9767
        %v9900 = vsub.f32 0.0, %v9768
        %v9901 = vsub.f32 0.0, %v9769
        %v9902 = vsub.f32 0.0, %v9770
        %v9903 = vsub.f32 0.0, %v9771
        %v9904 = vsub.f32 0.0, %v9772
        %v9905 = vsub.f32 0.0, %v9773
        %v9906 = vsub.f32 0.0, %v9774
        %v9907 = vsub.f32 0.0, %v9775
        %v9908 = vsub.f32 0.0, %v9776
        %v9909 = vsub.f32 0.0, %v9777
        %v9910 = vsub.f32 0.0, %v9778
        %v9911 = vsub.f32 0.0, %v9779
        %v9912 = vsub.f32 0.0, %v9780
        %v9913 = vsub.f32 0.0, %v9781
        %v9914 = vsub.f32 0.0, %v9782
        %v9915 = vsub.f32 0.0, %v9783
        %v9916 = vsub.f32 0.0, %v9784
        %v9917 = vsub.f32 0.0, %v9785
        %v9918 = vsub.f32 0.0, %v9786
        %v9919 = vsub.f32 0.0, %v9787
        %v9920 = vsub.f32 0.0, %v9788
        %v9921 = vsub.f32 0.0, %v9789
        %v9922 = vsub.f32 0.0, %v9790
        %v9923 = vsub.f32 0.0, %v9791
        %v9924 = vsub.f32 0.0, %v9792
        %v9925 = vsub.f32 0.0, %v9793
        %v9926 = vsub.f32 0.0, %v9794
        %v9927 = vsub.f32 0.0, %v9795
        %v9928 = vsub.f32 0.0, %v9796
        %v9929 = vsub.f32 0.0, %v9797
        %v9930 = vsub.f32 0.0, %v9798
        %v9931 = vsub.f32 0.0, %v9799
        %v9932 = vsub.f32 0.0, %v9800
        %v9933 = vsub.f32 0.0, %v9801
        %v9934 = vsub.f32 0.0, %v9802
        %v9935 = vsub.f32 0.0, %v9803
        %v9936 = vsub.f32 0.0, %v9804
        %v9937 = vsub.f32 0.0, %v9805
        %v9938 = vsub.f32 0.0, %v9806
        %v9939 = vsub.f32 0.0, %v9807
        %v9940 = vsub.f32 0.0, %v9808
        %v9941 = vsub.f32 0.0, %v9809
        %v9942 = vsub.f32 0.0, %v9810
        %v9943 = vsub.f32 0.0, %v9811
        %v9944 = vsub.f32 0.0, %v9812
        %v9945 = vsub.f32 0.0, %v9813
        %v9946 = vsub.f32 0.0, %v9814
        %v9947 = vsub.f32 0.0, %v9815
        %v9948 = vsub.f32 0.0, %v9816
        %v9949 = vsub.f32 0.0, %v9817
        %v9950 = vsub.f32 0.0, %v9818
        %v9951 = vsub.f32 0.0, %v9819
        %v9952 = vsub.f32 0.0, %v9820
        %v9953 = vsub.f32 0.0, %v9821
        %v9954 = vsub.f32 0.0, %v9822
        %v9955 = vsub.f32 0.0, %v9823
        %v9956 = vsub.f32 0.0, %v9824
        %v9957 = vsub.f32 0.0, %v9825
        %v9958 = vsub.f32 0.0, %v9826
        %v9959 = vsub.f32 0.0, %v9827
        %v9960 = vsub.f32 0.0, %v9828
        %v9961 = vsub.f32 0.0, %v9829
        %v9962 = vsub.f32 0.0, %v9830
        %v9963 = vsub.f32 0.0, %v9831
        %v9964 = vsub.f32 0.0, %v9832
        %v9965 = vsub.f32 0.0, %v9833
        %v9966 = vsub.f32 0.0, %v9834
        %v9967 = vsub.f32 0.0, %v9835
        %v9968 = vsub.f32 0.0, %v9836
        %v9969 = vsub.f32 0.0, %v9837
        %v9970 = vsub.f32 0.0, %v9838
        %v9971 = vsub.f32 0.0, %v9839
        %v9972 = vsub.f32 0.0, %v9840
        %v9973 = vsub.f32 0.0, %v9841
        %v9974 = vsub.f32 0.0, %v9842
        %v9975 = vsub.f32 0.0, %v9843
        %v9976 = vsub.f32 0.0, %v9844
        %v9977 = vsub.f32 0.0, %v9845
        %v9978 = vsub.f32 0.0, %v9846
        %v9979 = vsub.f32 0.0, %v9847
        %v9980 = vsub.f32 0.0, %v9848
        %v9981 = vsub.f32 0.0, %v9849
        %v9982 = vsub.f32 0.0, %v9850
        %v9983 = vsub.f32 0.0, %v9851
        %v9984 = vsub.f32 0.0, %v9852
        %v9985 = vsub.f32 0.0, %v9853
        %v9986 = vsub.f32 0.0, %v9854
        %v9987 = vsub.f32 0.0, %v9855
        %v9988 = vsub.f32 0.0, %v9856
        %v9989 = vsub.f32 0.0, %v9857
        %v9990 = vsub.f32 0.0, %v9858
        %v9991 = vsub.f32 0.0, %v9859
        %v9992 = vsub.f32 0.0, %v9860
        %v9993 = vsub.f32 0.0, %v9861
        %v9994 = vsub.f32 0.0, %v9862
        %v9995 = vsub.f32 0.0, %v9863
        %v9996 = vsub.f32 0.0, %v9864
        %v9997 = vsub.f32 0.0, %v9865
        %v9998 = vsub.f32 0.0, %v9866
        %v9999 = vsub.f32 0.0, %v9867
        %v10000 = vsub.f32 0.0, %v9868
        %v10001 = vsub.f32 0.0, %v9869
        %v10002 = vsub.f32 0.0, %v9870
        %v10003 = vsub.f32 0.0, %v9871
        %v10004 = vsub.f32 0.0, %v9872
        %v10005 = vsub.f32 0.0, %v9873
        %v10006 = vsub.f32 0.0, %v9874
        %v10007 = vsub.f32 0.0, %v9875
        %v10008 = vsub.f32 0.0, %v9876
        %v10009 = vsub.f32 0.0, %v9877
        %v10010 = vsub.f32 0.0, %v9878
        %v10011 = vsub.f32 0.0, %v9879
        %v10012 = vsub.f32 0.0, %v9880
        %v10013 = vsub.f32 0.0, %v9881
        %v10014 = vsub.f32 0.0, %v9882
        %v10015 = vsub.f32 0.0, %v9883
        %v10016 = vsub.f32 0.0, %v9884
        %v10017 = vsub.f32 0.0, %v9885
        %v10018 = vsub.f32 0.0, %v9886
        %v10019 = vsub.f32 0.0, %v9887
        %v10020 = vsub.f32 0.0, %v9888
        %v10021 = vsub.f32 0.0, %v9889
        %v10022 = vsub.f32 0.0, %v9890
        %v10023 = vsub.f32 0.0, %v9891
        %v10024 = vsub.f32 0.0, %v9892
        %v10025 = vsub.f32 0.0, %v9893
        %v10026 = vsub.f32 0.0, %v9894
        %v10027 = vsub.f32 0.0, %v9895
        %v10028 = vsub.f32 0.0, %v9896
        %v10029 = vsub.f32 0.0, %v9897
        %v10030 = vmul.f32 %v9898, 1.442695
        %v10031 = vpow.pop %v10030
        %v10032 = vmul.f32 %v9899, 1.442695
        %v10033 = vpow.pop %v10032
        %v10034 = vmul.f32 %v9900, 1.442695
        %v10035 = vpow.pop %v10034
        %v10036 = vmul.f32 %v9901, 1.442695
        %v10037 = vpow.pop %v10036
        %v10038 = vmul.f32 %v9902, 1.442695
        %v10039 = vpow.pop %v10038
        %v10040 = vmul.f32 %v9903, 1.442695
        %v10041 = vpow.pop %v10040
        %v10042 = vmul.f32 %v9904, 1.442695
        %v10043 = vpow.pop %v10042
        %v10044 = vmul.f32 %v9905, 1.442695
        %v10045 = vpow.pop %v10044
        %v10046 = vmul.f32 %v9906, 1.442695
        %v10047 = vpow.pop %v10046
        %v10048 = vmul.f32 %v9907, 1.442695
        %v10049 = vpow.pop %v10048
        %v10050 = vmul.f32 %v9908, 1.442695
        %v10051 = vpow.pop %v10050
        %v10052 = vmul.f32 %v9909, 1.442695
        %v10053 = vpow.pop %v10052
        %v10054 = vmul.f32 %v9910, 1.442695
        %v10055 = vpow.pop %v10054
        %v10056 = vmul.f32 %v9911, 1.442695
        %v10057 = vpow.pop %v10056
        %v10058 = vmul.f32 %v9912, 1.442695
        %v10059 = vpow.pop %v10058
        %v10060 = vmul.f32 %v9913, 1.442695
        %v10061 = vpow.pop %v10060
        %v10062 = vmul.f32 %v9914, 1.442695
        %v10063 = vpow.pop %v10062
        %v10064 = vmul.f32 %v9915, 1.442695
        %v10065 = vpow.pop %v10064
        %v10066 = vmul.f32 %v9916, 1.442695
        %v10067 = vpow.pop %v10066
        %v10068 = vmul.f32 %v9917, 1.442695
        %v10069 = vpow.pop %v10068
        %v10070 = vmul.f32 %v9918, 1.442695
        %v10071 = vpow.pop %v10070
        %v10072 = vmul.f32 %v9919, 1.442695
        %v10073 = vpow.pop %v10072
        %v10074 = vmul.f32 %v9920, 1.442695
        %v10075 = vpow.pop %v10074
        %v10076 = vmul.f32 %v9921, 1.442695
        %v10077 = vpow.pop %v10076
        %v10078 = vmul.f32 %v9922, 1.442695
        %v10079 = vpow.pop %v10078
        %v10080 = vmul.f32 %v9923, 1.442695
        %v10081 = vpow.pop %v10080
        %v10082 = vmul.f32 %v9924, 1.442695
        %v10083 = vpow.pop %v10082
        %v10084 = vmul.f32 %v9925, 1.442695
        %v10085 = vpow.pop %v10084
        %v10086 = vmul.f32 %v9926, 1.442695
        %v10087 = vpow.pop %v10086
        %v10088 = vmul.f32 %v9927, 1.442695
        %v10089 = vpow.pop %v10088
        %v10090 = vmul.f32 %v9928, 1.442695
        %v10091 = vpow.pop %v10090
        %v10092 = vmul.f32 %v9929, 1.442695
        %v10093 = vpow.pop %v10092
        %v10094 = vmul.f32 %v9930, 1.442695
        %v10095 = vpow.pop %v10094
        %v10096 = vmul.f32 %v9931, 1.442695
        %v10097 = vpow.pop %v10096
        %v10098 = vmul.f32 %v9932, 1.442695
        %v10099 = vpow.pop %v10098
        %v10100 = vmul.f32 %v9933, 1.442695
        %v10101 = vpow.pop %v10100
        %v10102 = vmul.f32 %v9934, 1.442695
        %v10103 = vpow.pop %v10102
        %v10104 = vmul.f32 %v9935, 1.442695
        %v10105 = vpow.pop %v10104
        %v10106 = vmul.f32 %v9936, 1.442695
        %v10107 = vpow.pop %v10106
        %v10108 = vmul.f32 %v9937, 1.442695
        %v10109 = vpow.pop %v10108
        %v10110 = vmul.f32 %v9938, 1.442695
        %v10111 = vpow.pop %v10110
        %v10112 = vmul.f32 %v9939, 1.442695
        %v10113 = vpow.pop %v10112
        %v10114 = vmul.f32 %v9940, 1.442695
        %v10115 = vpow.pop %v10114
        %v10116 = vmul.f32 %v9941, 1.442695
        %v10117 = vpow.pop %v10116
        %v10118 = vmul.f32 %v9942, 1.442695
        %v10119 = vpow.pop %v10118
        %v10120 = vmul.f32 %v9943, 1.442695
        %v10121 = vpow.pop %v10120
        %v10122 = vmul.f32 %v9944, 1.442695
        %v10123 = vpow.pop %v10122
        %v10124 = vmul.f32 %v9945, 1.442695
        %v10125 = vpow.pop %v10124
        %v10126 = vmul.f32 %v9946, 1.442695
        %v10127 = vpow.pop %v10126
        %v10128 = vmul.f32 %v9947, 1.442695
        %v10129 = vpow.pop %v10128
        %v10130 = vmul.f32 %v9948, 1.442695
        %v10131 = vpow.pop %v10130
        %v10132 = vmul.f32 %v9949, 1.442695
        %v10133 = vpow.pop %v10132
        %v10134 = vmul.f32 %v9950, 1.442695
        %v10135 = vpow.pop %v10134
        %v10136 = vmul.f32 %v9951, 1.442695
        %v10137 = vpow.pop %v10136
        %v10138 = vmul.f32 %v9952, 1.442695
        %v10139 = vpow.pop %v10138
        %v10140 = vmul.f32 %v9953, 1.442695
        %v10141 = vpow.pop %v10140
        %v10142 = vmul.f32 %v9954, 1.442695
        %v10143 = vpow.pop %v10142
        %v10144 = vmul.f32 %v9955, 1.442695
        %v10145 = vpow.pop %v10144
        %v10146 = vmul.f32 %v9956, 1.442695
        %v10147 = vpow.pop %v10146
        %v10148 = vmul.f32 %v9957, 1.442695
        %v10149 = vpow.pop %v10148
        %v10150 = vmul.f32 %v9958, 1.442695
        %v10151 = vpow.pop %v10150
        %v10152 = vmul.f32 %v9959, 1.442695
        %v10153 = vpow.pop %v10152
        %v10154 = vmul.f32 %v9960, 1.442695
        %v10155 = vpow.pop %v10154
        %v10156 = vmul.f32 %v9961, 1.442695
        %v10157 = vpow.pop %v10156
        %v10158 = vmul.f32 %v9962, 1.442695
        %v10159 = vpow.pop %v10158
        %v10160 = vmul.f32 %v9963, 1.442695
        %v10161 = vpow.pop %v10160
        %v10162 = vmul.f32 %v9964, 1.442695
        %v10163 = vpow.pop %v10162
        %v10164 = vmul.f32 %v9965, 1.442695
        %v10165 = vpow.pop %v10164
        %v10166 = vmul.f32 %v9966, 1.442695
        %v10167 = vpow.pop %v10166
        %v10168 = vmul.f32 %v9967, 1.442695
        %v10169 = vpow.pop %v10168
        %v10170 = vmul.f32 %v9968, 1.442695
        %v10171 = vpow.pop %v10170
        %v10172 = vmul.f32 %v9969, 1.442695
        %v10173 = vpow.pop %v10172
        %v10174 = vmul.f32 %v9970, 1.442695
        %v10175 = vpow.pop %v10174
        %v10176 = vmul.f32 %v9971, 1.442695
        %v10177 = vpow.pop %v10176
        %v10178 = vmul.f32 %v9972, 1.442695
        %v10179 = vpow.pop %v10178
        %v10180 = vmul.f32 %v9973, 1.442695
        %v10181 = vpow.pop %v10180
        %v10182 = vmul.f32 %v9974, 1.442695
        %v10183 = vpow.pop %v10182
        %v10184 = vmul.f32 %v9975, 1.442695
        %v10185 = vpow.pop %v10184
        %v10186 = vmul.f32 %v9976, 1.442695
        %v10187 = vpow.pop %v10186
        %v10188 = vmul.f32 %v9977, 1.442695
        %v10189 = vpow.pop %v10188
        %v10190 = vmul.f32 %v9978, 1.442695
        %v10191 = vpow.pop %v10190
        %v10192 = vmul.f32 %v9979, 1.442695
        %v10193 = vpow.pop %v10192
        %v10194 = vmul.f32 %v9980, 1.442695
        %v10195 = vpow.pop %v10194
        %v10196 = vmul.f32 %v9981, 1.442695
        %v10197 = vpow.pop %v10196
        %v10198 = vmul.f32 %v9982, 1.442695
        %v10199 = vpow.pop %v10198
        %v10200 = vmul.f32 %v9983, 1.442695
        %v10201 = vpow.pop %v10200
        %v10202 = vmul.f32 %v9984, 1.442695
        %v10203 = vpow.pop %v10202
        %v10204 = vmul.f32 %v9985, 1.442695
        %v10205 = vpow.pop %v10204
        %v10206 = vmul.f32 %v9986, 1.442695
        %v10207 = vpow.pop %v10206
        %v10208 = vmul.f32 %v9987, 1.442695
        %v10209 = vpow.pop %v10208
        %v10210 = vmul.f32 %v9988, 1.442695
        %v10211 = vpow.pop %v10210
        %v10212 = vmul.f32 %v9989, 1.442695
        %v10213 = vpow.pop %v10212
        %v10214 = vmul.f32 %v9990, 1.442695
        %v10215 = vpow.pop %v10214
        %v10216 = vmul.f32 %v9991, 1.442695
        %v10217 = vpow.pop %v10216
        %v10218 = vmul.f32 %v9992, 1.442695
        %v10219 = vpow.pop %v10218
        %v10220 = vmul.f32 %v9993, 1.442695
        %v10221 = vpow.pop %v10220
        %v10222 = vmul.f32 %v9994, 1.442695
        %v10223 = vpow.pop %v10222
        %v10224 = vmul.f32 %v9995, 1.442695
        %v10225 = vpow.pop %v10224
        %v10226 = vmul.f32 %v9996, 1.442695
        %v10227 = vpow.pop %v10226
        %v10228 = vmul.f32 %v9997, 1.442695
        %v10229 = vpow.pop %v10228
        %v10230 = vmul.f32 %v9998, 1.442695
        %v10231 = vpow.pop %v10230
        %v10232 = vmul.f32 %v9999, 1.442695
        %v10233 = vpow.pop %v10232
        %v10234 = vmul.f32 %v10000, 1.442695
        %v10235 = vpow.pop %v10234
        %v10236 = vmul.f32 %v10001, 1.442695
        %v10237 = vpow.pop %v10236
        %v10238 = vmul.f32 %v10002, 1.442695
        %v10239 = vpow.pop %v10238
        %v10240 = vmul.f32 %v10003, 1.442695
        %v10241 = vpow.pop %v10240
        %v10242 = vmul.f32 %v10004, 1.442695
        %v10243 = vpow.pop %v10242
        %v10244 = vmul.f32 %v10005, 1.442695
        %v10245 = vpow.pop %v10244
        %v10246 = vmul.f32 %v10006, 1.442695
        %v10247 = vpow.pop %v10246
        %v10248 = vmul.f32 %v10007, 1.442695
        %v10249 = vpow.pop %v10248
        %v10250 = vmul.f32 %v10008, 1.442695
        %v10251 = vpow.pop %v10250
        %v10252 = vmul.f32 %v10009, 1.442695
        %v10253 = vpow.pop %v10252
        %v10254 = vmul.f32 %v10010, 1.442695
        %v10255 = vpow.pop %v10254
        %v10256 = vmul.f32 %v10011, 1.442695
        %v10257 = vpow.pop %v10256
        %v10258 = vmul.f32 %v10012, 1.442695
        %v10259 = vpow.pop %v10258
        %v10260 = vmul.f32 %v10013, 1.442695
        %v10261 = vpow.pop %v10260
        %v10262 = vmul.f32 %v10014, 1.442695
        %v10263 = vpow.pop %v10262
        %v10264 = vmul.f32 %v10015, 1.442695
        %v10265 = vpow.pop %v10264
        %v10266 = vmul.f32 %v10016, 1.442695
        %v10267 = vpow.pop %v10266
        %v10268 = vmul.f32 %v10017, 1.442695
        %v10269 = vpow.pop %v10268
        %v10270 = vmul.f32 %v10018, 1.442695
        %v10271 = vpow.pop %v10270
        %v10272 = vmul.f32 %v10019, 1.442695
        %v10273 = vpow.pop %v10272
        %v10274 = vmul.f32 %v10020, 1.442695
        %v10275 = vpow.pop %v10274
        %v10276 = vmul.f32 %v10021, 1.442695
        %v10277 = vpow.pop %v10276
        %v10278 = vmul.f32 %v10022, 1.442695
        %v10279 = vpow.pop %v10278
        %v10280 = vmul.f32 %v10023, 1.442695
        %v10281 = vpow.pop %v10280
        %v10282 = vmul.f32 %v10024, 1.442695
        %v10283 = vpow.pop %v10282
        %v10284 = vmul.f32 %v10025, 1.442695
        %v10285 = vpow.pop %v10284
        %v10286 = vmul.f32 %v10026, 1.442695
        %v10287 = vpow.pop %v10286
        %v10288 = vmul.f32 %v10027, 1.442695
        %v10289 = vpow.pop %v10288
        %v10290 = vmul.f32 %v10028, 1.442695
        %v10291 = vpow.pop %v10290
        %v10292 = vmul.f32 %v10029, 1.442695
        %v10293 = vpow.pop %v10292
        %v10294 = vadd.f32 %v10031, 1.0
        %v10295 = vadd.f32 %v10033, 1.0
        %v10296 = vadd.f32 %v10035, 1.0
        %v10297 = vadd.f32 %v10037, 1.0
        %v10298 = vadd.f32 %v10039, 1.0
        %v10299 = vadd.f32 %v10041, 1.0
        %v10300 = vadd.f32 %v10043, 1.0
        %v10301 = vadd.f32 %v10045, 1.0
        %v10302 = vadd.f32 %v10047, 1.0
        %v10303 = vadd.f32 %v10049, 1.0
        %v10304 = vadd.f32 %v10051, 1.0
        %v10305 = vadd.f32 %v10053, 1.0
        %v10306 = vadd.f32 %v10055, 1.0
        %v10307 = vadd.f32 %v10057, 1.0
        %v10308 = vadd.f32 %v10059, 1.0
        %v10309 = vadd.f32 %v10061, 1.0
        %v10310 = vadd.f32 %v10063, 1.0
        %v10311 = vadd.f32 %v10065, 1.0
        %v10312 = vadd.f32 %v10067, 1.0
        %v10313 = vadd.f32 %v10069, 1.0
        %v10314 = vadd.f32 %v10071, 1.0
        %v10315 = vadd.f32 %v10073, 1.0
        %v10316 = vadd.f32 %v10075, 1.0
        %v10317 = vadd.f32 %v10077, 1.0
        %v10318 = vadd.f32 %v10079, 1.0
        %v10319 = vadd.f32 %v10081, 1.0
        %v10320 = vadd.f32 %v10083, 1.0
        %v10321 = vadd.f32 %v10085, 1.0
        %v10322 = vadd.f32 %v10087, 1.0
        %v10323 = vadd.f32 %v10089, 1.0
        %v10324 = vadd.f32 %v10091, 1.0
        %v10325 = vadd.f32 %v10093, 1.0
        %v10326 = vadd.f32 %v10095, 1.0
        %v10327 = vadd.f32 %v10097, 1.0
        %v10328 = vadd.f32 %v10099, 1.0
        %v10329 = vadd.f32 %v10101, 1.0
        %v10330 = vadd.f32 %v10103, 1.0
        %v10331 = vadd.f32 %v10105, 1.0
        %v10332 = vadd.f32 %v10107, 1.0
        %v10333 = vadd.f32 %v10109, 1.0
        %v10334 = vadd.f32 %v10111, 1.0
        %v10335 = vadd.f32 %v10113, 1.0
        %v10336 = vadd.f32 %v10115, 1.0
        %v10337 = vadd.f32 %v10117, 1.0
        %v10338 = vadd.f32 %v10119, 1.0
        %v10339 = vadd.f32 %v10121, 1.0
        %v10340 = vadd.f32 %v10123, 1.0
        %v10341 = vadd.f32 %v10125, 1.0
        %v10342 = vadd.f32 %v10127, 1.0
        %v10343 = vadd.f32 %v10129, 1.0
        %v10344 = vadd.f32 %v10131, 1.0
        %v10345 = vadd.f32 %v10133, 1.0
        %v10346 = vadd.f32 %v10135, 1.0
        %v10347 = vadd.f32 %v10137, 1.0
        %v10348 = vadd.f32 %v10139, 1.0
        %v10349 = vadd.f32 %v10141, 1.0
        %v10350 = vadd.f32 %v10143, 1.0
        %v10351 = vadd.f32 %v10145, 1.0
        %v10352 = vadd.f32 %v10147, 1.0
        %v10353 = vadd.f32 %v10149, 1.0
        %v10354 = vadd.f32 %v10151, 1.0
        %v10355 = vadd.f32 %v10153, 1.0
        %v10356 = vadd.f32 %v10155, 1.0
        %v10357 = vadd.f32 %v10157, 1.0
        %v10358 = vadd.f32 %v10159, 1.0
        %v10359 = vadd.f32 %v10161, 1.0
        %v10360 = vadd.f32 %v10163, 1.0
        %v10361 = vadd.f32 %v10165, 1.0
        %v10362 = vadd.f32 %v10167, 1.0
        %v10363 = vadd.f32 %v10169, 1.0
        %v10364 = vadd.f32 %v10171, 1.0
        %v10365 = vadd.f32 %v10173, 1.0
        %v10366 = vadd.f32 %v10175, 1.0
        %v10367 = vadd.f32 %v10177, 1.0
        %v10368 = vadd.f32 %v10179, 1.0
        %v10369 = vadd.f32 %v10181, 1.0
        %v10370 = vadd.f32 %v10183, 1.0
        %v10371 = vadd.f32 %v10185, 1.0
        %v10372 = vadd.f32 %v10187, 1.0
        %v10373 = vadd.f32 %v10189, 1.0
        %v10374 = vadd.f32 %v10191, 1.0
        %v10375 = vadd.f32 %v10193, 1.0
        %v10376 = vadd.f32 %v10195, 1.0
        %v10377 = vadd.f32 %v10197, 1.0
        %v10378 = vadd.f32 %v10199, 1.0
        %v10379 = vadd.f32 %v10201, 1.0
        %v10380 = vadd.f32 %v10203, 1.0
        %v10381 = vadd.f32 %v10205, 1.0
        %v10382 = vadd.f32 %v10207, 1.0
        %v10383 = vadd.f32 %v10209, 1.0
        %v10384 = vadd.f32 %v10211, 1.0
        %v10385 = vadd.f32 %v10213, 1.0
        %v10386 = vadd.f32 %v10215, 1.0
        %v10387 = vadd.f32 %v10217, 1.0
        %v10388 = vadd.f32 %v10219, 1.0
        %v10389 = vadd.f32 %v10221, 1.0
        %v10390 = vadd.f32 %v10223, 1.0
        %v10391 = vadd.f32 %v10225, 1.0
        %v10392 = vadd.f32 %v10227, 1.0
        %v10393 = vadd.f32 %v10229, 1.0
        %v10394 = vadd.f32 %v10231, 1.0
        %v10395 = vadd.f32 %v10233, 1.0
        %v10396 = vadd.f32 %v10235, 1.0
        %v10397 = vadd.f32 %v10237, 1.0
        %v10398 = vadd.f32 %v10239, 1.0
        %v10399 = vadd.f32 %v10241, 1.0
        %v10400 = vadd.f32 %v10243, 1.0
        %v10401 = vadd.f32 %v10245, 1.0
        %v10402 = vadd.f32 %v10247, 1.0
        %v10403 = vadd.f32 %v10249, 1.0
        %v10404 = vadd.f32 %v10251, 1.0
        %v10405 = vadd.f32 %v10253, 1.0
        %v10406 = vadd.f32 %v10255, 1.0
        %v10407 = vadd.f32 %v10257, 1.0
        %v10408 = vadd.f32 %v10259, 1.0
        %v10409 = vadd.f32 %v10261, 1.0
        %v10410 = vadd.f32 %v10263, 1.0
        %v10411 = vadd.f32 %v10265, 1.0
        %v10412 = vadd.f32 %v10267, 1.0
        %v10413 = vadd.f32 %v10269, 1.0
        %v10414 = vadd.f32 %v10271, 1.0
        %v10415 = vadd.f32 %v10273, 1.0
        %v10416 = vadd.f32 %v10275, 1.0
        %v10417 = vadd.f32 %v10277, 1.0
        %v10418 = vadd.f32 %v10279, 1.0
        %v10419 = vadd.f32 %v10281, 1.0
        %v10420 = vadd.f32 %v10283, 1.0
        %v10421 = vadd.f32 %v10285, 1.0
        %v10422 = vadd.f32 %v10287, 1.0
        %v10423 = vadd.f32 %v10289, 1.0
        %v10424 = vadd.f32 %v10291, 1.0
        %v10425 = vadd.f32 %v10293, 1.0
        %v10426 = vrcp.pop %v10294
        %v10427 = vrcp.pop %v10295
        %v10428 = vrcp.pop %v10296
        %v10429 = vrcp.pop %v10297
        %v10430 = vrcp.pop %v10298
        %v10431 = vrcp.pop %v10299
        %v10432 = vrcp.pop %v10300
        %v10433 = vrcp.pop %v10301
        %v10434 = vrcp.pop %v10302
        %v10435 = vrcp.pop %v10303
        %v10436 = vrcp.pop %v10304
        %v10437 = vrcp.pop %v10305
        %v10438 = vrcp.pop %v10306
        %v10439 = vrcp.pop %v10307
        %v10440 = vrcp.pop %v10308
        %v10441 = vrcp.pop %v10309
        %v10442 = vrcp.pop %v10310
        %v10443 = vrcp.pop %v10311
        %v10444 = vrcp.pop %v10312
        %v10445 = vrcp.pop %v10313
        %v10446 = vrcp.pop %v10314
        %v10447 = vrcp.pop %v10315
        %v10448 = vrcp.pop %v10316
        %v10449 = vrcp.pop %v10317
        %v10450 = vrcp.pop %v10318
        %v10451 = vrcp.pop %v10319
        %v10452 = vrcp.pop %v10320
        %v10453 = vrcp.pop %v10321
        %v10454 = vrcp.pop %v10322
        %v10455 = vrcp.pop %v10323
        %v10456 = vrcp.pop %v10324
        %v10457 = vrcp.pop %v10325
        %v10458 = vrcp.pop %v10326
        %v10459 = vrcp.pop %v10327
        %v10460 = vrcp.pop %v10328
        %v10461 = vrcp.pop %v10329
        %v10462 = vrcp.pop %v10330
        %v10463 = vrcp.pop %v10331
        %v10464 = vrcp.pop %v10332
        %v10465 = vrcp.pop %v10333
        %v10466 = vrcp.pop %v10334
        %v10467 = vrcp.pop %v10335
        %v10468 = vrcp.pop %v10336
        %v10469 = vrcp.pop %v10337
        %v10470 = vrcp.pop %v10338
        %v10471 = vrcp.pop %v10339
        %v10472 = vrcp.pop %v10340
        %v10473 = vrcp.pop %v10341
        %v10474 = vrcp.pop %v10342
        %v10475 = vrcp.pop %v10343
        %v10476 = vrcp.pop %v10344
        %v10477 = vrcp.pop %v10345
        %v10478 = vrcp.pop %v10346
        %v10479 = vrcp.pop %v10347
        %v10480 = vrcp.pop %v10348
        %v10481 = vrcp.pop %v10349
        %v10482 = vrcp.pop %v10350
        %v10483 = vrcp.pop %v10351
        %v10484 = vrcp.pop %v10352
        %v10485 = vrcp.pop %v10353
        %v10486 = vrcp.pop %v10354
        %v10487 = vrcp.pop %v10355
        %v10488 = vrcp.pop %v10356
        %v10489 = vrcp.pop %v10357
        %v10490 = vrcp.pop %v10358
        %v10491 = vrcp.pop %v10359
        %v10492 = vrcp.pop %v10360
        %v10493 = vrcp.pop %v10361
        %v10494 = vrcp.pop %v10362
        %v10495 = vrcp.pop %v10363
        %v10496 = vrcp.pop %v10364
        %v10497 = vrcp.pop %v10365
        %v10498 = vrcp.pop %v10366
        %v10499 = vrcp.pop %v10367
        %v10500 = vrcp.pop %v10368
        %v10501 = vrcp.pop %v10369
        %v10502 = vrcp.pop %v10370
        %v10503 = vrcp.pop %v10371
        %v10504 = vrcp.pop %v10372
        %v10505 = vrcp.pop %v10373
        %v10506 = vrcp.pop %v10374
        %v10507 = vrcp.pop %v10375
        %v10508 = vrcp.pop %v10376
        %v10509 = vrcp.pop %v10377
        %v10510 = vrcp.pop %v10378
        %v10511 = vrcp.pop %v10379
        %v10512 = vrcp.pop %v10380
        %v10513 = vrcp.pop %v10381
        %v10514 = vrcp.pop %v10382
        %v10515 = vrcp.pop %v10383
        %v10516 = vrcp.pop %v10384
        %v10517 = vrcp.pop %v10385
        %v10518 = vrcp.pop %v10386
        %v10519 = vrcp.pop %v10387
        %v10520 = vrcp.pop %v10388
        %v10521 = vrcp.pop %v10389
        %v10522 = vrcp.pop %v10390
        %v10523 = vrcp.pop %v10391
        %v10524 = vrcp.pop %v10392
        %v10525 = vrcp.pop %v10393
        %v10526 = vrcp.pop %v10394
        %v10527 = vrcp.pop %v10395
        %v10528 = vrcp.pop %v10396
        %v10529 = vrcp.pop %v10397
        %v10530 = vrcp.pop %v10398
        %v10531 = vrcp.pop %v10399
        %v10532 = vrcp.pop %v10400
        %v10533 = vrcp.pop %v10401
        %v10534 = vrcp.pop %v10402
        %v10535 = vrcp.pop %v10403
        %v10536 = vrcp.pop %v10404
        %v10537 = vrcp.pop %v10405
        %v10538 = vrcp.pop %v10406
        %v10539 = vrcp.pop %v10407
        %v10540 = vrcp.pop %v10408
        %v10541 = vrcp.pop %v10409
        %v10542 = vrcp.pop %v10410
        %v10543 = vrcp.pop %v10411
        %v10544 = vrcp.pop %v10412
        %v10545 = vrcp.pop %v10413
        %v10546 = vrcp.pop %v10414
        %v10547 = vrcp.pop %v10415
        %v10548 = vrcp.pop %v10416
        %v10549 = vrcp.pop %v10417
        %v10550 = vrcp.pop %v10418
        %v10551 = vrcp.pop %v10419
        %v10552 = vrcp.pop %v10420
        %v10553 = vrcp.pop %v10421
        %v10554 = vrcp.pop %v10422
        %v10555 = vrcp.pop %v10423
        %v10556 = vrcp.pop %v10424
        %v10557 = vrcp.pop %v10425
        %v10558 = vmul.f32 %v9766, %v10426
        %v10559 = vmul.f32 %v9767, %v10427
        %v10560 = vmul.f32 %v9768, %v10428
        %v10561 = vmul.f32 %v9769, %v10429
        %v10562 = vmul.f32 %v9770, %v10430
        %v10563 = vmul.f32 %v9771, %v10431
        %v10564 = vmul.f32 %v9772, %v10432
        %v10565 = vmul.f32 %v9773, %v10433
        %v10566 = vmul.f32 %v9774, %v10434
        %v10567 = vmul.f32 %v9775, %v10435
        %v10568 = vmul.f32 %v9776, %v10436
        %v10569 = vmul.f32 %v9777, %v10437
        %v10570 = vmul.f32 %v9778, %v10438
        %v10571 = vmul.f32 %v9779, %v10439
        %v10572 = vmul.f32 %v9780, %v10440
        %v10573 = vmul.f32 %v9781, %v10441
        %v10574 = vmul.f32 %v9782, %v10442
        %v10575 = vmul.f32 %v9783, %v10443
        %v10576 = vmul.f32 %v9784, %v10444
        %v10577 = vmul.f32 %v9785, %v10445
        %v10578 = vmul.f32 %v9786, %v10446
        %v10579 = vmul.f32 %v9787, %v10447
        %v10580 = vmul.f32 %v9788, %v10448
        %v10581 = vmul.f32 %v9789, %v10449
        %v10582 = vmul.f32 %v9790, %v10450
        %v10583 = vmul.f32 %v9791, %v10451
        %v10584 = vmul.f32 %v9792, %v10452
        %v10585 = vmul.f32 %v9793, %v10453
        %v10586 = vmul.f32 %v9794, %v10454
        %v10587 = vmul.f32 %v9795, %v10455
        %v10588 = vmul.f32 %v9796, %v10456
        %v10589 = vmul.f32 %v9797, %v10457
        %v10590 = vmul.f32 %v9798, %v10458
        %v10591 = vmul.f32 %v9799, %v10459
        %v10592 = vmul.f32 %v9800, %v10460
        %v10593 = vmul.f32 %v9801, %v10461
        %v10594 = vmul.f32 %v9802, %v10462
        %v10595 = vmul.f32 %v9803, %v10463
        %v10596 = vmul.f32 %v9804, %v10464
        %v10597 = vmul.f32 %v9805, %v10465
        %v10598 = vmul.f32 %v9806, %v10466
        %v10599 = vmul.f32 %v9807, %v10467
        %v10600 = vmul.f32 %v9808, %v10468
        %v10601 = vmul.f32 %v9809, %v10469
        %v10602 = vmul.f32 %v9810, %v10470
        %v10603 = vmul.f32 %v9811, %v10471
        %v10604 = vmul.f32 %v9812, %v10472
        %v10605 = vmul.f32 %v9813, %v10473
        %v10606 = vmul.f32 %v9814, %v10474
        %v10607 = vmul.f32 %v9815, %v10475
        %v10608 = vmul.f32 %v9816, %v10476
        %v10609 = vmul.f32 %v9817, %v10477
        %v10610 = vmul.f32 %v9818, %v10478
        %v10611 = vmul.f32 %v9819, %v10479
        %v10612 = vmul.f32 %v9820, %v10480
        %v10613 = vmul.f32 %v9821, %v10481
        %v10614 = vmul.f32 %v9822, %v10482
        %v10615 = vmul.f32 %v9823, %v10483
        %v10616 = vmul.f32 %v9824, %v10484
        %v10617 = vmul.f32 %v9825, %v10485
        %v10618 = vmul.f32 %v9826, %v10486
        %v10619 = vmul.f32 %v9827, %v10487
        %v10620 = vmul.f32 %v9828, %v10488
        %v10621 = vmul.f32 %v9829, %v10489
        %v10622 = vmul.f32 %v9830, %v10490
        %v10623 = vmul.f32 %v9831, %v10491
        %v10624 = vmul.f32 %v9832, %v10492
        %v10625 = vmul.f32 %v9833, %v10493
        %v10626 = vmul.f32 %v9834, %v10494
        %v10627 = vmul.f32 %v9835, %v10495
        %v10628 = vmul.f32 %v9836, %v10496
        %v10629 = vmul.f32 %v9837, %v10497
        %v10630 = vmul.f32 %v9838, %v10498
        %v10631 = vmul.f32 %v9839, %v10499
        %v10632 = vmul.f32 %v9840, %v10500
        %v10633 = vmul.f32 %v9841, %v10501
        %v10634 = vmul.f32 %v9842, %v10502
        %v10635 = vmul.f32 %v9843, %v10503
        %v10636 = vmul.f32 %v9844, %v10504
        %v10637 = vmul.f32 %v9845, %v10505
        %v10638 = vmul.f32 %v9846, %v10506
        %v10639 = vmul.f32 %v9847, %v10507
        %v10640 = vmul.f32 %v9848, %v10508
        %v10641 = vmul.f32 %v9849, %v10509
        %v10642 = vmul.f32 %v9850, %v10510
        %v10643 = vmul.f32 %v9851, %v10511
        %v10644 = vmul.f32 %v9852, %v10512
        %v10645 = vmul.f32 %v9853, %v10513
        %v10646 = vmul.f32 %v9854, %v10514
        %v10647 = vmul.f32 %v9855, %v10515
        %v10648 = vmul.f32 %v9856, %v10516
        %v10649 = vmul.f32 %v9857, %v10517
        %v10650 = vmul.f32 %v9858, %v10518
        %v10651 = vmul.f32 %v9859, %v10519
        %v10652 = vmul.f32 %v9860, %v10520
        %v10653 = vmul.f32 %v9861, %v10521
        %v10654 = vmul.f32 %v9862, %v10522
        %v10655 = vmul.f32 %v9863, %v10523
        %v10656 = vmul.f32 %v9864, %v10524
        %v10657 = vmul.f32 %v9865, %v10525
        %v10658 = vmul.f32 %v9866, %v10526
        %v10659 = vmul.f32 %v9867, %v10527
        %v10660 = vmul.f32 %v9868, %v10528
        %v10661 = vmul.f32 %v9869, %v10529
        %v10662 = vmul.f32 %v9870, %v10530
        %v10663 = vmul.f32 %v9871, %v10531
        %v10664 = vmul.f32 %v9872, %v10532
        %v10665 = vmul.f32 %v9873, %v10533
        %v10666 = vmul.f32 %v9874, %v10534
        %v10667 = vmul.f32 %v9875, %v10535
        %v10668 = vmul.f32 %v9876, %v10536
        %v10669 = vmul.f32 %v9877, %v10537
        %v10670 = vmul.f32 %v9878, %v10538
        %v10671 = vmul.f32 %v9879, %v10539
        %v10672 = vmul.f32 %v9880, %v10540
        %v10673 = vmul.f32 %v9881, %v10541
        %v10674 = vmul.f32 %v9882, %v10542
        %v10675 = vmul.f32 %v9883, %v10543
        %v10676 = vmul.f32 %v9884, %v10544
        %v10677 = vmul.f32 %v9885, %v10545
        %v10678 = vmul.f32 %v9886, %v10546
        %v10679 = vmul.f32 %v9887, %v10547
        %v10680 = vmul.f32 %v9888, %v10548
        %v10681 = vmul.f32 %v9889, %v10549
        %v10682 = vmul.f32 %v9890, %v10550
        %v10683 = vmul.f32 %v9891, %v10551
        %v10684 = vmul.f32 %v9892, %v10552
        %v10685 = vmul.f32 %v9893, %v10553
        %v10686 = vmul.f32 %v9894, %v10554
        %v10687 = vmul.f32 %v9895, %v10555
        %v10688 = vmul.f32 %v9896, %v10556
        %v10689 = vmul.f32 %v9897, %v10557
        %10690 = vst [vmem:[%s163] sm:$0xff] %v10558
        %10691 = vst [vmem:[%s163 + $0x8] sm:$0xff] %v10559
        %10692 = vst [vmem:[%s163 + $0x10] sm:$0xff] %v10560
        %10693 = vst [vmem:[%s163 + $0x18] sm:$0xff] %v10561
        %10694 = vst [vmem:[%s163 + $0x20] sm:$0xff] %v10562
        %10695 = vst [vmem:[%s163 + $0x28] sm:$0xff] %v10563
        %10696 = vst [vmem:[%s163 + $0x30] sm:$0xff] %v10564
        %10697 = vst [vmem:[%s163 + $0x38] sm:$0xff] %v10565
        %10698 = vst [vmem:[%s163 + $0x40] sm:$0xff] %v10566
        %10699 = vst [vmem:[%s163 + $0x48] sm:$0xff] %v10567
        %10700 = vst [vmem:[%s163 + $0x50] sm:$0xff] %v10568
        %10701 = vst [vmem:[%s163 + $0x58] sm:$0xff] %v10569
        %10702 = vst [vmem:[%s163 + $0x60] sm:$0xff] %v10570
        %10703 = vst [vmem:[%s163 + $0x68] sm:$0xff] %v10571
        %10704 = vst [vmem:[%s163 + $0x70] sm:$0xff] %v10572
        %10705 = vst [vmem:[%s163 + $0x78] sm:$0xff] %v10573
        %10706 = vst [vmem:[%s163 + $0x80] sm:$0xff] %v10574
        %10707 = vst [vmem:[%s163 + $0x88] sm:$0xff] %v10575
        %10708 = vst [vmem:[%s163 + $0x90] sm:$0xff] %v10576
        %10709 = vst [vmem:[%s163 + $0x98] sm:$0xff] %v10577
        %10710 = vst [vmem:[%s163 + $0xa0] sm:$0xff] %v10578
        %10711 = vst [vmem:[%s163 + $0xa8] sm:$0xff] %v10579
        %10712 = vst [vmem:[%s163 + $0xb0] sm:$0xff] %v10580
        %10713 = vst [vmem:[%s163 + $0xb8] sm:$0xff] %v10581
        %10714 = vst [vmem:[%s163 + $0xc0] sm:$0xff] %v10582
        %10715 = vst [vmem:[%s163 + $0xc8] sm:$0xff] %v10583
        %10716 = vst [vmem:[%s163 + $0xd0] sm:$0xff] %v10584
        %10717 = vst [vmem:[%s163 + $0xd8] sm:$0xff] %v10585
        %10718 = vst [vmem:[%s163 + $0xe0] sm:$0xff] %v10586
        %10719 = vst [vmem:[%s163 + $0xe8] sm:$0xff] %v10587
        %10720 = vst [vmem:[%s163 + $0xf0] sm:$0xff] %v10588
        %10721 = vst [vmem:[%s163 + $0xf8] sm:$0xff] %v10589
        %10722 = vst [vmem:[%s163 + $0x100] sm:$0xff] %v10590
        %10723 = vst [vmem:[%s163 + $0x108] sm:$0xff] %v10591
        %10724 = vst [vmem:[%s163 + $0x110] sm:$0xff] %v10592
        %10725 = vst [vmem:[%s163 + $0x118] sm:$0xff] %v10593
        %10726 = vst [vmem:[%s163 + $0x120] sm:$0xff] %v10594
        %10727 = vst [vmem:[%s163 + $0x128] sm:$0xff] %v10595
        %10728 = vst [vmem:[%s163 + $0x130] sm:$0xff] %v10596
        %10729 = vst [vmem:[%s163 + $0x138] sm:$0xff] %v10597
        %10730 = vst [vmem:[%s163 + $0x140] sm:$0xff] %v10598
        %10731 = vst [vmem:[%s163 + $0x148] sm:$0xff] %v10599
        %10732 = vst [vmem:[%s163 + $0x150] sm:$0xff] %v10600
        %10733 = vst [vmem:[%s163 + $0x158] sm:$0xff] %v10601
        %10734 = vst [vmem:[%s163 + $0x160] sm:$0xff] %v10602
        %10735 = vst [vmem:[%s163 + $0x168] sm:$0xff] %v10603
        %10736 = vst [vmem:[%s163 + $0x170] sm:$0xff] %v10604
        %10737 = vst [vmem:[%s163 + $0x178] sm:$0xff] %v10605
        %10738 = vst [vmem:[%s163 + $0x180] sm:$0xff] %v10606
        %10739 = vst [vmem:[%s163 + $0x188] sm:$0xff] %v10607
        %10740 = vst [vmem:[%s163 + $0x190] sm:$0xff] %v10608
        %10741 = vst [vmem:[%s163 + $0x198] sm:$0xff] %v10609
        %10742 = vst [vmem:[%s163 + $0x1a0] sm:$0xff] %v10610
        %10743 = vst [vmem:[%s163 + $0x1a8] sm:$0xff] %v10611
        %10744 = vst [vmem:[%s163 + $0x1b0] sm:$0xff] %v10612
        %10745 = vst [vmem:[%s163 + $0x1b8] sm:$0xff] %v10613
        %10746 = vst [vmem:[%s163 + $0x1c0] sm:$0xff] %v10614
        %10747 = vst [vmem:[%s163 + $0x1c8] sm:$0xff] %v10615
        %10748 = vst [vmem:[%s163 + $0x1d0] sm:$0xff] %v10616
        %10749 = vst [vmem:[%s163 + $0x1d8] sm:$0xff] %v10617
        %10750 = vst [vmem:[%s163 + $0x1e0] sm:$0xff] %v10618
        %10751 = vst [vmem:[%s163 + $0x1e8] sm:$0xff] %v10619
        %10752 = vst [vmem:[%s163 + $0x1f0] sm:$0xff] %v10620
        %10753 = vst [vmem:[%s163 + $0x1f8] sm:$0xff] %v10621
        %10754 = vst [vmem:[%s163 + $0x200] sm:$0xff] %v10622
        %10755 = vst [vmem:[%s163 + $0x208] sm:$0xff] %v10623
        %10756 = vst [vmem:[%s163 + $0x210] sm:$0xff] %v10624
        %10757 = vst [vmem:[%s163 + $0x218] sm:$0xff] %v10625
        %10758 = vst [vmem:[%s163 + $0x220] sm:$0xff] %v10626
        %10759 = vst [vmem:[%s163 + $0x228] sm:$0xff] %v10627
        %10760 = vst [vmem:[%s163 + $0x230] sm:$0xff] %v10628
        %10761 = vst [vmem:[%s163 + $0x238] sm:$0xff] %v10629
        %10762 = vst [vmem:[%s163 + $0x240] sm:$0xff] %v10630
        %10763 = vst [vmem:[%s163 + $0x248] sm:$0xff] %v10631
        %10764 = vst [vmem:[%s163 + $0x250] sm:$0xff] %v10632
        %10765 = vst [vmem:[%s163 + $0x258] sm:$0xff] %v10633
        %10766 = vst [vmem:[%s163 + $0x260] sm:$0xff] %v10634
        %10767 = vst [vmem:[%s163 + $0x268] sm:$0xff] %v10635
        %10768 = vst [vmem:[%s163 + $0x270] sm:$0xff] %v10636
        %10769 = vst [vmem:[%s163 + $0x278] sm:$0xff] %v10637
        %10770 = vst [vmem:[%s163 + $0x280] sm:$0xff] %v10638
        %10771 = vst [vmem:[%s163 + $0x288] sm:$0xff] %v10639
        %10772 = vst [vmem:[%s163 + $0x290] sm:$0xff] %v10640
        %10773 = vst [vmem:[%s163 + $0x298] sm:$0xff] %v10641
        %10774 = vst [vmem:[%s163 + $0x2a0] sm:$0xff] %v10642
        %10775 = vst [vmem:[%s163 + $0x2a8] sm:$0xff] %v10643
        %10776 = vst [vmem:[%s163 + $0x2b0] sm:$0xff] %v10644
        %10777 = vst [vmem:[%s163 + $0x2b8] sm:$0xff] %v10645
        %10778 = vst [vmem:[%s163 + $0x2c0] sm:$0xff] %v10646
        %10779 = vst [vmem:[%s163 + $0x2c8] sm:$0xff] %v10647
        %10780 = vst [vmem:[%s163 + $0x2d0] sm:$0xff] %v10648
        %10781 = vst [vmem:[%s163 + $0x2d8] sm:$0xff] %v10649
        %10782 = vst [vmem:[%s163 + $0x2e0] sm:$0xff] %v10650
        %10783 = vst [vmem:[%s163 + $0x2e8] sm:$0xff] %v10651
        %10784 = vst [vmem:[%s163 + $0x2f0] sm:$0xff] %v10652
        %10785 = vst [vmem:[%s163 + $0x2f8] sm:$0xff] %v10653
        %10786 = vst [vmem:[%s163 + $0x300] sm:$0xff] %v10654
        %10787 = vst [vmem:[%s163 + $0x308] sm:$0xff] %v10655
        %10788 = vst [vmem:[%s163 + $0x310] sm:$0xff] %v10656
        %10789 = vst [vmem:[%s163 + $0x318] sm:$0xff] %v10657
        %10790 = vst [vmem:[%s163 + $0x320] sm:$0xff] %v10658
        %10791 = vst [vmem:[%s163 + $0x328] sm:$0xff] %v10659
        %10792 = vst [vmem:[%s163 + $0x330] sm:$0xff] %v10660
        %10793 = vst [vmem:[%s163 + $0x338] sm:$0xff] %v10661
        %10794 = vst [vmem:[%s163 + $0x340] sm:$0xff] %v10662
        %10795 = vst [vmem:[%s163 + $0x348] sm:$0xff] %v10663
        %10796 = vst [vmem:[%s163 + $0x350] sm:$0xff] %v10664
        %10797 = vst [vmem:[%s163 + $0x358] sm:$0xff] %v10665
        %10798 = vst [vmem:[%s163 + $0x360] sm:$0xff] %v10666
        %10799 = vst [vmem:[%s163 + $0x368] sm:$0xff] %v10667
        %10800 = vst [vmem:[%s163 + $0x370] sm:$0xff] %v10668
        %10801 = vst [vmem:[%s163 + $0x378] sm:$0xff] %v10669
        %10802 = vst [vmem:[%s163 + $0x380] sm:$0xff] %v10670
        %10803 = vst [vmem:[%s163 + $0x388] sm:$0xff] %v10671
        %10804 = vst [vmem:[%s163 + $0x390] sm:$0xff] %v10672
        %10805 = vst [vmem:[%s163 + $0x398] sm:$0xff] %v10673
        %10806 = vst [vmem:[%s163 + $0x3a0] sm:$0xff] %v10674
        %10807 = vst [vmem:[%s163 + $0x3a8] sm:$0xff] %v10675
        %10808 = vst [vmem:[%s163 + $0x3b0] sm:$0xff] %v10676
        %10809 = vst [vmem:[%s163 + $0x3b8] sm:$0xff] %v10677
        %10810 = vst [vmem:[%s163 + $0x3c0] sm:$0xff] %v10678
        %10811 = vst [vmem:[%s163 + $0x3c8] sm:$0xff] %v10679
        %10812 = vst [vmem:[%s163 + $0x3d0] sm:$0xff] %v10680
        %10813 = vst [vmem:[%s163 + $0x3d8] sm:$0xff] %v10681
        %10814 = vst [vmem:[%s163 + $0x3e0] sm:$0xff] %v10682
        %10815 = vst [vmem:[%s163 + $0x3e8] sm:$0xff] %v10683
        %10816 = vst [vmem:[%s163 + $0x3f0] sm:$0xff] %v10684
        %10817 = vst [vmem:[%s163 + $0x3f8] sm:$0xff] %v10685
        %10818 = vst [vmem:[%s163 + $0x400] sm:$0xff] %v10686
        %10819 = vst [vmem:[%s163 + $0x408] sm:$0xff] %v10687
        %10820 = vst [vmem:[%s163 + $0x410] sm:$0xff] %v10688
        %10821 = vst [vmem:[%s163 + $0x418] sm:$0xff] %v10689
        %s10822 = sand.u32 %s93, 1
        %s10823 = scalar_lea.sflag [#allocation3], %s10822
        %s10824 = sand.u32 %s93, 1
        %s10825 = smul.addr %s10824, 1056
        %s10826 = scalar_lea.vmem [#allocation2], %s10825
        // Predicated region
        $region33: #{tpu_custom_call.1} parent=31 // pred_check
          %p10827 = pneg %p103
        $region34: #{tpu_custom_call.1} parent=31 // pred_check_branch
          %10829 = sbr.rel (%p10827) target = $region36
        $region35: #{tpu_custom_call.1} parent=31 // pred_region
          %s10831 = ssub.s32 16896, 16896
          %10832 = vsyncadd %s10823, %s10831
          %s10833 = smul.addr %s17, 132
          %s10834 = smul.addr %s10833, 128
          %s10835 = scalar_lea.hbm %s3, %s10834
          %s10836 = sshll.u32 %s10826, 4
          %s10837 = int_to_ptr.vmem [resolvable:$true] %s10836
          %10842 = dma.vmem_to_hbm [thread:$0]  %s10837, 16896, %s10835, %s10823, 128, 128, 8
        $region36: #{tpu_custom_call.1} parent=31 // pred_fallthru
          _
      $region32: #{tpu_custom_call.1} parent=5 // pred_fallthru
        _
      %p10843 = scmp.le.s32.totalorder 2, %s12
      // Predicated region
      $region37: #{tpu_custom_call.1} parent=5 // pred_check
        %p10844 = pneg %p10843
      $region38: #{tpu_custom_call.1} parent=5 // pred_check_branch
        %10846 = sbr.rel (%p10844) target = $region40
      $region39: #{tpu_custom_call.1} parent=5 // pred_region
        %s10847 = ssub.s32 %s12, 2
        // Predicated region
        $region41: #{tpu_custom_call.1} parent=39 // pred_check
          %p10848 = pneg %p109
        $region42: #{tpu_custom_call.1} parent=39 // pred_check_branch
          %10850 = sbr.rel (%p10848) target = $region44
        $region43: #{tpu_custom_call.1} parent=39 // pred_region
          %s10851 = sand.u32 %s94, 1
          %s10852 = scalar_lea.sflag [#allocation3], %s10851
          %s10853 = sand.u32 %s94, 1
          %s10854 = smul.addr %s10853, 1056
          %s10855 = scalar_lea.vmem [#allocation2], %s10854
          %10856 = dma.done %s10852, 16896
        $region44: #{tpu_custom_call.1} parent=39 // pred_fallthru
          _
      $region40: #{tpu_custom_call.1} parent=5 // pred_fallthru
        _
    $region6: #{tpu_custom_call.1} parent=1 // loop_footer
      %s16 = sadd.s32 1, %s12
    $region7: #{tpu_custom_call.1} parent=1 // loop_footer_branch
      %11 = sbr.rel target = $region3
    $region8: #{tpu_custom_call.1} parent=1 // loop_exit
      _
    %10857 = vsyncpa [#allocation3], 1
    %s10858 = scalar_lea.sflag [#allocation3], 1
    %10859 = vsyncpa %s10858, 1

</llo_original>
